<compile_context>
chip_gen: v7x
topology: tpu7x:2x2x1
jax: 0.10.0
libtpu: 0.0.40
codegen_flags: <defaults>
</compile_context>

<pallas_src>
import functools

import jax
import jax.numpy as jnp
from jax import lax
from jax.experimental import pallas as pl
from jax.experimental.pallas import tpu as pltpu

EPS = 1e-5


def _conv3x3_instnorm(load_col, w_ref, h, w):
    """3x3 'VALID' conv over a reflect-padded (H+2, W+2, C) block, then
    per-channel instance norm over the spatial axis.

    load_col(dx) returns the (H+2, W, C) column-shifted slab of the padded
    image, already in the matmul compute dtype.  w_ref is (3, 3*Cin, Cout),
    indexed by dx, with the three dy taps folded dy-major into the K dim.
    Returns (H*W, Cout) float32 with zero mean / unit variance per channel.
    The conv bias is intentionally omitted: it is cancelled exactly by the
    instance-norm mean subtraction.
    """
    hw = h * w
    acc = None
    for dx in range(3):                                    # static 3-tap unroll
        col = load_col(dx)                                 # (H+2, W, C)
        patch = jnp.concatenate(                           # (H, W, 3C), dy-major
            [col[0:h], col[1:h + 1], col[2:h + 2]], axis=-1)
        patch = patch.reshape(hw, -1)                      # layout-preserving (W%8==0)
        d = jnp.dot(patch, w_ref[dx], preferred_element_type=jnp.float32)
        acc = d if acc is None else acc + d
    inv_hw = 1.0 / hw
    mean = jnp.sum(acc, axis=0, keepdims=True) * inv_hw    # (1, C) f32
    centered = acc - mean                                  # needed for output anyway
    var = jnp.sum(centered * centered, axis=0, keepdims=True) * inv_hw
    return centered * lax.rsqrt(var + EPS)


def _make_kernel(bt, h, w, c, compute_dtype):
    hw = h * w

    def _reflect_pad_into(pad_ref, img):
        # img: (H, W, C) compute dtype; pad_ref: (H+2, W+2, C) VMEM scratch.
        pad_ref[1:h + 1, 1:w + 1, :] = img
        pad_ref[0:1, 1:w + 1, :] = img[1:2]                    # top row    <- row 1
        pad_ref[h + 1:h + 2, 1:w + 1, :] = img[h - 2:h - 1]    # bottom row <- row H-2
        pad_ref[:, 0:1, :] = pad_ref[:, 2:3, :]                # left col  (+ corners)
        pad_ref[:, w + 1:w + 2, :] = pad_ref[:, w - 1:w, :]    # right col (+ corners)

    def kernel(x_ref, w1_ref, w2_ref, o_ref, xpad_ref, ypad_ref):
        # x_ref : (bt, H, W, C)    input dtype (unpadded)
        # w1/w2 : (3, 3C, C)       compute dtype, dy-folded into K
        # o_ref : (bt, H*W, C)     input dtype
        # xpad_ref / ypad_ref: (H+2, W+2, C) compute-dtype VMEM scratches
        for i in range(bt):                                    # static small unroll
            # ---- in-kernel reflect pad of the input (cast once to bf16) ------
            _reflect_pad_into(xpad_ref, x_ref[i].astype(compute_dtype))

            # ---- stage 1: conv3x3 -> instance norm -> ReLU --------------------
            y = _conv3x3_instnorm(
                lambda dx: xpad_ref[:, dx:dx + w, :], w1_ref, h, w)
            y = jnp.maximum(y, 0.0)
            # TODO(synk): nn.Dropout(0.5) branch (use_dropout=True) not
            # implemented; this build follows the nn.Identity() path.

            # ---- reflect-pad the intermediate entirely inside VMEM (bf16) -----
            _reflect_pad_into(ypad_ref, y.astype(compute_dtype).reshape(h, w, c))

            # ---- stage 2: conv3x3 -> instance norm -> residual add ------------
            z = _conv3x3_instnorm(
                lambda dx: ypad_ref[:, dx:dx + w, :], w2_ref, h, w)
            x_res = x_ref[i].reshape(hw, c).astype(jnp.float32)   # aligned load
            o_ref[i] = (x_res + z).astype(o_ref.dtype)

    return kernel


def _vmem_limit_bytes():
    """3/4 of physical VMEM, capped at 64 MiB (v7x has only 64 MiB per TC)."""
    try:
        cap = pltpu.get_tpu_info().vmem_capacity_bytes
    except Exception:
        cap = 64 * 1024 * 1024                       # conservative fallback
    return int(min(cap * 3 // 4, 64 * 1024 * 1024))


def _images_per_step(n, h, w, c, itemsize, max_images):
    """Largest divisor of n <= max_images whose double-buffered in/out
    activation blocks stay under a modest VMEM budget."""
    per_image = 2 * 2 * h * w * c * itemsize          # (in + out) x double-buffer
    cap = max(1, min(max_images, (16 * 1024 * 1024) // max(per_image, 1)))
    cap = min(cap, n)
    return max(d for d in range(1, cap + 1) if n % d == 0)


@functools.partial(jax.jit, static_argnames=("compute_dtype", "max_images_per_step"))
def resnet_block(x_nchw, w1, b1, w2, b2, *, compute_dtype=jnp.bfloat16,
                 max_images_per_step=4):
    """x + conv_block(x).  Weights are HWIO (3, 3, C, C); biases (C,).

    b1 / b2 are accepted for API parity with nn.Conv2d but unused: a conv bias
    immediately followed by InstanceNorm2d(affine=False) is cancelled exactly
    by the mean subtraction.
    """
    del b1, b2
    n, c, h, w = x_nchw.shape
    hw = h * w
    hp, wp = h + 2, w + 2

    x = jnp.transpose(x_nchw, (0, 2, 3, 1))                # NCHW -> NHWC (no pad pass)

    # dy-fold: (ky, kx, Cin, Cout) -> (kx, ky*Cin, Cout); each conv stage then
    # runs as three MXU dots with K = 3*C.
    w1f = jnp.transpose(w1, (1, 0, 2, 3)).reshape(3, 3 * c, c).astype(compute_dtype)
    w2f = jnp.transpose(w2, (1, 0, 2, 3)).reshape(3, 3 * c, c).astype(compute_dtype)

    bt = _images_per_step(n, h, w, c, x_nchw.dtype.itemsize, max_images_per_step)
    # NOTE(v7x megacore): with the batch grid marked "parallel", keep n//bt an
    # even/>=2 count for 2-TensorCore chips (or split HW across cores with a
    # cross-core stats exchange for single-image inference).

    out_flat = pl.pallas_call(
        _make_kernel(bt, h, w, c, compute_dtype),
        out_shape=jax.ShapeDtypeStruct((n, hw, c), x_nchw.dtype),
        grid_spec=pltpu.PrefetchScalarGridSpec(
            num_scalar_prefetch=0,
            grid=(n // bt,),                           # bt images per grid step
            in_specs=[
                pl.BlockSpec((bt, h, w, c), lambda b: (b, 0, 0, 0)),
                # Constant index maps: the folded weights are DMA'd once and
                # stay VMEM-resident.  (pipeline_mode=pl.Buffered(1) would
                # reclaim the second buffer; left default for robustness —
                # negligible at these channel counts.)
                pl.BlockSpec((3, 3 * c, c), lambda b: (0, 0, 0)),
                pl.BlockSpec((3, 3 * c, c), lambda b: (0, 0, 0)),
            ],
            out_specs=pl.BlockSpec((bt, hw, c), lambda b: (b, 0, 0)),
            scratch_shapes=[
                pltpu.VMEM((hp, wp, c), compute_dtype),   # reflect-padded input
                pltpu.VMEM((hp, wp, c), compute_dtype),   # reflect-padded stage-1 act
            ],
        ),
        compiler_params=pltpu.CompilerParams(
            dimension_semantics=("parallel",),         # batch steps independent
            vmem_limit_bytes=_vmem_limit_bytes(),
        ),
    )(x, w1f, w2f)

    out = out_flat.reshape(n, h, w, c)
    return jnp.transpose(out, (0, 3, 1, 2))                # NHWC -> NCHW


# ---------------------------- pure-JAX reference -----------------------------
def resnet_block_ref(x_nchw, w1, b1, w2, b2):
    x = jnp.transpose(x_nchw, (0, 2, 3, 1))

    def conv(t, wgt, bias):
        tp = jnp.pad(t, ((0, 0), (1, 1), (1, 1), (0, 0)), mode="reflect")
        y = lax.conv_general_dilated(
            tp, wgt, (1, 1), "VALID", dimension_numbers=("NHWC", "HWIO", "NHWC"))
        return y + bias

    def inorm(t):
        mean = jnp.mean(t, axis=(1, 2), keepdims=True)
        var = jnp.mean((t - mean) ** 2, axis=(1, 2), keepdims=True)
        return (t - mean) * lax.rsqrt(var + EPS)

    y = jnp.maximum(inorm(conv(x, w1, b1)), 0.0)
    z = inorm(conv(y, w2, b2))
    return jnp.transpose(x + z, (0, 3, 1, 2))


if __name__ == "__main__":
    # dim=128 keeps the channel (lane) axis dense and W%8==0 keeps the
    # (H,W,C)->(HW,C) reshapes layout-preserving; 16x16 spatial, batch 2.
    N, C, H, W = 2, 128, 16, 16

    key = jax.random.PRNGKey(0)
    k1, k2, k3, k4, k5 = jax.random.split(key, 5)
    x = jax.random.normal(k1, (N, C, H, W), jnp.float32)
    # Conv2d(dim, dim, kernel_size=3) weights (stored HWIO) + biases.
    w1 = jax.random.normal(k2, (3, 3, C, C), jnp.float32) * 0.1
    b1 = jax.random.normal(k3, (C,), jnp.float32) * 0.1
    w2 = jax.random.normal(k4, (3, 3, C, C), jnp.float32) * 0.1
    b2 = jax.random.normal(k5, (C,), jnp.float32) * 0.1

    ref = resnet_block_ref(x, w1, b1, w2, b2)

    # Exact-semantics check: f32 compute path vs. the f32 XLA reference.
    out_f32 = jax.block_until_ready(
        resnet_block(x, w1, b1, w2, b2, compute_dtype=jnp.float32))
    assert out_f32.shape == x.shape and out_f32.dtype == x.dtype
    err_f32 = float(jnp.max(jnp.abs(out_f32 - ref)))
    if err_f32 > 5e-4:
        raise AssertionError(f"f32 kernel/reference mismatch, max abs err = {err_f32}")

    # Default (performance) path: bf16 MXU operands, f32 accumulation & stats.
    out = jax.block_until_ready(resnet_block(x, w1, b1, w2, b2))
    assert out.shape == x.shape and out.dtype == x.dtype
    err_bf16 = float(jnp.max(jnp.abs(out - ref)))
    if err_bf16 > 1e-1:
        raise AssertionError(f"bf16 kernel/reference mismatch, max abs err = {err_bf16}")

    print("KERNEL_OK")
</pallas_src>

<mosaic_0001>
module attributes {stable_mosaic.version = 11 : i64} {
  func.func @kernel(%arg0: i32, %arg1: memref<2x16x16x128xf32, #tpu.memory_space<vmem>>, %arg2: memref<3x384x128xf32, #tpu.memory_space<vmem>>, %arg3: memref<3x384x128xf32, #tpu.memory_space<vmem>>, %arg4: memref<2x256x128xf32, #tpu.memory_space<vmem>>, %arg5: memref<18x18x128xf32, #tpu.memory_space<vmem>>, %arg6: memref<18x18x128xf32, #tpu.memory_space<vmem>>) attributes {dimension_semantics = [#tpu.dimension_semantics<parallel>], iteration_bounds = array<i64: 1>, scalar_prefetch = 0 : i64, scratch_operands = 2 : i64, tpu.core_type = #tpu.core_type<tc>, window_params = [{transform_indices = @transform_0, window_bounds = array<i64: 2, 16, 16, 128>}, {pipeline_mode = #tpu.pipeline_mode<synchronous>, transform_indices = @transform_1, window_bounds = array<i64: 3, 384, 128>}, {pipeline_mode = #tpu.pipeline_mode<synchronous>, transform_indices = @transform_2, window_bounds = array<i64: 3, 384, 128>}, {transform_indices = @transform_3, window_bounds = array<i64: 2, 256, 128>}]} {
    %c0 = arith.constant 0 : index
    %c0_0 = arith.constant 0 : index
    %c0_1 = arith.constant 0 : index
    %c0_2 = arith.constant 0 : index
    %0 = vector.load %arg1[%c0, %c0_0, %c0_1, %c0_2] : memref<2x16x16x128xf32, #tpu.memory_space<vmem>>, vector<1x16x16x128xf32>
    %1 = vector.shape_cast %0 : vector<1x16x16x128xf32> to vector<16x16x128xf32>
    %c1 = arith.constant 1 : index
    %c1_3 = arith.constant 1 : index
    %c0_4 = arith.constant 0 : index
    %2 = vector.load %arg5[%c1, %c1_3, %c0_4] : memref<18x18x128xf32, #tpu.memory_space<vmem>>, vector<16x16x128xf32>
    tpu.vector_store %arg5[%c1, %c1_3, %c0_4], %1 {strides = array<i32>} : memref<18x18x128xf32, #tpu.memory_space<vmem>>, vector<16x16x128xf32>,
    %3 = vector.extract_strided_slice %1 {offsets = [1, 0, 0], sizes = [1, 16, 128], strides = [1, 1, 1]} : vector<16x16x128xf32> to vector<1x16x128xf32>
    %c0_5 = arith.constant 0 : index
    %c1_6 = arith.constant 1 : index
    %c0_7 = arith.constant 0 : index
    %4 = vector.load %arg5[%c0_5, %c1_6, %c0_7] : memref<18x18x128xf32, #tpu.memory_space<vmem>>, vector<1x16x128xf32>
    tpu.vector_store %arg5[%c0_5, %c1_6, %c0_7], %3 {strides = array<i32>} : memref<18x18x128xf32, #tpu.memory_space<vmem>>, vector<1x16x128xf32>,
    %5 = vector.extract_strided_slice %1 {offsets = [14, 0, 0], sizes = [1, 16, 128], strides = [1, 1, 1]} : vector<16x16x128xf32> to vector<1x16x128xf32>
    %c17 = arith.constant 17 : index
    %c1_8 = arith.constant 1 : index
    %c0_9 = arith.constant 0 : index
    %6 = vector.load %arg5[%c17, %c1_8, %c0_9] : memref<18x18x128xf32, #tpu.memory_space<vmem>>, vector<1x16x128xf32>
    tpu.vector_store %arg5[%c17, %c1_8, %c0_9], %5 {strides = array<i32>} : memref<18x18x128xf32, #tpu.memory_space<vmem>>, vector<1x16x128xf32>,
    %c0_10 = arith.constant 0 : index
    %c2 = arith.constant 2 : index
    %c0_11 = arith.constant 0 : index
    %7 = vector.load %arg5[%c0_10, %c2, %c0_11] : memref<18x18x128xf32, #tpu.memory_space<vmem>>, vector<18x1x128xf32>
    %c0_12 = arith.constant 0 : index
    %c0_13 = arith.constant 0 : index
    %c0_14 = arith.constant 0 : index
    %8 = vector.load %arg5[%c0_12, %c0_13, %c0_14] : memref<18x18x128xf32, #tpu.memory_space<vmem>>, vector<18x1x128xf32>
    tpu.vector_store %arg5[%c0_12, %c0_13, %c0_14], %7 {strides = array<i32>} : memref<18x18x128xf32, #tpu.memory_space<vmem>>, vector<18x1x128xf32>,
    %c0_15 = arith.constant 0 : index
    %c15 = arith.constant 15 : index
    %c0_16 = arith.constant 0 : index
    %9 = vector.load %arg5[%c0_15, %c15, %c0_16] : memref<18x18x128xf32, #tpu.memory_space<vmem>>, vector<18x1x128xf32>
    %c0_17 = arith.constant 0 : index
    %c17_18 = arith.constant 17 : index
    %c0_19 = arith.constant 0 : index
    %10 = vector.load %arg5[%c0_17, %c17_18, %c0_19] : memref<18x18x128xf32, #tpu.memory_space<vmem>>, vector<18x1x128xf32>
    tpu.vector_store %arg5[%c0_17, %c17_18, %c0_19], %9 {strides = array<i32>} : memref<18x18x128xf32, #tpu.memory_space<vmem>>, vector<18x1x128xf32>,
    %c0_20 = arith.constant 0 : index
    %c0_21 = arith.constant 0 : index
    %c0_22 = arith.constant 0 : index
    %11 = vector.load %arg5[%c0_20, %c0_21, %c0_22] : memref<18x18x128xf32, #tpu.memory_space<vmem>>, vector<18x16x128xf32>
    %12 = vector.extract_strided_slice %11 {offsets = [0, 0, 0], sizes = [16, 16, 128], strides = [1, 1, 1]} : vector<18x16x128xf32> to vector<16x16x128xf32>
    %13 = vector.extract_strided_slice %11 {offsets = [1, 0, 0], sizes = [16, 16, 128], strides = [1, 1, 1]} : vector<18x16x128xf32> to vector<16x16x128xf32>
    %14 = vector.extract_strided_slice %11 {offsets = [2, 0, 0], sizes = [16, 16, 128], strides = [1, 1, 1]} : vector<18x16x128xf32> to vector<16x16x128xf32>
    %15 = tpu.concatenate %12, %13, %14 in 2 : vector<16x16x128xf32>, vector<16x16x128xf32>, vector<16x16x128xf32> -> vector<16x16x384xf32>
    %16 = vector.shape_cast %15 : vector<16x16x384xf32> to vector<256x384xf32>
    %c0_23 = arith.constant 0 : index
    %c0_24 = arith.constant 0 : index
    %c0_25 = arith.constant 0 : index
    %17 = vector.load %arg2[%c0_23, %c0_24, %c0_25] : memref<3x384x128xf32, #tpu.memory_space<vmem>>, vector<1x384x128xf32>
    %18 = vector.shape_cast %17 : vector<1x384x128xf32> to vector<384x128xf32>
    %cst = arith.constant dense<0.000000e+00> : vector<256x128xf32>
    %19 = tpu.matmul %16, %18, %cst {dimension_numbers = #tpu.dot_dimension_numbers<[1], [0], [0], [1], [0, 0, 1, 1], [], []>} : vector<256x384xf32>, vector<384x128xf32>, vector<256x128xf32> -> vector<256x128xf32>
    %c0_26 = arith.constant 0 : index
    %c1_27 = arith.constant 1 : index
    %c0_28 = arith.constant 0 : index
    %20 = vector.load %arg5[%c0_26, %c1_27, %c0_28] : memref<18x18x128xf32, #tpu.memory_space<vmem>>, vector<18x16x128xf32>
    %21 = vector.extract_strided_slice %20 {offsets = [0, 0, 0], sizes = [16, 16, 128], strides = [1, 1, 1]} : vector<18x16x128xf32> to vector<16x16x128xf32>
    %22 = vector.extract_strided_slice %20 {offsets = [1, 0, 0], sizes = [16, 16, 128], strides = [1, 1, 1]} : vector<18x16x128xf32> to vector<16x16x128xf32>
    %23 = vector.extract_strided_slice %20 {offsets = [2, 0, 0], sizes = [16, 16, 128], strides = [1, 1, 1]} : vector<18x16x128xf32> to vector<16x16x128xf32>
    %24 = tpu.concatenate %21, %22, %23 in 2 : vector<16x16x128xf32>, vector<16x16x128xf32>, vector<16x16x128xf32> -> vector<16x16x384xf32>
    %25 = vector.shape_cast %24 : vector<16x16x384xf32> to vector<256x384xf32>
    %c1_29 = arith.constant 1 : index
    %c0_30 = arith.constant 0 : index
    %c0_31 = arith.constant 0 : index
    %26 = vector.load %arg2[%c1_29, %c0_30, %c0_31] : memref<3x384x128xf32, #tpu.memory_space<vmem>>, vector<1x384x128xf32>
    %27 = vector.shape_cast %26 : vector<1x384x128xf32> to vector<384x128xf32>
    %cst_32 = arith.constant dense<0.000000e+00> : vector<256x128xf32>
    %28 = tpu.matmul %25, %27, %cst_32 {dimension_numbers = #tpu.dot_dimension_numbers<[1], [0], [0], [1], [0, 0, 1, 1], [], []>} : vector<256x384xf32>, vector<384x128xf32>, vector<256x128xf32> -> vector<256x128xf32>
    %29 = arith.addf %19, %28 : vector<256x128xf32>
    %c0_33 = arith.constant 0 : index
    %c2_34 = arith.constant 2 : index
    %c0_35 = arith.constant 0 : index
    %30 = vector.load %arg5[%c0_33, %c2_34, %c0_35] : memref<18x18x128xf32, #tpu.memory_space<vmem>>, vector<18x16x128xf32>
    %31 = vector.extract_strided_slice %30 {offsets = [0, 0, 0], sizes = [16, 16, 128], strides = [1, 1, 1]} : vector<18x16x128xf32> to vector<16x16x128xf32>
    %32 = vector.extract_strided_slice %30 {offsets = [1, 0, 0], sizes = [16, 16, 128], strides = [1, 1, 1]} : vector<18x16x128xf32> to vector<16x16x128xf32>
    %33 = vector.extract_strided_slice %30 {offsets = [2, 0, 0], sizes = [16, 16, 128], strides = [1, 1, 1]} : vector<18x16x128xf32> to vector<16x16x128xf32>
    %34 = tpu.concatenate %31, %32, %33 in 2 : vector<16x16x128xf32>, vector<16x16x128xf32>, vector<16x16x128xf32> -> vector<16x16x384xf32>
    %35 = vector.shape_cast %34 : vector<16x16x384xf32> to vector<256x384xf32>
    %c2_36 = arith.constant 2 : index
    %c0_37 = arith.constant 0 : index
    %c0_38 = arith.constant 0 : index
    %36 = vector.load %arg2[%c2_36, %c0_37, %c0_38] : memref<3x384x128xf32, #tpu.memory_space<vmem>>, vector<1x384x128xf32>
    %37 = vector.shape_cast %36 : vector<1x384x128xf32> to vector<384x128xf32>
    %cst_39 = arith.constant dense<0.000000e+00> : vector<256x128xf32>
    %38 = tpu.matmul %35, %37, %cst_39 {dimension_numbers = #tpu.dot_dimension_numbers<[1], [0], [0], [1], [0, 0, 1, 1], [], []>} : vector<256x384xf32>, vector<384x128xf32>, vector<256x128xf32> -> vector<256x128xf32>
    %39 = arith.addf %29, %38 : vector<256x128xf32>
    %cst_40 = arith.constant dense<0.000000e+00> : vector<128xf32>
    %40 = vector.multi_reduction <add>, %39, %cst_40 [0] : vector<256x128xf32> to vector<128xf32>
    %41 = vector.shape_cast %40 : vector<128xf32> to vector<1x128xf32>
    %cst_41 = arith.constant 3.906250e-03 : f32
    %42 = vector.broadcast %cst_41 : f32 to vector<1x128xf32>
    %43 = arith.mulf %41, %42 : vector<1x128xf32>
    %44 = vector.broadcast %43 : vector<1x128xf32> to vector<256x128xf32>
    %45 = arith.subf %39, %44 : vector<256x128xf32>
    %46 = arith.mulf %45, %45 : vector<256x128xf32>
    %cst_42 = arith.constant dense<0.000000e+00> : vector<128xf32>
    %47 = vector.multi_reduction <add>, %46, %cst_42 [0] : vector<256x128xf32> to vector<128xf32>
    %48 = vector.shape_cast %47 : vector<128xf32> to vector<1x128xf32>
    %cst_43 = arith.constant 3.906250e-03 : f32
    %49 = vector.broadcast %cst_43 : f32 to vector<1x128xf32>
    %50 = arith.mulf %48, %49 : vector<1x128xf32>
    %cst_44 = arith.constant 9.99999974E-6 : f32
    %51 = vector.broadcast %cst_44 : f32 to vector<1x128xf32>
    %52 = arith.addf %50, %51 : vector<1x128xf32>
    %53 = math.rsqrt %52 : vector<1x128xf32>
    %54 = vector.broadcast %53 : vector<1x128xf32> to vector<256x128xf32>
    %55 = arith.mulf %45, %54 : vector<256x128xf32>
    %cst_45 = arith.constant 0.000000e+00 : f32
    %56 = vector.broadcast %cst_45 : f32 to vector<256x128xf32>
    %57 = arith.maximumf %55, %56 : vector<256x128xf32>
    %58 = vector.shape_cast %57 : vector<256x128xf32> to vector<16x16x128xf32>
    %c1_46 = arith.constant 1 : index
    %c1_47 = arith.constant 1 : index
    %c0_48 = arith.constant 0 : index
    %59 = vector.load %arg6[%c1_46, %c1_47, %c0_48] : memref<18x18x128xf32, #tpu.memory_space<vmem>>, vector<16x16x128xf32>
    tpu.vector_store %arg6[%c1_46, %c1_47, %c0_48], %58 {strides = array<i32>} : memref<18x18x128xf32, #tpu.memory_space<vmem>>, vector<16x16x128xf32>,
    %60 = vector.extract_strided_slice %58 {offsets = [1, 0, 0], sizes = [1, 16, 128], strides = [1, 1, 1]} : vector<16x16x128xf32> to vector<1x16x128xf32>
    %c0_49 = arith.constant 0 : index
    %c1_50 = arith.constant 1 : index
    %c0_51 = arith.constant 0 : index
    %61 = vector.load %arg6[%c0_49, %c1_50, %c0_51] : memref<18x18x128xf32, #tpu.memory_space<vmem>>, vector<1x16x128xf32>
    tpu.vector_store %arg6[%c0_49, %c1_50, %c0_51], %60 {strides = array<i32>} : memref<18x18x128xf32, #tpu.memory_space<vmem>>, vector<1x16x128xf32>,
    %62 = vector.extract_strided_slice %58 {offsets = [14, 0, 0], sizes = [1, 16, 128], strides = [1, 1, 1]} : vector<16x16x128xf32> to vector<1x16x128xf32>
    %c17_52 = arith.constant 17 : index
    %c1_53 = arith.constant 1 : index
    %c0_54 = arith.constant 0 : index
    %63 = vector.load %arg6[%c17_52, %c1_53, %c0_54] : memref<18x18x128xf32, #tpu.memory_space<vmem>>, vector<1x16x128xf32>
    tpu.vector_store %arg6[%c17_52, %c1_53, %c0_54], %62 {strides = array<i32>} : memref<18x18x128xf32, #tpu.memory_space<vmem>>, vector<1x16x128xf32>,
    %c0_55 = arith.constant 0 : index
    %c2_56 = arith.constant 2 : index
    %c0_57 = arith.constant 0 : index
    %64 = vector.load %arg6[%c0_55, %c2_56, %c0_57] : memref<18x18x128xf32, #tpu.memory_space<vmem>>, vector<18x1x128xf32>
    %c0_58 = arith.constant 0 : index
    %c0_59 = arith.constant 0 : index
    %c0_60 = arith.constant 0 : index
    %65 = vector.load %arg6[%c0_58, %c0_59, %c0_60] : memref<18x18x128xf32, #tpu.memory_space<vmem>>, vector<18x1x128xf32>
    tpu.vector_store %arg6[%c0_58, %c0_59, %c0_60], %64 {strides = array<i32>} : memref<18x18x128xf32, #tpu.memory_space<vmem>>, vector<18x1x128xf32>,
    %c0_61 = arith.constant 0 : index
    %c15_62 = arith.constant 15 : index
    %c0_63 = arith.constant 0 : index
    %66 = vector.load %arg6[%c0_61, %c15_62, %c0_63] : memref<18x18x128xf32, #tpu.memory_space<vmem>>, vector<18x1x128xf32>
    %c0_64 = arith.constant 0 : index
    %c17_65 = arith.constant 17 : index
    %c0_66 = arith.constant 0 : index
    %67 = vector.load %arg6[%c0_64, %c17_65, %c0_66] : memref<18x18x128xf32, #tpu.memory_space<vmem>>, vector<18x1x128xf32>
    tpu.vector_store %arg6[%c0_64, %c17_65, %c0_66], %66 {strides = array<i32>} : memref<18x18x128xf32, #tpu.memory_space<vmem>>, vector<18x1x128xf32>,
    %c0_67 = arith.constant 0 : index
    %c0_68 = arith.constant 0 : index
    %c0_69 = arith.constant 0 : index
    %68 = vector.load %arg6[%c0_67, %c0_68, %c0_69] : memref<18x18x128xf32, #tpu.memory_space<vmem>>, vector<18x16x128xf32>
    %69 = vector.extract_strided_slice %68 {offsets = [0, 0, 0], sizes = [16, 16, 128], strides = [1, 1, 1]} : vector<18x16x128xf32> to vector<16x16x128xf32>
    %70 = vector.extract_strided_slice %68 {offsets = [1, 0, 0], sizes = [16, 16, 128], strides = [1, 1, 1]} : vector<18x16x128xf32> to vector<16x16x128xf32>
    %71 = vector.extract_strided_slice %68 {offsets = [2, 0, 0], sizes = [16, 16, 128], strides = [1, 1, 1]} : vector<18x16x128xf32> to vector<16x16x128xf32>
    %72 = tpu.concatenate %69, %70, %71 in 2 : vector<16x16x128xf32>, vector<16x16x128xf32>, vector<16x16x128xf32> -> vector<16x16x384xf32>
    %73 = vector.shape_cast %72 : vector<16x16x384xf32> to vector<256x384xf32>
    %c0_70 = arith.constant 0 : index
    %c0_71 = arith.constant 0 : index
    %c0_72 = arith.constant 0 : index
    %74 = vector.load %arg3[%c0_70, %c0_71, %c0_72] : memref<3x384x128xf32, #tpu.memory_space<vmem>>, vector<1x384x128xf32>
    %75 = vector.shape_cast %74 : vector<1x384x128xf32> to vector<384x128xf32>
    %cst_73 = arith.constant dense<0.000000e+00> : vector<256x128xf32>
    %76 = tpu.matmul %73, %75, %cst_73 {dimension_numbers = #tpu.dot_dimension_numbers<[1], [0], [0], [1], [0, 0, 1, 1], [], []>} : vector<256x384xf32>, vector<384x128xf32>, vector<256x128xf32> -> vector<256x128xf32>
    %c0_74 = arith.constant 0 : index
    %c1_75 = arith.constant 1 : index
    %c0_76 = arith.constant 0 : index
    %77 = vector.load %arg6[%c0_74, %c1_75, %c0_76] : memref<18x18x128xf32, #tpu.memory_space<vmem>>, vector<18x16x128xf32>
    %78 = vector.extract_strided_slice %77 {offsets = [0, 0, 0], sizes = [16, 16, 128], strides = [1, 1, 1]} : vector<18x16x128xf32> to vector<16x16x128xf32>
    %79 = vector.extract_strided_slice %77 {offsets = [1, 0, 0], sizes = [16, 16, 128], strides = [1, 1, 1]} : vector<18x16x128xf32> to vector<16x16x128xf32>
    %80 = vector.extract_strided_slice %77 {offsets = [2, 0, 0], sizes = [16, 16, 128], strides = [1, 1, 1]} : vector<18x16x128xf32> to vector<16x16x128xf32>
    %81 = tpu.concatenate %78, %79, %80 in 2 : vector<16x16x128xf32>, vector<16x16x128xf32>, vector<16x16x128xf32> -> vector<16x16x384xf32>
    %82 = vector.shape_cast %81 : vector<16x16x384xf32> to vector<256x384xf32>
    %c1_77 = arith.constant 1 : index
    %c0_78 = arith.constant 0 : index
    %c0_79 = arith.constant 0 : index
    %83 = vector.load %arg3[%c1_77, %c0_78, %c0_79] : memref<3x384x128xf32, #tpu.memory_space<vmem>>, vector<1x384x128xf32>
    %84 = vector.shape_cast %83 : vector<1x384x128xf32> to vector<384x128xf32>
    %cst_80 = arith.constant dense<0.000000e+00> : vector<256x128xf32>
    %85 = tpu.matmul %82, %84, %cst_80 {dimension_numbers = #tpu.dot_dimension_numbers<[1], [0], [0], [1], [0, 0, 1, 1], [], []>} : vector<256x384xf32>, vector<384x128xf32>, vector<256x128xf32> -> vector<256x128xf32>
    %86 = arith.addf %76, %85 : vector<256x128xf32>
    %c0_81 = arith.constant 0 : index
    %c2_82 = arith.constant 2 : index
    %c0_83 = arith.constant 0 : index
    %87 = vector.load %arg6[%c0_81, %c2_82, %c0_83] : memref<18x18x128xf32, #tpu.memory_space<vmem>>, vector<18x16x128xf32>
    %88 = vector.extract_strided_slice %87 {offsets = [0, 0, 0], sizes = [16, 16, 128], strides = [1, 1, 1]} : vector<18x16x128xf32> to vector<16x16x128xf32>
    %89 = vector.extract_strided_slice %87 {offsets = [1, 0, 0], sizes = [16, 16, 128], strides = [1, 1, 1]} : vector<18x16x128xf32> to vector<16x16x128xf32>
    %90 = vector.extract_strided_slice %87 {offsets = [2, 0, 0], sizes = [16, 16, 128], strides = [1, 1, 1]} : vector<18x16x128xf32> to vector<16x16x128xf32>
    %91 = tpu.concatenate %88, %89, %90 in 2 : vector<16x16x128xf32>, vector<16x16x128xf32>, vector<16x16x128xf32> -> vector<16x16x384xf32>
    %92 = vector.shape_cast %91 : vector<16x16x384xf32> to vector<256x384xf32>
    %c2_84 = arith.constant 2 : index
    %c0_85 = arith.constant 0 : index
    %c0_86 = arith.constant 0 : index
    %93 = vector.load %arg3[%c2_84, %c0_85, %c0_86] : memref<3x384x128xf32, #tpu.memory_space<vmem>>, vector<1x384x128xf32>
    %94 = vector.shape_cast %93 : vector<1x384x128xf32> to vector<384x128xf32>
    %cst_87 = arith.constant dense<0.000000e+00> : vector<256x128xf32>
    %95 = tpu.matmul %92, %94, %cst_87 {dimension_numbers = #tpu.dot_dimension_numbers<[1], [0], [0], [1], [0, 0, 1, 1], [], []>} : vector<256x384xf32>, vector<384x128xf32>, vector<256x128xf32> -> vector<256x128xf32>
    %96 = arith.addf %86, %95 : vector<256x128xf32>
    %cst_88 = arith.constant dense<0.000000e+00> : vector<128xf32>
    %97 = vector.multi_reduction <add>, %96, %cst_88 [0] : vector<256x128xf32> to vector<128xf32>
    %98 = vector.shape_cast %97 : vector<128xf32> to vector<1x128xf32>
    %cst_89 = arith.constant 3.906250e-03 : f32
    %99 = vector.broadcast %cst_89 : f32 to vector<1x128xf32>
    %100 = arith.mulf %98, %99 : vector<1x128xf32>
    %101 = vector.broadcast %100 : vector<1x128xf32> to vector<256x128xf32>
    %102 = arith.subf %96, %101 : vector<256x128xf32>
    %103 = arith.mulf %102, %102 : vector<256x128xf32>
    %cst_90 = arith.constant dense<0.000000e+00> : vector<128xf32>
    %104 = vector.multi_reduction <add>, %103, %cst_90 [0] : vector<256x128xf32> to vector<128xf32>
    %105 = vector.shape_cast %104 : vector<128xf32> to vector<1x128xf32>
    %cst_91 = arith.constant 3.906250e-03 : f32
    %106 = vector.broadcast %cst_91 : f32 to vector<1x128xf32>
    %107 = arith.mulf %105, %106 : vector<1x128xf32>
    %cst_92 = arith.constant 9.99999974E-6 : f32
    %108 = vector.broadcast %cst_92 : f32 to vector<1x128xf32>
    %109 = arith.addf %107, %108 : vector<1x128xf32>
    %110 = math.rsqrt %109 : vector<1x128xf32>
    %111 = vector.broadcast %110 : vector<1x128xf32> to vector<256x128xf32>
    %112 = arith.mulf %102, %111 : vector<256x128xf32>
    %c0_93 = arith.constant 0 : index
    %c0_94 = arith.constant 0 : index
    %c0_95 = arith.constant 0 : index
    %c0_96 = arith.constant 0 : index
    %113 = vector.load %arg1[%c0_93, %c0_94, %c0_95, %c0_96] : memref<2x16x16x128xf32, #tpu.memory_space<vmem>>, vector<1x16x16x128xf32>
    %114 = vector.shape_cast %113 : vector<1x16x16x128xf32> to vector<16x16x128xf32>
    %115 = vector.shape_cast %114 : vector<16x16x128xf32> to vector<256x128xf32>
    %116 = arith.addf %115, %112 : vector<256x128xf32>
    %c0_97 = arith.constant 0 : index
    %c0_98 = arith.constant 0 : index
    %c0_99 = arith.constant 0 : index
    %117 = vector.load %arg4[%c0_97, %c0_98, %c0_99] : memref<2x256x128xf32, #tpu.memory_space<vmem>>, vector<1x256x128xf32>
    %118 = vector.shape_cast %117 : vector<1x256x128xf32> to vector<256x128xf32>
    %119 = vector.shape_cast %116 : vector<256x128xf32> to vector<1x256x128xf32>
    tpu.vector_store %arg4[%c0_97, %c0_98, %c0_99], %119 {strides = array<i32>} : memref<2x256x128xf32, #tpu.memory_space<vmem>>, vector<1x256x128xf32>,
    %c1_100 = arith.constant 1 : index
    %c0_101 = arith.constant 0 : index
    %c0_102 = arith.constant 0 : index
    %c0_103 = arith.constant 0 : index
    %120 = vector.load %arg1[%c1_100, %c0_101, %c0_102, %c0_103] : memref<2x16x16x128xf32, #tpu.memory_space<vmem>>, vector<1x16x16x128xf32>
    %121 = vector.shape_cast %120 : vector<1x16x16x128xf32> to vector<16x16x128xf32>
    %c1_104 = arith.constant 1 : index
    %c1_105 = arith.constant 1 : index
    %c0_106 = arith.constant 0 : index
    %122 = vector.load %arg5[%c1_104, %c1_105, %c0_106] : memref<18x18x128xf32, #tpu.memory_space<vmem>>, vector<16x16x128xf32>
    tpu.vector_store %arg5[%c1_104, %c1_105, %c0_106], %121 {strides = array<i32>} : memref<18x18x128xf32, #tpu.memory_space<vmem>>, vector<16x16x128xf32>,
    %123 = vector.extract_strided_slice %121 {offsets = [1, 0, 0], sizes = [1, 16, 128], strides = [1, 1, 1]} : vector<16x16x128xf32> to vector<1x16x128xf32>
    %c0_107 = arith.constant 0 : index
    %c1_108 = arith.constant 1 : index
    %c0_109 = arith.constant 0 : index
    %124 = vector.load %arg5[%c0_107, %c1_108, %c0_109] : memref<18x18x128xf32, #tpu.memory_space<vmem>>, vector<1x16x128xf32>
    tpu.vector_store %arg5[%c0_107, %c1_108, %c0_109], %123 {strides = array<i32>} : memref<18x18x128xf32, #tpu.memory_space<vmem>>, vector<1x16x128xf32>,
    %125 = vector.extract_strided_slice %121 {offsets = [14, 0, 0], sizes = [1, 16, 128], strides = [1, 1, 1]} : vector<16x16x128xf32> to vector<1x16x128xf32>
    %c17_110 = arith.constant 17 : index
    %c1_111 = arith.constant 1 : index
    %c0_112 = arith.constant 0 : index
    %126 = vector.load %arg5[%c17_110, %c1_111, %c0_112] : memref<18x18x128xf32, #tpu.memory_space<vmem>>, vector<1x16x128xf32>
    tpu.vector_store %arg5[%c17_110, %c1_111, %c0_112], %125 {strides = array<i32>} : memref<18x18x128xf32, #tpu.memory_space<vmem>>, vector<1x16x128xf32>,
    %c0_113 = arith.constant 0 : index
    %c2_114 = arith.constant 2 : index
    %c0_115 = arith.constant 0 : index
    %127 = vector.load %arg5[%c0_113, %c2_114, %c0_115] : memref<18x18x128xf32, #tpu.memory_space<vmem>>, vector<18x1x128xf32>
    %c0_116 = arith.constant 0 : index
    %c0_117 = arith.constant 0 : index
    %c0_118 = arith.constant 0 : index
    %128 = vector.load %arg5[%c0_116, %c0_117, %c0_118] : memref<18x18x128xf32, #tpu.memory_space<vmem>>, vector<18x1x128xf32>
    tpu.vector_store %arg5[%c0_116, %c0_117, %c0_118], %127 {strides = array<i32>} : memref<18x18x128xf32, #tpu.memory_space<vmem>>, vector<18x1x128xf32>,
    %c0_119 = arith.constant 0 : index
    %c15_120 = arith.constant 15 : index
    %c0_121 = arith.constant 0 : index
    %129 = vector.load %arg5[%c0_119, %c15_120, %c0_121] : memref<18x18x128xf32, #tpu.memory_space<vmem>>, vector<18x1x128xf32>
    %c0_122 = arith.constant 0 : index
    %c17_123 = arith.constant 17 : index
    %c0_124 = arith.constant 0 : index
    %130 = vector.load %arg5[%c0_122, %c17_123, %c0_124] : memref<18x18x128xf32, #tpu.memory_space<vmem>>, vector<18x1x128xf32>
    tpu.vector_store %arg5[%c0_122, %c17_123, %c0_124], %129 {strides = array<i32>} : memref<18x18x128xf32, #tpu.memory_space<vmem>>, vector<18x1x128xf32>,
    %c0_125 = arith.constant 0 : index
    %c0_126 = arith.constant 0 : index
    %c0_127 = arith.constant 0 : index
    %131 = vector.load %arg5[%c0_125, %c0_126, %c0_127] : memref<18x18x128xf32, #tpu.memory_space<vmem>>, vector<18x16x128xf32>
    %132 = vector.extract_strided_slice %131 {offsets = [0, 0, 0], sizes = [16, 16, 128], strides = [1, 1, 1]} : vector<18x16x128xf32> to vector<16x16x128xf32>
    %133 = vector.extract_strided_slice %131 {offsets = [1, 0, 0], sizes = [16, 16, 128], strides = [1, 1, 1]} : vector<18x16x128xf32> to vector<16x16x128xf32>
    %134 = vector.extract_strided_slice %131 {offsets = [2, 0, 0], sizes = [16, 16, 128], strides = [1, 1, 1]} : vector<18x16x128xf32> to vector<16x16x128xf32>
    %135 = tpu.concatenate %132, %133, %134 in 2 : vector<16x16x128xf32>, vector<16x16x128xf32>, vector<16x16x128xf32> -> vector<16x16x384xf32>
    %136 = vector.shape_cast %135 : vector<16x16x384xf32> to vector<256x384xf32>
    %c0_128 = arith.constant 0 : index
    %c0_129 = arith.constant 0 : index
    %c0_130 = arith.constant 0 : index
    %137 = vector.load %arg2[%c0_128, %c0_129, %c0_130] : memref<3x384x128xf32, #tpu.memory_space<vmem>>, vector<1x384x128xf32>
    %138 = vector.shape_cast %137 : vector<1x384x128xf32> to vector<384x128xf32>
    %cst_131 = arith.constant dense<0.000000e+00> : vector<256x128xf32>
    %139 = tpu.matmul %136, %138, %cst_131 {dimension_numbers = #tpu.dot_dimension_numbers<[1], [0], [0], [1], [0, 0, 1, 1], [], []>} : vector<256x384xf32>, vector<384x128xf32>, vector<256x128xf32> -> vector<256x128xf32>
    %c0_132 = arith.constant 0 : index
    %c1_133 = arith.constant 1 : index
    %c0_134 = arith.constant 0 : index
    %140 = vector.load %arg5[%c0_132, %c1_133, %c0_134] : memref<18x18x128xf32, #tpu.memory_space<vmem>>, vector<18x16x128xf32>
    %141 = vector.extract_strided_slice %140 {offsets = [0, 0, 0], sizes = [16, 16, 128], strides = [1, 1, 1]} : vector<18x16x128xf32> to vector<16x16x128xf32>
    %142 = vector.extract_strided_slice %140 {offsets = [1, 0, 0], sizes = [16, 16, 128], strides = [1, 1, 1]} : vector<18x16x128xf32> to vector<16x16x128xf32>
    %143 = vector.extract_strided_slice %140 {offsets = [2, 0, 0], sizes = [16, 16, 128], strides = [1, 1, 1]} : vector<18x16x128xf32> to vector<16x16x128xf32>
    %144 = tpu.concatenate %141, %142, %143 in 2 : vector<16x16x128xf32>, vector<16x16x128xf32>, vector<16x16x128xf32> -> vector<16x16x384xf32>
    %145 = vector.shape_cast %144 : vector<16x16x384xf32> to vector<256x384xf32>
    %c1_135 = arith.constant 1 : index
    %c0_136 = arith.constant 0 : index
    %c0_137 = arith.constant 0 : index
    %146 = vector.load %arg2[%c1_135, %c0_136, %c0_137] : memref<3x384x128xf32, #tpu.memory_space<vmem>>, vector<1x384x128xf32>
    %147 = vector.shape_cast %146 : vector<1x384x128xf32> to vector<384x128xf32>
    %cst_138 = arith.constant dense<0.000000e+00> : vector<256x128xf32>
    %148 = tpu.matmul %145, %147, %cst_138 {dimension_numbers = #tpu.dot_dimension_numbers<[1], [0], [0], [1], [0, 0, 1, 1], [], []>} : vector<256x384xf32>, vector<384x128xf32>, vector<256x128xf32> -> vector<256x128xf32>
    %149 = arith.addf %139, %148 : vector<256x128xf32>
    %c0_139 = arith.constant 0 : index
    %c2_140 = arith.constant 2 : index
    %c0_141 = arith.constant 0 : index
    %150 = vector.load %arg5[%c0_139, %c2_140, %c0_141] : memref<18x18x128xf32, #tpu.memory_space<vmem>>, vector<18x16x128xf32>
    %151 = vector.extract_strided_slice %150 {offsets = [0, 0, 0], sizes = [16, 16, 128], strides = [1, 1, 1]} : vector<18x16x128xf32> to vector<16x16x128xf32>
    %152 = vector.extract_strided_slice %150 {offsets = [1, 0, 0], sizes = [16, 16, 128], strides = [1, 1, 1]} : vector<18x16x128xf32> to vector<16x16x128xf32>
    %153 = vector.extract_strided_slice %150 {offsets = [2, 0, 0], sizes = [16, 16, 128], strides = [1, 1, 1]} : vector<18x16x128xf32> to vector<16x16x128xf32>
    %154 = tpu.concatenate %151, %152, %153 in 2 : vector<16x16x128xf32>, vector<16x16x128xf32>, vector<16x16x128xf32> -> vector<16x16x384xf32>
    %155 = vector.shape_cast %154 : vector<16x16x384xf32> to vector<256x384xf32>
    %c2_142 = arith.constant 2 : index
    %c0_143 = arith.constant 0 : index
    %c0_144 = arith.constant 0 : index
    %156 = vector.load %arg2[%c2_142, %c0_143, %c0_144] : memref<3x384x128xf32, #tpu.memory_space<vmem>>, vector<1x384x128xf32>
    %157 = vector.shape_cast %156 : vector<1x384x128xf32> to vector<384x128xf32>
    %cst_145 = arith.constant dense<0.000000e+00> : vector<256x128xf32>
    %158 = tpu.matmul %155, %157, %cst_145 {dimension_numbers = #tpu.dot_dimension_numbers<[1], [0], [0], [1], [0, 0, 1, 1], [], []>} : vector<256x384xf32>, vector<384x128xf32>, vector<256x128xf32> -> vector<256x128xf32>
    %159 = arith.addf %149, %158 : vector<256x128xf32>
    %cst_146 = arith.constant dense<0.000000e+00> : vector<128xf32>
    %160 = vector.multi_reduction <add>, %159, %cst_146 [0] : vector<256x128xf32> to vector<128xf32>
    %161 = vector.shape_cast %160 : vector<128xf32> to vector<1x128xf32>
    %cst_147 = arith.constant 3.906250e-03 : f32
    %162 = vector.broadcast %cst_147 : f32 to vector<1x128xf32>
    %163 = arith.mulf %161, %162 : vector<1x128xf32>
    %164 = vector.broadcast %163 : vector<1x128xf32> to vector<256x128xf32>
    %165 = arith.subf %159, %164 : vector<256x128xf32>
    %166 = arith.mulf %165, %165 : vector<256x128xf32>
    %cst_148 = arith.constant dense<0.000000e+00> : vector<128xf32>
    %167 = vector.multi_reduction <add>, %166, %cst_148 [0] : vector<256x128xf32> to vector<128xf32>
    %168 = vector.shape_cast %167 : vector<128xf32> to vector<1x128xf32>
    %cst_149 = arith.constant 3.906250e-03 : f32
    %169 = vector.broadcast %cst_149 : f32 to vector<1x128xf32>
    %170 = arith.mulf %168, %169 : vector<1x128xf32>
    %cst_150 = arith.constant 9.99999974E-6 : f32
    %171 = vector.broadcast %cst_150 : f32 to vector<1x128xf32>
    %172 = arith.addf %170, %171 : vector<1x128xf32>
    %173 = math.rsqrt %172 : vector<1x128xf32>
    %174 = vector.broadcast %173 : vector<1x128xf32> to vector<256x128xf32>
    %175 = arith.mulf %165, %174 : vector<256x128xf32>
    %cst_151 = arith.constant 0.000000e+00 : f32
    %176 = vector.broadcast %cst_151 : f32 to vector<256x128xf32>
    %177 = arith.maximumf %175, %176 : vector<256x128xf32>
    %178 = vector.shape_cast %177 : vector<256x128xf32> to vector<16x16x128xf32>
    %c1_152 = arith.constant 1 : index
    %c1_153 = arith.constant 1 : index
    %c0_154 = arith.constant 0 : index
    %179 = vector.load %arg6[%c1_152, %c1_153, %c0_154] : memref<18x18x128xf32, #tpu.memory_space<vmem>>, vector<16x16x128xf32>
    tpu.vector_store %arg6[%c1_152, %c1_153, %c0_154], %178 {strides = array<i32>} : memref<18x18x128xf32, #tpu.memory_space<vmem>>, vector<16x16x128xf32>,
    %180 = vector.extract_strided_slice %178 {offsets = [1, 0, 0], sizes = [1, 16, 128], strides = [1, 1, 1]} : vector<16x16x128xf32> to vector<1x16x128xf32>
    %c0_155 = arith.constant 0 : index
    %c1_156 = arith.constant 1 : index
    %c0_157 = arith.constant 0 : index
    %181 = vector.load %arg6[%c0_155, %c1_156, %c0_157] : memref<18x18x128xf32, #tpu.memory_space<vmem>>, vector<1x16x128xf32>
    tpu.vector_store %arg6[%c0_155, %c1_156, %c0_157], %180 {strides = array<i32>} : memref<18x18x128xf32, #tpu.memory_space<vmem>>, vector<1x16x128xf32>,
    %182 = vector.extract_strided_slice %178 {offsets = [14, 0, 0], sizes = [1, 16, 128], strides = [1, 1, 1]} : vector<16x16x128xf32> to vector<1x16x128xf32>
    %c17_158 = arith.constant 17 : index
    %c1_159 = arith.constant 1 : index
    %c0_160 = arith.constant 0 : index
    %183 = vector.load %arg6[%c17_158, %c1_159, %c0_160] : memref<18x18x128xf32, #tpu.memory_space<vmem>>, vector<1x16x128xf32>
    tpu.vector_store %arg6[%c17_158, %c1_159, %c0_160], %182 {strides = array<i32>} : memref<18x18x128xf32, #tpu.memory_space<vmem>>, vector<1x16x128xf32>,
    %c0_161 = arith.constant 0 : index
    %c2_162 = arith.constant 2 : index
    %c0_163 = arith.constant 0 : index
    %184 = vector.load %arg6[%c0_161, %c2_162, %c0_163] : memref<18x18x128xf32, #tpu.memory_space<vmem>>, vector<18x1x128xf32>
    %c0_164 = arith.constant 0 : index
    %c0_165 = arith.constant 0 : index
    %c0_166 = arith.constant 0 : index
    %185 = vector.load %arg6[%c0_164, %c0_165, %c0_166] : memref<18x18x128xf32, #tpu.memory_space<vmem>>, vector<18x1x128xf32>
    tpu.vector_store %arg6[%c0_164, %c0_165, %c0_166], %184 {strides = array<i32>} : memref<18x18x128xf32, #tpu.memory_space<vmem>>, vector<18x1x128xf32>,
    %c0_167 = arith.constant 0 : index
    %c15_168 = arith.constant 15 : index
    %c0_169 = arith.constant 0 : index
    %186 = vector.load %arg6[%c0_167, %c15_168, %c0_169] : memref<18x18x128xf32, #tpu.memory_space<vmem>>, vector<18x1x128xf32>
    %c0_170 = arith.constant 0 : index
    %c17_171 = arith.constant 17 : index
    %c0_172 = arith.constant 0 : index
    %187 = vector.load %arg6[%c0_170, %c17_171, %c0_172] : memref<18x18x128xf32, #tpu.memory_space<vmem>>, vector<18x1x128xf32>
    tpu.vector_store %arg6[%c0_170, %c17_171, %c0_172], %186 {strides = array<i32>} : memref<18x18x128xf32, #tpu.memory_space<vmem>>, vector<18x1x128xf32>,
    %c0_173 = arith.constant 0 : index
    %c0_174 = arith.constant 0 : index
    %c0_175 = arith.constant 0 : index
    %188 = vector.load %arg6[%c0_173, %c0_174, %c0_175] : memref<18x18x128xf32, #tpu.memory_space<vmem>>, vector<18x16x128xf32>
    %189 = vector.extract_strided_slice %188 {offsets = [0, 0, 0], sizes = [16, 16, 128], strides = [1, 1, 1]} : vector<18x16x128xf32> to vector<16x16x128xf32>
    %190 = vector.extract_strided_slice %188 {offsets = [1, 0, 0], sizes = [16, 16, 128], strides = [1, 1, 1]} : vector<18x16x128xf32> to vector<16x16x128xf32>
    %191 = vector.extract_strided_slice %188 {offsets = [2, 0, 0], sizes = [16, 16, 128], strides = [1, 1, 1]} : vector<18x16x128xf32> to vector<16x16x128xf32>
    %192 = tpu.concatenate %189, %190, %191 in 2 : vector<16x16x128xf32>, vector<16x16x128xf32>, vector<16x16x128xf32> -> vector<16x16x384xf32>
    %193 = vector.shape_cast %192 : vector<16x16x384xf32> to vector<256x384xf32>
    %c0_176 = arith.constant 0 : index
    %c0_177 = arith.constant 0 : index
    %c0_178 = arith.constant 0 : index
    %194 = vector.load %arg3[%c0_176, %c0_177, %c0_178] : memref<3x384x128xf32, #tpu.memory_space<vmem>>, vector<1x384x128xf32>
    %195 = vector.shape_cast %194 : vector<1x384x128xf32> to vector<384x128xf32>
    %cst_179 = arith.constant dense<0.000000e+00> : vector<256x128xf32>
    %196 = tpu.matmul %193, %195, %cst_179 {dimension_numbers = #tpu.dot_dimension_numbers<[1], [0], [0], [1], [0, 0, 1, 1], [], []>} : vector<256x384xf32>, vector<384x128xf32>, vector<256x128xf32> -> vector<256x128xf32>
    %c0_180 = arith.constant 0 : index
    %c1_181 = arith.constant 1 : index
    %c0_182 = arith.constant 0 : index
    %197 = vector.load %arg6[%c0_180, %c1_181, %c0_182] : memref<18x18x128xf32, #tpu.memory_space<vmem>>, vector<18x16x128xf32>
    %198 = vector.extract_strided_slice %197 {offsets = [0, 0, 0], sizes = [16, 16, 128], strides = [1, 1, 1]} : vector<18x16x128xf32> to vector<16x16x128xf32>
    %199 = vector.extract_strided_slice %197 {offsets = [1, 0, 0], sizes = [16, 16, 128], strides = [1, 1, 1]} : vector<18x16x128xf32> to vector<16x16x128xf32>
    %200 = vector.extract_strided_slice %197 {offsets = [2, 0, 0], sizes = [16, 16, 128], strides = [1, 1, 1]} : vector<18x16x128xf32> to vector<16x16x128xf32>
    %201 = tpu.concatenate %198, %199, %200 in 2 : vector<16x16x128xf32>, vector<16x16x128xf32>, vector<16x16x128xf32> -> vector<16x16x384xf32>
    %202 = vector.shape_cast %201 : vector<16x16x384xf32> to vector<256x384xf32>
    %c1_183 = arith.constant 1 : index
    %c0_184 = arith.constant 0 : index
    %c0_185 = arith.constant 0 : index
    %203 = vector.load %arg3[%c1_183, %c0_184, %c0_185] : memref<3x384x128xf32, #tpu.memory_space<vmem>>, vector<1x384x128xf32>
    %204 = vector.shape_cast %203 : vector<1x384x128xf32> to vector<384x128xf32>
    %cst_186 = arith.constant dense<0.000000e+00> : vector<256x128xf32>
    %205 = tpu.matmul %202, %204, %cst_186 {dimension_numbers = #tpu.dot_dimension_numbers<[1], [0], [0], [1], [0, 0, 1, 1], [], []>} : vector<256x384xf32>, vector<384x128xf32>, vector<256x128xf32> -> vector<256x128xf32>
    %206 = arith.addf %196, %205 : vector<256x128xf32>
    %c0_187 = arith.constant 0 : index
    %c2_188 = arith.constant 2 : index
    %c0_189 = arith.constant 0 : index
    %207 = vector.load %arg6[%c0_187, %c2_188, %c0_189] : memref<18x18x128xf32, #tpu.memory_space<vmem>>, vector<18x16x128xf32>
    %208 = vector.extract_strided_slice %207 {offsets = [0, 0, 0], sizes = [16, 16, 128], strides = [1, 1, 1]} : vector<18x16x128xf32> to vector<16x16x128xf32>
    %209 = vector.extract_strided_slice %207 {offsets = [1, 0, 0], sizes = [16, 16, 128], strides = [1, 1, 1]} : vector<18x16x128xf32> to vector<16x16x128xf32>
    %210 = vector.extract_strided_slice %207 {offsets = [2, 0, 0], sizes = [16, 16, 128], strides = [1, 1, 1]} : vector<18x16x128xf32> to vector<16x16x128xf32>
    %211 = tpu.concatenate %208, %209, %210 in 2 : vector<16x16x128xf32>, vector<16x16x128xf32>, vector<16x16x128xf32> -> vector<16x16x384xf32>
    %212 = vector.shape_cast %211 : vector<16x16x384xf32> to vector<256x384xf32>
    %c2_190 = arith.constant 2 : index
    %c0_191 = arith.constant 0 : index
    %c0_192 = arith.constant 0 : index
    %213 = vector.load %arg3[%c2_190, %c0_191, %c0_192] : memref<3x384x128xf32, #tpu.memory_space<vmem>>, vector<1x384x128xf32>
    %214 = vector.shape_cast %213 : vector<1x384x128xf32> to vector<384x128xf32>
    %cst_193 = arith.constant dense<0.000000e+00> : vector<256x128xf32>
    %215 = tpu.matmul %212, %214, %cst_193 {dimension_numbers = #tpu.dot_dimension_numbers<[1], [0], [0], [1], [0, 0, 1, 1], [], []>} : vector<256x384xf32>, vector<384x128xf32>, vector<256x128xf32> -> vector<256x128xf32>
    %216 = arith.addf %206, %215 : vector<256x128xf32>
    %cst_194 = arith.constant dense<0.000000e+00> : vector<128xf32>
    %217 = vector.multi_reduction <add>, %216, %cst_194 [0] : vector<256x128xf32> to vector<128xf32>
    %218 = vector.shape_cast %217 : vector<128xf32> to vector<1x128xf32>
    %cst_195 = arith.constant 3.906250e-03 : f32
    %219 = vector.broadcast %cst_195 : f32 to vector<1x128xf32>
    %220 = arith.mulf %218, %219 : vector<1x128xf32>
    %221 = vector.broadcast %220 : vector<1x128xf32> to vector<256x128xf32>
    %222 = arith.subf %216, %221 : vector<256x128xf32>
    %223 = arith.mulf %222, %222 : vector<256x128xf32>
    %cst_196 = arith.constant dense<0.000000e+00> : vector<128xf32>
    %224 = vector.multi_reduction <add>, %223, %cst_196 [0] : vector<256x128xf32> to vector<128xf32>
    %225 = vector.shape_cast %224 : vector<128xf32> to vector<1x128xf32>
    %cst_197 = arith.constant 3.906250e-03 : f32
    %226 = vector.broadcast %cst_197 : f32 to vector<1x128xf32>
    %227 = arith.mulf %225, %226 : vector<1x128xf32>
    %cst_198 = arith.constant 9.99999974E-6 : f32
    %228 = vector.broadcast %cst_198 : f32 to vector<1x128xf32>
    %229 = arith.addf %227, %228 : vector<1x128xf32>
    %230 = math.rsqrt %229 : vector<1x128xf32>
    %231 = vector.broadcast %230 : vector<1x128xf32> to vector<256x128xf32>
    %232 = arith.mulf %222, %231 : vector<256x128xf32>
    %c1_199 = arith.constant 1 : index
    %c0_200 = arith.constant 0 : index
    %c0_201 = arith.constant 0 : index
    %c0_202 = arith.constant 0 : index
    %233 = vector.load %arg1[%c1_199, %c0_200, %c0_201, %c0_202] : memref<2x16x16x128xf32, #tpu.memory_space<vmem>>, vector<1x16x16x128xf32>
    %234 = vector.shape_cast %233 : vector<1x16x16x128xf32> to vector<16x16x128xf32>
    %235 = vector.shape_cast %234 : vector<16x16x128xf32> to vector<256x128xf32>
    %236 = arith.addf %235, %232 : vector<256x128xf32>
    %c1_203 = arith.constant 1 : index
    %c0_204 = arith.constant 0 : index
    %c0_205 = arith.constant 0 : index
    %237 = vector.load %arg4[%c1_203, %c0_204, %c0_205] : memref<2x256x128xf32, #tpu.memory_space<vmem>>, vector<1x256x128xf32>
    %238 = vector.shape_cast %237 : vector<1x256x128xf32> to vector<256x128xf32>
    %239 = vector.shape_cast %236 : vector<256x128xf32> to vector<1x256x128xf32>
    tpu.vector_store %arg4[%c1_203, %c0_204, %c0_205], %239 {strides = array<i32>} : memref<2x256x128xf32, #tpu.memory_space<vmem>>, vector<1x256x128xf32>,
    return
  }
  func.func @transform_0(%arg0: i32) -> (i32, i32, i32, i32) {
    %c0_i32 = arith.constant 0 : i32
    %c0_i32_0 = arith.constant 0 : i32
    %c0_i32_1 = arith.constant 0 : i32
    %c0_i32_2 = arith.constant 0 : i32
    return %arg0, %c0_i32, %c0_i32_0, %c0_i32_1 : i32, i32, i32, i32
  }
  func.func @transform_1(%arg0: i32) -> (i32, i32, i32) {
    %c0_i32 = arith.constant 0 : i32
    %c0_i32_0 = arith.constant 0 : i32
    %c0_i32_1 = arith.constant 0 : i32
    %c0_i32_2 = arith.constant 0 : i32
    return %c0_i32, %c0_i32_0, %c0_i32_1 : i32, i32, i32
  }
  func.func @transform_2(%arg0: i32) -> (i32, i32, i32) {
    %c0_i32 = arith.constant 0 : i32
    %c0_i32_0 = arith.constant 0 : i32
    %c0_i32_1 = arith.constant 0 : i32
    %c0_i32_2 = arith.constant 0 : i32
    return %c0_i32, %c0_i32_0, %c0_i32_1 : i32, i32, i32
  }
  func.func @transform_3(%arg0: i32) -> (i32, i32, i32) {
    %c0_i32 = arith.constant 0 : i32
    %c0_i32_0 = arith.constant 0 : i32
    %c0_i32_1 = arith.constant 0 : i32
    return %arg0, %c0_i32, %c0_i32_0 : i32, i32, i32
  }
}

</mosaic_0001>

<llo_original>
// kernel: resnet_block.1
$region0: #{resnet_block.1}
  #allocation0 [shape = 'u32[]', space=smem, size = 0x4, offset = 0x4, fixed_abs, tag = 'smem constant byte address 0x4 - core index']
  #allocation1 [shape = 'u32[144,128]{1,0:T(1,128)}', space=vmem, size = 0x12000, scoped, tag = 'internal scratch']
  #allocation2 [shape = 'f32[18,18,128]{2,1,0:T(8,128)}', space=vmem, size = 0x36000, scoped, tag = 'scratch operand']
  #allocation3 [shape = 'f32[18,18,128]{2,1,0:T(8,128)}', space=vmem, size = 0x36000, scoped, tag = 'scratch operand']
  %s0 = inlined_call_operand.vmem [shape: f32[2,16,16,128], index: 0, kind: input, shape index: {}]
  %s1 = inlined_call_operand.vmem [shape: f32[3,384,128], index: 1, kind: input, shape index: {}]
  %s2 = inlined_call_operand.vmem [shape: f32[3,384,128], index: 2, kind: input, shape index: {}]
  %s3 = inlined_call_operand.hbm [shape: f32[2,256,128], index: 3, kind: output, shape index: {}]
  %s4 = sld [smem:[#allocation0]]
  $region22: #{resnet_block.1} parent=0
    _
  %s6 = ssub.s32 1, %s4
  %s7 = scalar_select 0, %s6, %s4
  $region1: #{resnet_block.1} parent=0
    #allocation4 [shape = 'u8[262144]{0}', space=vmem, size = 0x40000, scoped, tag = 'output window, operand 0, single buffered']
    #allocation5 [shape = 's32[1]{0}', space=sflag, size = 0x4, scoped, tag = 'scoped memory for resnet_block.1']
    %8 = vsyncpa [#allocation5], 0
    // Predicated region
    $region2: #{resnet_block.1} parent=1 // pred_check
      _
    $region3: #{resnet_block.1} parent=1 // pred_check_branch
      %10 = sbr.rel (0) target = $region5
    $region4: #{resnet_block.1} parent=1 // pred_region
      _
    $region5: #{resnet_block.1} parent=1 // pred_fallthru
      _
    // Predicated region
    $region6: #{resnet_block.1} parent=1 // pred_check
      _
    $region7: #{resnet_block.1} parent=1 // pred_check_branch
      %12 = sbr.rel (0) target = $region9
    $region8: #{resnet_block.1} parent=1 // pred_region
      _
    $region9: #{resnet_block.1} parent=1 // pred_fallthru
      _
    // Predicated region
    $region10: #{resnet_block.1} parent=1 // pred_check
      _
    $region11: #{resnet_block.1} parent=1 // pred_check_branch
      %14 = sbr.rel (0) target = $region13
    $region12: #{resnet_block.1} parent=1 // pred_region
      _
    $region13: #{resnet_block.1} parent=1 // pred_fallthru
      _
    %v15 = vld [vmem:[%s0] sm:$0xff]
    %v16 = vld [vmem:[%s0 + $0x8] sm:$0xff]
    %v17 = vld [vmem:[%s0 + $0x10] sm:$0xff]
    %v18 = vld [vmem:[%s0 + $0x18] sm:$0xff]
    %v19 = vld [vmem:[%s0 + $0x20] sm:$0xff]
    %v20 = vld [vmem:[%s0 + $0x28] sm:$0xff]
    %v21 = vld [vmem:[%s0 + $0x30] sm:$0xff]
    %v22 = vld [vmem:[%s0 + $0x38] sm:$0xff]
    %v23 = vld [vmem:[%s0 + $0x40] sm:$0xff]
    %v24 = vld [vmem:[%s0 + $0x48] sm:$0xff]
    %v25 = vld [vmem:[%s0 + $0x50] sm:$0xff]
    %v26 = vld [vmem:[%s0 + $0x58] sm:$0xff]
    %v27 = vld [vmem:[%s0 + $0x60] sm:$0xff]
    %v28 = vld [vmem:[%s0 + $0x68] sm:$0xff]
    %v29 = vld [vmem:[%s0 + $0x70] sm:$0xff]
    %v30 = vld [vmem:[%s0 + $0x78] sm:$0xff]
    %v31 = vld [vmem:[%s0 + $0x80] sm:$0xff]
    %v32 = vld [vmem:[%s0 + $0x88] sm:$0xff]
    %v33 = vld [vmem:[%s0 + $0x90] sm:$0xff]
    %v34 = vld [vmem:[%s0 + $0x98] sm:$0xff]
    %v35 = vld [vmem:[%s0 + $0xa0] sm:$0xff]
    %v36 = vld [vmem:[%s0 + $0xa8] sm:$0xff]
    %v37 = vld [vmem:[%s0 + $0xb0] sm:$0xff]
    %v38 = vld [vmem:[%s0 + $0xb8] sm:$0xff]
    %v39 = vld [vmem:[%s0 + $0xc0] sm:$0xff]
    %v40 = vld [vmem:[%s0 + $0xc8] sm:$0xff]
    %v41 = vld [vmem:[%s0 + $0xd0] sm:$0xff]
    %v42 = vld [vmem:[%s0 + $0xd8] sm:$0xff]
    %v43 = vld [vmem:[%s0 + $0xe0] sm:$0xff]
    %v44 = vld [vmem:[%s0 + $0xe8] sm:$0xff]
    %v45 = vld [vmem:[%s0 + $0xf0] sm:$0xff]
    %v46 = vld [vmem:[%s0 + $0xf8] sm:$0xff]
    %s47 = scalar_lea.vmem [#allocation2], 24
    %48 = vst [vmem:[%s47 + $0x1] sm:$0xff] %v15
    %49 = vst [vmem:[%s47 + $0x9] sm:$0xff] %v16
    %50 = vst [vmem:[%s47 + $0x19] sm:$0xff] %v17
    %51 = vst [vmem:[%s47 + $0x21] sm:$0xff] %v18
    %52 = vst [vmem:[%s47 + $0x31] sm:$0xff] %v19
    %53 = vst [vmem:[%s47 + $0x39] sm:$0xff] %v20
    %54 = vst [vmem:[%s47 + $0x49] sm:$0xff] %v21
    %55 = vst [vmem:[%s47 + $0x51] sm:$0xff] %v22
    %56 = vst [vmem:[%s47 + $0x61] sm:$0xff] %v23
    %57 = vst [vmem:[%s47 + $0x69] sm:$0xff] %v24
    %58 = vst [vmem:[%s47 + $0x79] sm:$0xff] %v25
    %59 = vst [vmem:[%s47 + $0x81] sm:$0xff] %v26
    %60 = vst [vmem:[%s47 + $0x91] sm:$0xff] %v27
    %61 = vst [vmem:[%s47 + $0x99] sm:$0xff] %v28
    %62 = vst [vmem:[%s47 + $0xa9] sm:$0xff] %v29
    %63 = vst [vmem:[%s47 + $0xb1] sm:$0xff] %v30
    %64 = vst [vmem:[%s47 + $0xc1] sm:$0xff] %v31
    %65 = vst [vmem:[%s47 + $0xc9] sm:$0xff] %v32
    %66 = vst [vmem:[%s47 + $0xd9] sm:$0xff] %v33
    %67 = vst [vmem:[%s47 + $0xe1] sm:$0xff] %v34
    %68 = vst [vmem:[%s47 + $0xf1] sm:$0xff] %v35
    %69 = vst [vmem:[%s47 + $0xf9] sm:$0xff] %v36
    %70 = vst [vmem:[%s47 + $0x109] sm:$0xff] %v37
    %71 = vst [vmem:[%s47 + $0x111] sm:$0xff] %v38
    %72 = vst [vmem:[%s47 + $0x121] sm:$0xff] %v39
    %73 = vst [vmem:[%s47 + $0x129] sm:$0xff] %v40
    %74 = vst [vmem:[%s47 + $0x139] sm:$0xff] %v41
    %75 = vst [vmem:[%s47 + $0x141] sm:$0xff] %v42
    %76 = vst [vmem:[%s47 + $0x151] sm:$0xff] %v43
    %77 = vst [vmem:[%s47 + $0x159] sm:$0xff] %v44
    %78 = vst [vmem:[%s47 + $0x169] sm:$0xff] %v45
    %79 = vst [vmem:[%s47 + $0x171] sm:$0xff] %v46
    %80 = vst [vmem:[#allocation2 + $0x1] sm:$0xff] %v17
    %81 = vst [vmem:[#allocation2 + $0x9] sm:$0xff] %v18
    %s82 = scalar_lea.vmem [#allocation2], 408
    %83 = vst [vmem:[%s82 + $0x1] sm:$0xff] %v43
    %84 = vst [vmem:[%s82 + $0x9] sm:$0xff] %v44
    %v85 = vld [vmem:[#allocation2 + $0x2] sm:$0x1]
    %v86 = vld [vmem:[#allocation2 + $0x1a] sm:$0x1]
    %v87 = vld [vmem:[#allocation2 + $0x32] sm:$0x1]
    %v88 = vld [vmem:[#allocation2 + $0x4a] sm:$0x1]
    %v89 = vld [vmem:[#allocation2 + $0x62] sm:$0x1]
    %v90 = vld [vmem:[#allocation2 + $0x7a] sm:$0x1]
    %v91 = vld [vmem:[#allocation2 + $0x92] sm:$0x1]
    %v92 = vld [vmem:[#allocation2 + $0xaa] sm:$0x1]
    %v93 = vld [vmem:[#allocation2 + $0xc2] sm:$0x1]
    %v94 = vld [vmem:[#allocation2 + $0xda] sm:$0x1]
    %v95 = vld [vmem:[#allocation2 + $0xf2] sm:$0x1]
    %v96 = vld [vmem:[#allocation2 + $0x10a] sm:$0x1]
    %v97 = vld [vmem:[#allocation2 + $0x122] sm:$0x1]
    %v98 = vld [vmem:[#allocation2 + $0x13a] sm:$0x1]
    %v99 = vld [vmem:[#allocation2 + $0x152] sm:$0x1]
    %v100 = vld [vmem:[#allocation2 + $0x16a] sm:$0x1]
    %v101 = vld [vmem:[#allocation2 + $0x182] sm:$0x1]
    %v102 = vld [vmem:[#allocation2 + $0x19a] sm:$0x1]
    %103 = vst [vmem:[#allocation2] sm:$0x1] %v85
    %104 = vst [vmem:[#allocation2 + $0x18] sm:$0x1] %v86
    %105 = vst [vmem:[#allocation2 + $0x30] sm:$0x1] %v87
    %106 = vst [vmem:[#allocation2 + $0x48] sm:$0x1] %v88
    %107 = vst [vmem:[#allocation2 + $0x60] sm:$0x1] %v89
    %108 = vst [vmem:[#allocation2 + $0x78] sm:$0x1] %v90
    %109 = vst [vmem:[#allocation2 + $0x90] sm:$0x1] %v91
    %110 = vst [vmem:[#allocation2 + $0xa8] sm:$0x1] %v92
    %111 = vst [vmem:[#allocation2 + $0xc0] sm:$0x1] %v93
    %112 = vst [vmem:[#allocation2 + $0xd8] sm:$0x1] %v94
    %113 = vst [vmem:[#allocation2 + $0xf0] sm:$0x1] %v95
    %114 = vst [vmem:[#allocation2 + $0x108] sm:$0x1] %v96
    %115 = vst [vmem:[#allocation2 + $0x120] sm:$0x1] %v97
    %116 = vst [vmem:[#allocation2 + $0x138] sm:$0x1] %v98
    %117 = vst [vmem:[#allocation2 + $0x150] sm:$0x1] %v99
    %118 = vst [vmem:[#allocation2 + $0x168] sm:$0x1] %v100
    %119 = vst [vmem:[#allocation2 + $0x180] sm:$0x1] %v101
    %120 = vst [vmem:[#allocation2 + $0x198] sm:$0x1] %v102
    %v121 = vld [vmem:[#allocation2 + $0xf] sm:$0x1]
    %v122 = vld [vmem:[#allocation2 + $0x27] sm:$0x1]
    %v123 = vld [vmem:[#allocation2 + $0x3f] sm:$0x1]
    %v124 = vld [vmem:[#allocation2 + $0x57] sm:$0x1]
    %v125 = vld [vmem:[#allocation2 + $0x6f] sm:$0x1]
    %v126 = vld [vmem:[#allocation2 + $0x87] sm:$0x1]
    %v127 = vld [vmem:[#allocation2 + $0x9f] sm:$0x1]
    %v128 = vld [vmem:[#allocation2 + $0xb7] sm:$0x1]
    %v129 = vld [vmem:[#allocation2 + $0xcf] sm:$0x1]
    %v130 = vld [vmem:[#allocation2 + $0xe7] sm:$0x1]
    %v131 = vld [vmem:[#allocation2 + $0xff] sm:$0x1]
    %v132 = vld [vmem:[#allocation2 + $0x117] sm:$0x1]
    %v133 = vld [vmem:[#allocation2 + $0x12f] sm:$0x1]
    %v134 = vld [vmem:[#allocation2 + $0x147] sm:$0x1]
    %v135 = vld [vmem:[#allocation2 + $0x15f] sm:$0x1]
    %v136 = vld [vmem:[#allocation2 + $0x177] sm:$0x1]
    %v137 = vld [vmem:[#allocation2 + $0x18f] sm:$0x1]
    %v138 = vld [vmem:[#allocation2 + $0x1a7] sm:$0x1]
    %139 = vst [vmem:[#allocation2 + $0x11] sm:$0x1] %v121
    %140 = vst [vmem:[#allocation2 + $0x29] sm:$0x1] %v122
    %141 = vst [vmem:[#allocation2 + $0x41] sm:$0x1] %v123
    %142 = vst [vmem:[#allocation2 + $0x59] sm:$0x1] %v124
    %143 = vst [vmem:[#allocation2 + $0x71] sm:$0x1] %v125
    %144 = vst [vmem:[#allocation2 + $0x89] sm:$0x1] %v126
    %145 = vst [vmem:[#allocation2 + $0xa1] sm:$0x1] %v127
    %146 = vst [vmem:[#allocation2 + $0xb9] sm:$0x1] %v128
    %147 = vst [vmem:[#allocation2 + $0xd1] sm:$0x1] %v129
    %148 = vst [vmem:[#allocation2 + $0xe9] sm:$0x1] %v130
    %149 = vst [vmem:[#allocation2 + $0x101] sm:$0x1] %v131
    %150 = vst [vmem:[#allocation2 + $0x119] sm:$0x1] %v132
    %151 = vst [vmem:[#allocation2 + $0x131] sm:$0x1] %v133
    %152 = vst [vmem:[#allocation2 + $0x149] sm:$0x1] %v134
    %153 = vst [vmem:[#allocation2 + $0x161] sm:$0x1] %v135
    %154 = vst [vmem:[#allocation2 + $0x179] sm:$0x1] %v136
    %155 = vst [vmem:[#allocation2 + $0x191] sm:$0x1] %v137
    %156 = vst [vmem:[#allocation2 + $0x1a9] sm:$0x1] %v138
    %v157 = vld [vmem:[#allocation2] sm:$0xff]
    %v158 = vld [vmem:[#allocation2 + $0x8] sm:$0xff]
    %v159 = vld [vmem:[#allocation2 + $0x18] sm:$0xff]
    %v160 = vld [vmem:[#allocation2 + $0x20] sm:$0xff]
    %v161 = vld [vmem:[#allocation2 + $0x30] sm:$0xff]
    %v162 = vld [vmem:[#allocation2 + $0x38] sm:$0xff]
    %v163 = vld [vmem:[#allocation2 + $0x48] sm:$0xff]
    %v164 = vld [vmem:[#allocation2 + $0x50] sm:$0xff]
    %v165 = vld [vmem:[#allocation2 + $0x60] sm:$0xff]
    %v166 = vld [vmem:[#allocation2 + $0x68] sm:$0xff]
    %v167 = vld [vmem:[#allocation2 + $0x78] sm:$0xff]
    %v168 = vld [vmem:[#allocation2 + $0x80] sm:$0xff]
    %v169 = vld [vmem:[#allocation2 + $0x90] sm:$0xff]
    %v170 = vld [vmem:[#allocation2 + $0x98] sm:$0xff]
    %v171 = vld [vmem:[#allocation2 + $0xa8] sm:$0xff]
    %v172 = vld [vmem:[#allocation2 + $0xb0] sm:$0xff]
    %v173 = vld [vmem:[#allocation2 + $0xc0] sm:$0xff]
    %v174 = vld [vmem:[#allocation2 + $0xc8] sm:$0xff]
    %v175 = vld [vmem:[#allocation2 + $0xd8] sm:$0xff]
    %v176 = vld [vmem:[#allocation2 + $0xe0] sm:$0xff]
    %v177 = vld [vmem:[#allocation2 + $0xf0] sm:$0xff]
    %v178 = vld [vmem:[#allocation2 + $0xf8] sm:$0xff]
    %v179 = vld [vmem:[#allocation2 + $0x108] sm:$0xff]
    %v180 = vld [vmem:[#allocation2 + $0x110] sm:$0xff]
    %v181 = vld [vmem:[#allocation2 + $0x120] sm:$0xff]
    %v182 = vld [vmem:[#allocation2 + $0x128] sm:$0xff]
    %v183 = vld [vmem:[#allocation2 + $0x138] sm:$0xff]
    %v184 = vld [vmem:[#allocation2 + $0x140] sm:$0xff]
    %v185 = vld [vmem:[#allocation2 + $0x150] sm:$0xff]
    %v186 = vld [vmem:[#allocation2 + $0x158] sm:$0xff]
    %v187 = vld [vmem:[#allocation2 + $0x168] sm:$0xff]
    %v188 = vld [vmem:[#allocation2 + $0x170] sm:$0xff]
    %v189 = vld [vmem:[#allocation2 + $0x180] sm:$0xff]
    %v190 = vld [vmem:[#allocation2 + $0x188] sm:$0xff]
    %v191 = vld [vmem:[#allocation2 + $0x198] sm:$0xff]
    %v192 = vld [vmem:[#allocation2 + $0x1a0] sm:$0xff]
    %v193 = vld [vmem:[%s1] sm:$0xff]
    %v194 = vld [vmem:[%s1 + $0x8] sm:$0xff]
    %v195 = vld [vmem:[%s1 + $0x10] sm:$0xff]
    %v196 = vld [vmem:[%s1 + $0x18] sm:$0xff]
    %v197 = vld [vmem:[%s1 + $0x20] sm:$0xff]
    %v198 = vld [vmem:[%s1 + $0x28] sm:$0xff]
    %v199 = vld [vmem:[%s1 + $0x30] sm:$0xff]
    %v200 = vld [vmem:[%s1 + $0x38] sm:$0xff]
    %v201 = vld [vmem:[%s1 + $0x40] sm:$0xff]
    %v202 = vld [vmem:[%s1 + $0x48] sm:$0xff]
    %v203 = vld [vmem:[%s1 + $0x50] sm:$0xff]
    %v204 = vld [vmem:[%s1 + $0x58] sm:$0xff]
    %v205 = vld [vmem:[%s1 + $0x60] sm:$0xff]
    %v206 = vld [vmem:[%s1 + $0x68] sm:$0xff]
    %v207 = vld [vmem:[%s1 + $0x70] sm:$0xff]
    %v208 = vld [vmem:[%s1 + $0x78] sm:$0xff]
    %v209 = vld [vmem:[%s1 + $0x80] sm:$0xff]
    %v210 = vld [vmem:[%s1 + $0x88] sm:$0xff]
    %v211 = vld [vmem:[%s1 + $0x90] sm:$0xff]
    %v212 = vld [vmem:[%s1 + $0x98] sm:$0xff]
    %v213 = vld [vmem:[%s1 + $0xa0] sm:$0xff]
    %v214 = vld [vmem:[%s1 + $0xa8] sm:$0xff]
    %v215 = vld [vmem:[%s1 + $0xb0] sm:$0xff]
    %v216 = vld [vmem:[%s1 + $0xb8] sm:$0xff]
    %v217 = vld [vmem:[%s1 + $0xc0] sm:$0xff]
    %v218 = vld [vmem:[%s1 + $0xc8] sm:$0xff]
    %v219 = vld [vmem:[%s1 + $0xd0] sm:$0xff]
    %v220 = vld [vmem:[%s1 + $0xd8] sm:$0xff]
    %v221 = vld [vmem:[%s1 + $0xe0] sm:$0xff]
    %v222 = vld [vmem:[%s1 + $0xe8] sm:$0xff]
    %v223 = vld [vmem:[%s1 + $0xf0] sm:$0xff]
    %v224 = vld [vmem:[%s1 + $0xf8] sm:$0xff]
    %v225 = vld [vmem:[%s1 + $0x100] sm:$0xff]
    %v226 = vld [vmem:[%s1 + $0x108] sm:$0xff]
    %v227 = vld [vmem:[%s1 + $0x110] sm:$0xff]
    %v228 = vld [vmem:[%s1 + $0x118] sm:$0xff]
    %v229 = vld [vmem:[%s1 + $0x120] sm:$0xff]
    %v230 = vld [vmem:[%s1 + $0x128] sm:$0xff]
    %v231 = vld [vmem:[%s1 + $0x130] sm:$0xff]
    %v232 = vld [vmem:[%s1 + $0x138] sm:$0xff]
    %v233 = vld [vmem:[%s1 + $0x140] sm:$0xff]
    %v234 = vld [vmem:[%s1 + $0x148] sm:$0xff]
    %v235 = vld [vmem:[%s1 + $0x150] sm:$0xff]
    %v236 = vld [vmem:[%s1 + $0x158] sm:$0xff]
    %v237 = vld [vmem:[%s1 + $0x160] sm:$0xff]
    %v238 = vld [vmem:[%s1 + $0x168] sm:$0xff]
    %v239 = vld [vmem:[%s1 + $0x170] sm:$0xff]
    %v240 = vld [vmem:[%s1 + $0x178] sm:$0xff]
    %v241 = vld [vmem:[#allocation2 + $0x1] sm:$0xff]
    %v242 = vld [vmem:[#allocation2 + $0x9] sm:$0xff]
    %v243 = vld [vmem:[#allocation2 + $0x19] sm:$0xff]
    %v244 = vld [vmem:[#allocation2 + $0x21] sm:$0xff]
    %v245 = vld [vmem:[#allocation2 + $0x31] sm:$0xff]
    %v246 = vld [vmem:[#allocation2 + $0x39] sm:$0xff]
    %v247 = vld [vmem:[#allocation2 + $0x49] sm:$0xff]
    %v248 = vld [vmem:[#allocation2 + $0x51] sm:$0xff]
    %v249 = vld [vmem:[#allocation2 + $0x61] sm:$0xff]
    %v250 = vld [vmem:[#allocation2 + $0x69] sm:$0xff]
    %v251 = vld [vmem:[#allocation2 + $0x79] sm:$0xff]
    %v252 = vld [vmem:[#allocation2 + $0x81] sm:$0xff]
    %v253 = vld [vmem:[#allocation2 + $0x91] sm:$0xff]
    %v254 = vld [vmem:[#allocation2 + $0x99] sm:$0xff]
    %v255 = vld [vmem:[#allocation2 + $0xa9] sm:$0xff]
    %v256 = vld [vmem:[#allocation2 + $0xb1] sm:$0xff]
    %v257 = vld [vmem:[#allocation2 + $0xc1] sm:$0xff]
    %v258 = vld [vmem:[#allocation2 + $0xc9] sm:$0xff]
    %v259 = vld [vmem:[#allocation2 + $0xd9] sm:$0xff]
    %v260 = vld [vmem:[#allocation2 + $0xe1] sm:$0xff]
    %v261 = vld [vmem:[#allocation2 + $0xf1] sm:$0xff]
    %v262 = vld [vmem:[#allocation2 + $0xf9] sm:$0xff]
    %v263 = vld [vmem:[#allocation2 + $0x109] sm:$0xff]
    %v264 = vld [vmem:[#allocation2 + $0x111] sm:$0xff]
    %v265 = vld [vmem:[#allocation2 + $0x121] sm:$0xff]
    %v266 = vld [vmem:[#allocation2 + $0x129] sm:$0xff]
    %v267 = vld [vmem:[#allocation2 + $0x139] sm:$0xff]
    %v268 = vld [vmem:[#allocation2 + $0x141] sm:$0xff]
    %v269 = vld [vmem:[#allocation2 + $0x151] sm:$0xff]
    %v270 = vld [vmem:[#allocation2 + $0x159] sm:$0xff]
    %v271 = vld [vmem:[#allocation2 + $0x169] sm:$0xff]
    %v272 = vld [vmem:[#allocation2 + $0x171] sm:$0xff]
    %v273 = vld [vmem:[#allocation2 + $0x181] sm:$0xff]
    %v274 = vld [vmem:[#allocation2 + $0x189] sm:$0xff]
    %v275 = vld [vmem:[#allocation2 + $0x199] sm:$0xff]
    %v276 = vld [vmem:[#allocation2 + $0x1a1] sm:$0xff]
    %s277 = scalar_lea.vmem %s1, 384
    %v278 = vld [vmem:[%s277] sm:$0xff]
    %v279 = vld [vmem:[%s277 + $0x8] sm:$0xff]
    %v280 = vld [vmem:[%s277 + $0x10] sm:$0xff]
    %v281 = vld [vmem:[%s277 + $0x18] sm:$0xff]
    %v282 = vld [vmem:[%s277 + $0x20] sm:$0xff]
    %v283 = vld [vmem:[%s277 + $0x28] sm:$0xff]
    %v284 = vld [vmem:[%s277 + $0x30] sm:$0xff]
    %v285 = vld [vmem:[%s277 + $0x38] sm:$0xff]
    %v286 = vld [vmem:[%s277 + $0x40] sm:$0xff]
    %v287 = vld [vmem:[%s277 + $0x48] sm:$0xff]
    %v288 = vld [vmem:[%s277 + $0x50] sm:$0xff]
    %v289 = vld [vmem:[%s277 + $0x58] sm:$0xff]
    %v290 = vld [vmem:[%s277 + $0x60] sm:$0xff]
    %v291 = vld [vmem:[%s277 + $0x68] sm:$0xff]
    %v292 = vld [vmem:[%s277 + $0x70] sm:$0xff]
    %v293 = vld [vmem:[%s277 + $0x78] sm:$0xff]
    %v294 = vld [vmem:[%s277 + $0x80] sm:$0xff]
    %v295 = vld [vmem:[%s277 + $0x88] sm:$0xff]
    %v296 = vld [vmem:[%s277 + $0x90] sm:$0xff]
    %v297 = vld [vmem:[%s277 + $0x98] sm:$0xff]
    %v298 = vld [vmem:[%s277 + $0xa0] sm:$0xff]
    %v299 = vld [vmem:[%s277 + $0xa8] sm:$0xff]
    %v300 = vld [vmem:[%s277 + $0xb0] sm:$0xff]
    %v301 = vld [vmem:[%s277 + $0xb8] sm:$0xff]
    %v302 = vld [vmem:[%s277 + $0xc0] sm:$0xff]
    %v303 = vld [vmem:[%s277 + $0xc8] sm:$0xff]
    %v304 = vld [vmem:[%s277 + $0xd0] sm:$0xff]
    %v305 = vld [vmem:[%s277 + $0xd8] sm:$0xff]
    %v306 = vld [vmem:[%s277 + $0xe0] sm:$0xff]
    %v307 = vld [vmem:[%s277 + $0xe8] sm:$0xff]
    %v308 = vld [vmem:[%s277 + $0xf0] sm:$0xff]
    %v309 = vld [vmem:[%s277 + $0xf8] sm:$0xff]
    %v310 = vld [vmem:[%s277 + $0x100] sm:$0xff]
    %v311 = vld [vmem:[%s277 + $0x108] sm:$0xff]
    %v312 = vld [vmem:[%s277 + $0x110] sm:$0xff]
    %v313 = vld [vmem:[%s277 + $0x118] sm:$0xff]
    %v314 = vld [vmem:[%s277 + $0x120] sm:$0xff]
    %v315 = vld [vmem:[%s277 + $0x128] sm:$0xff]
    %v316 = vld [vmem:[%s277 + $0x130] sm:$0xff]
    %v317 = vld [vmem:[%s277 + $0x138] sm:$0xff]
    %v318 = vld [vmem:[%s277 + $0x140] sm:$0xff]
    %v319 = vld [vmem:[%s277 + $0x148] sm:$0xff]
    %v320 = vld [vmem:[%s277 + $0x150] sm:$0xff]
    %v321 = vld [vmem:[%s277 + $0x158] sm:$0xff]
    %v322 = vld [vmem:[%s277 + $0x160] sm:$0xff]
    %v323 = vld [vmem:[%s277 + $0x168] sm:$0xff]
    %v324 = vld [vmem:[%s277 + $0x170] sm:$0xff]
    %v325 = vld [vmem:[%s277 + $0x178] sm:$0xff]
    %326 = vmatprep.subr.mxu0 0.0
    %327 = vmatpush1.msra.mxu0 %v278
    %328 = vmatprep.subr.mxu0 0.0
    %329 = vmatpush1.msra.mxu0 %v279
    %330 = vmatprep.subr.mxu0 0.0
    %331 = vmatpush1.msra.mxu0 %v280
    %332 = vmatprep.subr.mxu0 0.0
    %333 = vmatpush1.msra.mxu0 %v281
    %334 = vmatprep.subr.mxu0 0.0
    %335 = vmatpush1.msra.mxu0 %v282
    %336 = vmatprep.subr.mxu0 0.0
    %337 = vmatpush1.msra.mxu0 %v283
    %338 = vmatprep.subr.mxu0 0.0
    %339 = vmatpush1.msra.mxu0 %v284
    %340 = vmatprep.subr.mxu0 0.0
    %341 = vmatpush1.msra.mxu0 %v285
    %342 = vmatprep.subr.mxu0 0.0
    %343 = vmatpush1.msra.mxu0 %v286
    %344 = vmatprep.subr.mxu0 0.0
    %345 = vmatpush1.msra.mxu0 %v287
    %346 = vmatprep.subr.mxu0 0.0
    %347 = vmatpush1.msra.mxu0 %v288
    %348 = vmatprep.subr.mxu0 0.0
    %349 = vmatpush1.msra.mxu0 %v289
    %350 = vmatprep.subr.mxu0 0.0
    %351 = vmatpush1.msra.mxu0 %v290
    %352 = vmatprep.subr.mxu0 0.0
    %353 = vmatpush1.msra.mxu0 %v291
    %354 = vmatprep.subr.mxu0 0.0
    %355 = vmatpush1.msra.mxu0 %v292
    %356 = vmatprep.subr.mxu0 0.0
    %357 = vmatpush1.msra.mxu0 %v293
    %358 = vmatprep.subr.mxu0 0.0
    %359 = vmatpush1.msra.mxu0 %v294
    %360 = vmatprep.subr.mxu0 0.0
    %361 = vmatpush1.msra.mxu0 %v295
    %362 = vmatprep.subr.mxu0 0.0
    %363 = vmatpush1.msra.mxu0 %v296
    %364 = vmatprep.subr.mxu0 0.0
    %365 = vmatpush1.msra.mxu0 %v297
    %366 = vmatprep.subr.mxu0 0.0
    %367 = vmatpush1.msra.mxu0 %v298
    %368 = vmatprep.subr.mxu0 0.0
    %369 = vmatpush1.msra.mxu0 %v299
    %370 = vmatprep.subr.mxu0 0.0
    %371 = vmatpush1.msra.mxu0 %v300
    %372 = vmatprep.subr.mxu0 0.0
    %373 = vmatpush1.msra.mxu0 %v301
    %374 = vmatprep.subr.mxu0 0.0
    %375 = vmatpush1.msra.mxu0 %v302
    %376 = vmatprep.subr.mxu0 0.0
    %377 = vmatpush1.msra.mxu0 %v303
    %378 = vmatprep.subr.mxu0 0.0
    %379 = vmatpush1.msra.mxu0 %v304
    %380 = vmatprep.subr.mxu0 0.0
    %381 = vmatpush1.msra.mxu0 %v305
    %382 = vmatprep.subr.mxu0 0.0
    %383 = vmatpush1.msra.mxu0 %v306
    %384 = vmatprep.subr.mxu0 0.0
    %385 = vmatpush1.msra.mxu0 %v307
    %386 = vmatprep.subr.mxu0 0.0
    %387 = vmatpush1.msra.mxu0 %v308
    %388 = vmatprep.subr.mxu0 0.0
    %389 = vmatpush1.msra.mxu0 %v309
    %390 = vmatprep.mubr.f32.mxu0 %v243
    %391 = vmatmul.mubr.f32.gmra.mrb[0].mxu0 %v241
    %v392 = vpop.f32.mrb[0].mxu0
    %v393 = vadd.f32 0.0, %v392
    %v394 = vpop.f32.mrb[0].mxu0
    %395 = vmatprep.mubr.f32.mxu0 %v244
    %396 = vmatmul.mubr.f32.gmra.mrb[0].mxu0 %v242
    %v397 = vpop.f32.mrb[0].mxu0
    %v398 = vadd.f32 0.0, %v397
    %v399 = vpop.f32.mrb[0].mxu0
    %400 = vmatprep.mubr.f32.mxu0 %v245
    %401 = vmatmul.mubr.f32.gmra.mrb[0].mxu0 %v243
    %v402 = vpop.f32.mrb[0].mxu0
    %v403 = vadd.f32 0.0, %v402
    %v404 = vpop.f32.mrb[0].mxu0
    %405 = vmatprep.mubr.f32.mxu0 %v246
    %406 = vmatmul.mubr.f32.gmra.mrb[0].mxu0 %v244
    %v407 = vpop.f32.mrb[0].mxu0
    %v408 = vadd.f32 0.0, %v407
    %v409 = vpop.f32.mrb[0].mxu0
    %410 = vmatprep.mubr.f32.mxu0 %v247
    %411 = vmatmul.mubr.f32.gmra.mrb[0].mxu0 %v245
    %v412 = vpop.f32.mrb[0].mxu0
    %v413 = vadd.f32 0.0, %v412
    %v414 = vpop.f32.mrb[0].mxu0
    %415 = vmatprep.mubr.f32.mxu0 %v248
    %416 = vmatmul.mubr.f32.gmra.mrb[0].mxu0 %v246
    %v417 = vpop.f32.mrb[0].mxu0
    %v418 = vadd.f32 0.0, %v417
    %v419 = vpop.f32.mrb[0].mxu0
    %420 = vmatprep.mubr.f32.mxu0 %v249
    %421 = vmatmul.mubr.f32.gmra.mrb[0].mxu0 %v247
    %v422 = vpop.f32.mrb[0].mxu0
    %v423 = vadd.f32 0.0, %v422
    %v424 = vpop.f32.mrb[0].mxu0
    %425 = vmatprep.mubr.f32.mxu0 %v250
    %426 = vmatmul.mubr.f32.gmra.mrb[0].mxu0 %v248
    %v427 = vpop.f32.mrb[0].mxu0
    %v428 = vadd.f32 0.0, %v427
    %v429 = vpop.f32.mrb[0].mxu0
    %430 = vmatprep.mubr.f32.mxu0 %v251
    %431 = vmatmul.mubr.f32.gmra.mrb[0].mxu0 %v249
    %v432 = vpop.f32.mrb[0].mxu0
    %v433 = vadd.f32 0.0, %v432
    %v434 = vpop.f32.mrb[0].mxu0
    %435 = vmatprep.mubr.f32.mxu0 %v252
    %436 = vmatmul.mubr.f32.gmra.mrb[0].mxu0 %v250
    %v437 = vpop.f32.mrb[0].mxu0
    %v438 = vadd.f32 0.0, %v437
    %v439 = vpop.f32.mrb[0].mxu0
    %440 = vmatprep.mubr.f32.mxu0 %v253
    %441 = vmatmul.mubr.f32.gmra.mrb[0].mxu0 %v251
    %v442 = vpop.f32.mrb[0].mxu0
    %v443 = vadd.f32 0.0, %v442
    %v444 = vpop.f32.mrb[0].mxu0
    %445 = vmatprep.mubr.f32.mxu0 %v254
    %446 = vmatmul.mubr.f32.gmra.mrb[0].mxu0 %v252
    %v447 = vpop.f32.mrb[0].mxu0
    %v448 = vadd.f32 0.0, %v447
    %v449 = vpop.f32.mrb[0].mxu0
    %450 = vmatprep.mubr.f32.mxu0 %v255
    %451 = vmatmul.mubr.f32.gmra.mrb[0].mxu0 %v253
    %v452 = vpop.f32.mrb[0].mxu0
    %v453 = vadd.f32 0.0, %v452
    %v454 = vpop.f32.mrb[0].mxu0
    %455 = vmatprep.mubr.f32.mxu0 %v256
    %456 = vmatmul.mubr.f32.gmra.mrb[0].mxu0 %v254
    %v457 = vpop.f32.mrb[0].mxu0
    %v458 = vadd.f32 0.0, %v457
    %v459 = vpop.f32.mrb[0].mxu0
    %460 = vmatprep.mubr.f32.mxu0 %v257
    %461 = vmatmul.mubr.f32.gmra.mrb[0].mxu0 %v255
    %v462 = vpop.f32.mrb[0].mxu0
    %v463 = vadd.f32 0.0, %v462
    %v464 = vpop.f32.mrb[0].mxu0
    %465 = vmatprep.mubr.f32.mxu0 %v258
    %466 = vmatmul.mubr.f32.gmra.mrb[0].mxu0 %v256
    %v467 = vpop.f32.mrb[0].mxu0
    %v468 = vadd.f32 0.0, %v467
    %v469 = vpop.f32.mrb[0].mxu0
    %470 = vmatprep.mubr.f32.mxu0 %v259
    %471 = vmatmul.mubr.f32.gmra.mrb[0].mxu0 %v257
    %v472 = vpop.f32.mrb[0].mxu0
    %v473 = vadd.f32 0.0, %v472
    %v474 = vpop.f32.mrb[0].mxu0
    %475 = vmatprep.mubr.f32.mxu0 %v260
    %476 = vmatmul.mubr.f32.gmra.mrb[0].mxu0 %v258
    %v477 = vpop.f32.mrb[0].mxu0
    %v478 = vadd.f32 0.0, %v477
    %v479 = vpop.f32.mrb[0].mxu0
    %480 = vmatprep.mubr.f32.mxu0 %v261
    %481 = vmatmul.mubr.f32.gmra.mrb[0].mxu0 %v259
    %v482 = vpop.f32.mrb[0].mxu0
    %v483 = vadd.f32 0.0, %v482
    %v484 = vpop.f32.mrb[0].mxu0
    %485 = vmatprep.mubr.f32.mxu0 %v262
    %486 = vmatmul.mubr.f32.gmra.mrb[0].mxu0 %v260
    %v487 = vpop.f32.mrb[0].mxu0
    %v488 = vadd.f32 0.0, %v487
    %v489 = vpop.f32.mrb[0].mxu0
    %490 = vmatprep.mubr.f32.mxu0 %v263
    %491 = vmatmul.mubr.f32.gmra.mrb[0].mxu0 %v261
    %v492 = vpop.f32.mrb[0].mxu0
    %v493 = vadd.f32 0.0, %v492
    %v494 = vpop.f32.mrb[0].mxu0
    %495 = vmatprep.mubr.f32.mxu0 %v264
    %496 = vmatmul.mubr.f32.gmra.mrb[0].mxu0 %v262
    %v497 = vpop.f32.mrb[0].mxu0
    %v498 = vadd.f32 0.0, %v497
    %v499 = vpop.f32.mrb[0].mxu0
    %500 = vmatprep.mubr.f32.mxu0 %v265
    %501 = vmatmul.mubr.f32.gmra.mrb[0].mxu0 %v263
    %v502 = vpop.f32.mrb[0].mxu0
    %v503 = vadd.f32 0.0, %v502
    %v504 = vpop.f32.mrb[0].mxu0
    %505 = vmatprep.mubr.f32.mxu0 %v266
    %506 = vmatmul.mubr.f32.gmra.mrb[0].mxu0 %v264
    %v507 = vpop.f32.mrb[0].mxu0
    %v508 = vadd.f32 0.0, %v507
    %v509 = vpop.f32.mrb[0].mxu0
    %510 = vmatprep.mubr.f32.mxu0 %v267
    %511 = vmatmul.mubr.f32.gmra.mrb[0].mxu0 %v265
    %v512 = vpop.f32.mrb[0].mxu0
    %v513 = vadd.f32 0.0, %v512
    %v514 = vpop.f32.mrb[0].mxu0
    %515 = vmatprep.mubr.f32.mxu0 %v268
    %516 = vmatmul.mubr.f32.gmra.mrb[0].mxu0 %v266
    %v517 = vpop.f32.mrb[0].mxu0
    %v518 = vadd.f32 0.0, %v517
    %v519 = vpop.f32.mrb[0].mxu0
    %520 = vmatprep.mubr.f32.mxu0 %v269
    %521 = vmatmul.mubr.f32.gmra.mrb[0].mxu0 %v267
    %v522 = vpop.f32.mrb[0].mxu0
    %v523 = vadd.f32 0.0, %v522
    %v524 = vpop.f32.mrb[0].mxu0
    %525 = vmatprep.mubr.f32.mxu0 %v270
    %526 = vmatmul.mubr.f32.gmra.mrb[0].mxu0 %v268
    %v527 = vpop.f32.mrb[0].mxu0
    %v528 = vadd.f32 0.0, %v527
    %v529 = vpop.f32.mrb[0].mxu0
    %530 = vmatprep.mubr.f32.mxu0 %v271
    %531 = vmatmul.mubr.f32.gmra.mrb[0].mxu0 %v269
    %v532 = vpop.f32.mrb[0].mxu0
    %v533 = vadd.f32 0.0, %v532
    %v534 = vpop.f32.mrb[0].mxu0
    %535 = vmatprep.mubr.f32.mxu0 %v272
    %536 = vmatmul.mubr.f32.gmra.mrb[0].mxu0 %v270
    %v537 = vpop.f32.mrb[0].mxu0
    %v538 = vadd.f32 0.0, %v537
    %v539 = vpop.f32.mrb[0].mxu0
    %540 = vmatprep.mubr.f32.mxu0 %v273
    %541 = vmatmul.mubr.f32.gmra.mrb[0].mxu0 %v271
    %v542 = vpop.f32.mrb[0].mxu0
    %v543 = vadd.f32 0.0, %v542
    %v544 = vpop.f32.mrb[0].mxu0
    %545 = vmatprep.mubr.f32.mxu0 %v274
    %546 = vmatmul.mubr.f32.gmra.mrb[0].mxu0 %v272
    %v547 = vpop.f32.mrb[0].mxu0
    %v548 = vadd.f32 0.0, %v547
    %v549 = vpop.f32.mrb[0].mxu0
    %550 = vdwg.mxu0
    %551 = vmatprep.subr.mxu0 0.0
    %552 = vmatpush1.msra.mxu0 %v310
    %553 = vmatprep.subr.mxu0 0.0
    %554 = vmatpush1.msra.mxu0 %v311
    %555 = vmatprep.subr.mxu0 0.0
    %556 = vmatpush1.msra.mxu0 %v312
    %557 = vmatprep.subr.mxu0 0.0
    %558 = vmatpush1.msra.mxu0 %v313
    %559 = vmatprep.subr.mxu0 0.0
    %560 = vmatpush1.msra.mxu0 %v314
    %561 = vmatprep.subr.mxu0 0.0
    %562 = vmatpush1.msra.mxu0 %v315
    %563 = vmatprep.subr.mxu0 0.0
    %564 = vmatpush1.msra.mxu0 %v316
    %565 = vmatprep.subr.mxu0 0.0
    %566 = vmatpush1.msra.mxu0 %v317
    %567 = vmatprep.subr.mxu0 0.0
    %568 = vmatpush1.msra.mxu0 %v318
    %569 = vmatprep.subr.mxu0 0.0
    %570 = vmatpush1.msra.mxu0 %v319
    %571 = vmatprep.subr.mxu0 0.0
    %572 = vmatpush1.msra.mxu0 %v320
    %573 = vmatprep.subr.mxu0 0.0
    %574 = vmatpush1.msra.mxu0 %v321
    %575 = vmatprep.subr.mxu0 0.0
    %576 = vmatpush1.msra.mxu0 %v322
    %577 = vmatprep.subr.mxu0 0.0
    %578 = vmatpush1.msra.mxu0 %v323
    %579 = vmatprep.subr.mxu0 0.0
    %580 = vmatpush1.msra.mxu0 %v324
    %581 = vmatprep.subr.mxu0 0.0
    %582 = vmatpush1.msra.mxu0 %v325
    %583 = vmatprep.subr.mxu0 0.0
    %584 = vmatpush1.msra.mxu0 0.0
    %585 = vmatprep.subr.mxu0 0.0
    %586 = vmatpush1.msra.mxu0 0.0
    %587 = vmatprep.subr.mxu0 0.0
    %588 = vmatpush1.msra.mxu0 0.0
    %589 = vmatprep.subr.mxu0 0.0
    %590 = vmatpush1.msra.mxu0 0.0
    %591 = vmatprep.subr.mxu0 0.0
    %592 = vmatpush1.msra.mxu0 0.0
    %593 = vmatprep.subr.mxu0 0.0
    %594 = vmatpush1.msra.mxu0 0.0
    %595 = vmatprep.subr.mxu0 0.0
    %596 = vmatpush1.msra.mxu0 0.0
    %597 = vmatprep.subr.mxu0 0.0
    %598 = vmatpush1.msra.mxu0 0.0
    %599 = vmatprep.subr.mxu0 0.0
    %600 = vmatpush1.msra.mxu0 0.0
    %601 = vmatprep.subr.mxu0 0.0
    %602 = vmatpush1.msra.mxu0 0.0
    %603 = vmatprep.subr.mxu0 0.0
    %604 = vmatpush1.msra.mxu0 0.0
    %605 = vmatprep.subr.mxu0 0.0
    %606 = vmatpush1.msra.mxu0 0.0
    %607 = vmatprep.subr.mxu0 0.0
    %608 = vmatpush1.msra.mxu0 0.0
    %609 = vmatprep.subr.mxu0 0.0
    %610 = vmatpush1.msra.mxu0 0.0
    %611 = vmatprep.subr.mxu0 0.0
    %612 = vmatpush1.msra.mxu0 0.0
    %613 = vmatprep.subr.mxu0 0.0
    %614 = vmatpush1.msra.mxu0 0.0
    %615 = vmatprep.mubr.f32.mxu0 0.0
    %616 = vmatmul.mubr.f32.gmra.mrb[0].mxu0 %v245
    %v617 = vpop.f32.mrb[0].mxu0
    %v618 = vadd.f32 %v393, %v617
    %v619 = vpop.f32.mrb[0].mxu0
    %620 = vmatprep.mubr.f32.mxu0 0.0
    %621 = vmatmul.mubr.f32.gmra.mrb[0].mxu0 %v246
    %v622 = vpop.f32.mrb[0].mxu0
    %v623 = vadd.f32 %v398, %v622
    %v624 = vpop.f32.mrb[0].mxu0
    %625 = vmatprep.mubr.f32.mxu0 0.0
    %626 = vmatmul.mubr.f32.gmra.mrb[0].mxu0 %v247
    %v627 = vpop.f32.mrb[0].mxu0
    %v628 = vadd.f32 %v403, %v627
    %v629 = vpop.f32.mrb[0].mxu0
    %630 = vmatprep.mubr.f32.mxu0 0.0
    %631 = vmatmul.mubr.f32.gmra.mrb[0].mxu0 %v248
    %v632 = vpop.f32.mrb[0].mxu0
    %v633 = vadd.f32 %v408, %v632
    %v634 = vpop.f32.mrb[0].mxu0
    %635 = vmatprep.mubr.f32.mxu0 0.0
    %636 = vmatmul.mubr.f32.gmra.mrb[0].mxu0 %v249
    %v637 = vpop.f32.mrb[0].mxu0
    %v638 = vadd.f32 %v413, %v637
    %v639 = vpop.f32.mrb[0].mxu0
    %640 = vmatprep.mubr.f32.mxu0 0.0
    %641 = vmatmul.mubr.f32.gmra.mrb[0].mxu0 %v250
    %v642 = vpop.f32.mrb[0].mxu0
    %v643 = vadd.f32 %v418, %v642
    %v644 = vpop.f32.mrb[0].mxu0
    %645 = vmatprep.mubr.f32.mxu0 0.0
    %646 = vmatmul.mubr.f32.gmra.mrb[0].mxu0 %v251
    %v647 = vpop.f32.mrb[0].mxu0
    %v648 = vadd.f32 %v423, %v647
    %v649 = vpop.f32.mrb[0].mxu0
    %650 = vmatprep.mubr.f32.mxu0 0.0
    %651 = vmatmul.mubr.f32.gmra.mrb[0].mxu0 %v252
    %v652 = vpop.f32.mrb[0].mxu0
    %v653 = vadd.f32 %v428, %v652
    %v654 = vpop.f32.mrb[0].mxu0
    %655 = vmatprep.mubr.f32.mxu0 0.0
    %656 = vmatmul.mubr.f32.gmra.mrb[0].mxu0 %v253
    %v657 = vpop.f32.mrb[0].mxu0
    %v658 = vadd.f32 %v433, %v657
    %v659 = vpop.f32.mrb[0].mxu0
    %660 = vmatprep.mubr.f32.mxu0 0.0
    %661 = vmatmul.mubr.f32.gmra.mrb[0].mxu0 %v254
    %v662 = vpop.f32.mrb[0].mxu0
    %v663 = vadd.f32 %v438, %v662
    %v664 = vpop.f32.mrb[0].mxu0
    %665 = vmatprep.mubr.f32.mxu0 0.0
    %666 = vmatmul.mubr.f32.gmra.mrb[0].mxu0 %v255
    %v667 = vpop.f32.mrb[0].mxu0
    %v668 = vadd.f32 %v443, %v667
    %v669 = vpop.f32.mrb[0].mxu0
    %670 = vmatprep.mubr.f32.mxu0 0.0
    %671 = vmatmul.mubr.f32.gmra.mrb[0].mxu0 %v256
    %v672 = vpop.f32.mrb[0].mxu0
    %v673 = vadd.f32 %v448, %v672
    %v674 = vpop.f32.mrb[0].mxu0
    %675 = vmatprep.mubr.f32.mxu0 0.0
    %676 = vmatmul.mubr.f32.gmra.mrb[0].mxu0 %v257
    %v677 = vpop.f32.mrb[0].mxu0
    %v678 = vadd.f32 %v453, %v677
    %v679 = vpop.f32.mrb[0].mxu0
    %680 = vmatprep.mubr.f32.mxu0 0.0
    %681 = vmatmul.mubr.f32.gmra.mrb[0].mxu0 %v258
    %v682 = vpop.f32.mrb[0].mxu0
    %v683 = vadd.f32 %v458, %v682
    %v684 = vpop.f32.mrb[0].mxu0
    %685 = vmatprep.mubr.f32.mxu0 0.0
    %686 = vmatmul.mubr.f32.gmra.mrb[0].mxu0 %v259
    %v687 = vpop.f32.mrb[0].mxu0
    %v688 = vadd.f32 %v463, %v687
    %v689 = vpop.f32.mrb[0].mxu0
    %690 = vmatprep.mubr.f32.mxu0 0.0
    %691 = vmatmul.mubr.f32.gmra.mrb[0].mxu0 %v260
    %v692 = vpop.f32.mrb[0].mxu0
    %v693 = vadd.f32 %v468, %v692
    %v694 = vpop.f32.mrb[0].mxu0
    %695 = vmatprep.mubr.f32.mxu0 0.0
    %696 = vmatmul.mubr.f32.gmra.mrb[0].mxu0 %v261
    %v697 = vpop.f32.mrb[0].mxu0
    %v698 = vadd.f32 %v473, %v697
    %v699 = vpop.f32.mrb[0].mxu0
    %700 = vmatprep.mubr.f32.mxu0 0.0
    %701 = vmatmul.mubr.f32.gmra.mrb[0].mxu0 %v262
    %v702 = vpop.f32.mrb[0].mxu0
    %v703 = vadd.f32 %v478, %v702
    %v704 = vpop.f32.mrb[0].mxu0
    %705 = vmatprep.mubr.f32.mxu0 0.0
    %706 = vmatmul.mubr.f32.gmra.mrb[0].mxu0 %v263
    %v707 = vpop.f32.mrb[0].mxu0
    %v708 = vadd.f32 %v483, %v707
    %v709 = vpop.f32.mrb[0].mxu0
    %710 = vmatprep.mubr.f32.mxu0 0.0
    %711 = vmatmul.mubr.f32.gmra.mrb[0].mxu0 %v264
    %v712 = vpop.f32.mrb[0].mxu0
    %v713 = vadd.f32 %v488, %v712
    %v714 = vpop.f32.mrb[0].mxu0
    %715 = vmatprep.mubr.f32.mxu0 0.0
    %716 = vmatmul.mubr.f32.gmra.mrb[0].mxu0 %v265
    %v717 = vpop.f32.mrb[0].mxu0
    %v718 = vadd.f32 %v493, %v717
    %v719 = vpop.f32.mrb[0].mxu0
    %720 = vmatprep.mubr.f32.mxu0 0.0
    %721 = vmatmul.mubr.f32.gmra.mrb[0].mxu0 %v266
    %v722 = vpop.f32.mrb[0].mxu0
    %v723 = vadd.f32 %v498, %v722
    %v724 = vpop.f32.mrb[0].mxu0
    %725 = vmatprep.mubr.f32.mxu0 0.0
    %726 = vmatmul.mubr.f32.gmra.mrb[0].mxu0 %v267
    %v727 = vpop.f32.mrb[0].mxu0
    %v728 = vadd.f32 %v503, %v727
    %v729 = vpop.f32.mrb[0].mxu0
    %730 = vmatprep.mubr.f32.mxu0 0.0
    %731 = vmatmul.mubr.f32.gmra.mrb[0].mxu0 %v268
    %v732 = vpop.f32.mrb[0].mxu0
    %v733 = vadd.f32 %v508, %v732
    %v734 = vpop.f32.mrb[0].mxu0
    %735 = vmatprep.mubr.f32.mxu0 0.0
    %736 = vmatmul.mubr.f32.gmra.mrb[0].mxu0 %v269
    %v737 = vpop.f32.mrb[0].mxu0
    %v738 = vadd.f32 %v513, %v737
    %v739 = vpop.f32.mrb[0].mxu0
    %740 = vmatprep.mubr.f32.mxu0 0.0
    %741 = vmatmul.mubr.f32.gmra.mrb[0].mxu0 %v270
    %v742 = vpop.f32.mrb[0].mxu0
    %v743 = vadd.f32 %v518, %v742
    %v744 = vpop.f32.mrb[0].mxu0
    %745 = vmatprep.mubr.f32.mxu0 0.0
    %746 = vmatmul.mubr.f32.gmra.mrb[0].mxu0 %v271
    %v747 = vpop.f32.mrb[0].mxu0
    %v748 = vadd.f32 %v523, %v747
    %v749 = vpop.f32.mrb[0].mxu0
    %750 = vmatprep.mubr.f32.mxu0 0.0
    %751 = vmatmul.mubr.f32.gmra.mrb[0].mxu0 %v272
    %v752 = vpop.f32.mrb[0].mxu0
    %v753 = vadd.f32 %v528, %v752
    %v754 = vpop.f32.mrb[0].mxu0
    %755 = vmatprep.mubr.f32.mxu0 0.0
    %756 = vmatmul.mubr.f32.gmra.mrb[0].mxu0 %v273
    %v757 = vpop.f32.mrb[0].mxu0
    %v758 = vadd.f32 %v533, %v757
    %v759 = vpop.f32.mrb[0].mxu0
    %760 = vmatprep.mubr.f32.mxu0 0.0
    %761 = vmatmul.mubr.f32.gmra.mrb[0].mxu0 %v274
    %v762 = vpop.f32.mrb[0].mxu0
    %v763 = vadd.f32 %v538, %v762
    %v764 = vpop.f32.mrb[0].mxu0
    %765 = vmatprep.mubr.f32.mxu0 0.0
    %766 = vmatmul.mubr.f32.gmra.mrb[0].mxu0 %v275
    %v767 = vpop.f32.mrb[0].mxu0
    %v768 = vadd.f32 %v543, %v767
    %v769 = vpop.f32.mrb[0].mxu0
    %770 = vmatprep.mubr.f32.mxu0 0.0
    %771 = vmatmul.mubr.f32.gmra.mrb[0].mxu0 %v276
    %v772 = vpop.f32.mrb[0].mxu0
    %v773 = vadd.f32 %v548, %v772
    %v774 = vpop.f32.mrb[0].mxu0
    %775 = vdwg.mxu0
    %776 = vmatprep.subr.mxu0 0.0
    %777 = vmatpush1.msra.mxu0 %v193
    %778 = vmatprep.subr.mxu0 0.0
    %779 = vmatpush1.msra.mxu0 %v194
    %780 = vmatprep.subr.mxu0 0.0
    %781 = vmatpush1.msra.mxu0 %v195
    %782 = vmatprep.subr.mxu0 0.0
    %783 = vmatpush1.msra.mxu0 %v196
    %784 = vmatprep.subr.mxu0 0.0
    %785 = vmatpush1.msra.mxu0 %v197
    %786 = vmatprep.subr.mxu0 0.0
    %787 = vmatpush1.msra.mxu0 %v198
    %788 = vmatprep.subr.mxu0 0.0
    %789 = vmatpush1.msra.mxu0 %v199
    %790 = vmatprep.subr.mxu0 0.0
    %791 = vmatpush1.msra.mxu0 %v200
    %792 = vmatprep.subr.mxu0 0.0
    %793 = vmatpush1.msra.mxu0 %v201
    %794 = vmatprep.subr.mxu0 0.0
    %795 = vmatpush1.msra.mxu0 %v202
    %796 = vmatprep.subr.mxu0 0.0
    %797 = vmatpush1.msra.mxu0 %v203
    %798 = vmatprep.subr.mxu0 0.0
    %799 = vmatpush1.msra.mxu0 %v204
    %800 = vmatprep.subr.mxu0 0.0
    %801 = vmatpush1.msra.mxu0 %v205
    %802 = vmatprep.subr.mxu0 0.0
    %803 = vmatpush1.msra.mxu0 %v206
    %804 = vmatprep.subr.mxu0 0.0
    %805 = vmatpush1.msra.mxu0 %v207
    %806 = vmatprep.subr.mxu0 0.0
    %807 = vmatpush1.msra.mxu0 %v208
    %808 = vmatprep.subr.mxu0 0.0
    %809 = vmatpush1.msra.mxu0 %v209
    %810 = vmatprep.subr.mxu0 0.0
    %811 = vmatpush1.msra.mxu0 %v210
    %812 = vmatprep.subr.mxu0 0.0
    %813 = vmatpush1.msra.mxu0 %v211
    %814 = vmatprep.subr.mxu0 0.0
    %815 = vmatpush1.msra.mxu0 %v212
    %816 = vmatprep.subr.mxu0 0.0
    %817 = vmatpush1.msra.mxu0 %v213
    %818 = vmatprep.subr.mxu0 0.0
    %819 = vmatpush1.msra.mxu0 %v214
    %820 = vmatprep.subr.mxu0 0.0
    %821 = vmatpush1.msra.mxu0 %v215
    %822 = vmatprep.subr.mxu0 0.0
    %823 = vmatpush1.msra.mxu0 %v216
    %824 = vmatprep.subr.mxu0 0.0
    %825 = vmatpush1.msra.mxu0 %v217
    %826 = vmatprep.subr.mxu0 0.0
    %827 = vmatpush1.msra.mxu0 %v218
    %828 = vmatprep.subr.mxu0 0.0
    %829 = vmatpush1.msra.mxu0 %v219
    %830 = vmatprep.subr.mxu0 0.0
    %831 = vmatpush1.msra.mxu0 %v220
    %832 = vmatprep.subr.mxu0 0.0
    %833 = vmatpush1.msra.mxu0 %v221
    %834 = vmatprep.subr.mxu0 0.0
    %835 = vmatpush1.msra.mxu0 %v222
    %836 = vmatprep.subr.mxu0 0.0
    %837 = vmatpush1.msra.mxu0 %v223
    %838 = vmatprep.subr.mxu0 0.0
    %839 = vmatpush1.msra.mxu0 %v224
    %840 = vmatprep.mubr.f32.mxu0 %v159
    %841 = vmatmul.mubr.f32.gmra.mrb[0].mxu0 %v157
    %v842 = vpop.f32.mrb[0].mxu0
    %v843 = vadd.f32 %v618, %v842
    %v844 = vpop.f32.mrb[0].mxu0
    %845 = vmatprep.mubr.f32.mxu0 %v160
    %846 = vmatmul.mubr.f32.gmra.mrb[0].mxu0 %v158
    %v847 = vpop.f32.mrb[0].mxu0
    %v848 = vadd.f32 %v623, %v847
    %v849 = vpop.f32.mrb[0].mxu0
    %850 = vmatprep.mubr.f32.mxu0 %v161
    %851 = vmatmul.mubr.f32.gmra.mrb[0].mxu0 %v159
    %v852 = vpop.f32.mrb[0].mxu0
    %v853 = vadd.f32 %v628, %v852
    %v854 = vpop.f32.mrb[0].mxu0
    %855 = vmatprep.mubr.f32.mxu0 %v162
    %856 = vmatmul.mubr.f32.gmra.mrb[0].mxu0 %v160
    %v857 = vpop.f32.mrb[0].mxu0
    %v858 = vadd.f32 %v633, %v857
    %v859 = vpop.f32.mrb[0].mxu0
    %860 = vmatprep.mubr.f32.mxu0 %v163
    %861 = vmatmul.mubr.f32.gmra.mrb[0].mxu0 %v161
    %v862 = vpop.f32.mrb[0].mxu0
    %v863 = vadd.f32 %v638, %v862
    %v864 = vpop.f32.mrb[0].mxu0
    %865 = vmatprep.mubr.f32.mxu0 %v164
    %866 = vmatmul.mubr.f32.gmra.mrb[0].mxu0 %v162
    %v867 = vpop.f32.mrb[0].mxu0
    %v868 = vadd.f32 %v643, %v867
    %v869 = vpop.f32.mrb[0].mxu0
    %870 = vmatprep.mubr.f32.mxu0 %v165
    %871 = vmatmul.mubr.f32.gmra.mrb[0].mxu0 %v163
    %v872 = vpop.f32.mrb[0].mxu0
    %v873 = vadd.f32 %v648, %v872
    %v874 = vpop.f32.mrb[0].mxu0
    %875 = vmatprep.mubr.f32.mxu0 %v166
    %876 = vmatmul.mubr.f32.gmra.mrb[0].mxu0 %v164
    %v877 = vpop.f32.mrb[0].mxu0
    %v878 = vadd.f32 %v653, %v877
    %v879 = vpop.f32.mrb[0].mxu0
    %880 = vmatprep.mubr.f32.mxu0 %v167
    %881 = vmatmul.mubr.f32.gmra.mrb[0].mxu0 %v165
    %v882 = vpop.f32.mrb[0].mxu0
    %v883 = vadd.f32 %v658, %v882
    %v884 = vpop.f32.mrb[0].mxu0
    %885 = vmatprep.mubr.f32.mxu0 %v168
    %886 = vmatmul.mubr.f32.gmra.mrb[0].mxu0 %v166
    %v887 = vpop.f32.mrb[0].mxu0
    %v888 = vadd.f32 %v663, %v887
    %v889 = vpop.f32.mrb[0].mxu0
    %890 = vmatprep.mubr.f32.mxu0 %v169
    %891 = vmatmul.mubr.f32.gmra.mrb[0].mxu0 %v167
    %v892 = vpop.f32.mrb[0].mxu0
    %v893 = vadd.f32 %v668, %v892
    %v894 = vpop.f32.mrb[0].mxu0
    %895 = vmatprep.mubr.f32.mxu0 %v170
    %896 = vmatmul.mubr.f32.gmra.mrb[0].mxu0 %v168
    %v897 = vpop.f32.mrb[0].mxu0
    %v898 = vadd.f32 %v673, %v897
    %v899 = vpop.f32.mrb[0].mxu0
    %900 = vmatprep.mubr.f32.mxu0 %v171
    %901 = vmatmul.mubr.f32.gmra.mrb[0].mxu0 %v169
    %v902 = vpop.f32.mrb[0].mxu0
    %v903 = vadd.f32 %v678, %v902
    %v904 = vpop.f32.mrb[0].mxu0
    %905 = vmatprep.mubr.f32.mxu0 %v172
    %906 = vmatmul.mubr.f32.gmra.mrb[0].mxu0 %v170
    %v907 = vpop.f32.mrb[0].mxu0
    %v908 = vadd.f32 %v683, %v907
    %v909 = vpop.f32.mrb[0].mxu0
    %910 = vmatprep.mubr.f32.mxu0 %v173
    %911 = vmatmul.mubr.f32.gmra.mrb[0].mxu0 %v171
    %v912 = vpop.f32.mrb[0].mxu0
    %v913 = vadd.f32 %v688, %v912
    %v914 = vpop.f32.mrb[0].mxu0
    %915 = vmatprep.mubr.f32.mxu0 %v174
    %916 = vmatmul.mubr.f32.gmra.mrb[0].mxu0 %v172
    %v917 = vpop.f32.mrb[0].mxu0
    %v918 = vadd.f32 %v693, %v917
    %v919 = vpop.f32.mrb[0].mxu0
    %920 = vmatprep.mubr.f32.mxu0 %v175
    %921 = vmatmul.mubr.f32.gmra.mrb[0].mxu0 %v173
    %v922 = vpop.f32.mrb[0].mxu0
    %v923 = vadd.f32 %v698, %v922
    %v924 = vpop.f32.mrb[0].mxu0
    %925 = vmatprep.mubr.f32.mxu0 %v176
    %926 = vmatmul.mubr.f32.gmra.mrb[0].mxu0 %v174
    %v927 = vpop.f32.mrb[0].mxu0
    %v928 = vadd.f32 %v703, %v927
    %v929 = vpop.f32.mrb[0].mxu0
    %930 = vmatprep.mubr.f32.mxu0 %v177
    %931 = vmatmul.mubr.f32.gmra.mrb[0].mxu0 %v175
    %v932 = vpop.f32.mrb[0].mxu0
    %v933 = vadd.f32 %v708, %v932
    %v934 = vpop.f32.mrb[0].mxu0
    %935 = vmatprep.mubr.f32.mxu0 %v178
    %936 = vmatmul.mubr.f32.gmra.mrb[0].mxu0 %v176
    %v937 = vpop.f32.mrb[0].mxu0
    %v938 = vadd.f32 %v713, %v937
    %v939 = vpop.f32.mrb[0].mxu0
    %940 = vmatprep.mubr.f32.mxu0 %v179
    %941 = vmatmul.mubr.f32.gmra.mrb[0].mxu0 %v177
    %v942 = vpop.f32.mrb[0].mxu0
    %v943 = vadd.f32 %v718, %v942
    %v944 = vpop.f32.mrb[0].mxu0
    %945 = vmatprep.mubr.f32.mxu0 %v180
    %946 = vmatmul.mubr.f32.gmra.mrb[0].mxu0 %v178
    %v947 = vpop.f32.mrb[0].mxu0
    %v948 = vadd.f32 %v723, %v947
    %v949 = vpop.f32.mrb[0].mxu0
    %950 = vmatprep.mubr.f32.mxu0 %v181
    %951 = vmatmul.mubr.f32.gmra.mrb[0].mxu0 %v179
    %v952 = vpop.f32.mrb[0].mxu0
    %v953 = vadd.f32 %v728, %v952
    %v954 = vpop.f32.mrb[0].mxu0
    %955 = vmatprep.mubr.f32.mxu0 %v182
    %956 = vmatmul.mubr.f32.gmra.mrb[0].mxu0 %v180
    %v957 = vpop.f32.mrb[0].mxu0
    %v958 = vadd.f32 %v733, %v957
    %v959 = vpop.f32.mrb[0].mxu0
    %960 = vmatprep.mubr.f32.mxu0 %v183
    %961 = vmatmul.mubr.f32.gmra.mrb[0].mxu0 %v181
    %v962 = vpop.f32.mrb[0].mxu0
    %v963 = vadd.f32 %v738, %v962
    %v964 = vpop.f32.mrb[0].mxu0
    %965 = vmatprep.mubr.f32.mxu0 %v184
    %966 = vmatmul.mubr.f32.gmra.mrb[0].mxu0 %v182
    %v967 = vpop.f32.mrb[0].mxu0
    %v968 = vadd.f32 %v743, %v967
    %v969 = vpop.f32.mrb[0].mxu0
    %970 = vmatprep.mubr.f32.mxu0 %v185
    %971 = vmatmul.mubr.f32.gmra.mrb[0].mxu0 %v183
    %v972 = vpop.f32.mrb[0].mxu0
    %v973 = vadd.f32 %v748, %v972
    %v974 = vpop.f32.mrb[0].mxu0
    %975 = vmatprep.mubr.f32.mxu0 %v186
    %976 = vmatmul.mubr.f32.gmra.mrb[0].mxu0 %v184
    %v977 = vpop.f32.mrb[0].mxu0
    %v978 = vadd.f32 %v753, %v977
    %v979 = vpop.f32.mrb[0].mxu0
    %980 = vmatprep.mubr.f32.mxu0 %v187
    %981 = vmatmul.mubr.f32.gmra.mrb[0].mxu0 %v185
    %v982 = vpop.f32.mrb[0].mxu0
    %v983 = vadd.f32 %v758, %v982
    %v984 = vpop.f32.mrb[0].mxu0
    %985 = vmatprep.mubr.f32.mxu0 %v188
    %986 = vmatmul.mubr.f32.gmra.mrb[0].mxu0 %v186
    %v987 = vpop.f32.mrb[0].mxu0
    %v988 = vadd.f32 %v763, %v987
    %v989 = vpop.f32.mrb[0].mxu0
    %990 = vmatprep.mubr.f32.mxu0 %v189
    %991 = vmatmul.mubr.f32.gmra.mrb[0].mxu0 %v187
    %v992 = vpop.f32.mrb[0].mxu0
    %v993 = vadd.f32 %v768, %v992
    %v994 = vpop.f32.mrb[0].mxu0
    %995 = vmatprep.mubr.f32.mxu0 %v190
    %996 = vmatmul.mubr.f32.gmra.mrb[0].mxu0 %v188
    %v997 = vpop.f32.mrb[0].mxu0
    %v998 = vadd.f32 %v773, %v997
    %v999 = vpop.f32.mrb[0].mxu0
    %1000 = vdwg.mxu0
    %1001 = vmatprep.subr.mxu0 0.0
    %1002 = vmatpush1.msra.mxu0 %v225
    %1003 = vmatprep.subr.mxu0 0.0
    %1004 = vmatpush1.msra.mxu0 %v226
    %1005 = vmatprep.subr.mxu0 0.0
    %1006 = vmatpush1.msra.mxu0 %v227
    %1007 = vmatprep.subr.mxu0 0.0
    %1008 = vmatpush1.msra.mxu0 %v228
    %1009 = vmatprep.subr.mxu0 0.0
    %1010 = vmatpush1.msra.mxu0 %v229
    %1011 = vmatprep.subr.mxu0 0.0
    %1012 = vmatpush1.msra.mxu0 %v230
    %1013 = vmatprep.subr.mxu0 0.0
    %1014 = vmatpush1.msra.mxu0 %v231
    %1015 = vmatprep.subr.mxu0 0.0
    %1016 = vmatpush1.msra.mxu0 %v232
    %1017 = vmatprep.subr.mxu0 0.0
    %1018 = vmatpush1.msra.mxu0 %v233
    %1019 = vmatprep.subr.mxu0 0.0
    %1020 = vmatpush1.msra.mxu0 %v234
    %1021 = vmatprep.subr.mxu0 0.0
    %1022 = vmatpush1.msra.mxu0 %v235
    %1023 = vmatprep.subr.mxu0 0.0
    %1024 = vmatpush1.msra.mxu0 %v236
    %1025 = vmatprep.subr.mxu0 0.0
    %1026 = vmatpush1.msra.mxu0 %v237
    %1027 = vmatprep.subr.mxu0 0.0
    %1028 = vmatpush1.msra.mxu0 %v238
    %1029 = vmatprep.subr.mxu0 0.0
    %1030 = vmatpush1.msra.mxu0 %v239
    %1031 = vmatprep.subr.mxu0 0.0
    %1032 = vmatpush1.msra.mxu0 %v240
    %1033 = vmatprep.subr.mxu0 0.0
    %1034 = vmatpush1.msra.mxu0 0.0
    %1035 = vmatprep.subr.mxu0 0.0
    %1036 = vmatpush1.msra.mxu0 0.0
    %1037 = vmatprep.subr.mxu0 0.0
    %1038 = vmatpush1.msra.mxu0 0.0
    %1039 = vmatprep.subr.mxu0 0.0
    %1040 = vmatpush1.msra.mxu0 0.0
    %1041 = vmatprep.subr.mxu0 0.0
    %1042 = vmatpush1.msra.mxu0 0.0
    %1043 = vmatprep.subr.mxu0 0.0
    %1044 = vmatpush1.msra.mxu0 0.0
    %1045 = vmatprep.subr.mxu0 0.0
    %1046 = vmatpush1.msra.mxu0 0.0
    %1047 = vmatprep.subr.mxu0 0.0
    %1048 = vmatpush1.msra.mxu0 0.0
    %1049 = vmatprep.subr.mxu0 0.0
    %1050 = vmatpush1.msra.mxu0 0.0
    %1051 = vmatprep.subr.mxu0 0.0
    %1052 = vmatpush1.msra.mxu0 0.0
    %1053 = vmatprep.subr.mxu0 0.0
    %1054 = vmatpush1.msra.mxu0 0.0
    %1055 = vmatprep.subr.mxu0 0.0
    %1056 = vmatpush1.msra.mxu0 0.0
    %1057 = vmatprep.subr.mxu0 0.0
    %1058 = vmatpush1.msra.mxu0 0.0
    %1059 = vmatprep.subr.mxu0 0.0
    %1060 = vmatpush1.msra.mxu0 0.0
    %1061 = vmatprep.subr.mxu0 0.0
    %1062 = vmatpush1.msra.mxu0 0.0
    %1063 = vmatprep.subr.mxu0 0.0
    %1064 = vmatpush1.msra.mxu0 0.0
    %1065 = vmatprep.mubr.f32.mxu0 0.0
    %1066 = vmatmul.mubr.f32.gmra.mrb[0].mxu0 %v161
    %v1067 = vpop.f32.mrb[0].mxu0
    %v1068 = vadd.f32 %v843, %v1067
    %v1069 = vpop.f32.mrb[0].mxu0
    %1070 = vmatprep.mubr.f32.mxu0 0.0
    %1071 = vmatmul.mubr.f32.gmra.mrb[0].mxu0 %v162
    %v1072 = vpop.f32.mrb[0].mxu0
    %v1073 = vadd.f32 %v848, %v1072
    %v1074 = vpop.f32.mrb[0].mxu0
    %1075 = vmatprep.mubr.f32.mxu0 0.0
    %1076 = vmatmul.mubr.f32.gmra.mrb[0].mxu0 %v163
    %v1077 = vpop.f32.mrb[0].mxu0
    %v1078 = vadd.f32 %v853, %v1077
    %v1079 = vpop.f32.mrb[0].mxu0
    %1080 = vmatprep.mubr.f32.mxu0 0.0
    %1081 = vmatmul.mubr.f32.gmra.mrb[0].mxu0 %v164
    %v1082 = vpop.f32.mrb[0].mxu0
    %v1083 = vadd.f32 %v858, %v1082
    %v1084 = vpop.f32.mrb[0].mxu0
    %1085 = vmatprep.mubr.f32.mxu0 0.0
    %1086 = vmatmul.mubr.f32.gmra.mrb[0].mxu0 %v165
    %v1087 = vpop.f32.mrb[0].mxu0
    %v1088 = vadd.f32 %v863, %v1087
    %v1089 = vpop.f32.mrb[0].mxu0
    %1090 = vmatprep.mubr.f32.mxu0 0.0
    %1091 = vmatmul.mubr.f32.gmra.mrb[0].mxu0 %v166
    %v1092 = vpop.f32.mrb[0].mxu0
    %v1093 = vadd.f32 %v868, %v1092
    %v1094 = vpop.f32.mrb[0].mxu0
    %1095 = vmatprep.mubr.f32.mxu0 0.0
    %1096 = vmatmul.mubr.f32.gmra.mrb[0].mxu0 %v167
    %v1097 = vpop.f32.mrb[0].mxu0
    %v1098 = vadd.f32 %v873, %v1097
    %v1099 = vpop.f32.mrb[0].mxu0
    %1100 = vmatprep.mubr.f32.mxu0 0.0
    %1101 = vmatmul.mubr.f32.gmra.mrb[0].mxu0 %v168
    %v1102 = vpop.f32.mrb[0].mxu0
    %v1103 = vadd.f32 %v878, %v1102
    %v1104 = vpop.f32.mrb[0].mxu0
    %1105 = vmatprep.mubr.f32.mxu0 0.0
    %1106 = vmatmul.mubr.f32.gmra.mrb[0].mxu0 %v169
    %v1107 = vpop.f32.mrb[0].mxu0
    %v1108 = vadd.f32 %v883, %v1107
    %v1109 = vpop.f32.mrb[0].mxu0
    %1110 = vmatprep.mubr.f32.mxu0 0.0
    %1111 = vmatmul.mubr.f32.gmra.mrb[0].mxu0 %v170
    %v1112 = vpop.f32.mrb[0].mxu0
    %v1113 = vadd.f32 %v888, %v1112
    %v1114 = vpop.f32.mrb[0].mxu0
    %1115 = vmatprep.mubr.f32.mxu0 0.0
    %1116 = vmatmul.mubr.f32.gmra.mrb[0].mxu0 %v171
    %v1117 = vpop.f32.mrb[0].mxu0
    %v1118 = vadd.f32 %v893, %v1117
    %v1119 = vpop.f32.mrb[0].mxu0
    %1120 = vmatprep.mubr.f32.mxu0 0.0
    %1121 = vmatmul.mubr.f32.gmra.mrb[0].mxu0 %v172
    %v1122 = vpop.f32.mrb[0].mxu0
    %v1123 = vadd.f32 %v898, %v1122
    %v1124 = vpop.f32.mrb[0].mxu0
    %1125 = vmatprep.mubr.f32.mxu0 0.0
    %1126 = vmatmul.mubr.f32.gmra.mrb[0].mxu0 %v173
    %v1127 = vpop.f32.mrb[0].mxu0
    %v1128 = vadd.f32 %v903, %v1127
    %v1129 = vpop.f32.mrb[0].mxu0
    %1130 = vmatprep.mubr.f32.mxu0 0.0
    %1131 = vmatmul.mubr.f32.gmra.mrb[0].mxu0 %v174
    %v1132 = vpop.f32.mrb[0].mxu0
    %v1133 = vadd.f32 %v908, %v1132
    %v1134 = vpop.f32.mrb[0].mxu0
    %1135 = vmatprep.mubr.f32.mxu0 0.0
    %1136 = vmatmul.mubr.f32.gmra.mrb[0].mxu0 %v175
    %v1137 = vpop.f32.mrb[0].mxu0
    %v1138 = vadd.f32 %v913, %v1137
    %v1139 = vpop.f32.mrb[0].mxu0
    %1140 = vmatprep.mubr.f32.mxu0 0.0
    %1141 = vmatmul.mubr.f32.gmra.mrb[0].mxu0 %v176
    %v1142 = vpop.f32.mrb[0].mxu0
    %v1143 = vadd.f32 %v918, %v1142
    %v1144 = vpop.f32.mrb[0].mxu0
    %1145 = vmatprep.mubr.f32.mxu0 0.0
    %1146 = vmatmul.mubr.f32.gmra.mrb[0].mxu0 %v177
    %v1147 = vpop.f32.mrb[0].mxu0
    %v1148 = vadd.f32 %v923, %v1147
    %v1149 = vpop.f32.mrb[0].mxu0
    %1150 = vmatprep.mubr.f32.mxu0 0.0
    %1151 = vmatmul.mubr.f32.gmra.mrb[0].mxu0 %v178
    %v1152 = vpop.f32.mrb[0].mxu0
    %v1153 = vadd.f32 %v928, %v1152
    %v1154 = vpop.f32.mrb[0].mxu0
    %1155 = vmatprep.mubr.f32.mxu0 0.0
    %1156 = vmatmul.mubr.f32.gmra.mrb[0].mxu0 %v179
    %v1157 = vpop.f32.mrb[0].mxu0
    %v1158 = vadd.f32 %v933, %v1157
    %v1159 = vpop.f32.mrb[0].mxu0
    %1160 = vmatprep.mubr.f32.mxu0 0.0
    %1161 = vmatmul.mubr.f32.gmra.mrb[0].mxu0 %v180
    %v1162 = vpop.f32.mrb[0].mxu0
    %v1163 = vadd.f32 %v938, %v1162
    %v1164 = vpop.f32.mrb[0].mxu0
    %1165 = vmatprep.mubr.f32.mxu0 0.0
    %1166 = vmatmul.mubr.f32.gmra.mrb[0].mxu0 %v181
    %v1167 = vpop.f32.mrb[0].mxu0
    %v1168 = vadd.f32 %v943, %v1167
    %v1169 = vpop.f32.mrb[0].mxu0
    %1170 = vmatprep.mubr.f32.mxu0 0.0
    %1171 = vmatmul.mubr.f32.gmra.mrb[0].mxu0 %v182
    %v1172 = vpop.f32.mrb[0].mxu0
    %v1173 = vadd.f32 %v948, %v1172
    %v1174 = vpop.f32.mrb[0].mxu0
    %1175 = vmatprep.mubr.f32.mxu0 0.0
    %1176 = vmatmul.mubr.f32.gmra.mrb[0].mxu0 %v183
    %v1177 = vpop.f32.mrb[0].mxu0
    %v1178 = vadd.f32 %v953, %v1177
    %v1179 = vpop.f32.mrb[0].mxu0
    %1180 = vmatprep.mubr.f32.mxu0 0.0
    %1181 = vmatmul.mubr.f32.gmra.mrb[0].mxu0 %v184
    %v1182 = vpop.f32.mrb[0].mxu0
    %v1183 = vadd.f32 %v958, %v1182
    %v1184 = vpop.f32.mrb[0].mxu0
    %1185 = vmatprep.mubr.f32.mxu0 0.0
    %1186 = vmatmul.mubr.f32.gmra.mrb[0].mxu0 %v185
    %v1187 = vpop.f32.mrb[0].mxu0
    %v1188 = vadd.f32 %v963, %v1187
    %v1189 = vpop.f32.mrb[0].mxu0
    %1190 = vmatprep.mubr.f32.mxu0 0.0
    %1191 = vmatmul.mubr.f32.gmra.mrb[0].mxu0 %v186
    %v1192 = vpop.f32.mrb[0].mxu0
    %v1193 = vadd.f32 %v968, %v1192
    %v1194 = vpop.f32.mrb[0].mxu0
    %1195 = vmatprep.mubr.f32.mxu0 0.0
    %1196 = vmatmul.mubr.f32.gmra.mrb[0].mxu0 %v187
    %v1197 = vpop.f32.mrb[0].mxu0
    %v1198 = vadd.f32 %v973, %v1197
    %v1199 = vpop.f32.mrb[0].mxu0
    %1200 = vmatprep.mubr.f32.mxu0 0.0
    %1201 = vmatmul.mubr.f32.gmra.mrb[0].mxu0 %v188
    %v1202 = vpop.f32.mrb[0].mxu0
    %v1203 = vadd.f32 %v978, %v1202
    %v1204 = vpop.f32.mrb[0].mxu0
    %1205 = vmatprep.mubr.f32.mxu0 0.0
    %1206 = vmatmul.mubr.f32.gmra.mrb[0].mxu0 %v189
    %v1207 = vpop.f32.mrb[0].mxu0
    %v1208 = vadd.f32 %v983, %v1207
    %v1209 = vpop.f32.mrb[0].mxu0
    %1210 = vmatprep.mubr.f32.mxu0 0.0
    %1211 = vmatmul.mubr.f32.gmra.mrb[0].mxu0 %v190
    %v1212 = vpop.f32.mrb[0].mxu0
    %v1213 = vadd.f32 %v988, %v1212
    %v1214 = vpop.f32.mrb[0].mxu0
    %1215 = vmatprep.mubr.f32.mxu0 0.0
    %1216 = vmatmul.mubr.f32.gmra.mrb[0].mxu0 %v191
    %v1217 = vpop.f32.mrb[0].mxu0
    %v1218 = vadd.f32 %v993, %v1217
    %v1219 = vpop.f32.mrb[0].mxu0
    %1220 = vmatprep.mubr.f32.mxu0 0.0
    %1221 = vmatmul.mubr.f32.gmra.mrb[0].mxu0 %v192
    %v1222 = vpop.f32.mrb[0].mxu0
    %v1223 = vadd.f32 %v998, %v1222
    %v1224 = vpop.f32.mrb[0].mxu0
    %1225 = vdwg.mxu0
    %v1226 = vld [vmem:[#allocation2 + $0x2] sm:$0xff]
    %v1227 = vld [vmem:[#allocation2 + $0xa] sm:$0xff]
    %v1228 = vld [vmem:[#allocation2 + $0x1a] sm:$0xff]
    %v1229 = vld [vmem:[#allocation2 + $0x22] sm:$0xff]
    %v1230 = vld [vmem:[#allocation2 + $0x32] sm:$0xff]
    %v1231 = vld [vmem:[#allocation2 + $0x3a] sm:$0xff]
    %v1232 = vld [vmem:[#allocation2 + $0x4a] sm:$0xff]
    %v1233 = vld [vmem:[#allocation2 + $0x52] sm:$0xff]
    %v1234 = vld [vmem:[#allocation2 + $0x62] sm:$0xff]
    %v1235 = vld [vmem:[#allocation2 + $0x6a] sm:$0xff]
    %v1236 = vld [vmem:[#allocation2 + $0x7a] sm:$0xff]
    %v1237 = vld [vmem:[#allocation2 + $0x82] sm:$0xff]
    %v1238 = vld [vmem:[#allocation2 + $0x92] sm:$0xff]
    %v1239 = vld [vmem:[#allocation2 + $0x9a] sm:$0xff]
    %v1240 = vld [vmem:[#allocation2 + $0xaa] sm:$0xff]
    %v1241 = vld [vmem:[#allocation2 + $0xb2] sm:$0xff]
    %v1242 = vld [vmem:[#allocation2 + $0xc2] sm:$0xff]
    %v1243 = vld [vmem:[#allocation2 + $0xca] sm:$0xff]
    %v1244 = vld [vmem:[#allocation2 + $0xda] sm:$0xff]
    %v1245 = vld [vmem:[#allocation2 + $0xe2] sm:$0xff]
    %v1246 = vld [vmem:[#allocation2 + $0xf2] sm:$0xff]
    %v1247 = vld [vmem:[#allocation2 + $0xfa] sm:$0xff]
    %v1248 = vld [vmem:[#allocation2 + $0x10a] sm:$0xff]
    %v1249 = vld [vmem:[#allocation2 + $0x112] sm:$0xff]
    %v1250 = vld [vmem:[#allocation2 + $0x122] sm:$0xff]
    %v1251 = vld [vmem:[#allocation2 + $0x12a] sm:$0xff]
    %v1252 = vld [vmem:[#allocation2 + $0x13a] sm:$0xff]
    %v1253 = vld [vmem:[#allocation2 + $0x142] sm:$0xff]
    %v1254 = vld [vmem:[#allocation2 + $0x152] sm:$0xff]
    %v1255 = vld [vmem:[#allocation2 + $0x15a] sm:$0xff]
    %v1256 = vld [vmem:[#allocation2 + $0x16a] sm:$0xff]
    %v1257 = vld [vmem:[#allocation2 + $0x172] sm:$0xff]
    %v1258 = vld [vmem:[#allocation2 + $0x182] sm:$0xff]
    %v1259 = vld [vmem:[#allocation2 + $0x18a] sm:$0xff]
    %v1260 = vld [vmem:[#allocation2 + $0x19a] sm:$0xff]
    %v1261 = vld [vmem:[#allocation2 + $0x1a2] sm:$0xff]
    %s1262 = scalar_lea.vmem %s1, 768
    %v1263 = vld [vmem:[%s1262] sm:$0xff]
    %v1264 = vld [vmem:[%s1262 + $0x8] sm:$0xff]
    %v1265 = vld [vmem:[%s1262 + $0x10] sm:$0xff]
    %v1266 = vld [vmem:[%s1262 + $0x18] sm:$0xff]
    %v1267 = vld [vmem:[%s1262 + $0x20] sm:$0xff]
    %v1268 = vld [vmem:[%s1262 + $0x28] sm:$0xff]
    %v1269 = vld [vmem:[%s1262 + $0x30] sm:$0xff]
    %v1270 = vld [vmem:[%s1262 + $0x38] sm:$0xff]
    %v1271 = vld [vmem:[%s1262 + $0x40] sm:$0xff]
    %v1272 = vld [vmem:[%s1262 + $0x48] sm:$0xff]
    %v1273 = vld [vmem:[%s1262 + $0x50] sm:$0xff]
    %v1274 = vld [vmem:[%s1262 + $0x58] sm:$0xff]
    %v1275 = vld [vmem:[%s1262 + $0x60] sm:$0xff]
    %v1276 = vld [vmem:[%s1262 + $0x68] sm:$0xff]
    %v1277 = vld [vmem:[%s1262 + $0x70] sm:$0xff]
    %v1278 = vld [vmem:[%s1262 + $0x78] sm:$0xff]
    %v1279 = vld [vmem:[%s1262 + $0x80] sm:$0xff]
    %v1280 = vld [vmem:[%s1262 + $0x88] sm:$0xff]
    %v1281 = vld [vmem:[%s1262 + $0x90] sm:$0xff]
    %v1282 = vld [vmem:[%s1262 + $0x98] sm:$0xff]
    %v1283 = vld [vmem:[%s1262 + $0xa0] sm:$0xff]
    %v1284 = vld [vmem:[%s1262 + $0xa8] sm:$0xff]
    %v1285 = vld [vmem:[%s1262 + $0xb0] sm:$0xff]
    %v1286 = vld [vmem:[%s1262 + $0xb8] sm:$0xff]
    %v1287 = vld [vmem:[%s1262 + $0xc0] sm:$0xff]
    %v1288 = vld [vmem:[%s1262 + $0xc8] sm:$0xff]
    %v1289 = vld [vmem:[%s1262 + $0xd0] sm:$0xff]
    %v1290 = vld [vmem:[%s1262 + $0xd8] sm:$0xff]
    %v1291 = vld [vmem:[%s1262 + $0xe0] sm:$0xff]
    %v1292 = vld [vmem:[%s1262 + $0xe8] sm:$0xff]
    %v1293 = vld [vmem:[%s1262 + $0xf0] sm:$0xff]
    %v1294 = vld [vmem:[%s1262 + $0xf8] sm:$0xff]
    %v1295 = vld [vmem:[%s1262 + $0x100] sm:$0xff]
    %v1296 = vld [vmem:[%s1262 + $0x108] sm:$0xff]
    %v1297 = vld [vmem:[%s1262 + $0x110] sm:$0xff]
    %v1298 = vld [vmem:[%s1262 + $0x118] sm:$0xff]
    %v1299 = vld [vmem:[%s1262 + $0x120] sm:$0xff]
    %v1300 = vld [vmem:[%s1262 + $0x128] sm:$0xff]
    %v1301 = vld [vmem:[%s1262 + $0x130] sm:$0xff]
    %v1302 = vld [vmem:[%s1262 + $0x138] sm:$0xff]
    %v1303 = vld [vmem:[%s1262 + $0x140] sm:$0xff]
    %v1304 = vld [vmem:[%s1262 + $0x148] sm:$0xff]
    %v1305 = vld [vmem:[%s1262 + $0x150] sm:$0xff]
    %v1306 = vld [vmem:[%s1262 + $0x158] sm:$0xff]
    %v1307 = vld [vmem:[%s1262 + $0x160] sm:$0xff]
    %v1308 = vld [vmem:[%s1262 + $0x168] sm:$0xff]
    %v1309 = vld [vmem:[%s1262 + $0x170] sm:$0xff]
    %v1310 = vld [vmem:[%s1262 + $0x178] sm:$0xff]
    %1311 = vmatprep.subr.mxu0 0.0
    %1312 = vmatpush1.msra.mxu0 %v1263
    %1313 = vmatprep.subr.mxu0 0.0
    %1314 = vmatpush1.msra.mxu0 %v1264
    %1315 = vmatprep.subr.mxu0 0.0
    %1316 = vmatpush1.msra.mxu0 %v1265
    %1317 = vmatprep.subr.mxu0 0.0
    %1318 = vmatpush1.msra.mxu0 %v1266
    %1319 = vmatprep.subr.mxu0 0.0
    %1320 = vmatpush1.msra.mxu0 %v1267
    %1321 = vmatprep.subr.mxu0 0.0
    %1322 = vmatpush1.msra.mxu0 %v1268
    %1323 = vmatprep.subr.mxu0 0.0
    %1324 = vmatpush1.msra.mxu0 %v1269
    %1325 = vmatprep.subr.mxu0 0.0
    %1326 = vmatpush1.msra.mxu0 %v1270
    %1327 = vmatprep.subr.mxu0 0.0
    %1328 = vmatpush1.msra.mxu0 %v1271
    %1329 = vmatprep.subr.mxu0 0.0
    %1330 = vmatpush1.msra.mxu0 %v1272
    %1331 = vmatprep.subr.mxu0 0.0
    %1332 = vmatpush1.msra.mxu0 %v1273
    %1333 = vmatprep.subr.mxu0 0.0
    %1334 = vmatpush1.msra.mxu0 %v1274
    %1335 = vmatprep.subr.mxu0 0.0
    %1336 = vmatpush1.msra.mxu0 %v1275
    %1337 = vmatprep.subr.mxu0 0.0
    %1338 = vmatpush1.msra.mxu0 %v1276
    %1339 = vmatprep.subr.mxu0 0.0
    %1340 = vmatpush1.msra.mxu0 %v1277
    %1341 = vmatprep.subr.mxu0 0.0
    %1342 = vmatpush1.msra.mxu0 %v1278
    %1343 = vmatprep.subr.mxu0 0.0
    %1344 = vmatpush1.msra.mxu0 %v1279
    %1345 = vmatprep.subr.mxu0 0.0
    %1346 = vmatpush1.msra.mxu0 %v1280
    %1347 = vmatprep.subr.mxu0 0.0
    %1348 = vmatpush1.msra.mxu0 %v1281
    %1349 = vmatprep.subr.mxu0 0.0
    %1350 = vmatpush1.msra.mxu0 %v1282
    %1351 = vmatprep.subr.mxu0 0.0
    %1352 = vmatpush1.msra.mxu0 %v1283
    %1353 = vmatprep.subr.mxu0 0.0
    %1354 = vmatpush1.msra.mxu0 %v1284
    %1355 = vmatprep.subr.mxu0 0.0
    %1356 = vmatpush1.msra.mxu0 %v1285
    %1357 = vmatprep.subr.mxu0 0.0
    %1358 = vmatpush1.msra.mxu0 %v1286
    %1359 = vmatprep.subr.mxu0 0.0
    %1360 = vmatpush1.msra.mxu0 %v1287
    %1361 = vmatprep.subr.mxu0 0.0
    %1362 = vmatpush1.msra.mxu0 %v1288
    %1363 = vmatprep.subr.mxu0 0.0
    %1364 = vmatpush1.msra.mxu0 %v1289
    %1365 = vmatprep.subr.mxu0 0.0
    %1366 = vmatpush1.msra.mxu0 %v1290
    %1367 = vmatprep.subr.mxu0 0.0
    %1368 = vmatpush1.msra.mxu0 %v1291
    %1369 = vmatprep.subr.mxu0 0.0
    %1370 = vmatpush1.msra.mxu0 %v1292
    %1371 = vmatprep.subr.mxu0 0.0
    %1372 = vmatpush1.msra.mxu0 %v1293
    %1373 = vmatprep.subr.mxu0 0.0
    %1374 = vmatpush1.msra.mxu0 %v1294
    %1375 = vmatprep.mubr.f32.mxu0 %v1228
    %1376 = vmatmul.mubr.f32.gmra.mrb[0].mxu0 %v1226
    %v1377 = vpop.f32.mrb[0].mxu0
    %v1378 = vadd.f32 0.0, %v1377
    %v1379 = vpop.f32.mrb[0].mxu0
    %1380 = vmatprep.mubr.f32.mxu0 %v1229
    %1381 = vmatmul.mubr.f32.gmra.mrb[0].mxu0 %v1227
    %v1382 = vpop.f32.mrb[0].mxu0
    %v1383 = vadd.f32 0.0, %v1382
    %v1384 = vpop.f32.mrb[0].mxu0
    %1385 = vmatprep.mubr.f32.mxu0 %v1230
    %1386 = vmatmul.mubr.f32.gmra.mrb[0].mxu0 %v1228
    %v1387 = vpop.f32.mrb[0].mxu0
    %v1388 = vadd.f32 0.0, %v1387
    %v1389 = vpop.f32.mrb[0].mxu0
    %1390 = vmatprep.mubr.f32.mxu0 %v1231
    %1391 = vmatmul.mubr.f32.gmra.mrb[0].mxu0 %v1229
    %v1392 = vpop.f32.mrb[0].mxu0
    %v1393 = vadd.f32 0.0, %v1392
    %v1394 = vpop.f32.mrb[0].mxu0
    %1395 = vmatprep.mubr.f32.mxu0 %v1232
    %1396 = vmatmul.mubr.f32.gmra.mrb[0].mxu0 %v1230
    %v1397 = vpop.f32.mrb[0].mxu0
    %v1398 = vadd.f32 0.0, %v1397
    %v1399 = vpop.f32.mrb[0].mxu0
    %1400 = vmatprep.mubr.f32.mxu0 %v1233
    %1401 = vmatmul.mubr.f32.gmra.mrb[0].mxu0 %v1231
    %v1402 = vpop.f32.mrb[0].mxu0
    %v1403 = vadd.f32 0.0, %v1402
    %v1404 = vpop.f32.mrb[0].mxu0
    %1405 = vmatprep.mubr.f32.mxu0 %v1234
    %1406 = vmatmul.mubr.f32.gmra.mrb[0].mxu0 %v1232
    %v1407 = vpop.f32.mrb[0].mxu0
    %v1408 = vadd.f32 0.0, %v1407
    %v1409 = vpop.f32.mrb[0].mxu0
    %1410 = vmatprep.mubr.f32.mxu0 %v1235
    %1411 = vmatmul.mubr.f32.gmra.mrb[0].mxu0 %v1233
    %v1412 = vpop.f32.mrb[0].mxu0
    %v1413 = vadd.f32 0.0, %v1412
    %v1414 = vpop.f32.mrb[0].mxu0
    %1415 = vmatprep.mubr.f32.mxu0 %v1236
    %1416 = vmatmul.mubr.f32.gmra.mrb[0].mxu0 %v1234
    %v1417 = vpop.f32.mrb[0].mxu0
    %v1418 = vadd.f32 0.0, %v1417
    %v1419 = vpop.f32.mrb[0].mxu0
    %1420 = vmatprep.mubr.f32.mxu0 %v1237
    %1421 = vmatmul.mubr.f32.gmra.mrb[0].mxu0 %v1235
    %v1422 = vpop.f32.mrb[0].mxu0
    %v1423 = vadd.f32 0.0, %v1422
    %v1424 = vpop.f32.mrb[0].mxu0
    %1425 = vmatprep.mubr.f32.mxu0 %v1238
    %1426 = vmatmul.mubr.f32.gmra.mrb[0].mxu0 %v1236
    %v1427 = vpop.f32.mrb[0].mxu0
    %v1428 = vadd.f32 0.0, %v1427
    %v1429 = vpop.f32.mrb[0].mxu0
    %1430 = vmatprep.mubr.f32.mxu0 %v1239
    %1431 = vmatmul.mubr.f32.gmra.mrb[0].mxu0 %v1237
    %v1432 = vpop.f32.mrb[0].mxu0
    %v1433 = vadd.f32 0.0, %v1432
    %v1434 = vpop.f32.mrb[0].mxu0
    %1435 = vmatprep.mubr.f32.mxu0 %v1240
    %1436 = vmatmul.mubr.f32.gmra.mrb[0].mxu0 %v1238
    %v1437 = vpop.f32.mrb[0].mxu0
    %v1438 = vadd.f32 0.0, %v1437
    %v1439 = vpop.f32.mrb[0].mxu0
    %1440 = vmatprep.mubr.f32.mxu0 %v1241
    %1441 = vmatmul.mubr.f32.gmra.mrb[0].mxu0 %v1239
    %v1442 = vpop.f32.mrb[0].mxu0
    %v1443 = vadd.f32 0.0, %v1442
    %v1444 = vpop.f32.mrb[0].mxu0
    %1445 = vmatprep.mubr.f32.mxu0 %v1242
    %1446 = vmatmul.mubr.f32.gmra.mrb[0].mxu0 %v1240
    %v1447 = vpop.f32.mrb[0].mxu0
    %v1448 = vadd.f32 0.0, %v1447
    %v1449 = vpop.f32.mrb[0].mxu0
    %1450 = vmatprep.mubr.f32.mxu0 %v1243
    %1451 = vmatmul.mubr.f32.gmra.mrb[0].mxu0 %v1241
    %v1452 = vpop.f32.mrb[0].mxu0
    %v1453 = vadd.f32 0.0, %v1452
    %v1454 = vpop.f32.mrb[0].mxu0
    %1455 = vmatprep.mubr.f32.mxu0 %v1244
    %1456 = vmatmul.mubr.f32.gmra.mrb[0].mxu0 %v1242
    %v1457 = vpop.f32.mrb[0].mxu0
    %v1458 = vadd.f32 0.0, %v1457
    %v1459 = vpop.f32.mrb[0].mxu0
    %1460 = vmatprep.mubr.f32.mxu0 %v1245
    %1461 = vmatmul.mubr.f32.gmra.mrb[0].mxu0 %v1243
    %v1462 = vpop.f32.mrb[0].mxu0
    %v1463 = vadd.f32 0.0, %v1462
    %v1464 = vpop.f32.mrb[0].mxu0
    %1465 = vmatprep.mubr.f32.mxu0 %v1246
    %1466 = vmatmul.mubr.f32.gmra.mrb[0].mxu0 %v1244
    %v1467 = vpop.f32.mrb[0].mxu0
    %v1468 = vadd.f32 0.0, %v1467
    %v1469 = vpop.f32.mrb[0].mxu0
    %1470 = vmatprep.mubr.f32.mxu0 %v1247
    %1471 = vmatmul.mubr.f32.gmra.mrb[0].mxu0 %v1245
    %v1472 = vpop.f32.mrb[0].mxu0
    %v1473 = vadd.f32 0.0, %v1472
    %v1474 = vpop.f32.mrb[0].mxu0
    %1475 = vmatprep.mubr.f32.mxu0 %v1248
    %1476 = vmatmul.mubr.f32.gmra.mrb[0].mxu0 %v1246
    %v1477 = vpop.f32.mrb[0].mxu0
    %v1478 = vadd.f32 0.0, %v1477
    %v1479 = vpop.f32.mrb[0].mxu0
    %1480 = vmatprep.mubr.f32.mxu0 %v1249
    %1481 = vmatmul.mubr.f32.gmra.mrb[0].mxu0 %v1247
    %v1482 = vpop.f32.mrb[0].mxu0
    %v1483 = vadd.f32 0.0, %v1482
    %v1484 = vpop.f32.mrb[0].mxu0
    %1485 = vmatprep.mubr.f32.mxu0 %v1250
    %1486 = vmatmul.mubr.f32.gmra.mrb[0].mxu0 %v1248
    %v1487 = vpop.f32.mrb[0].mxu0
    %v1488 = vadd.f32 0.0, %v1487
    %v1489 = vpop.f32.mrb[0].mxu0
    %1490 = vmatprep.mubr.f32.mxu0 %v1251
    %1491 = vmatmul.mubr.f32.gmra.mrb[0].mxu0 %v1249
    %v1492 = vpop.f32.mrb[0].mxu0
    %v1493 = vadd.f32 0.0, %v1492
    %v1494 = vpop.f32.mrb[0].mxu0
    %1495 = vmatprep.mubr.f32.mxu0 %v1252
    %1496 = vmatmul.mubr.f32.gmra.mrb[0].mxu0 %v1250
    %v1497 = vpop.f32.mrb[0].mxu0
    %v1498 = vadd.f32 0.0, %v1497
    %v1499 = vpop.f32.mrb[0].mxu0
    %1500 = vmatprep.mubr.f32.mxu0 %v1253
    %1501 = vmatmul.mubr.f32.gmra.mrb[0].mxu0 %v1251
    %v1502 = vpop.f32.mrb[0].mxu0
    %v1503 = vadd.f32 0.0, %v1502
    %v1504 = vpop.f32.mrb[0].mxu0
    %1505 = vmatprep.mubr.f32.mxu0 %v1254
    %1506 = vmatmul.mubr.f32.gmra.mrb[0].mxu0 %v1252
    %v1507 = vpop.f32.mrb[0].mxu0
    %v1508 = vadd.f32 0.0, %v1507
    %v1509 = vpop.f32.mrb[0].mxu0
    %1510 = vmatprep.mubr.f32.mxu0 %v1255
    %1511 = vmatmul.mubr.f32.gmra.mrb[0].mxu0 %v1253
    %v1512 = vpop.f32.mrb[0].mxu0
    %v1513 = vadd.f32 0.0, %v1512
    %v1514 = vpop.f32.mrb[0].mxu0
    %1515 = vmatprep.mubr.f32.mxu0 %v1256
    %1516 = vmatmul.mubr.f32.gmra.mrb[0].mxu0 %v1254
    %v1517 = vpop.f32.mrb[0].mxu0
    %v1518 = vadd.f32 0.0, %v1517
    %v1519 = vpop.f32.mrb[0].mxu0
    %1520 = vmatprep.mubr.f32.mxu0 %v1257
    %1521 = vmatmul.mubr.f32.gmra.mrb[0].mxu0 %v1255
    %v1522 = vpop.f32.mrb[0].mxu0
    %v1523 = vadd.f32 0.0, %v1522
    %v1524 = vpop.f32.mrb[0].mxu0
    %1525 = vmatprep.mubr.f32.mxu0 %v1258
    %1526 = vmatmul.mubr.f32.gmra.mrb[0].mxu0 %v1256
    %v1527 = vpop.f32.mrb[0].mxu0
    %v1528 = vadd.f32 0.0, %v1527
    %v1529 = vpop.f32.mrb[0].mxu0
    %1530 = vmatprep.mubr.f32.mxu0 %v1259
    %1531 = vmatmul.mubr.f32.gmra.mrb[0].mxu0 %v1257
    %v1532 = vpop.f32.mrb[0].mxu0
    %v1533 = vadd.f32 0.0, %v1532
    %v1534 = vpop.f32.mrb[0].mxu0
    %1535 = vdwg.mxu0
    %1536 = vmatprep.subr.mxu0 0.0
    %1537 = vmatpush1.msra.mxu0 %v1295
    %1538 = vmatprep.subr.mxu0 0.0
    %1539 = vmatpush1.msra.mxu0 %v1296
    %1540 = vmatprep.subr.mxu0 0.0
    %1541 = vmatpush1.msra.mxu0 %v1297
    %1542 = vmatprep.subr.mxu0 0.0
    %1543 = vmatpush1.msra.mxu0 %v1298
    %1544 = vmatprep.subr.mxu0 0.0
    %1545 = vmatpush1.msra.mxu0 %v1299
    %1546 = vmatprep.subr.mxu0 0.0
    %1547 = vmatpush1.msra.mxu0 %v1300
    %1548 = vmatprep.subr.mxu0 0.0
    %1549 = vmatpush1.msra.mxu0 %v1301
    %1550 = vmatprep.subr.mxu0 0.0
    %1551 = vmatpush1.msra.mxu0 %v1302
    %1552 = vmatprep.subr.mxu0 0.0
    %1553 = vmatpush1.msra.mxu0 %v1303
    %1554 = vmatprep.subr.mxu0 0.0
    %1555 = vmatpush1.msra.mxu0 %v1304
    %1556 = vmatprep.subr.mxu0 0.0
    %1557 = vmatpush1.msra.mxu0 %v1305
    %1558 = vmatprep.subr.mxu0 0.0
    %1559 = vmatpush1.msra.mxu0 %v1306
    %1560 = vmatprep.subr.mxu0 0.0
    %1561 = vmatpush1.msra.mxu0 %v1307
    %1562 = vmatprep.subr.mxu0 0.0
    %1563 = vmatpush1.msra.mxu0 %v1308
    %1564 = vmatprep.subr.mxu0 0.0
    %1565 = vmatpush1.msra.mxu0 %v1309
    %1566 = vmatprep.subr.mxu0 0.0
    %1567 = vmatpush1.msra.mxu0 %v1310
    %1568 = vmatprep.subr.mxu0 0.0
    %1569 = vmatpush1.msra.mxu0 0.0
    %1570 = vmatprep.subr.mxu0 0.0
    %1571 = vmatpush1.msra.mxu0 0.0
    %1572 = vmatprep.subr.mxu0 0.0
    %1573 = vmatpush1.msra.mxu0 0.0
    %1574 = vmatprep.subr.mxu0 0.0
    %1575 = vmatpush1.msra.mxu0 0.0
    %1576 = vmatprep.subr.mxu0 0.0
    %1577 = vmatpush1.msra.mxu0 0.0
    %1578 = vmatprep.subr.mxu0 0.0
    %1579 = vmatpush1.msra.mxu0 0.0
    %1580 = vmatprep.subr.mxu0 0.0
    %1581 = vmatpush1.msra.mxu0 0.0
    %1582 = vmatprep.subr.mxu0 0.0
    %1583 = vmatpush1.msra.mxu0 0.0
    %1584 = vmatprep.subr.mxu0 0.0
    %1585 = vmatpush1.msra.mxu0 0.0
    %1586 = vmatprep.subr.mxu0 0.0
    %1587 = vmatpush1.msra.mxu0 0.0
    %1588 = vmatprep.subr.mxu0 0.0
    %1589 = vmatpush1.msra.mxu0 0.0
    %1590 = vmatprep.subr.mxu0 0.0
    %1591 = vmatpush1.msra.mxu0 0.0
    %1592 = vmatprep.subr.mxu0 0.0
    %1593 = vmatpush1.msra.mxu0 0.0
    %1594 = vmatprep.subr.mxu0 0.0
    %1595 = vmatpush1.msra.mxu0 0.0
    %1596 = vmatprep.subr.mxu0 0.0
    %1597 = vmatpush1.msra.mxu0 0.0
    %1598 = vmatprep.subr.mxu0 0.0
    %1599 = vmatpush1.msra.mxu0 0.0
    %1600 = vmatprep.mubr.f32.mxu0 0.0
    %1601 = vmatmul.mubr.f32.gmra.mrb[0].mxu0 %v1230
    %v1602 = vpop.f32.mrb[0].mxu0
    %v1603 = vadd.f32 %v1378, %v1602
    %v1604 = vpop.f32.mrb[0].mxu0
    %1605 = vmatprep.mubr.f32.mxu0 0.0
    %1606 = vmatmul.mubr.f32.gmra.mrb[0].mxu0 %v1231
    %v1607 = vpop.f32.mrb[0].mxu0
    %v1608 = vadd.f32 %v1383, %v1607
    %v1609 = vpop.f32.mrb[0].mxu0
    %1610 = vmatprep.mubr.f32.mxu0 0.0
    %1611 = vmatmul.mubr.f32.gmra.mrb[0].mxu0 %v1232
    %v1612 = vpop.f32.mrb[0].mxu0
    %v1613 = vadd.f32 %v1388, %v1612
    %v1614 = vpop.f32.mrb[0].mxu0
    %1615 = vmatprep.mubr.f32.mxu0 0.0
    %1616 = vmatmul.mubr.f32.gmra.mrb[0].mxu0 %v1233
    %v1617 = vpop.f32.mrb[0].mxu0
    %v1618 = vadd.f32 %v1393, %v1617
    %v1619 = vpop.f32.mrb[0].mxu0
    %1620 = vmatprep.mubr.f32.mxu0 0.0
    %1621 = vmatmul.mubr.f32.gmra.mrb[0].mxu0 %v1234
    %v1622 = vpop.f32.mrb[0].mxu0
    %v1623 = vadd.f32 %v1398, %v1622
    %v1624 = vpop.f32.mrb[0].mxu0
    %1625 = vmatprep.mubr.f32.mxu0 0.0
    %1626 = vmatmul.mubr.f32.gmra.mrb[0].mxu0 %v1235
    %v1627 = vpop.f32.mrb[0].mxu0
    %v1628 = vadd.f32 %v1403, %v1627
    %v1629 = vpop.f32.mrb[0].mxu0
    %1630 = vmatprep.mubr.f32.mxu0 0.0
    %1631 = vmatmul.mubr.f32.gmra.mrb[0].mxu0 %v1236
    %v1632 = vpop.f32.mrb[0].mxu0
    %v1633 = vadd.f32 %v1408, %v1632
    %v1634 = vpop.f32.mrb[0].mxu0
    %1635 = vmatprep.mubr.f32.mxu0 0.0
    %1636 = vmatmul.mubr.f32.gmra.mrb[0].mxu0 %v1237
    %v1637 = vpop.f32.mrb[0].mxu0
    %v1638 = vadd.f32 %v1413, %v1637
    %v1639 = vpop.f32.mrb[0].mxu0
    %1640 = vmatprep.mubr.f32.mxu0 0.0
    %1641 = vmatmul.mubr.f32.gmra.mrb[0].mxu0 %v1238
    %v1642 = vpop.f32.mrb[0].mxu0
    %v1643 = vadd.f32 %v1418, %v1642
    %v1644 = vpop.f32.mrb[0].mxu0
    %1645 = vmatprep.mubr.f32.mxu0 0.0
    %1646 = vmatmul.mubr.f32.gmra.mrb[0].mxu0 %v1239
    %v1647 = vpop.f32.mrb[0].mxu0
    %v1648 = vadd.f32 %v1423, %v1647
    %v1649 = vpop.f32.mrb[0].mxu0
    %1650 = vmatprep.mubr.f32.mxu0 0.0
    %1651 = vmatmul.mubr.f32.gmra.mrb[0].mxu0 %v1240
    %v1652 = vpop.f32.mrb[0].mxu0
    %v1653 = vadd.f32 %v1428, %v1652
    %v1654 = vpop.f32.mrb[0].mxu0
    %1655 = vmatprep.mubr.f32.mxu0 0.0
    %1656 = vmatmul.mubr.f32.gmra.mrb[0].mxu0 %v1241
    %v1657 = vpop.f32.mrb[0].mxu0
    %v1658 = vadd.f32 %v1433, %v1657
    %v1659 = vpop.f32.mrb[0].mxu0
    %1660 = vmatprep.mubr.f32.mxu0 0.0
    %1661 = vmatmul.mubr.f32.gmra.mrb[0].mxu0 %v1242
    %v1662 = vpop.f32.mrb[0].mxu0
    %v1663 = vadd.f32 %v1438, %v1662
    %v1664 = vpop.f32.mrb[0].mxu0
    %1665 = vmatprep.mubr.f32.mxu0 0.0
    %1666 = vmatmul.mubr.f32.gmra.mrb[0].mxu0 %v1243
    %v1667 = vpop.f32.mrb[0].mxu0
    %v1668 = vadd.f32 %v1443, %v1667
    %v1669 = vpop.f32.mrb[0].mxu0
    %1670 = vmatprep.mubr.f32.mxu0 0.0
    %1671 = vmatmul.mubr.f32.gmra.mrb[0].mxu0 %v1244
    %v1672 = vpop.f32.mrb[0].mxu0
    %v1673 = vadd.f32 %v1448, %v1672
    %v1674 = vpop.f32.mrb[0].mxu0
    %1675 = vmatprep.mubr.f32.mxu0 0.0
    %1676 = vmatmul.mubr.f32.gmra.mrb[0].mxu0 %v1245
    %v1677 = vpop.f32.mrb[0].mxu0
    %v1678 = vadd.f32 %v1453, %v1677
    %v1679 = vpop.f32.mrb[0].mxu0
    %1680 = vmatprep.mubr.f32.mxu0 0.0
    %1681 = vmatmul.mubr.f32.gmra.mrb[0].mxu0 %v1246
    %v1682 = vpop.f32.mrb[0].mxu0
    %v1683 = vadd.f32 %v1458, %v1682
    %v1684 = vpop.f32.mrb[0].mxu0
    %1685 = vmatprep.mubr.f32.mxu0 0.0
    %1686 = vmatmul.mubr.f32.gmra.mrb[0].mxu0 %v1247
    %v1687 = vpop.f32.mrb[0].mxu0
    %v1688 = vadd.f32 %v1463, %v1687
    %v1689 = vpop.f32.mrb[0].mxu0
    %1690 = vmatprep.mubr.f32.mxu0 0.0
    %1691 = vmatmul.mubr.f32.gmra.mrb[0].mxu0 %v1248
    %v1692 = vpop.f32.mrb[0].mxu0
    %v1693 = vadd.f32 %v1468, %v1692
    %v1694 = vpop.f32.mrb[0].mxu0
    %1695 = vmatprep.mubr.f32.mxu0 0.0
    %1696 = vmatmul.mubr.f32.gmra.mrb[0].mxu0 %v1249
    %v1697 = vpop.f32.mrb[0].mxu0
    %v1698 = vadd.f32 %v1473, %v1697
    %v1699 = vpop.f32.mrb[0].mxu0
    %1700 = vmatprep.mubr.f32.mxu0 0.0
    %1701 = vmatmul.mubr.f32.gmra.mrb[0].mxu0 %v1250
    %v1702 = vpop.f32.mrb[0].mxu0
    %v1703 = vadd.f32 %v1478, %v1702
    %v1704 = vpop.f32.mrb[0].mxu0
    %1705 = vmatprep.mubr.f32.mxu0 0.0
    %1706 = vmatmul.mubr.f32.gmra.mrb[0].mxu0 %v1251
    %v1707 = vpop.f32.mrb[0].mxu0
    %v1708 = vadd.f32 %v1483, %v1707
    %v1709 = vpop.f32.mrb[0].mxu0
    %1710 = vmatprep.mubr.f32.mxu0 0.0
    %1711 = vmatmul.mubr.f32.gmra.mrb[0].mxu0 %v1252
    %v1712 = vpop.f32.mrb[0].mxu0
    %v1713 = vadd.f32 %v1488, %v1712
    %v1714 = vpop.f32.mrb[0].mxu0
    %1715 = vmatprep.mubr.f32.mxu0 0.0
    %1716 = vmatmul.mubr.f32.gmra.mrb[0].mxu0 %v1253
    %v1717 = vpop.f32.mrb[0].mxu0
    %v1718 = vadd.f32 %v1493, %v1717
    %v1719 = vpop.f32.mrb[0].mxu0
    %1720 = vmatprep.mubr.f32.mxu0 0.0
    %1721 = vmatmul.mubr.f32.gmra.mrb[0].mxu0 %v1254
    %v1722 = vpop.f32.mrb[0].mxu0
    %v1723 = vadd.f32 %v1498, %v1722
    %v1724 = vpop.f32.mrb[0].mxu0
    %1725 = vmatprep.mubr.f32.mxu0 0.0
    %1726 = vmatmul.mubr.f32.gmra.mrb[0].mxu0 %v1255
    %v1727 = vpop.f32.mrb[0].mxu0
    %v1728 = vadd.f32 %v1503, %v1727
    %v1729 = vpop.f32.mrb[0].mxu0
    %1730 = vmatprep.mubr.f32.mxu0 0.0
    %1731 = vmatmul.mubr.f32.gmra.mrb[0].mxu0 %v1256
    %v1732 = vpop.f32.mrb[0].mxu0
    %v1733 = vadd.f32 %v1508, %v1732
    %v1734 = vpop.f32.mrb[0].mxu0
    %1735 = vmatprep.mubr.f32.mxu0 0.0
    %1736 = vmatmul.mubr.f32.gmra.mrb[0].mxu0 %v1257
    %v1737 = vpop.f32.mrb[0].mxu0
    %v1738 = vadd.f32 %v1513, %v1737
    %v1739 = vpop.f32.mrb[0].mxu0
    %1740 = vmatprep.mubr.f32.mxu0 0.0
    %1741 = vmatmul.mubr.f32.gmra.mrb[0].mxu0 %v1258
    %v1742 = vpop.f32.mrb[0].mxu0
    %v1743 = vadd.f32 %v1518, %v1742
    %v1744 = vpop.f32.mrb[0].mxu0
    %1745 = vmatprep.mubr.f32.mxu0 0.0
    %1746 = vmatmul.mubr.f32.gmra.mrb[0].mxu0 %v1259
    %v1747 = vpop.f32.mrb[0].mxu0
    %v1748 = vadd.f32 %v1523, %v1747
    %v1749 = vpop.f32.mrb[0].mxu0
    %1750 = vmatprep.mubr.f32.mxu0 0.0
    %1751 = vmatmul.mubr.f32.gmra.mrb[0].mxu0 %v1260
    %v1752 = vpop.f32.mrb[0].mxu0
    %v1753 = vadd.f32 %v1528, %v1752
    %v1754 = vpop.f32.mrb[0].mxu0
    %1755 = vmatprep.mubr.f32.mxu0 0.0
    %1756 = vmatmul.mubr.f32.gmra.mrb[0].mxu0 %v1261
    %v1757 = vpop.f32.mrb[0].mxu0
    %v1758 = vadd.f32 %v1533, %v1757
    %v1759 = vpop.f32.mrb[0].mxu0
    %1760 = vdwg.mxu0
    %v1761 = vadd.f32 %v1068, %v1603
    %v1762 = vadd.f32 %v1073, %v1608
    %v1763 = vadd.f32 %v1078, %v1613
    %v1764 = vadd.f32 %v1083, %v1618
    %v1765 = vadd.f32 %v1088, %v1623
    %v1766 = vadd.f32 %v1093, %v1628
    %v1767 = vadd.f32 %v1098, %v1633
    %v1768 = vadd.f32 %v1103, %v1638
    %v1769 = vadd.f32 %v1108, %v1643
    %v1770 = vadd.f32 %v1113, %v1648
    %v1771 = vadd.f32 %v1118, %v1653
    %v1772 = vadd.f32 %v1123, %v1658
    %v1773 = vadd.f32 %v1128, %v1663
    %v1774 = vadd.f32 %v1133, %v1668
    %v1775 = vadd.f32 %v1138, %v1673
    %v1776 = vadd.f32 %v1143, %v1678
    %v1777 = vadd.f32 %v1148, %v1683
    %v1778 = vadd.f32 %v1153, %v1688
    %v1779 = vadd.f32 %v1158, %v1693
    %v1780 = vadd.f32 %v1163, %v1698
    %v1781 = vadd.f32 %v1168, %v1703
    %v1782 = vadd.f32 %v1173, %v1708
    %v1783 = vadd.f32 %v1178, %v1713
    %v1784 = vadd.f32 %v1183, %v1718
    %v1785 = vadd.f32 %v1188, %v1723
    %v1786 = vadd.f32 %v1193, %v1728
    %v1787 = vadd.f32 %v1198, %v1733
    %v1788 = vadd.f32 %v1203, %v1738
    %v1789 = vadd.f32 %v1208, %v1743
    %v1790 = vadd.f32 %v1213, %v1748
    %v1791 = vadd.f32 %v1218, %v1753
    %v1792 = vadd.f32 %v1223, %v1758
    %v1793 = vadd.f32 %v1761, %v1762
    %v1794 = vadd.f32 %v1793, %v1763
    %v1795 = vadd.f32 %v1794, %v1764
    %v1796 = vadd.f32 %v1795, %v1765
    %v1797 = vadd.f32 %v1796, %v1766
    %v1798 = vadd.f32 %v1797, %v1767
    %v1799 = vadd.f32 %v1798, %v1768
    %v1800 = vadd.f32 %v1799, %v1769
    %v1801 = vadd.f32 %v1800, %v1770
    %v1802 = vadd.f32 %v1801, %v1771
    %v1803 = vadd.f32 %v1802, %v1772
    %v1804 = vadd.f32 %v1803, %v1773
    %v1805 = vadd.f32 %v1804, %v1774
    %v1806 = vadd.f32 %v1805, %v1775
    %v1807 = vadd.f32 %v1806, %v1776
    %v1808 = vadd.f32 %v1807, %v1777
    %v1809 = vadd.f32 %v1808, %v1778
    %v1810 = vadd.f32 %v1809, %v1779
    %v1811 = vadd.f32 %v1810, %v1780
    %v1812 = vadd.f32 %v1811, %v1781
    %v1813 = vadd.f32 %v1812, %v1782
    %v1814 = vadd.f32 %v1813, %v1783
    %v1815 = vadd.f32 %v1814, %v1784
    %v1816 = vadd.f32 %v1815, %v1785
    %v1817 = vadd.f32 %v1816, %v1786
    %v1818 = vadd.f32 %v1817, %v1787
    %v1819 = vadd.f32 %v1818, %v1788
    %v1820 = vadd.f32 %v1819, %v1789
    %v1821 = vadd.f32 %v1820, %v1790
    %v1822 = vadd.f32 %v1821, %v1791
    %v1823 = vadd.f32 %v1822, %v1792
    %v1824 = vrot.slane %v1823, 4
    %v1825 = vadd.f32 %v1823, %v1824
    %v1826 = vrot.slane %v1825, 2
    %v1827 = vadd.f32 %v1825, %v1826
    %v1828 = vrot.slane %v1827, 1
    %v1829 = vadd.f32 %v1827, %v1828
    %v1830 = vmul.f32 %v1829, 0.00390625
    %v1831 = vsub.f32 %v1761, %v1830
    %v1832 = vsub.f32 %v1762, %v1830
    %v1833 = vsub.f32 %v1763, %v1830
    %v1834 = vsub.f32 %v1764, %v1830
    %v1835 = vsub.f32 %v1765, %v1830
    %v1836 = vsub.f32 %v1766, %v1830
    %v1837 = vsub.f32 %v1767, %v1830
    %v1838 = vsub.f32 %v1768, %v1830
    %v1839 = vsub.f32 %v1769, %v1830
    %v1840 = vsub.f32 %v1770, %v1830
    %v1841 = vsub.f32 %v1771, %v1830
    %v1842 = vsub.f32 %v1772, %v1830
    %v1843 = vsub.f32 %v1773, %v1830
    %v1844 = vsub.f32 %v1774, %v1830
    %v1845 = vsub.f32 %v1775, %v1830
    %v1846 = vsub.f32 %v1776, %v1830
    %v1847 = vsub.f32 %v1777, %v1830
    %v1848 = vsub.f32 %v1778, %v1830
    %v1849 = vsub.f32 %v1779, %v1830
    %v1850 = vsub.f32 %v1780, %v1830
    %v1851 = vsub.f32 %v1781, %v1830
    %v1852 = vsub.f32 %v1782, %v1830
    %v1853 = vsub.f32 %v1783, %v1830
    %v1854 = vsub.f32 %v1784, %v1830
    %v1855 = vsub.f32 %v1785, %v1830
    %v1856 = vsub.f32 %v1786, %v1830
    %v1857 = vsub.f32 %v1787, %v1830
    %v1858 = vsub.f32 %v1788, %v1830
    %v1859 = vsub.f32 %v1789, %v1830
    %v1860 = vsub.f32 %v1790, %v1830
    %v1861 = vsub.f32 %v1791, %v1830
    %v1862 = vsub.f32 %v1792, %v1830
    %v1863 = vmul.f32 %v1831, %v1831
    %v1864 = vmul.f32 %v1832, %v1832
    %v1865 = vmul.f32 %v1833, %v1833
    %v1866 = vmul.f32 %v1834, %v1834
    %v1867 = vmul.f32 %v1835, %v1835
    %v1868 = vmul.f32 %v1836, %v1836
    %v1869 = vmul.f32 %v1837, %v1837
    %v1870 = vmul.f32 %v1838, %v1838
    %v1871 = vmul.f32 %v1839, %v1839
    %v1872 = vmul.f32 %v1840, %v1840
    %v1873 = vmul.f32 %v1841, %v1841
    %v1874 = vmul.f32 %v1842, %v1842
    %v1875 = vmul.f32 %v1843, %v1843
    %v1876 = vmul.f32 %v1844, %v1844
    %v1877 = vmul.f32 %v1845, %v1845
    %v1878 = vmul.f32 %v1846, %v1846
    %v1879 = vmul.f32 %v1847, %v1847
    %v1880 = vmul.f32 %v1848, %v1848
    %v1881 = vmul.f32 %v1849, %v1849
    %v1882 = vmul.f32 %v1850, %v1850
    %v1883 = vmul.f32 %v1851, %v1851
    %v1884 = vmul.f32 %v1852, %v1852
    %v1885 = vmul.f32 %v1853, %v1853
    %v1886 = vmul.f32 %v1854, %v1854
    %v1887 = vmul.f32 %v1855, %v1855
    %v1888 = vmul.f32 %v1856, %v1856
    %v1889 = vmul.f32 %v1857, %v1857
    %v1890 = vmul.f32 %v1858, %v1858
    %v1891 = vmul.f32 %v1859, %v1859
    %v1892 = vmul.f32 %v1860, %v1860
    %v1893 = vmul.f32 %v1861, %v1861
    %v1894 = vmul.f32 %v1862, %v1862
    %v1895 = vadd.f32 %v1863, %v1864
    %v1896 = vadd.f32 %v1895, %v1865
    %v1897 = vadd.f32 %v1896, %v1866
    %v1898 = vadd.f32 %v1897, %v1867
    %v1899 = vadd.f32 %v1898, %v1868
    %v1900 = vadd.f32 %v1899, %v1869
    %v1901 = vadd.f32 %v1900, %v1870
    %v1902 = vadd.f32 %v1901, %v1871
    %v1903 = vadd.f32 %v1902, %v1872
    %v1904 = vadd.f32 %v1903, %v1873
    %v1905 = vadd.f32 %v1904, %v1874
    %v1906 = vadd.f32 %v1905, %v1875
    %v1907 = vadd.f32 %v1906, %v1876
    %v1908 = vadd.f32 %v1907, %v1877
    %v1909 = vadd.f32 %v1908, %v1878
    %v1910 = vadd.f32 %v1909, %v1879
    %v1911 = vadd.f32 %v1910, %v1880
    %v1912 = vadd.f32 %v1911, %v1881
    %v1913 = vadd.f32 %v1912, %v1882
    %v1914 = vadd.f32 %v1913, %v1883
    %v1915 = vadd.f32 %v1914, %v1884
    %v1916 = vadd.f32 %v1915, %v1885
    %v1917 = vadd.f32 %v1916, %v1886
    %v1918 = vadd.f32 %v1917, %v1887
    %v1919 = vadd.f32 %v1918, %v1888
    %v1920 = vadd.f32 %v1919, %v1889
    %v1921 = vadd.f32 %v1920, %v1890
    %v1922 = vadd.f32 %v1921, %v1891
    %v1923 = vadd.f32 %v1922, %v1892
    %v1924 = vadd.f32 %v1923, %v1893
    %v1925 = vadd.f32 %v1924, %v1894
    %v1926 = vrot.slane %v1925, 4
    %v1927 = vadd.f32 %v1925, %v1926
    %v1928 = vrot.slane %v1927, 2
    %v1929 = vadd.f32 %v1927, %v1928
    %v1930 = vrot.slane %v1929, 1
    %v1931 = vadd.f32 %v1929, %v1930
    %v1932 = vmul.f32 %v1931, 0.00390625
    %v1933 = vadd.f32 %v1932, 1e-05
    %v1934 = vrsqrt.pop %v1933
    %v1935 = vmul.f32 %v1831, %v1934
    %v1936 = vmul.f32 %v1832, %v1934
    %v1937 = vmul.f32 %v1833, %v1934
    %v1938 = vmul.f32 %v1834, %v1934
    %v1939 = vmul.f32 %v1835, %v1934
    %v1940 = vmul.f32 %v1836, %v1934
    %v1941 = vmul.f32 %v1837, %v1934
    %v1942 = vmul.f32 %v1838, %v1934
    %v1943 = vmul.f32 %v1839, %v1934
    %v1944 = vmul.f32 %v1840, %v1934
    %v1945 = vmul.f32 %v1841, %v1934
    %v1946 = vmul.f32 %v1842, %v1934
    %v1947 = vmul.f32 %v1843, %v1934
    %v1948 = vmul.f32 %v1844, %v1934
    %v1949 = vmul.f32 %v1845, %v1934
    %v1950 = vmul.f32 %v1846, %v1934
    %v1951 = vmul.f32 %v1847, %v1934
    %v1952 = vmul.f32 %v1848, %v1934
    %v1953 = vmul.f32 %v1849, %v1934
    %v1954 = vmul.f32 %v1850, %v1934
    %v1955 = vmul.f32 %v1851, %v1934
    %v1956 = vmul.f32 %v1852, %v1934
    %v1957 = vmul.f32 %v1853, %v1934
    %v1958 = vmul.f32 %v1854, %v1934
    %v1959 = vmul.f32 %v1855, %v1934
    %v1960 = vmul.f32 %v1856, %v1934
    %v1961 = vmul.f32 %v1857, %v1934
    %v1962 = vmul.f32 %v1858, %v1934
    %v1963 = vmul.f32 %v1859, %v1934
    %v1964 = vmul.f32 %v1860, %v1934
    %v1965 = vmul.f32 %v1861, %v1934
    %v1966 = vmul.f32 %v1862, %v1934
    %v1967 = vmax.f32 %v1935, 0.0
    %v1968 = vmax.f32 %v1936, 0.0
    %v1969 = vmax.f32 %v1937, 0.0
    %v1970 = vmax.f32 %v1938, 0.0
    %v1971 = vmax.f32 %v1939, 0.0
    %v1972 = vmax.f32 %v1940, 0.0
    %v1973 = vmax.f32 %v1941, 0.0
    %v1974 = vmax.f32 %v1942, 0.0
    %v1975 = vmax.f32 %v1943, 0.0
    %v1976 = vmax.f32 %v1944, 0.0
    %v1977 = vmax.f32 %v1945, 0.0
    %v1978 = vmax.f32 %v1946, 0.0
    %v1979 = vmax.f32 %v1947, 0.0
    %v1980 = vmax.f32 %v1948, 0.0
    %v1981 = vmax.f32 %v1949, 0.0
    %v1982 = vmax.f32 %v1950, 0.0
    %v1983 = vmax.f32 %v1951, 0.0
    %v1984 = vmax.f32 %v1952, 0.0
    %v1985 = vmax.f32 %v1953, 0.0
    %v1986 = vmax.f32 %v1954, 0.0
    %v1987 = vmax.f32 %v1955, 0.0
    %v1988 = vmax.f32 %v1956, 0.0
    %v1989 = vmax.f32 %v1957, 0.0
    %v1990 = vmax.f32 %v1958, 0.0
    %v1991 = vmax.f32 %v1959, 0.0
    %v1992 = vmax.f32 %v1960, 0.0
    %v1993 = vmax.f32 %v1961, 0.0
    %v1994 = vmax.f32 %v1962, 0.0
    %v1995 = vmax.f32 %v1963, 0.0
    %v1996 = vmax.f32 %v1964, 0.0
    %v1997 = vmax.f32 %v1965, 0.0
    %v1998 = vmax.f32 %v1966, 0.0
    %s1999 = scalar_lea.vmem [#allocation3], 24
    %2000 = vst [vmem:[%s1999 + $0x1] sm:$0xff] %v1967
    %2001 = vst [vmem:[%s1999 + $0x9] sm:$0xff] %v1968
    %2002 = vst [vmem:[%s1999 + $0x19] sm:$0xff] %v1969
    %2003 = vst [vmem:[%s1999 + $0x21] sm:$0xff] %v1970
    %2004 = vst [vmem:[%s1999 + $0x31] sm:$0xff] %v1971
    %2005 = vst [vmem:[%s1999 + $0x39] sm:$0xff] %v1972
    %2006 = vst [vmem:[%s1999 + $0x49] sm:$0xff] %v1973
    %2007 = vst [vmem:[%s1999 + $0x51] sm:$0xff] %v1974
    %2008 = vst [vmem:[%s1999 + $0x61] sm:$0xff] %v1975
    %2009 = vst [vmem:[%s1999 + $0x69] sm:$0xff] %v1976
    %2010 = vst [vmem:[%s1999 + $0x79] sm:$0xff] %v1977
    %2011 = vst [vmem:[%s1999 + $0x81] sm:$0xff] %v1978
    %2012 = vst [vmem:[%s1999 + $0x91] sm:$0xff] %v1979
    %2013 = vst [vmem:[%s1999 + $0x99] sm:$0xff] %v1980
    %2014 = vst [vmem:[%s1999 + $0xa9] sm:$0xff] %v1981
    %2015 = vst [vmem:[%s1999 + $0xb1] sm:$0xff] %v1982
    %2016 = vst [vmem:[%s1999 + $0xc1] sm:$0xff] %v1983
    %2017 = vst [vmem:[%s1999 + $0xc9] sm:$0xff] %v1984
    %2018 = vst [vmem:[%s1999 + $0xd9] sm:$0xff] %v1985
    %2019 = vst [vmem:[%s1999 + $0xe1] sm:$0xff] %v1986
    %2020 = vst [vmem:[%s1999 + $0xf1] sm:$0xff] %v1987
    %2021 = vst [vmem:[%s1999 + $0xf9] sm:$0xff] %v1988
    %2022 = vst [vmem:[%s1999 + $0x109] sm:$0xff] %v1989
    %2023 = vst [vmem:[%s1999 + $0x111] sm:$0xff] %v1990
    %2024 = vst [vmem:[%s1999 + $0x121] sm:$0xff] %v1991
    %2025 = vst [vmem:[%s1999 + $0x129] sm:$0xff] %v1992
    %2026 = vst [vmem:[%s1999 + $0x139] sm:$0xff] %v1993
    %2027 = vst [vmem:[%s1999 + $0x141] sm:$0xff] %v1994
    %2028 = vst [vmem:[%s1999 + $0x151] sm:$0xff] %v1995
    %2029 = vst [vmem:[%s1999 + $0x159] sm:$0xff] %v1996
    %2030 = vst [vmem:[%s1999 + $0x169] sm:$0xff] %v1997
    %2031 = vst [vmem:[%s1999 + $0x171] sm:$0xff] %v1998
    %2032 = vst [vmem:[#allocation3 + $0x1] sm:$0xff] %v1969
    %2033 = vst [vmem:[#allocation3 + $0x9] sm:$0xff] %v1970
    %s2034 = scalar_lea.vmem [#allocation3], 408
    %2035 = vst [vmem:[%s2034 + $0x1] sm:$0xff] %v1995
    %2036 = vst [vmem:[%s2034 + $0x9] sm:$0xff] %v1996
    %v2037 = vld [vmem:[#allocation3 + $0x2] sm:$0x1]
    %v2038 = vld [vmem:[#allocation3 + $0x1a] sm:$0x1]
    %v2039 = vld [vmem:[#allocation3 + $0x32] sm:$0x1]
    %v2040 = vld [vmem:[#allocation3 + $0x4a] sm:$0x1]
    %v2041 = vld [vmem:[#allocation3 + $0x62] sm:$0x1]
    %v2042 = vld [vmem:[#allocation3 + $0x7a] sm:$0x1]
    %v2043 = vld [vmem:[#allocation3 + $0x92] sm:$0x1]
    %v2044 = vld [vmem:[#allocation3 + $0xaa] sm:$0x1]
    %v2045 = vld [vmem:[#allocation3 + $0xc2] sm:$0x1]
    %v2046 = vld [vmem:[#allocation3 + $0xda] sm:$0x1]
    %v2047 = vld [vmem:[#allocation3 + $0xf2] sm:$0x1]
    %v2048 = vld [vmem:[#allocation3 + $0x10a] sm:$0x1]
    %v2049 = vld [vmem:[#allocation3 + $0x122] sm:$0x1]
    %v2050 = vld [vmem:[#allocation3 + $0x13a] sm:$0x1]
    %v2051 = vld [vmem:[#allocation3 + $0x152] sm:$0x1]
    %v2052 = vld [vmem:[#allocation3 + $0x16a] sm:$0x1]
    %v2053 = vld [vmem:[#allocation3 + $0x182] sm:$0x1]
    %v2054 = vld [vmem:[#allocation3 + $0x19a] sm:$0x1]
    %2055 = vst [vmem:[#allocation3] sm:$0x1] %v2037
    %2056 = vst [vmem:[#allocation3 + $0x18] sm:$0x1] %v2038
    %2057 = vst [vmem:[#allocation3 + $0x30] sm:$0x1] %v2039
    %2058 = vst [vmem:[#allocation3 + $0x48] sm:$0x1] %v2040
    %2059 = vst [vmem:[#allocation3 + $0x60] sm:$0x1] %v2041
    %2060 = vst [vmem:[#allocation3 + $0x78] sm:$0x1] %v2042
    %2061 = vst [vmem:[#allocation3 + $0x90] sm:$0x1] %v2043
    %2062 = vst [vmem:[#allocation3 + $0xa8] sm:$0x1] %v2044
    %2063 = vst [vmem:[#allocation3 + $0xc0] sm:$0x1] %v2045
    %2064 = vst [vmem:[#allocation3 + $0xd8] sm:$0x1] %v2046
    %2065 = vst [vmem:[#allocation3 + $0xf0] sm:$0x1] %v2047
    %2066 = vst [vmem:[#allocation3 + $0x108] sm:$0x1] %v2048
    %2067 = vst [vmem:[#allocation3 + $0x120] sm:$0x1] %v2049
    %2068 = vst [vmem:[#allocation3 + $0x138] sm:$0x1] %v2050
    %2069 = vst [vmem:[#allocation3 + $0x150] sm:$0x1] %v2051
    %2070 = vst [vmem:[#allocation3 + $0x168] sm:$0x1] %v2052
    %2071 = vst [vmem:[#allocation3 + $0x180] sm:$0x1] %v2053
    %2072 = vst [vmem:[#allocation3 + $0x198] sm:$0x1] %v2054
    %v2073 = vld [vmem:[#allocation3 + $0xf] sm:$0x1]
    %v2074 = vld [vmem:[#allocation3 + $0x27] sm:$0x1]
    %v2075 = vld [vmem:[#allocation3 + $0x3f] sm:$0x1]
    %v2076 = vld [vmem:[#allocation3 + $0x57] sm:$0x1]
    %v2077 = vld [vmem:[#allocation3 + $0x6f] sm:$0x1]
    %v2078 = vld [vmem:[#allocation3 + $0x87] sm:$0x1]
    %v2079 = vld [vmem:[#allocation3 + $0x9f] sm:$0x1]
    %v2080 = vld [vmem:[#allocation3 + $0xb7] sm:$0x1]
    %v2081 = vld [vmem:[#allocation3 + $0xcf] sm:$0x1]
    %v2082 = vld [vmem:[#allocation3 + $0xe7] sm:$0x1]
    %v2083 = vld [vmem:[#allocation3 + $0xff] sm:$0x1]
    %v2084 = vld [vmem:[#allocation3 + $0x117] sm:$0x1]
    %v2085 = vld [vmem:[#allocation3 + $0x12f] sm:$0x1]
    %v2086 = vld [vmem:[#allocation3 + $0x147] sm:$0x1]
    %v2087 = vld [vmem:[#allocation3 + $0x15f] sm:$0x1]
    %v2088 = vld [vmem:[#allocation3 + $0x177] sm:$0x1]
    %v2089 = vld [vmem:[#allocation3 + $0x18f] sm:$0x1]
    %v2090 = vld [vmem:[#allocation3 + $0x1a7] sm:$0x1]
    %2091 = vst [vmem:[#allocation3 + $0x11] sm:$0x1] %v2073
    %2092 = vst [vmem:[#allocation3 + $0x29] sm:$0x1] %v2074
    %2093 = vst [vmem:[#allocation3 + $0x41] sm:$0x1] %v2075
    %2094 = vst [vmem:[#allocation3 + $0x59] sm:$0x1] %v2076
    %2095 = vst [vmem:[#allocation3 + $0x71] sm:$0x1] %v2077
    %2096 = vst [vmem:[#allocation3 + $0x89] sm:$0x1] %v2078
    %2097 = vst [vmem:[#allocation3 + $0xa1] sm:$0x1] %v2079
    %2098 = vst [vmem:[#allocation3 + $0xb9] sm:$0x1] %v2080
    %2099 = vst [vmem:[#allocation3 + $0xd1] sm:$0x1] %v2081
    %2100 = vst [vmem:[#allocation3 + $0xe9] sm:$0x1] %v2082
    %2101 = vst [vmem:[#allocation3 + $0x101] sm:$0x1] %v2083
    %2102 = vst [vmem:[#allocation3 + $0x119] sm:$0x1] %v2084
    %2103 = vst [vmem:[#allocation3 + $0x131] sm:$0x1] %v2085
    %2104 = vst [vmem:[#allocation3 + $0x149] sm:$0x1] %v2086
    %2105 = vst [vmem:[#allocation3 + $0x161] sm:$0x1] %v2087
    %2106 = vst [vmem:[#allocation3 + $0x179] sm:$0x1] %v2088
    %2107 = vst [vmem:[#allocation3 + $0x191] sm:$0x1] %v2089
    %2108 = vst [vmem:[#allocation3 + $0x1a9] sm:$0x1] %v2090
    %v2109 = vld [vmem:[#allocation3] sm:$0xff]
    %v2110 = vld [vmem:[#allocation3 + $0x8] sm:$0xff]
    %v2111 = vld [vmem:[#allocation3 + $0x18] sm:$0xff]
    %v2112 = vld [vmem:[#allocation3 + $0x20] sm:$0xff]
    %v2113 = vld [vmem:[#allocation3 + $0x30] sm:$0xff]
    %v2114 = vld [vmem:[#allocation3 + $0x38] sm:$0xff]
    %v2115 = vld [vmem:[#allocation3 + $0x48] sm:$0xff]
    %v2116 = vld [vmem:[#allocation3 + $0x50] sm:$0xff]
    %v2117 = vld [vmem:[#allocation3 + $0x60] sm:$0xff]
    %v2118 = vld [vmem:[#allocation3 + $0x68] sm:$0xff]
    %v2119 = vld [vmem:[#allocation3 + $0x78] sm:$0xff]
    %v2120 = vld [vmem:[#allocation3 + $0x80] sm:$0xff]
    %v2121 = vld [vmem:[#allocation3 + $0x90] sm:$0xff]
    %v2122 = vld [vmem:[#allocation3 + $0x98] sm:$0xff]
    %v2123 = vld [vmem:[#allocation3 + $0xa8] sm:$0xff]
    %v2124 = vld [vmem:[#allocation3 + $0xb0] sm:$0xff]
    %v2125 = vld [vmem:[#allocation3 + $0xc0] sm:$0xff]
    %v2126 = vld [vmem:[#allocation3 + $0xc8] sm:$0xff]
    %v2127 = vld [vmem:[#allocation3 + $0xd8] sm:$0xff]
    %v2128 = vld [vmem:[#allocation3 + $0xe0] sm:$0xff]
    %v2129 = vld [vmem:[#allocation3 + $0xf0] sm:$0xff]
    %v2130 = vld [vmem:[#allocation3 + $0xf8] sm:$0xff]
    %v2131 = vld [vmem:[#allocation3 + $0x108] sm:$0xff]
    %v2132 = vld [vmem:[#allocation3 + $0x110] sm:$0xff]
    %v2133 = vld [vmem:[#allocation3 + $0x120] sm:$0xff]
    %v2134 = vld [vmem:[#allocation3 + $0x128] sm:$0xff]
    %v2135 = vld [vmem:[#allocation3 + $0x138] sm:$0xff]
    %v2136 = vld [vmem:[#allocation3 + $0x140] sm:$0xff]
    %v2137 = vld [vmem:[#allocation3 + $0x150] sm:$0xff]
    %v2138 = vld [vmem:[#allocation3 + $0x158] sm:$0xff]
    %v2139 = vld [vmem:[#allocation3 + $0x168] sm:$0xff]
    %v2140 = vld [vmem:[#allocation3 + $0x170] sm:$0xff]
    %v2141 = vld [vmem:[#allocation3 + $0x180] sm:$0xff]
    %v2142 = vld [vmem:[#allocation3 + $0x188] sm:$0xff]
    %v2143 = vld [vmem:[#allocation3 + $0x198] sm:$0xff]
    %v2144 = vld [vmem:[#allocation3 + $0x1a0] sm:$0xff]
    %v2145 = vld [vmem:[%s2] sm:$0xff]
    %v2146 = vld [vmem:[%s2 + $0x8] sm:$0xff]
    %v2147 = vld [vmem:[%s2 + $0x10] sm:$0xff]
    %v2148 = vld [vmem:[%s2 + $0x18] sm:$0xff]
    %v2149 = vld [vmem:[%s2 + $0x20] sm:$0xff]
    %v2150 = vld [vmem:[%s2 + $0x28] sm:$0xff]
    %v2151 = vld [vmem:[%s2 + $0x30] sm:$0xff]
    %v2152 = vld [vmem:[%s2 + $0x38] sm:$0xff]
    %v2153 = vld [vmem:[%s2 + $0x40] sm:$0xff]
    %v2154 = vld [vmem:[%s2 + $0x48] sm:$0xff]
    %v2155 = vld [vmem:[%s2 + $0x50] sm:$0xff]
    %v2156 = vld [vmem:[%s2 + $0x58] sm:$0xff]
    %v2157 = vld [vmem:[%s2 + $0x60] sm:$0xff]
    %v2158 = vld [vmem:[%s2 + $0x68] sm:$0xff]
    %v2159 = vld [vmem:[%s2 + $0x70] sm:$0xff]
    %v2160 = vld [vmem:[%s2 + $0x78] sm:$0xff]
    %v2161 = vld [vmem:[%s2 + $0x80] sm:$0xff]
    %v2162 = vld [vmem:[%s2 + $0x88] sm:$0xff]
    %v2163 = vld [vmem:[%s2 + $0x90] sm:$0xff]
    %v2164 = vld [vmem:[%s2 + $0x98] sm:$0xff]
    %v2165 = vld [vmem:[%s2 + $0xa0] sm:$0xff]
    %v2166 = vld [vmem:[%s2 + $0xa8] sm:$0xff]
    %v2167 = vld [vmem:[%s2 + $0xb0] sm:$0xff]
    %v2168 = vld [vmem:[%s2 + $0xb8] sm:$0xff]
    %v2169 = vld [vmem:[%s2 + $0xc0] sm:$0xff]
    %v2170 = vld [vmem:[%s2 + $0xc8] sm:$0xff]
    %v2171 = vld [vmem:[%s2 + $0xd0] sm:$0xff]
    %v2172 = vld [vmem:[%s2 + $0xd8] sm:$0xff]
    %v2173 = vld [vmem:[%s2 + $0xe0] sm:$0xff]
    %v2174 = vld [vmem:[%s2 + $0xe8] sm:$0xff]
    %v2175 = vld [vmem:[%s2 + $0xf0] sm:$0xff]
    %v2176 = vld [vmem:[%s2 + $0xf8] sm:$0xff]
    %v2177 = vld [vmem:[%s2 + $0x100] sm:$0xff]
    %v2178 = vld [vmem:[%s2 + $0x108] sm:$0xff]
    %v2179 = vld [vmem:[%s2 + $0x110] sm:$0xff]
    %v2180 = vld [vmem:[%s2 + $0x118] sm:$0xff]
    %v2181 = vld [vmem:[%s2 + $0x120] sm:$0xff]
    %v2182 = vld [vmem:[%s2 + $0x128] sm:$0xff]
    %v2183 = vld [vmem:[%s2 + $0x130] sm:$0xff]
    %v2184 = vld [vmem:[%s2 + $0x138] sm:$0xff]
    %v2185 = vld [vmem:[%s2 + $0x140] sm:$0xff]
    %v2186 = vld [vmem:[%s2 + $0x148] sm:$0xff]
    %v2187 = vld [vmem:[%s2 + $0x150] sm:$0xff]
    %v2188 = vld [vmem:[%s2 + $0x158] sm:$0xff]
    %v2189 = vld [vmem:[%s2 + $0x160] sm:$0xff]
    %v2190 = vld [vmem:[%s2 + $0x168] sm:$0xff]
    %v2191 = vld [vmem:[%s2 + $0x170] sm:$0xff]
    %v2192 = vld [vmem:[%s2 + $0x178] sm:$0xff]
    %v2193 = vld [vmem:[#allocation3 + $0x1] sm:$0xff]
    %v2194 = vld [vmem:[#allocation3 + $0x9] sm:$0xff]
    %v2195 = vld [vmem:[#allocation3 + $0x19] sm:$0xff]
    %v2196 = vld [vmem:[#allocation3 + $0x21] sm:$0xff]
    %v2197 = vld [vmem:[#allocation3 + $0x31] sm:$0xff]
    %v2198 = vld [vmem:[#allocation3 + $0x39] sm:$0xff]
    %v2199 = vld [vmem:[#allocation3 + $0x49] sm:$0xff]
    %v2200 = vld [vmem:[#allocation3 + $0x51] sm:$0xff]
    %v2201 = vld [vmem:[#allocation3 + $0x61] sm:$0xff]
    %v2202 = vld [vmem:[#allocation3 + $0x69] sm:$0xff]
    %v2203 = vld [vmem:[#allocation3 + $0x79] sm:$0xff]
    %v2204 = vld [vmem:[#allocation3 + $0x81] sm:$0xff]
    %v2205 = vld [vmem:[#allocation3 + $0x91] sm:$0xff]
    %v2206 = vld [vmem:[#allocation3 + $0x99] sm:$0xff]
    %v2207 = vld [vmem:[#allocation3 + $0xa9] sm:$0xff]
    %v2208 = vld [vmem:[#allocation3 + $0xb1] sm:$0xff]
    %v2209 = vld [vmem:[#allocation3 + $0xc1] sm:$0xff]
    %v2210 = vld [vmem:[#allocation3 + $0xc9] sm:$0xff]
    %v2211 = vld [vmem:[#allocation3 + $0xd9] sm:$0xff]
    %v2212 = vld [vmem:[#allocation3 + $0xe1] sm:$0xff]
    %v2213 = vld [vmem:[#allocation3 + $0xf1] sm:$0xff]
    %v2214 = vld [vmem:[#allocation3 + $0xf9] sm:$0xff]
    %v2215 = vld [vmem:[#allocation3 + $0x109] sm:$0xff]
    %v2216 = vld [vmem:[#allocation3 + $0x111] sm:$0xff]
    %v2217 = vld [vmem:[#allocation3 + $0x121] sm:$0xff]
    %v2218 = vld [vmem:[#allocation3 + $0x129] sm:$0xff]
    %v2219 = vld [vmem:[#allocation3 + $0x139] sm:$0xff]
    %v2220 = vld [vmem:[#allocation3 + $0x141] sm:$0xff]
    %v2221 = vld [vmem:[#allocation3 + $0x151] sm:$0xff]
    %v2222 = vld [vmem:[#allocation3 + $0x159] sm:$0xff]
    %v2223 = vld [vmem:[#allocation3 + $0x169] sm:$0xff]
    %v2224 = vld [vmem:[#allocation3 + $0x171] sm:$0xff]
    %v2225 = vld [vmem:[#allocation3 + $0x181] sm:$0xff]
    %v2226 = vld [vmem:[#allocation3 + $0x189] sm:$0xff]
    %v2227 = vld [vmem:[#allocation3 + $0x199] sm:$0xff]
    %v2228 = vld [vmem:[#allocation3 + $0x1a1] sm:$0xff]
    %s2229 = scalar_lea.vmem %s2, 384
    %v2230 = vld [vmem:[%s2229] sm:$0xff]
    %v2231 = vld [vmem:[%s2229 + $0x8] sm:$0xff]
    %v2232 = vld [vmem:[%s2229 + $0x10] sm:$0xff]
    %v2233 = vld [vmem:[%s2229 + $0x18] sm:$0xff]
    %v2234 = vld [vmem:[%s2229 + $0x20] sm:$0xff]
    %v2235 = vld [vmem:[%s2229 + $0x28] sm:$0xff]
    %v2236 = vld [vmem:[%s2229 + $0x30] sm:$0xff]
    %v2237 = vld [vmem:[%s2229 + $0x38] sm:$0xff]
    %v2238 = vld [vmem:[%s2229 + $0x40] sm:$0xff]
    %v2239 = vld [vmem:[%s2229 + $0x48] sm:$0xff]
    %v2240 = vld [vmem:[%s2229 + $0x50] sm:$0xff]
    %v2241 = vld [vmem:[%s2229 + $0x58] sm:$0xff]
    %v2242 = vld [vmem:[%s2229 + $0x60] sm:$0xff]
    %v2243 = vld [vmem:[%s2229 + $0x68] sm:$0xff]
    %v2244 = vld [vmem:[%s2229 + $0x70] sm:$0xff]
    %v2245 = vld [vmem:[%s2229 + $0x78] sm:$0xff]
    %v2246 = vld [vmem:[%s2229 + $0x80] sm:$0xff]
    %v2247 = vld [vmem:[%s2229 + $0x88] sm:$0xff]
    %v2248 = vld [vmem:[%s2229 + $0x90] sm:$0xff]
    %v2249 = vld [vmem:[%s2229 + $0x98] sm:$0xff]
    %v2250 = vld [vmem:[%s2229 + $0xa0] sm:$0xff]
    %v2251 = vld [vmem:[%s2229 + $0xa8] sm:$0xff]
    %v2252 = vld [vmem:[%s2229 + $0xb0] sm:$0xff]
    %v2253 = vld [vmem:[%s2229 + $0xb8] sm:$0xff]
    %v2254 = vld [vmem:[%s2229 + $0xc0] sm:$0xff]
    %v2255 = vld [vmem:[%s2229 + $0xc8] sm:$0xff]
    %v2256 = vld [vmem:[%s2229 + $0xd0] sm:$0xff]
    %v2257 = vld [vmem:[%s2229 + $0xd8] sm:$0xff]
    %v2258 = vld [vmem:[%s2229 + $0xe0] sm:$0xff]
    %v2259 = vld [vmem:[%s2229 + $0xe8] sm:$0xff]
    %v2260 = vld [vmem:[%s2229 + $0xf0] sm:$0xff]
    %v2261 = vld [vmem:[%s2229 + $0xf8] sm:$0xff]
    %v2262 = vld [vmem:[%s2229 + $0x100] sm:$0xff]
    %v2263 = vld [vmem:[%s2229 + $0x108] sm:$0xff]
    %v2264 = vld [vmem:[%s2229 + $0x110] sm:$0xff]
    %v2265 = vld [vmem:[%s2229 + $0x118] sm:$0xff]
    %v2266 = vld [vmem:[%s2229 + $0x120] sm:$0xff]
    %v2267 = vld [vmem:[%s2229 + $0x128] sm:$0xff]
    %v2268 = vld [vmem:[%s2229 + $0x130] sm:$0xff]
    %v2269 = vld [vmem:[%s2229 + $0x138] sm:$0xff]
    %v2270 = vld [vmem:[%s2229 + $0x140] sm:$0xff]
    %v2271 = vld [vmem:[%s2229 + $0x148] sm:$0xff]
    %v2272 = vld [vmem:[%s2229 + $0x150] sm:$0xff]
    %v2273 = vld [vmem:[%s2229 + $0x158] sm:$0xff]
    %v2274 = vld [vmem:[%s2229 + $0x160] sm:$0xff]
    %v2275 = vld [vmem:[%s2229 + $0x168] sm:$0xff]
    %v2276 = vld [vmem:[%s2229 + $0x170] sm:$0xff]
    %v2277 = vld [vmem:[%s2229 + $0x178] sm:$0xff]
    %2278 = vmatprep.subr.mxu0 0.0
    %2279 = vmatpush1.msra.mxu0 %v2230
    %2280 = vmatprep.subr.mxu0 0.0
    %2281 = vmatpush1.msra.mxu0 %v2231
    %2282 = vmatprep.subr.mxu0 0.0
    %2283 = vmatpush1.msra.mxu0 %v2232
    %2284 = vmatprep.subr.mxu0 0.0
    %2285 = vmatpush1.msra.mxu0 %v2233
    %2286 = vmatprep.subr.mxu0 0.0
    %2287 = vmatpush1.msra.mxu0 %v2234
    %2288 = vmatprep.subr.mxu0 0.0
    %2289 = vmatpush1.msra.mxu0 %v2235
    %2290 = vmatprep.subr.mxu0 0.0
    %2291 = vmatpush1.msra.mxu0 %v2236
    %2292 = vmatprep.subr.mxu0 0.0
    %2293 = vmatpush1.msra.mxu0 %v2237
    %2294 = vmatprep.subr.mxu0 0.0
    %2295 = vmatpush1.msra.mxu0 %v2238
    %2296 = vmatprep.subr.mxu0 0.0
    %2297 = vmatpush1.msra.mxu0 %v2239
    %2298 = vmatprep.subr.mxu0 0.0
    %2299 = vmatpush1.msra.mxu0 %v2240
    %2300 = vmatprep.subr.mxu0 0.0
    %2301 = vmatpush1.msra.mxu0 %v2241
    %2302 = vmatprep.subr.mxu0 0.0
    %2303 = vmatpush1.msra.mxu0 %v2242
    %2304 = vmatprep.subr.mxu0 0.0
    %2305 = vmatpush1.msra.mxu0 %v2243
    %2306 = vmatprep.subr.mxu0 0.0
    %2307 = vmatpush1.msra.mxu0 %v2244
    %2308 = vmatprep.subr.mxu0 0.0
    %2309 = vmatpush1.msra.mxu0 %v2245
    %2310 = vmatprep.subr.mxu0 0.0
    %2311 = vmatpush1.msra.mxu0 %v2246
    %2312 = vmatprep.subr.mxu0 0.0
    %2313 = vmatpush1.msra.mxu0 %v2247
    %2314 = vmatprep.subr.mxu0 0.0
    %2315 = vmatpush1.msra.mxu0 %v2248
    %2316 = vmatprep.subr.mxu0 0.0
    %2317 = vmatpush1.msra.mxu0 %v2249
    %2318 = vmatprep.subr.mxu0 0.0
    %2319 = vmatpush1.msra.mxu0 %v2250
    %2320 = vmatprep.subr.mxu0 0.0
    %2321 = vmatpush1.msra.mxu0 %v2251
    %2322 = vmatprep.subr.mxu0 0.0
    %2323 = vmatpush1.msra.mxu0 %v2252
    %2324 = vmatprep.subr.mxu0 0.0
    %2325 = vmatpush1.msra.mxu0 %v2253
    %2326 = vmatprep.subr.mxu0 0.0
    %2327 = vmatpush1.msra.mxu0 %v2254
    %2328 = vmatprep.subr.mxu0 0.0
    %2329 = vmatpush1.msra.mxu0 %v2255
    %2330 = vmatprep.subr.mxu0 0.0
    %2331 = vmatpush1.msra.mxu0 %v2256
    %2332 = vmatprep.subr.mxu0 0.0
    %2333 = vmatpush1.msra.mxu0 %v2257
    %2334 = vmatprep.subr.mxu0 0.0
    %2335 = vmatpush1.msra.mxu0 %v2258
    %2336 = vmatprep.subr.mxu0 0.0
    %2337 = vmatpush1.msra.mxu0 %v2259
    %2338 = vmatprep.subr.mxu0 0.0
    %2339 = vmatpush1.msra.mxu0 %v2260
    %2340 = vmatprep.subr.mxu0 0.0
    %2341 = vmatpush1.msra.mxu0 %v2261
    %2342 = vmatprep.mubr.f32.mxu0 %v2195
    %2343 = vmatmul.mubr.f32.gmra.mrb[0].mxu0 %v2193
    %v2344 = vpop.f32.mrb[0].mxu0
    %v2345 = vadd.f32 0.0, %v2344
    %v2346 = vpop.f32.mrb[0].mxu0
    %2347 = vmatprep.mubr.f32.mxu0 %v2196
    %2348 = vmatmul.mubr.f32.gmra.mrb[0].mxu0 %v2194
    %v2349 = vpop.f32.mrb[0].mxu0
    %v2350 = vadd.f32 0.0, %v2349
    %v2351 = vpop.f32.mrb[0].mxu0
    %2352 = vmatprep.mubr.f32.mxu0 %v2197
    %2353 = vmatmul.mubr.f32.gmra.mrb[0].mxu0 %v2195
    %v2354 = vpop.f32.mrb[0].mxu0
    %v2355 = vadd.f32 0.0, %v2354
    %v2356 = vpop.f32.mrb[0].mxu0
    %2357 = vmatprep.mubr.f32.mxu0 %v2198
    %2358 = vmatmul.mubr.f32.gmra.mrb[0].mxu0 %v2196
    %v2359 = vpop.f32.mrb[0].mxu0
    %v2360 = vadd.f32 0.0, %v2359
    %v2361 = vpop.f32.mrb[0].mxu0
    %2362 = vmatprep.mubr.f32.mxu0 %v2199
    %2363 = vmatmul.mubr.f32.gmra.mrb[0].mxu0 %v2197
    %v2364 = vpop.f32.mrb[0].mxu0
    %v2365 = vadd.f32 0.0, %v2364
    %v2366 = vpop.f32.mrb[0].mxu0
    %2367 = vmatprep.mubr.f32.mxu0 %v2200
    %2368 = vmatmul.mubr.f32.gmra.mrb[0].mxu0 %v2198
    %v2369 = vpop.f32.mrb[0].mxu0
    %v2370 = vadd.f32 0.0, %v2369
    %v2371 = vpop.f32.mrb[0].mxu0
    %2372 = vmatprep.mubr.f32.mxu0 %v2201
    %2373 = vmatmul.mubr.f32.gmra.mrb[0].mxu0 %v2199
    %v2374 = vpop.f32.mrb[0].mxu0
    %v2375 = vadd.f32 0.0, %v2374
    %v2376 = vpop.f32.mrb[0].mxu0
    %2377 = vmatprep.mubr.f32.mxu0 %v2202
    %2378 = vmatmul.mubr.f32.gmra.mrb[0].mxu0 %v2200
    %v2379 = vpop.f32.mrb[0].mxu0
    %v2380 = vadd.f32 0.0, %v2379
    %v2381 = vpop.f32.mrb[0].mxu0
    %2382 = vmatprep.mubr.f32.mxu0 %v2203
    %2383 = vmatmul.mubr.f32.gmra.mrb[0].mxu0 %v2201
    %v2384 = vpop.f32.mrb[0].mxu0
    %v2385 = vadd.f32 0.0, %v2384
    %v2386 = vpop.f32.mrb[0].mxu0
    %2387 = vmatprep.mubr.f32.mxu0 %v2204
    %2388 = vmatmul.mubr.f32.gmra.mrb[0].mxu0 %v2202
    %v2389 = vpop.f32.mrb[0].mxu0
    %v2390 = vadd.f32 0.0, %v2389
    %v2391 = vpop.f32.mrb[0].mxu0
    %2392 = vmatprep.mubr.f32.mxu0 %v2205
    %2393 = vmatmul.mubr.f32.gmra.mrb[0].mxu0 %v2203
    %v2394 = vpop.f32.mrb[0].mxu0
    %v2395 = vadd.f32 0.0, %v2394
    %v2396 = vpop.f32.mrb[0].mxu0
    %2397 = vmatprep.mubr.f32.mxu0 %v2206
    %2398 = vmatmul.mubr.f32.gmra.mrb[0].mxu0 %v2204
    %v2399 = vpop.f32.mrb[0].mxu0
    %v2400 = vadd.f32 0.0, %v2399
    %v2401 = vpop.f32.mrb[0].mxu0
    %2402 = vmatprep.mubr.f32.mxu0 %v2207
    %2403 = vmatmul.mubr.f32.gmra.mrb[0].mxu0 %v2205
    %v2404 = vpop.f32.mrb[0].mxu0
    %v2405 = vadd.f32 0.0, %v2404
    %v2406 = vpop.f32.mrb[0].mxu0
    %2407 = vmatprep.mubr.f32.mxu0 %v2208
    %2408 = vmatmul.mubr.f32.gmra.mrb[0].mxu0 %v2206
    %v2409 = vpop.f32.mrb[0].mxu0
    %v2410 = vadd.f32 0.0, %v2409
    %v2411 = vpop.f32.mrb[0].mxu0
    %2412 = vmatprep.mubr.f32.mxu0 %v2209
    %2413 = vmatmul.mubr.f32.gmra.mrb[0].mxu0 %v2207
    %v2414 = vpop.f32.mrb[0].mxu0
    %v2415 = vadd.f32 0.0, %v2414
    %v2416 = vpop.f32.mrb[0].mxu0
    %2417 = vmatprep.mubr.f32.mxu0 %v2210
    %2418 = vmatmul.mubr.f32.gmra.mrb[0].mxu0 %v2208
    %v2419 = vpop.f32.mrb[0].mxu0
    %v2420 = vadd.f32 0.0, %v2419
    %v2421 = vpop.f32.mrb[0].mxu0
    %2422 = vmatprep.mubr.f32.mxu0 %v2211
    %2423 = vmatmul.mubr.f32.gmra.mrb[0].mxu0 %v2209
    %v2424 = vpop.f32.mrb[0].mxu0
    %v2425 = vadd.f32 0.0, %v2424
    %v2426 = vpop.f32.mrb[0].mxu0
    %2427 = vmatprep.mubr.f32.mxu0 %v2212
    %2428 = vmatmul.mubr.f32.gmra.mrb[0].mxu0 %v2210
    %v2429 = vpop.f32.mrb[0].mxu0
    %v2430 = vadd.f32 0.0, %v2429
    %v2431 = vpop.f32.mrb[0].mxu0
    %2432 = vmatprep.mubr.f32.mxu0 %v2213
    %2433 = vmatmul.mubr.f32.gmra.mrb[0].mxu0 %v2211
    %v2434 = vpop.f32.mrb[0].mxu0
    %v2435 = vadd.f32 0.0, %v2434
    %v2436 = vpop.f32.mrb[0].mxu0
    %2437 = vmatprep.mubr.f32.mxu0 %v2214
    %2438 = vmatmul.mubr.f32.gmra.mrb[0].mxu0 %v2212
    %v2439 = vpop.f32.mrb[0].mxu0
    %v2440 = vadd.f32 0.0, %v2439
    %v2441 = vpop.f32.mrb[0].mxu0
    %2442 = vmatprep.mubr.f32.mxu0 %v2215
    %2443 = vmatmul.mubr.f32.gmra.mrb[0].mxu0 %v2213
    %v2444 = vpop.f32.mrb[0].mxu0
    %v2445 = vadd.f32 0.0, %v2444
    %v2446 = vpop.f32.mrb[0].mxu0
    %2447 = vmatprep.mubr.f32.mxu0 %v2216
    %2448 = vmatmul.mubr.f32.gmra.mrb[0].mxu0 %v2214
    %v2449 = vpop.f32.mrb[0].mxu0
    %v2450 = vadd.f32 0.0, %v2449
    %v2451 = vpop.f32.mrb[0].mxu0
    %2452 = vmatprep.mubr.f32.mxu0 %v2217
    %2453 = vmatmul.mubr.f32.gmra.mrb[0].mxu0 %v2215
    %v2454 = vpop.f32.mrb[0].mxu0
    %v2455 = vadd.f32 0.0, %v2454
    %v2456 = vpop.f32.mrb[0].mxu0
    %2457 = vmatprep.mubr.f32.mxu0 %v2218
    %2458 = vmatmul.mubr.f32.gmra.mrb[0].mxu0 %v2216
    %v2459 = vpop.f32.mrb[0].mxu0
    %v2460 = vadd.f32 0.0, %v2459
    %v2461 = vpop.f32.mrb[0].mxu0
    %2462 = vmatprep.mubr.f32.mxu0 %v2219
    %2463 = vmatmul.mubr.f32.gmra.mrb[0].mxu0 %v2217
    %v2464 = vpop.f32.mrb[0].mxu0
    %v2465 = vadd.f32 0.0, %v2464
    %v2466 = vpop.f32.mrb[0].mxu0
    %2467 = vmatprep.mubr.f32.mxu0 %v2220
    %2468 = vmatmul.mubr.f32.gmra.mrb[0].mxu0 %v2218
    %v2469 = vpop.f32.mrb[0].mxu0
    %v2470 = vadd.f32 0.0, %v2469
    %v2471 = vpop.f32.mrb[0].mxu0
    %2472 = vmatprep.mubr.f32.mxu0 %v2221
    %2473 = vmatmul.mubr.f32.gmra.mrb[0].mxu0 %v2219
    %v2474 = vpop.f32.mrb[0].mxu0
    %v2475 = vadd.f32 0.0, %v2474
    %v2476 = vpop.f32.mrb[0].mxu0
    %2477 = vmatprep.mubr.f32.mxu0 %v2222
    %2478 = vmatmul.mubr.f32.gmra.mrb[0].mxu0 %v2220
    %v2479 = vpop.f32.mrb[0].mxu0
    %v2480 = vadd.f32 0.0, %v2479
    %v2481 = vpop.f32.mrb[0].mxu0
    %2482 = vmatprep.mubr.f32.mxu0 %v2223
    %2483 = vmatmul.mubr.f32.gmra.mrb[0].mxu0 %v2221
    %v2484 = vpop.f32.mrb[0].mxu0
    %v2485 = vadd.f32 0.0, %v2484
    %v2486 = vpop.f32.mrb[0].mxu0
    %2487 = vmatprep.mubr.f32.mxu0 %v2224
    %2488 = vmatmul.mubr.f32.gmra.mrb[0].mxu0 %v2222
    %v2489 = vpop.f32.mrb[0].mxu0
    %v2490 = vadd.f32 0.0, %v2489
    %v2491 = vpop.f32.mrb[0].mxu0
    %2492 = vmatprep.mubr.f32.mxu0 %v2225
    %2493 = vmatmul.mubr.f32.gmra.mrb[0].mxu0 %v2223
    %v2494 = vpop.f32.mrb[0].mxu0
    %v2495 = vadd.f32 0.0, %v2494
    %v2496 = vpop.f32.mrb[0].mxu0
    %2497 = vmatprep.mubr.f32.mxu0 %v2226
    %2498 = vmatmul.mubr.f32.gmra.mrb[0].mxu0 %v2224
    %v2499 = vpop.f32.mrb[0].mxu0
    %v2500 = vadd.f32 0.0, %v2499
    %v2501 = vpop.f32.mrb[0].mxu0
    %2502 = vdwg.mxu0
    %2503 = vmatprep.subr.mxu0 0.0
    %2504 = vmatpush1.msra.mxu0 %v2262
    %2505 = vmatprep.subr.mxu0 0.0
    %2506 = vmatpush1.msra.mxu0 %v2263
    %2507 = vmatprep.subr.mxu0 0.0
    %2508 = vmatpush1.msra.mxu0 %v2264
    %2509 = vmatprep.subr.mxu0 0.0
    %2510 = vmatpush1.msra.mxu0 %v2265
    %2511 = vmatprep.subr.mxu0 0.0
    %2512 = vmatpush1.msra.mxu0 %v2266
    %2513 = vmatprep.subr.mxu0 0.0
    %2514 = vmatpush1.msra.mxu0 %v2267
    %2515 = vmatprep.subr.mxu0 0.0
    %2516 = vmatpush1.msra.mxu0 %v2268
    %2517 = vmatprep.subr.mxu0 0.0
    %2518 = vmatpush1.msra.mxu0 %v2269
    %2519 = vmatprep.subr.mxu0 0.0
    %2520 = vmatpush1.msra.mxu0 %v2270
    %2521 = vmatprep.subr.mxu0 0.0
    %2522 = vmatpush1.msra.mxu0 %v2271
    %2523 = vmatprep.subr.mxu0 0.0
    %2524 = vmatpush1.msra.mxu0 %v2272
    %2525 = vmatprep.subr.mxu0 0.0
    %2526 = vmatpush1.msra.mxu0 %v2273
    %2527 = vmatprep.subr.mxu0 0.0
    %2528 = vmatpush1.msra.mxu0 %v2274
    %2529 = vmatprep.subr.mxu0 0.0
    %2530 = vmatpush1.msra.mxu0 %v2275
    %2531 = vmatprep.subr.mxu0 0.0
    %2532 = vmatpush1.msra.mxu0 %v2276
    %2533 = vmatprep.subr.mxu0 0.0
    %2534 = vmatpush1.msra.mxu0 %v2277
    %2535 = vmatprep.subr.mxu0 0.0
    %2536 = vmatpush1.msra.mxu0 0.0
    %2537 = vmatprep.subr.mxu0 0.0
    %2538 = vmatpush1.msra.mxu0 0.0
    %2539 = vmatprep.subr.mxu0 0.0
    %2540 = vmatpush1.msra.mxu0 0.0
    %2541 = vmatprep.subr.mxu0 0.0
    %2542 = vmatpush1.msra.mxu0 0.0
    %2543 = vmatprep.subr.mxu0 0.0
    %2544 = vmatpush1.msra.mxu0 0.0
    %2545 = vmatprep.subr.mxu0 0.0
    %2546 = vmatpush1.msra.mxu0 0.0
    %2547 = vmatprep.subr.mxu0 0.0
    %2548 = vmatpush1.msra.mxu0 0.0
    %2549 = vmatprep.subr.mxu0 0.0
    %2550 = vmatpush1.msra.mxu0 0.0
    %2551 = vmatprep.subr.mxu0 0.0
    %2552 = vmatpush1.msra.mxu0 0.0
    %2553 = vmatprep.subr.mxu0 0.0
    %2554 = vmatpush1.msra.mxu0 0.0
    %2555 = vmatprep.subr.mxu0 0.0
    %2556 = vmatpush1.msra.mxu0 0.0
    %2557 = vmatprep.subr.mxu0 0.0
    %2558 = vmatpush1.msra.mxu0 0.0
    %2559 = vmatprep.subr.mxu0 0.0
    %2560 = vmatpush1.msra.mxu0 0.0
    %2561 = vmatprep.subr.mxu0 0.0
    %2562 = vmatpush1.msra.mxu0 0.0
    %2563 = vmatprep.subr.mxu0 0.0
    %2564 = vmatpush1.msra.mxu0 0.0
    %2565 = vmatprep.subr.mxu0 0.0
    %2566 = vmatpush1.msra.mxu0 0.0
    %2567 = vmatprep.mubr.f32.mxu0 0.0
    %2568 = vmatmul.mubr.f32.gmra.mrb[0].mxu0 %v2197
    %v2569 = vpop.f32.mrb[0].mxu0
    %v2570 = vadd.f32 %v2345, %v2569
    %v2571 = vpop.f32.mrb[0].mxu0
    %2572 = vmatprep.mubr.f32.mxu0 0.0
    %2573 = vmatmul.mubr.f32.gmra.mrb[0].mxu0 %v2198
    %v2574 = vpop.f32.mrb[0].mxu0
    %v2575 = vadd.f32 %v2350, %v2574
    %v2576 = vpop.f32.mrb[0].mxu0
    %2577 = vmatprep.mubr.f32.mxu0 0.0
    %2578 = vmatmul.mubr.f32.gmra.mrb[0].mxu0 %v2199
    %v2579 = vpop.f32.mrb[0].mxu0
    %v2580 = vadd.f32 %v2355, %v2579
    %v2581 = vpop.f32.mrb[0].mxu0
    %2582 = vmatprep.mubr.f32.mxu0 0.0
    %2583 = vmatmul.mubr.f32.gmra.mrb[0].mxu0 %v2200
    %v2584 = vpop.f32.mrb[0].mxu0
    %v2585 = vadd.f32 %v2360, %v2584
    %v2586 = vpop.f32.mrb[0].mxu0
    %2587 = vmatprep.mubr.f32.mxu0 0.0
    %2588 = vmatmul.mubr.f32.gmra.mrb[0].mxu0 %v2201
    %v2589 = vpop.f32.mrb[0].mxu0
    %v2590 = vadd.f32 %v2365, %v2589
    %v2591 = vpop.f32.mrb[0].mxu0
    %2592 = vmatprep.mubr.f32.mxu0 0.0
    %2593 = vmatmul.mubr.f32.gmra.mrb[0].mxu0 %v2202
    %v2594 = vpop.f32.mrb[0].mxu0
    %v2595 = vadd.f32 %v2370, %v2594
    %v2596 = vpop.f32.mrb[0].mxu0
    %2597 = vmatprep.mubr.f32.mxu0 0.0
    %2598 = vmatmul.mubr.f32.gmra.mrb[0].mxu0 %v2203
    %v2599 = vpop.f32.mrb[0].mxu0
    %v2600 = vadd.f32 %v2375, %v2599
    %v2601 = vpop.f32.mrb[0].mxu0
    %2602 = vmatprep.mubr.f32.mxu0 0.0
    %2603 = vmatmul.mubr.f32.gmra.mrb[0].mxu0 %v2204
    %v2604 = vpop.f32.mrb[0].mxu0
    %v2605 = vadd.f32 %v2380, %v2604
    %v2606 = vpop.f32.mrb[0].mxu0
    %2607 = vmatprep.mubr.f32.mxu0 0.0
    %2608 = vmatmul.mubr.f32.gmra.mrb[0].mxu0 %v2205
    %v2609 = vpop.f32.mrb[0].mxu0
    %v2610 = vadd.f32 %v2385, %v2609
    %v2611 = vpop.f32.mrb[0].mxu0
    %2612 = vmatprep.mubr.f32.mxu0 0.0
    %2613 = vmatmul.mubr.f32.gmra.mrb[0].mxu0 %v2206
    %v2614 = vpop.f32.mrb[0].mxu0
    %v2615 = vadd.f32 %v2390, %v2614
    %v2616 = vpop.f32.mrb[0].mxu0
    %2617 = vmatprep.mubr.f32.mxu0 0.0
    %2618 = vmatmul.mubr.f32.gmra.mrb[0].mxu0 %v2207
    %v2619 = vpop.f32.mrb[0].mxu0
    %v2620 = vadd.f32 %v2395, %v2619
    %v2621 = vpop.f32.mrb[0].mxu0
    %2622 = vmatprep.mubr.f32.mxu0 0.0
    %2623 = vmatmul.mubr.f32.gmra.mrb[0].mxu0 %v2208
    %v2624 = vpop.f32.mrb[0].mxu0
    %v2625 = vadd.f32 %v2400, %v2624
    %v2626 = vpop.f32.mrb[0].mxu0
    %2627 = vmatprep.mubr.f32.mxu0 0.0
    %2628 = vmatmul.mubr.f32.gmra.mrb[0].mxu0 %v2209
    %v2629 = vpop.f32.mrb[0].mxu0
    %v2630 = vadd.f32 %v2405, %v2629
    %v2631 = vpop.f32.mrb[0].mxu0
    %2632 = vmatprep.mubr.f32.mxu0 0.0
    %2633 = vmatmul.mubr.f32.gmra.mrb[0].mxu0 %v2210
    %v2634 = vpop.f32.mrb[0].mxu0
    %v2635 = vadd.f32 %v2410, %v2634
    %v2636 = vpop.f32.mrb[0].mxu0
    %2637 = vmatprep.mubr.f32.mxu0 0.0
    %2638 = vmatmul.mubr.f32.gmra.mrb[0].mxu0 %v2211
    %v2639 = vpop.f32.mrb[0].mxu0
    %v2640 = vadd.f32 %v2415, %v2639
    %v2641 = vpop.f32.mrb[0].mxu0
    %2642 = vmatprep.mubr.f32.mxu0 0.0
    %2643 = vmatmul.mubr.f32.gmra.mrb[0].mxu0 %v2212
    %v2644 = vpop.f32.mrb[0].mxu0
    %v2645 = vadd.f32 %v2420, %v2644
    %v2646 = vpop.f32.mrb[0].mxu0
    %2647 = vmatprep.mubr.f32.mxu0 0.0
    %2648 = vmatmul.mubr.f32.gmra.mrb[0].mxu0 %v2213
    %v2649 = vpop.f32.mrb[0].mxu0
    %v2650 = vadd.f32 %v2425, %v2649
    %v2651 = vpop.f32.mrb[0].mxu0
    %2652 = vmatprep.mubr.f32.mxu0 0.0
    %2653 = vmatmul.mubr.f32.gmra.mrb[0].mxu0 %v2214
    %v2654 = vpop.f32.mrb[0].mxu0
    %v2655 = vadd.f32 %v2430, %v2654
    %v2656 = vpop.f32.mrb[0].mxu0
    %2657 = vmatprep.mubr.f32.mxu0 0.0
    %2658 = vmatmul.mubr.f32.gmra.mrb[0].mxu0 %v2215
    %v2659 = vpop.f32.mrb[0].mxu0
    %v2660 = vadd.f32 %v2435, %v2659
    %v2661 = vpop.f32.mrb[0].mxu0
    %2662 = vmatprep.mubr.f32.mxu0 0.0
    %2663 = vmatmul.mubr.f32.gmra.mrb[0].mxu0 %v2216
    %v2664 = vpop.f32.mrb[0].mxu0
    %v2665 = vadd.f32 %v2440, %v2664
    %v2666 = vpop.f32.mrb[0].mxu0
    %2667 = vmatprep.mubr.f32.mxu0 0.0
    %2668 = vmatmul.mubr.f32.gmra.mrb[0].mxu0 %v2217
    %v2669 = vpop.f32.mrb[0].mxu0
    %v2670 = vadd.f32 %v2445, %v2669
    %v2671 = vpop.f32.mrb[0].mxu0
    %2672 = vmatprep.mubr.f32.mxu0 0.0
    %2673 = vmatmul.mubr.f32.gmra.mrb[0].mxu0 %v2218
    %v2674 = vpop.f32.mrb[0].mxu0
    %v2675 = vadd.f32 %v2450, %v2674
    %v2676 = vpop.f32.mrb[0].mxu0
    %2677 = vmatprep.mubr.f32.mxu0 0.0
    %2678 = vmatmul.mubr.f32.gmra.mrb[0].mxu0 %v2219
    %v2679 = vpop.f32.mrb[0].mxu0
    %v2680 = vadd.f32 %v2455, %v2679
    %v2681 = vpop.f32.mrb[0].mxu0
    %2682 = vmatprep.mubr.f32.mxu0 0.0
    %2683 = vmatmul.mubr.f32.gmra.mrb[0].mxu0 %v2220
    %v2684 = vpop.f32.mrb[0].mxu0
    %v2685 = vadd.f32 %v2460, %v2684
    %v2686 = vpop.f32.mrb[0].mxu0
    %2687 = vmatprep.mubr.f32.mxu0 0.0
    %2688 = vmatmul.mubr.f32.gmra.mrb[0].mxu0 %v2221
    %v2689 = vpop.f32.mrb[0].mxu0
    %v2690 = vadd.f32 %v2465, %v2689
    %v2691 = vpop.f32.mrb[0].mxu0
    %2692 = vmatprep.mubr.f32.mxu0 0.0
    %2693 = vmatmul.mubr.f32.gmra.mrb[0].mxu0 %v2222
    %v2694 = vpop.f32.mrb[0].mxu0
    %v2695 = vadd.f32 %v2470, %v2694
    %v2696 = vpop.f32.mrb[0].mxu0
    %2697 = vmatprep.mubr.f32.mxu0 0.0
    %2698 = vmatmul.mubr.f32.gmra.mrb[0].mxu0 %v2223
    %v2699 = vpop.f32.mrb[0].mxu0
    %v2700 = vadd.f32 %v2475, %v2699
    %v2701 = vpop.f32.mrb[0].mxu0
    %2702 = vmatprep.mubr.f32.mxu0 0.0
    %2703 = vmatmul.mubr.f32.gmra.mrb[0].mxu0 %v2224
    %v2704 = vpop.f32.mrb[0].mxu0
    %v2705 = vadd.f32 %v2480, %v2704
    %v2706 = vpop.f32.mrb[0].mxu0
    %2707 = vmatprep.mubr.f32.mxu0 0.0
    %2708 = vmatmul.mubr.f32.gmra.mrb[0].mxu0 %v2225
    %v2709 = vpop.f32.mrb[0].mxu0
    %v2710 = vadd.f32 %v2485, %v2709
    %v2711 = vpop.f32.mrb[0].mxu0
    %2712 = vmatprep.mubr.f32.mxu0 0.0
    %2713 = vmatmul.mubr.f32.gmra.mrb[0].mxu0 %v2226
    %v2714 = vpop.f32.mrb[0].mxu0
    %v2715 = vadd.f32 %v2490, %v2714
    %v2716 = vpop.f32.mrb[0].mxu0
    %2717 = vmatprep.mubr.f32.mxu0 0.0
    %2718 = vmatmul.mubr.f32.gmra.mrb[0].mxu0 %v2227
    %v2719 = vpop.f32.mrb[0].mxu0
    %v2720 = vadd.f32 %v2495, %v2719
    %v2721 = vpop.f32.mrb[0].mxu0
    %2722 = vmatprep.mubr.f32.mxu0 0.0
    %2723 = vmatmul.mubr.f32.gmra.mrb[0].mxu0 %v2228
    %v2724 = vpop.f32.mrb[0].mxu0
    %v2725 = vadd.f32 %v2500, %v2724
    %v2726 = vpop.f32.mrb[0].mxu0
    %2727 = vdwg.mxu0
    %2728 = vmatprep.subr.mxu0 0.0
    %2729 = vmatpush1.msra.mxu0 %v2145
    %2730 = vmatprep.subr.mxu0 0.0
    %2731 = vmatpush1.msra.mxu0 %v2146
    %2732 = vmatprep.subr.mxu0 0.0
    %2733 = vmatpush1.msra.mxu0 %v2147
    %2734 = vmatprep.subr.mxu0 0.0
    %2735 = vmatpush1.msra.mxu0 %v2148
    %2736 = vmatprep.subr.mxu0 0.0
    %2737 = vmatpush1.msra.mxu0 %v2149
    %2738 = vmatprep.subr.mxu0 0.0
    %2739 = vmatpush1.msra.mxu0 %v2150
    %2740 = vmatprep.subr.mxu0 0.0
    %2741 = vmatpush1.msra.mxu0 %v2151
    %2742 = vmatprep.subr.mxu0 0.0
    %2743 = vmatpush1.msra.mxu0 %v2152
    %2744 = vmatprep.subr.mxu0 0.0
    %2745 = vmatpush1.msra.mxu0 %v2153
    %2746 = vmatprep.subr.mxu0 0.0
    %2747 = vmatpush1.msra.mxu0 %v2154
    %2748 = vmatprep.subr.mxu0 0.0
    %2749 = vmatpush1.msra.mxu0 %v2155
    %2750 = vmatprep.subr.mxu0 0.0
    %2751 = vmatpush1.msra.mxu0 %v2156
    %2752 = vmatprep.subr.mxu0 0.0
    %2753 = vmatpush1.msra.mxu0 %v2157
    %2754 = vmatprep.subr.mxu0 0.0
    %2755 = vmatpush1.msra.mxu0 %v2158
    %2756 = vmatprep.subr.mxu0 0.0
    %2757 = vmatpush1.msra.mxu0 %v2159
    %2758 = vmatprep.subr.mxu0 0.0
    %2759 = vmatpush1.msra.mxu0 %v2160
    %2760 = vmatprep.subr.mxu0 0.0
    %2761 = vmatpush1.msra.mxu0 %v2161
    %2762 = vmatprep.subr.mxu0 0.0
    %2763 = vmatpush1.msra.mxu0 %v2162
    %2764 = vmatprep.subr.mxu0 0.0
    %2765 = vmatpush1.msra.mxu0 %v2163
    %2766 = vmatprep.subr.mxu0 0.0
    %2767 = vmatpush1.msra.mxu0 %v2164
    %2768 = vmatprep.subr.mxu0 0.0
    %2769 = vmatpush1.msra.mxu0 %v2165
    %2770 = vmatprep.subr.mxu0 0.0
    %2771 = vmatpush1.msra.mxu0 %v2166
    %2772 = vmatprep.subr.mxu0 0.0
    %2773 = vmatpush1.msra.mxu0 %v2167
    %2774 = vmatprep.subr.mxu0 0.0
    %2775 = vmatpush1.msra.mxu0 %v2168
    %2776 = vmatprep.subr.mxu0 0.0
    %2777 = vmatpush1.msra.mxu0 %v2169
    %2778 = vmatprep.subr.mxu0 0.0
    %2779 = vmatpush1.msra.mxu0 %v2170
    %2780 = vmatprep.subr.mxu0 0.0
    %2781 = vmatpush1.msra.mxu0 %v2171
    %2782 = vmatprep.subr.mxu0 0.0
    %2783 = vmatpush1.msra.mxu0 %v2172
    %2784 = vmatprep.subr.mxu0 0.0
    %2785 = vmatpush1.msra.mxu0 %v2173
    %2786 = vmatprep.subr.mxu0 0.0
    %2787 = vmatpush1.msra.mxu0 %v2174
    %2788 = vmatprep.subr.mxu0 0.0
    %2789 = vmatpush1.msra.mxu0 %v2175
    %2790 = vmatprep.subr.mxu0 0.0
    %2791 = vmatpush1.msra.mxu0 %v2176
    %2792 = vmatprep.mubr.f32.mxu0 %v2111
    %2793 = vmatmul.mubr.f32.gmra.mrb[0].mxu0 %v2109
    %v2794 = vpop.f32.mrb[0].mxu0
    %v2795 = vadd.f32 %v2570, %v2794
    %v2796 = vpop.f32.mrb[0].mxu0
    %2797 = vmatprep.mubr.f32.mxu0 %v2112
    %2798 = vmatmul.mubr.f32.gmra.mrb[0].mxu0 %v2110
    %v2799 = vpop.f32.mrb[0].mxu0
    %v2800 = vadd.f32 %v2575, %v2799
    %v2801 = vpop.f32.mrb[0].mxu0
    %2802 = vmatprep.mubr.f32.mxu0 %v2113
    %2803 = vmatmul.mubr.f32.gmra.mrb[0].mxu0 %v2111
    %v2804 = vpop.f32.mrb[0].mxu0
    %v2805 = vadd.f32 %v2580, %v2804
    %v2806 = vpop.f32.mrb[0].mxu0
    %2807 = vmatprep.mubr.f32.mxu0 %v2114
    %2808 = vmatmul.mubr.f32.gmra.mrb[0].mxu0 %v2112
    %v2809 = vpop.f32.mrb[0].mxu0
    %v2810 = vadd.f32 %v2585, %v2809
    %v2811 = vpop.f32.mrb[0].mxu0
    %2812 = vmatprep.mubr.f32.mxu0 %v2115
    %2813 = vmatmul.mubr.f32.gmra.mrb[0].mxu0 %v2113
    %v2814 = vpop.f32.mrb[0].mxu0
    %v2815 = vadd.f32 %v2590, %v2814
    %v2816 = vpop.f32.mrb[0].mxu0
    %2817 = vmatprep.mubr.f32.mxu0 %v2116
    %2818 = vmatmul.mubr.f32.gmra.mrb[0].mxu0 %v2114
    %v2819 = vpop.f32.mrb[0].mxu0
    %v2820 = vadd.f32 %v2595, %v2819
    %v2821 = vpop.f32.mrb[0].mxu0
    %2822 = vmatprep.mubr.f32.mxu0 %v2117
    %2823 = vmatmul.mubr.f32.gmra.mrb[0].mxu0 %v2115
    %v2824 = vpop.f32.mrb[0].mxu0
    %v2825 = vadd.f32 %v2600, %v2824
    %v2826 = vpop.f32.mrb[0].mxu0
    %2827 = vmatprep.mubr.f32.mxu0 %v2118
    %2828 = vmatmul.mubr.f32.gmra.mrb[0].mxu0 %v2116
    %v2829 = vpop.f32.mrb[0].mxu0
    %v2830 = vadd.f32 %v2605, %v2829
    %v2831 = vpop.f32.mrb[0].mxu0
    %2832 = vmatprep.mubr.f32.mxu0 %v2119
    %2833 = vmatmul.mubr.f32.gmra.mrb[0].mxu0 %v2117
    %v2834 = vpop.f32.mrb[0].mxu0
    %v2835 = vadd.f32 %v2610, %v2834
    %v2836 = vpop.f32.mrb[0].mxu0
    %2837 = vmatprep.mubr.f32.mxu0 %v2120
    %2838 = vmatmul.mubr.f32.gmra.mrb[0].mxu0 %v2118
    %v2839 = vpop.f32.mrb[0].mxu0
    %v2840 = vadd.f32 %v2615, %v2839
    %v2841 = vpop.f32.mrb[0].mxu0
    %2842 = vmatprep.mubr.f32.mxu0 %v2121
    %2843 = vmatmul.mubr.f32.gmra.mrb[0].mxu0 %v2119
    %v2844 = vpop.f32.mrb[0].mxu0
    %v2845 = vadd.f32 %v2620, %v2844
    %v2846 = vpop.f32.mrb[0].mxu0
    %2847 = vmatprep.mubr.f32.mxu0 %v2122
    %2848 = vmatmul.mubr.f32.gmra.mrb[0].mxu0 %v2120
    %v2849 = vpop.f32.mrb[0].mxu0
    %v2850 = vadd.f32 %v2625, %v2849
    %v2851 = vpop.f32.mrb[0].mxu0
    %2852 = vmatprep.mubr.f32.mxu0 %v2123
    %2853 = vmatmul.mubr.f32.gmra.mrb[0].mxu0 %v2121
    %v2854 = vpop.f32.mrb[0].mxu0
    %v2855 = vadd.f32 %v2630, %v2854
    %v2856 = vpop.f32.mrb[0].mxu0
    %2857 = vmatprep.mubr.f32.mxu0 %v2124
    %2858 = vmatmul.mubr.f32.gmra.mrb[0].mxu0 %v2122
    %v2859 = vpop.f32.mrb[0].mxu0
    %v2860 = vadd.f32 %v2635, %v2859
    %v2861 = vpop.f32.mrb[0].mxu0
    %2862 = vmatprep.mubr.f32.mxu0 %v2125
    %2863 = vmatmul.mubr.f32.gmra.mrb[0].mxu0 %v2123
    %v2864 = vpop.f32.mrb[0].mxu0
    %v2865 = vadd.f32 %v2640, %v2864
    %v2866 = vpop.f32.mrb[0].mxu0
    %2867 = vmatprep.mubr.f32.mxu0 %v2126
    %2868 = vmatmul.mubr.f32.gmra.mrb[0].mxu0 %v2124
    %v2869 = vpop.f32.mrb[0].mxu0
    %v2870 = vadd.f32 %v2645, %v2869
    %v2871 = vpop.f32.mrb[0].mxu0
    %2872 = vmatprep.mubr.f32.mxu0 %v2127
    %2873 = vmatmul.mubr.f32.gmra.mrb[0].mxu0 %v2125
    %v2874 = vpop.f32.mrb[0].mxu0
    %v2875 = vadd.f32 %v2650, %v2874
    %v2876 = vpop.f32.mrb[0].mxu0
    %2877 = vmatprep.mubr.f32.mxu0 %v2128
    %2878 = vmatmul.mubr.f32.gmra.mrb[0].mxu0 %v2126
    %v2879 = vpop.f32.mrb[0].mxu0
    %v2880 = vadd.f32 %v2655, %v2879
    %v2881 = vpop.f32.mrb[0].mxu0
    %2882 = vmatprep.mubr.f32.mxu0 %v2129
    %2883 = vmatmul.mubr.f32.gmra.mrb[0].mxu0 %v2127
    %v2884 = vpop.f32.mrb[0].mxu0
    %v2885 = vadd.f32 %v2660, %v2884
    %v2886 = vpop.f32.mrb[0].mxu0
    %2887 = vmatprep.mubr.f32.mxu0 %v2130
    %2888 = vmatmul.mubr.f32.gmra.mrb[0].mxu0 %v2128
    %v2889 = vpop.f32.mrb[0].mxu0
    %v2890 = vadd.f32 %v2665, %v2889
    %v2891 = vpop.f32.mrb[0].mxu0
    %2892 = vmatprep.mubr.f32.mxu0 %v2131
    %2893 = vmatmul.mubr.f32.gmra.mrb[0].mxu0 %v2129
    %v2894 = vpop.f32.mrb[0].mxu0
    %v2895 = vadd.f32 %v2670, %v2894
    %v2896 = vpop.f32.mrb[0].mxu0
    %2897 = vmatprep.mubr.f32.mxu0 %v2132
    %2898 = vmatmul.mubr.f32.gmra.mrb[0].mxu0 %v2130
    %v2899 = vpop.f32.mrb[0].mxu0
    %v2900 = vadd.f32 %v2675, %v2899
    %v2901 = vpop.f32.mrb[0].mxu0
    %2902 = vmatprep.mubr.f32.mxu0 %v2133
    %2903 = vmatmul.mubr.f32.gmra.mrb[0].mxu0 %v2131
    %v2904 = vpop.f32.mrb[0].mxu0
    %v2905 = vadd.f32 %v2680, %v2904
    %v2906 = vpop.f32.mrb[0].mxu0
    %2907 = vmatprep.mubr.f32.mxu0 %v2134
    %2908 = vmatmul.mubr.f32.gmra.mrb[0].mxu0 %v2132
    %v2909 = vpop.f32.mrb[0].mxu0
    %v2910 = vadd.f32 %v2685, %v2909
    %v2911 = vpop.f32.mrb[0].mxu0
    %2912 = vmatprep.mubr.f32.mxu0 %v2135
    %2913 = vmatmul.mubr.f32.gmra.mrb[0].mxu0 %v2133
    %v2914 = vpop.f32.mrb[0].mxu0
    %v2915 = vadd.f32 %v2690, %v2914
    %v2916 = vpop.f32.mrb[0].mxu0
    %2917 = vmatprep.mubr.f32.mxu0 %v2136
    %2918 = vmatmul.mubr.f32.gmra.mrb[0].mxu0 %v2134
    %v2919 = vpop.f32.mrb[0].mxu0
    %v2920 = vadd.f32 %v2695, %v2919
    %v2921 = vpop.f32.mrb[0].mxu0
    %2922 = vmatprep.mubr.f32.mxu0 %v2137
    %2923 = vmatmul.mubr.f32.gmra.mrb[0].mxu0 %v2135
    %v2924 = vpop.f32.mrb[0].mxu0
    %v2925 = vadd.f32 %v2700, %v2924
    %v2926 = vpop.f32.mrb[0].mxu0
    %2927 = vmatprep.mubr.f32.mxu0 %v2138
    %2928 = vmatmul.mubr.f32.gmra.mrb[0].mxu0 %v2136
    %v2929 = vpop.f32.mrb[0].mxu0
    %v2930 = vadd.f32 %v2705, %v2929
    %v2931 = vpop.f32.mrb[0].mxu0
    %2932 = vmatprep.mubr.f32.mxu0 %v2139
    %2933 = vmatmul.mubr.f32.gmra.mrb[0].mxu0 %v2137
    %v2934 = vpop.f32.mrb[0].mxu0
    %v2935 = vadd.f32 %v2710, %v2934
    %v2936 = vpop.f32.mrb[0].mxu0
    %2937 = vmatprep.mubr.f32.mxu0 %v2140
    %2938 = vmatmul.mubr.f32.gmra.mrb[0].mxu0 %v2138
    %v2939 = vpop.f32.mrb[0].mxu0
    %v2940 = vadd.f32 %v2715, %v2939
    %v2941 = vpop.f32.mrb[0].mxu0
    %2942 = vmatprep.mubr.f32.mxu0 %v2141
    %2943 = vmatmul.mubr.f32.gmra.mrb[0].mxu0 %v2139
    %v2944 = vpop.f32.mrb[0].mxu0
    %v2945 = vadd.f32 %v2720, %v2944
    %v2946 = vpop.f32.mrb[0].mxu0
    %2947 = vmatprep.mubr.f32.mxu0 %v2142
    %2948 = vmatmul.mubr.f32.gmra.mrb[0].mxu0 %v2140
    %v2949 = vpop.f32.mrb[0].mxu0
    %v2950 = vadd.f32 %v2725, %v2949
    %v2951 = vpop.f32.mrb[0].mxu0
    %2952 = vdwg.mxu0
    %2953 = vmatprep.subr.mxu0 0.0
    %2954 = vmatpush1.msra.mxu0 %v2177
    %2955 = vmatprep.subr.mxu0 0.0
    %2956 = vmatpush1.msra.mxu0 %v2178
    %2957 = vmatprep.subr.mxu0 0.0
    %2958 = vmatpush1.msra.mxu0 %v2179
    %2959 = vmatprep.subr.mxu0 0.0
    %2960 = vmatpush1.msra.mxu0 %v2180
    %2961 = vmatprep.subr.mxu0 0.0
    %2962 = vmatpush1.msra.mxu0 %v2181
    %2963 = vmatprep.subr.mxu0 0.0
    %2964 = vmatpush1.msra.mxu0 %v2182
    %2965 = vmatprep.subr.mxu0 0.0
    %2966 = vmatpush1.msra.mxu0 %v2183
    %2967 = vmatprep.subr.mxu0 0.0
    %2968 = vmatpush1.msra.mxu0 %v2184
    %2969 = vmatprep.subr.mxu0 0.0
    %2970 = vmatpush1.msra.mxu0 %v2185
    %2971 = vmatprep.subr.mxu0 0.0
    %2972 = vmatpush1.msra.mxu0 %v2186
    %2973 = vmatprep.subr.mxu0 0.0
    %2974 = vmatpush1.msra.mxu0 %v2187
    %2975 = vmatprep.subr.mxu0 0.0
    %2976 = vmatpush1.msra.mxu0 %v2188
    %2977 = vmatprep.subr.mxu0 0.0
    %2978 = vmatpush1.msra.mxu0 %v2189
    %2979 = vmatprep.subr.mxu0 0.0
    %2980 = vmatpush1.msra.mxu0 %v2190
    %2981 = vmatprep.subr.mxu0 0.0
    %2982 = vmatpush1.msra.mxu0 %v2191
    %2983 = vmatprep.subr.mxu0 0.0
    %2984 = vmatpush1.msra.mxu0 %v2192
    %2985 = vmatprep.subr.mxu0 0.0
    %2986 = vmatpush1.msra.mxu0 0.0
    %2987 = vmatprep.subr.mxu0 0.0
    %2988 = vmatpush1.msra.mxu0 0.0
    %2989 = vmatprep.subr.mxu0 0.0
    %2990 = vmatpush1.msra.mxu0 0.0
    %2991 = vmatprep.subr.mxu0 0.0
    %2992 = vmatpush1.msra.mxu0 0.0
    %2993 = vmatprep.subr.mxu0 0.0
    %2994 = vmatpush1.msra.mxu0 0.0
    %2995 = vmatprep.subr.mxu0 0.0
    %2996 = vmatpush1.msra.mxu0 0.0
    %2997 = vmatprep.subr.mxu0 0.0
    %2998 = vmatpush1.msra.mxu0 0.0
    %2999 = vmatprep.subr.mxu0 0.0
    %3000 = vmatpush1.msra.mxu0 0.0
    %3001 = vmatprep.subr.mxu0 0.0
    %3002 = vmatpush1.msra.mxu0 0.0
    %3003 = vmatprep.subr.mxu0 0.0
    %3004 = vmatpush1.msra.mxu0 0.0
    %3005 = vmatprep.subr.mxu0 0.0
    %3006 = vmatpush1.msra.mxu0 0.0
    %3007 = vmatprep.subr.mxu0 0.0
    %3008 = vmatpush1.msra.mxu0 0.0
    %3009 = vmatprep.subr.mxu0 0.0
    %3010 = vmatpush1.msra.mxu0 0.0
    %3011 = vmatprep.subr.mxu0 0.0
    %3012 = vmatpush1.msra.mxu0 0.0
    %3013 = vmatprep.subr.mxu0 0.0
    %3014 = vmatpush1.msra.mxu0 0.0
    %3015 = vmatprep.subr.mxu0 0.0
    %3016 = vmatpush1.msra.mxu0 0.0
    %3017 = vmatprep.mubr.f32.mxu0 0.0
    %3018 = vmatmul.mubr.f32.gmra.mrb[0].mxu0 %v2113
    %v3019 = vpop.f32.mrb[0].mxu0
    %v3020 = vadd.f32 %v2795, %v3019
    %v3021 = vpop.f32.mrb[0].mxu0
    %3022 = vmatprep.mubr.f32.mxu0 0.0
    %3023 = vmatmul.mubr.f32.gmra.mrb[0].mxu0 %v2114
    %v3024 = vpop.f32.mrb[0].mxu0
    %v3025 = vadd.f32 %v2800, %v3024
    %v3026 = vpop.f32.mrb[0].mxu0
    %3027 = vmatprep.mubr.f32.mxu0 0.0
    %3028 = vmatmul.mubr.f32.gmra.mrb[0].mxu0 %v2115
    %v3029 = vpop.f32.mrb[0].mxu0
    %v3030 = vadd.f32 %v2805, %v3029
    %v3031 = vpop.f32.mrb[0].mxu0
    %3032 = vmatprep.mubr.f32.mxu0 0.0
    %3033 = vmatmul.mubr.f32.gmra.mrb[0].mxu0 %v2116
    %v3034 = vpop.f32.mrb[0].mxu0
    %v3035 = vadd.f32 %v2810, %v3034
    %v3036 = vpop.f32.mrb[0].mxu0
    %3037 = vmatprep.mubr.f32.mxu0 0.0
    %3038 = vmatmul.mubr.f32.gmra.mrb[0].mxu0 %v2117
    %v3039 = vpop.f32.mrb[0].mxu0
    %v3040 = vadd.f32 %v2815, %v3039
    %v3041 = vpop.f32.mrb[0].mxu0
    %3042 = vmatprep.mubr.f32.mxu0 0.0
    %3043 = vmatmul.mubr.f32.gmra.mrb[0].mxu0 %v2118
    %v3044 = vpop.f32.mrb[0].mxu0
    %v3045 = vadd.f32 %v2820, %v3044
    %v3046 = vpop.f32.mrb[0].mxu0
    %3047 = vmatprep.mubr.f32.mxu0 0.0
    %3048 = vmatmul.mubr.f32.gmra.mrb[0].mxu0 %v2119
    %v3049 = vpop.f32.mrb[0].mxu0
    %v3050 = vadd.f32 %v2825, %v3049
    %v3051 = vpop.f32.mrb[0].mxu0
    %3052 = vmatprep.mubr.f32.mxu0 0.0
    %3053 = vmatmul.mubr.f32.gmra.mrb[0].mxu0 %v2120
    %v3054 = vpop.f32.mrb[0].mxu0
    %v3055 = vadd.f32 %v2830, %v3054
    %v3056 = vpop.f32.mrb[0].mxu0
    %3057 = vmatprep.mubr.f32.mxu0 0.0
    %3058 = vmatmul.mubr.f32.gmra.mrb[0].mxu0 %v2121
    %v3059 = vpop.f32.mrb[0].mxu0
    %v3060 = vadd.f32 %v2835, %v3059
    %v3061 = vpop.f32.mrb[0].mxu0
    %3062 = vmatprep.mubr.f32.mxu0 0.0
    %3063 = vmatmul.mubr.f32.gmra.mrb[0].mxu0 %v2122
    %v3064 = vpop.f32.mrb[0].mxu0
    %v3065 = vadd.f32 %v2840, %v3064
    %v3066 = vpop.f32.mrb[0].mxu0
    %3067 = vmatprep.mubr.f32.mxu0 0.0
    %3068 = vmatmul.mubr.f32.gmra.mrb[0].mxu0 %v2123
    %v3069 = vpop.f32.mrb[0].mxu0
    %v3070 = vadd.f32 %v2845, %v3069
    %v3071 = vpop.f32.mrb[0].mxu0
    %3072 = vmatprep.mubr.f32.mxu0 0.0
    %3073 = vmatmul.mubr.f32.gmra.mrb[0].mxu0 %v2124
    %v3074 = vpop.f32.mrb[0].mxu0
    %v3075 = vadd.f32 %v2850, %v3074
    %v3076 = vpop.f32.mrb[0].mxu0
    %3077 = vmatprep.mubr.f32.mxu0 0.0
    %3078 = vmatmul.mubr.f32.gmra.mrb[0].mxu0 %v2125
    %v3079 = vpop.f32.mrb[0].mxu0
    %v3080 = vadd.f32 %v2855, %v3079
    %v3081 = vpop.f32.mrb[0].mxu0
    %3082 = vmatprep.mubr.f32.mxu0 0.0
    %3083 = vmatmul.mubr.f32.gmra.mrb[0].mxu0 %v2126
    %v3084 = vpop.f32.mrb[0].mxu0
    %v3085 = vadd.f32 %v2860, %v3084
    %v3086 = vpop.f32.mrb[0].mxu0
    %3087 = vmatprep.mubr.f32.mxu0 0.0
    %3088 = vmatmul.mubr.f32.gmra.mrb[0].mxu0 %v2127
    %v3089 = vpop.f32.mrb[0].mxu0
    %v3090 = vadd.f32 %v2865, %v3089
    %v3091 = vpop.f32.mrb[0].mxu0
    %3092 = vmatprep.mubr.f32.mxu0 0.0
    %3093 = vmatmul.mubr.f32.gmra.mrb[0].mxu0 %v2128
    %v3094 = vpop.f32.mrb[0].mxu0
    %v3095 = vadd.f32 %v2870, %v3094
    %v3096 = vpop.f32.mrb[0].mxu0
    %3097 = vmatprep.mubr.f32.mxu0 0.0
    %3098 = vmatmul.mubr.f32.gmra.mrb[0].mxu0 %v2129
    %v3099 = vpop.f32.mrb[0].mxu0
    %v3100 = vadd.f32 %v2875, %v3099
    %v3101 = vpop.f32.mrb[0].mxu0
    %3102 = vmatprep.mubr.f32.mxu0 0.0
    %3103 = vmatmul.mubr.f32.gmra.mrb[0].mxu0 %v2130
    %v3104 = vpop.f32.mrb[0].mxu0
    %v3105 = vadd.f32 %v2880, %v3104
    %v3106 = vpop.f32.mrb[0].mxu0
    %3107 = vmatprep.mubr.f32.mxu0 0.0
    %3108 = vmatmul.mubr.f32.gmra.mrb[0].mxu0 %v2131
    %v3109 = vpop.f32.mrb[0].mxu0
    %v3110 = vadd.f32 %v2885, %v3109
    %v3111 = vpop.f32.mrb[0].mxu0
    %3112 = vmatprep.mubr.f32.mxu0 0.0
    %3113 = vmatmul.mubr.f32.gmra.mrb[0].mxu0 %v2132
    %v3114 = vpop.f32.mrb[0].mxu0
    %v3115 = vadd.f32 %v2890, %v3114
    %v3116 = vpop.f32.mrb[0].mxu0
    %3117 = vmatprep.mubr.f32.mxu0 0.0
    %3118 = vmatmul.mubr.f32.gmra.mrb[0].mxu0 %v2133
    %v3119 = vpop.f32.mrb[0].mxu0
    %v3120 = vadd.f32 %v2895, %v3119
    %v3121 = vpop.f32.mrb[0].mxu0
    %3122 = vmatprep.mubr.f32.mxu0 0.0
    %3123 = vmatmul.mubr.f32.gmra.mrb[0].mxu0 %v2134
    %v3124 = vpop.f32.mrb[0].mxu0
    %v3125 = vadd.f32 %v2900, %v3124
    %v3126 = vpop.f32.mrb[0].mxu0
    %3127 = vmatprep.mubr.f32.mxu0 0.0
    %3128 = vmatmul.mubr.f32.gmra.mrb[0].mxu0 %v2135
    %v3129 = vpop.f32.mrb[0].mxu0
    %v3130 = vadd.f32 %v2905, %v3129
    %v3131 = vpop.f32.mrb[0].mxu0
    %3132 = vmatprep.mubr.f32.mxu0 0.0
    %3133 = vmatmul.mubr.f32.gmra.mrb[0].mxu0 %v2136
    %v3134 = vpop.f32.mrb[0].mxu0
    %v3135 = vadd.f32 %v2910, %v3134
    %v3136 = vpop.f32.mrb[0].mxu0
    %3137 = vmatprep.mubr.f32.mxu0 0.0
    %3138 = vmatmul.mubr.f32.gmra.mrb[0].mxu0 %v2137
    %v3139 = vpop.f32.mrb[0].mxu0
    %v3140 = vadd.f32 %v2915, %v3139
    %v3141 = vpop.f32.mrb[0].mxu0
    %3142 = vmatprep.mubr.f32.mxu0 0.0
    %3143 = vmatmul.mubr.f32.gmra.mrb[0].mxu0 %v2138
    %v3144 = vpop.f32.mrb[0].mxu0
    %v3145 = vadd.f32 %v2920, %v3144
    %v3146 = vpop.f32.mrb[0].mxu0
    %3147 = vmatprep.mubr.f32.mxu0 0.0
    %3148 = vmatmul.mubr.f32.gmra.mrb[0].mxu0 %v2139
    %v3149 = vpop.f32.mrb[0].mxu0
    %v3150 = vadd.f32 %v2925, %v3149
    %v3151 = vpop.f32.mrb[0].mxu0
    %3152 = vmatprep.mubr.f32.mxu0 0.0
    %3153 = vmatmul.mubr.f32.gmra.mrb[0].mxu0 %v2140
    %v3154 = vpop.f32.mrb[0].mxu0
    %v3155 = vadd.f32 %v2930, %v3154
    %v3156 = vpop.f32.mrb[0].mxu0
    %3157 = vmatprep.mubr.f32.mxu0 0.0
    %3158 = vmatmul.mubr.f32.gmra.mrb[0].mxu0 %v2141
    %v3159 = vpop.f32.mrb[0].mxu0
    %v3160 = vadd.f32 %v2935, %v3159
    %v3161 = vpop.f32.mrb[0].mxu0
    %3162 = vmatprep.mubr.f32.mxu0 0.0
    %3163 = vmatmul.mubr.f32.gmra.mrb[0].mxu0 %v2142
    %v3164 = vpop.f32.mrb[0].mxu0
    %v3165 = vadd.f32 %v2940, %v3164
    %v3166 = vpop.f32.mrb[0].mxu0
    %3167 = vmatprep.mubr.f32.mxu0 0.0
    %3168 = vmatmul.mubr.f32.gmra.mrb[0].mxu0 %v2143
    %v3169 = vpop.f32.mrb[0].mxu0
    %v3170 = vadd.f32 %v2945, %v3169
    %v3171 = vpop.f32.mrb[0].mxu0
    %3172 = vmatprep.mubr.f32.mxu0 0.0
    %3173 = vmatmul.mubr.f32.gmra.mrb[0].mxu0 %v2144
    %v3174 = vpop.f32.mrb[0].mxu0
    %v3175 = vadd.f32 %v2950, %v3174
    %v3176 = vpop.f32.mrb[0].mxu0
    %3177 = vdwg.mxu0
    %v3178 = vld [vmem:[#allocation3 + $0x2] sm:$0xff]
    %v3179 = vld [vmem:[#allocation3 + $0xa] sm:$0xff]
    %v3180 = vld [vmem:[#allocation3 + $0x1a] sm:$0xff]
    %v3181 = vld [vmem:[#allocation3 + $0x22] sm:$0xff]
    %v3182 = vld [vmem:[#allocation3 + $0x32] sm:$0xff]
    %v3183 = vld [vmem:[#allocation3 + $0x3a] sm:$0xff]
    %v3184 = vld [vmem:[#allocation3 + $0x4a] sm:$0xff]
    %v3185 = vld [vmem:[#allocation3 + $0x52] sm:$0xff]
    %v3186 = vld [vmem:[#allocation3 + $0x62] sm:$0xff]
    %v3187 = vld [vmem:[#allocation3 + $0x6a] sm:$0xff]
    %v3188 = vld [vmem:[#allocation3 + $0x7a] sm:$0xff]
    %v3189 = vld [vmem:[#allocation3 + $0x82] sm:$0xff]
    %v3190 = vld [vmem:[#allocation3 + $0x92] sm:$0xff]
    %v3191 = vld [vmem:[#allocation3 + $0x9a] sm:$0xff]
    %v3192 = vld [vmem:[#allocation3 + $0xaa] sm:$0xff]
    %v3193 = vld [vmem:[#allocation3 + $0xb2] sm:$0xff]
    %v3194 = vld [vmem:[#allocation3 + $0xc2] sm:$0xff]
    %v3195 = vld [vmem:[#allocation3 + $0xca] sm:$0xff]
    %v3196 = vld [vmem:[#allocation3 + $0xda] sm:$0xff]
    %v3197 = vld [vmem:[#allocation3 + $0xe2] sm:$0xff]
    %v3198 = vld [vmem:[#allocation3 + $0xf2] sm:$0xff]
    %v3199 = vld [vmem:[#allocation3 + $0xfa] sm:$0xff]
    %v3200 = vld [vmem:[#allocation3 + $0x10a] sm:$0xff]
    %v3201 = vld [vmem:[#allocation3 + $0x112] sm:$0xff]
    %v3202 = vld [vmem:[#allocation3 + $0x122] sm:$0xff]
    %v3203 = vld [vmem:[#allocation3 + $0x12a] sm:$0xff]
    %v3204 = vld [vmem:[#allocation3 + $0x13a] sm:$0xff]
    %v3205 = vld [vmem:[#allocation3 + $0x142] sm:$0xff]
    %v3206 = vld [vmem:[#allocation3 + $0x152] sm:$0xff]
    %v3207 = vld [vmem:[#allocation3 + $0x15a] sm:$0xff]
    %v3208 = vld [vmem:[#allocation3 + $0x16a] sm:$0xff]
    %v3209 = vld [vmem:[#allocation3 + $0x172] sm:$0xff]
    %v3210 = vld [vmem:[#allocation3 + $0x182] sm:$0xff]
    %v3211 = vld [vmem:[#allocation3 + $0x18a] sm:$0xff]
    %v3212 = vld [vmem:[#allocation3 + $0x19a] sm:$0xff]
    %v3213 = vld [vmem:[#allocation3 + $0x1a2] sm:$0xff]
    %s3214 = scalar_lea.vmem %s2, 768
    %v3215 = vld [vmem:[%s3214] sm:$0xff]
    %v3216 = vld [vmem:[%s3214 + $0x8] sm:$0xff]
    %v3217 = vld [vmem:[%s3214 + $0x10] sm:$0xff]
    %v3218 = vld [vmem:[%s3214 + $0x18] sm:$0xff]
    %v3219 = vld [vmem:[%s3214 + $0x20] sm:$0xff]
    %v3220 = vld [vmem:[%s3214 + $0x28] sm:$0xff]
    %v3221 = vld [vmem:[%s3214 + $0x30] sm:$0xff]
    %v3222 = vld [vmem:[%s3214 + $0x38] sm:$0xff]
    %v3223 = vld [vmem:[%s3214 + $0x40] sm:$0xff]
    %v3224 = vld [vmem:[%s3214 + $0x48] sm:$0xff]
    %v3225 = vld [vmem:[%s3214 + $0x50] sm:$0xff]
    %v3226 = vld [vmem:[%s3214 + $0x58] sm:$0xff]
    %v3227 = vld [vmem:[%s3214 + $0x60] sm:$0xff]
    %v3228 = vld [vmem:[%s3214 + $0x68] sm:$0xff]
    %v3229 = vld [vmem:[%s3214 + $0x70] sm:$0xff]
    %v3230 = vld [vmem:[%s3214 + $0x78] sm:$0xff]
    %v3231 = vld [vmem:[%s3214 + $0x80] sm:$0xff]
    %v3232 = vld [vmem:[%s3214 + $0x88] sm:$0xff]
    %v3233 = vld [vmem:[%s3214 + $0x90] sm:$0xff]
    %v3234 = vld [vmem:[%s3214 + $0x98] sm:$0xff]
    %v3235 = vld [vmem:[%s3214 + $0xa0] sm:$0xff]
    %v3236 = vld [vmem:[%s3214 + $0xa8] sm:$0xff]
    %v3237 = vld [vmem:[%s3214 + $0xb0] sm:$0xff]
    %v3238 = vld [vmem:[%s3214 + $0xb8] sm:$0xff]
    %v3239 = vld [vmem:[%s3214 + $0xc0] sm:$0xff]
    %v3240 = vld [vmem:[%s3214 + $0xc8] sm:$0xff]
    %v3241 = vld [vmem:[%s3214 + $0xd0] sm:$0xff]
    %v3242 = vld [vmem:[%s3214 + $0xd8] sm:$0xff]
    %v3243 = vld [vmem:[%s3214 + $0xe0] sm:$0xff]
    %v3244 = vld [vmem:[%s3214 + $0xe8] sm:$0xff]
    %v3245 = vld [vmem:[%s3214 + $0xf0] sm:$0xff]
    %v3246 = vld [vmem:[%s3214 + $0xf8] sm:$0xff]
    %v3247 = vld [vmem:[%s3214 + $0x100] sm:$0xff]
    %v3248 = vld [vmem:[%s3214 + $0x108] sm:$0xff]
    %v3249 = vld [vmem:[%s3214 + $0x110] sm:$0xff]
    %v3250 = vld [vmem:[%s3214 + $0x118] sm:$0xff]
    %v3251 = vld [vmem:[%s3214 + $0x120] sm:$0xff]
    %v3252 = vld [vmem:[%s3214 + $0x128] sm:$0xff]
    %v3253 = vld [vmem:[%s3214 + $0x130] sm:$0xff]
    %v3254 = vld [vmem:[%s3214 + $0x138] sm:$0xff]
    %v3255 = vld [vmem:[%s3214 + $0x140] sm:$0xff]
    %v3256 = vld [vmem:[%s3214 + $0x148] sm:$0xff]
    %v3257 = vld [vmem:[%s3214 + $0x150] sm:$0xff]
    %v3258 = vld [vmem:[%s3214 + $0x158] sm:$0xff]
    %v3259 = vld [vmem:[%s3214 + $0x160] sm:$0xff]
    %v3260 = vld [vmem:[%s3214 + $0x168] sm:$0xff]
    %v3261 = vld [vmem:[%s3214 + $0x170] sm:$0xff]
    %v3262 = vld [vmem:[%s3214 + $0x178] sm:$0xff]
    %3263 = vmatprep.subr.mxu0 0.0
    %3264 = vmatpush1.msra.mxu0 %v3215
    %3265 = vmatprep.subr.mxu0 0.0
    %3266 = vmatpush1.msra.mxu0 %v3216
    %3267 = vmatprep.subr.mxu0 0.0
    %3268 = vmatpush1.msra.mxu0 %v3217
    %3269 = vmatprep.subr.mxu0 0.0
    %3270 = vmatpush1.msra.mxu0 %v3218
    %3271 = vmatprep.subr.mxu0 0.0
    %3272 = vmatpush1.msra.mxu0 %v3219
    %3273 = vmatprep.subr.mxu0 0.0
    %3274 = vmatpush1.msra.mxu0 %v3220
    %3275 = vmatprep.subr.mxu0 0.0
    %3276 = vmatpush1.msra.mxu0 %v3221
    %3277 = vmatprep.subr.mxu0 0.0
    %3278 = vmatpush1.msra.mxu0 %v3222
    %3279 = vmatprep.subr.mxu0 0.0
    %3280 = vmatpush1.msra.mxu0 %v3223
    %3281 = vmatprep.subr.mxu0 0.0
    %3282 = vmatpush1.msra.mxu0 %v3224
    %3283 = vmatprep.subr.mxu0 0.0
    %3284 = vmatpush1.msra.mxu0 %v3225
    %3285 = vmatprep.subr.mxu0 0.0
    %3286 = vmatpush1.msra.mxu0 %v3226
    %3287 = vmatprep.subr.mxu0 0.0
    %3288 = vmatpush1.msra.mxu0 %v3227
    %3289 = vmatprep.subr.mxu0 0.0
    %3290 = vmatpush1.msra.mxu0 %v3228
    %3291 = vmatprep.subr.mxu0 0.0
    %3292 = vmatpush1.msra.mxu0 %v3229
    %3293 = vmatprep.subr.mxu0 0.0
    %3294 = vmatpush1.msra.mxu0 %v3230
    %3295 = vmatprep.subr.mxu0 0.0
    %3296 = vmatpush1.msra.mxu0 %v3231
    %3297 = vmatprep.subr.mxu0 0.0
    %3298 = vmatpush1.msra.mxu0 %v3232
    %3299 = vmatprep.subr.mxu0 0.0
    %3300 = vmatpush1.msra.mxu0 %v3233
    %3301 = vmatprep.subr.mxu0 0.0
    %3302 = vmatpush1.msra.mxu0 %v3234
    %3303 = vmatprep.subr.mxu0 0.0
    %3304 = vmatpush1.msra.mxu0 %v3235
    %3305 = vmatprep.subr.mxu0 0.0
    %3306 = vmatpush1.msra.mxu0 %v3236
    %3307 = vmatprep.subr.mxu0 0.0
    %3308 = vmatpush1.msra.mxu0 %v3237
    %3309 = vmatprep.subr.mxu0 0.0
    %3310 = vmatpush1.msra.mxu0 %v3238
    %3311 = vmatprep.subr.mxu0 0.0
    %3312 = vmatpush1.msra.mxu0 %v3239
    %3313 = vmatprep.subr.mxu0 0.0
    %3314 = vmatpush1.msra.mxu0 %v3240
    %3315 = vmatprep.subr.mxu0 0.0
    %3316 = vmatpush1.msra.mxu0 %v3241
    %3317 = vmatprep.subr.mxu0 0.0
    %3318 = vmatpush1.msra.mxu0 %v3242
    %3319 = vmatprep.subr.mxu0 0.0
    %3320 = vmatpush1.msra.mxu0 %v3243
    %3321 = vmatprep.subr.mxu0 0.0
    %3322 = vmatpush1.msra.mxu0 %v3244
    %3323 = vmatprep.subr.mxu0 0.0
    %3324 = vmatpush1.msra.mxu0 %v3245
    %3325 = vmatprep.subr.mxu0 0.0
    %3326 = vmatpush1.msra.mxu0 %v3246
    %3327 = vmatprep.mubr.f32.mxu0 %v3180
    %3328 = vmatmul.mubr.f32.gmra.mrb[0].mxu0 %v3178
    %v3329 = vpop.f32.mrb[0].mxu0
    %v3330 = vadd.f32 0.0, %v3329
    %v3331 = vpop.f32.mrb[0].mxu0
    %3332 = vmatprep.mubr.f32.mxu0 %v3181
    %3333 = vmatmul.mubr.f32.gmra.mrb[0].mxu0 %v3179
    %v3334 = vpop.f32.mrb[0].mxu0
    %v3335 = vadd.f32 0.0, %v3334
    %v3336 = vpop.f32.mrb[0].mxu0
    %3337 = vmatprep.mubr.f32.mxu0 %v3182
    %3338 = vmatmul.mubr.f32.gmra.mrb[0].mxu0 %v3180
    %v3339 = vpop.f32.mrb[0].mxu0
    %v3340 = vadd.f32 0.0, %v3339
    %v3341 = vpop.f32.mrb[0].mxu0
    %3342 = vmatprep.mubr.f32.mxu0 %v3183
    %3343 = vmatmul.mubr.f32.gmra.mrb[0].mxu0 %v3181
    %v3344 = vpop.f32.mrb[0].mxu0
    %v3345 = vadd.f32 0.0, %v3344
    %v3346 = vpop.f32.mrb[0].mxu0
    %3347 = vmatprep.mubr.f32.mxu0 %v3184
    %3348 = vmatmul.mubr.f32.gmra.mrb[0].mxu0 %v3182
    %v3349 = vpop.f32.mrb[0].mxu0
    %v3350 = vadd.f32 0.0, %v3349
    %v3351 = vpop.f32.mrb[0].mxu0
    %3352 = vmatprep.mubr.f32.mxu0 %v3185
    %3353 = vmatmul.mubr.f32.gmra.mrb[0].mxu0 %v3183
    %v3354 = vpop.f32.mrb[0].mxu0
    %v3355 = vadd.f32 0.0, %v3354
    %v3356 = vpop.f32.mrb[0].mxu0
    %3357 = vmatprep.mubr.f32.mxu0 %v3186
    %3358 = vmatmul.mubr.f32.gmra.mrb[0].mxu0 %v3184
    %v3359 = vpop.f32.mrb[0].mxu0
    %v3360 = vadd.f32 0.0, %v3359
    %v3361 = vpop.f32.mrb[0].mxu0
    %3362 = vmatprep.mubr.f32.mxu0 %v3187
    %3363 = vmatmul.mubr.f32.gmra.mrb[0].mxu0 %v3185
    %v3364 = vpop.f32.mrb[0].mxu0
    %v3365 = vadd.f32 0.0, %v3364
    %v3366 = vpop.f32.mrb[0].mxu0
    %3367 = vmatprep.mubr.f32.mxu0 %v3188
    %3368 = vmatmul.mubr.f32.gmra.mrb[0].mxu0 %v3186
    %v3369 = vpop.f32.mrb[0].mxu0
    %v3370 = vadd.f32 0.0, %v3369
    %v3371 = vpop.f32.mrb[0].mxu0
    %3372 = vmatprep.mubr.f32.mxu0 %v3189
    %3373 = vmatmul.mubr.f32.gmra.mrb[0].mxu0 %v3187
    %v3374 = vpop.f32.mrb[0].mxu0
    %v3375 = vadd.f32 0.0, %v3374
    %v3376 = vpop.f32.mrb[0].mxu0
    %3377 = vmatprep.mubr.f32.mxu0 %v3190
    %3378 = vmatmul.mubr.f32.gmra.mrb[0].mxu0 %v3188
    %v3379 = vpop.f32.mrb[0].mxu0
    %v3380 = vadd.f32 0.0, %v3379
    %v3381 = vpop.f32.mrb[0].mxu0
    %3382 = vmatprep.mubr.f32.mxu0 %v3191
    %3383 = vmatmul.mubr.f32.gmra.mrb[0].mxu0 %v3189
    %v3384 = vpop.f32.mrb[0].mxu0
    %v3385 = vadd.f32 0.0, %v3384
    %v3386 = vpop.f32.mrb[0].mxu0
    %3387 = vmatprep.mubr.f32.mxu0 %v3192
    %3388 = vmatmul.mubr.f32.gmra.mrb[0].mxu0 %v3190
    %v3389 = vpop.f32.mrb[0].mxu0
    %v3390 = vadd.f32 0.0, %v3389
    %v3391 = vpop.f32.mrb[0].mxu0
    %3392 = vmatprep.mubr.f32.mxu0 %v3193
    %3393 = vmatmul.mubr.f32.gmra.mrb[0].mxu0 %v3191
    %v3394 = vpop.f32.mrb[0].mxu0
    %v3395 = vadd.f32 0.0, %v3394
    %v3396 = vpop.f32.mrb[0].mxu0
    %3397 = vmatprep.mubr.f32.mxu0 %v3194
    %3398 = vmatmul.mubr.f32.gmra.mrb[0].mxu0 %v3192
    %v3399 = vpop.f32.mrb[0].mxu0
    %v3400 = vadd.f32 0.0, %v3399
    %v3401 = vpop.f32.mrb[0].mxu0
    %3402 = vmatprep.mubr.f32.mxu0 %v3195
    %3403 = vmatmul.mubr.f32.gmra.mrb[0].mxu0 %v3193
    %v3404 = vpop.f32.mrb[0].mxu0
    %v3405 = vadd.f32 0.0, %v3404
    %v3406 = vpop.f32.mrb[0].mxu0
    %3407 = vmatprep.mubr.f32.mxu0 %v3196
    %3408 = vmatmul.mubr.f32.gmra.mrb[0].mxu0 %v3194
    %v3409 = vpop.f32.mrb[0].mxu0
    %v3410 = vadd.f32 0.0, %v3409
    %v3411 = vpop.f32.mrb[0].mxu0
    %3412 = vmatprep.mubr.f32.mxu0 %v3197
    %3413 = vmatmul.mubr.f32.gmra.mrb[0].mxu0 %v3195
    %v3414 = vpop.f32.mrb[0].mxu0
    %v3415 = vadd.f32 0.0, %v3414
    %v3416 = vpop.f32.mrb[0].mxu0
    %3417 = vmatprep.mubr.f32.mxu0 %v3198
    %3418 = vmatmul.mubr.f32.gmra.mrb[0].mxu0 %v3196
    %v3419 = vpop.f32.mrb[0].mxu0
    %v3420 = vadd.f32 0.0, %v3419
    %v3421 = vpop.f32.mrb[0].mxu0
    %3422 = vmatprep.mubr.f32.mxu0 %v3199
    %3423 = vmatmul.mubr.f32.gmra.mrb[0].mxu0 %v3197
    %v3424 = vpop.f32.mrb[0].mxu0
    %v3425 = vadd.f32 0.0, %v3424
    %v3426 = vpop.f32.mrb[0].mxu0
    %3427 = vmatprep.mubr.f32.mxu0 %v3200
    %3428 = vmatmul.mubr.f32.gmra.mrb[0].mxu0 %v3198
    %v3429 = vpop.f32.mrb[0].mxu0
    %v3430 = vadd.f32 0.0, %v3429
    %v3431 = vpop.f32.mrb[0].mxu0
    %3432 = vmatprep.mubr.f32.mxu0 %v3201
    %3433 = vmatmul.mubr.f32.gmra.mrb[0].mxu0 %v3199
    %v3434 = vpop.f32.mrb[0].mxu0
    %v3435 = vadd.f32 0.0, %v3434
    %v3436 = vpop.f32.mrb[0].mxu0
    %3437 = vmatprep.mubr.f32.mxu0 %v3202
    %3438 = vmatmul.mubr.f32.gmra.mrb[0].mxu0 %v3200
    %v3439 = vpop.f32.mrb[0].mxu0
    %v3440 = vadd.f32 0.0, %v3439
    %v3441 = vpop.f32.mrb[0].mxu0
    %3442 = vmatprep.mubr.f32.mxu0 %v3203
    %3443 = vmatmul.mubr.f32.gmra.mrb[0].mxu0 %v3201
    %v3444 = vpop.f32.mrb[0].mxu0
    %v3445 = vadd.f32 0.0, %v3444
    %v3446 = vpop.f32.mrb[0].mxu0
    %3447 = vmatprep.mubr.f32.mxu0 %v3204
    %3448 = vmatmul.mubr.f32.gmra.mrb[0].mxu0 %v3202
    %v3449 = vpop.f32.mrb[0].mxu0
    %v3450 = vadd.f32 0.0, %v3449
    %v3451 = vpop.f32.mrb[0].mxu0
    %3452 = vmatprep.mubr.f32.mxu0 %v3205
    %3453 = vmatmul.mubr.f32.gmra.mrb[0].mxu0 %v3203
    %v3454 = vpop.f32.mrb[0].mxu0
    %v3455 = vadd.f32 0.0, %v3454
    %v3456 = vpop.f32.mrb[0].mxu0
    %3457 = vmatprep.mubr.f32.mxu0 %v3206
    %3458 = vmatmul.mubr.f32.gmra.mrb[0].mxu0 %v3204
    %v3459 = vpop.f32.mrb[0].mxu0
    %v3460 = vadd.f32 0.0, %v3459
    %v3461 = vpop.f32.mrb[0].mxu0
    %3462 = vmatprep.mubr.f32.mxu0 %v3207
    %3463 = vmatmul.mubr.f32.gmra.mrb[0].mxu0 %v3205
    %v3464 = vpop.f32.mrb[0].mxu0
    %v3465 = vadd.f32 0.0, %v3464
    %v3466 = vpop.f32.mrb[0].mxu0
    %3467 = vmatprep.mubr.f32.mxu0 %v3208
    %3468 = vmatmul.mubr.f32.gmra.mrb[0].mxu0 %v3206
    %v3469 = vpop.f32.mrb[0].mxu0
    %v3470 = vadd.f32 0.0, %v3469
    %v3471 = vpop.f32.mrb[0].mxu0
    %3472 = vmatprep.mubr.f32.mxu0 %v3209
    %3473 = vmatmul.mubr.f32.gmra.mrb[0].mxu0 %v3207
    %v3474 = vpop.f32.mrb[0].mxu0
    %v3475 = vadd.f32 0.0, %v3474
    %v3476 = vpop.f32.mrb[0].mxu0
    %3477 = vmatprep.mubr.f32.mxu0 %v3210
    %3478 = vmatmul.mubr.f32.gmra.mrb[0].mxu0 %v3208
    %v3479 = vpop.f32.mrb[0].mxu0
    %v3480 = vadd.f32 0.0, %v3479
    %v3481 = vpop.f32.mrb[0].mxu0
    %3482 = vmatprep.mubr.f32.mxu0 %v3211
    %3483 = vmatmul.mubr.f32.gmra.mrb[0].mxu0 %v3209
    %v3484 = vpop.f32.mrb[0].mxu0
    %v3485 = vadd.f32 0.0, %v3484
    %v3486 = vpop.f32.mrb[0].mxu0
    %3487 = vdwg.mxu0
    %3488 = vmatprep.subr.mxu0 0.0
    %3489 = vmatpush1.msra.mxu0 %v3247
    %3490 = vmatprep.subr.mxu0 0.0
    %3491 = vmatpush1.msra.mxu0 %v3248
    %3492 = vmatprep.subr.mxu0 0.0
    %3493 = vmatpush1.msra.mxu0 %v3249
    %3494 = vmatprep.subr.mxu0 0.0
    %3495 = vmatpush1.msra.mxu0 %v3250
    %3496 = vmatprep.subr.mxu0 0.0
    %3497 = vmatpush1.msra.mxu0 %v3251
    %3498 = vmatprep.subr.mxu0 0.0
    %3499 = vmatpush1.msra.mxu0 %v3252
    %3500 = vmatprep.subr.mxu0 0.0
    %3501 = vmatpush1.msra.mxu0 %v3253
    %3502 = vmatprep.subr.mxu0 0.0
    %3503 = vmatpush1.msra.mxu0 %v3254
    %3504 = vmatprep.subr.mxu0 0.0
    %3505 = vmatpush1.msra.mxu0 %v3255
    %3506 = vmatprep.subr.mxu0 0.0
    %3507 = vmatpush1.msra.mxu0 %v3256
    %3508 = vmatprep.subr.mxu0 0.0
    %3509 = vmatpush1.msra.mxu0 %v3257
    %3510 = vmatprep.subr.mxu0 0.0
    %3511 = vmatpush1.msra.mxu0 %v3258
    %3512 = vmatprep.subr.mxu0 0.0
    %3513 = vmatpush1.msra.mxu0 %v3259
    %3514 = vmatprep.subr.mxu0 0.0
    %3515 = vmatpush1.msra.mxu0 %v3260
    %3516 = vmatprep.subr.mxu0 0.0
    %3517 = vmatpush1.msra.mxu0 %v3261
    %3518 = vmatprep.subr.mxu0 0.0
    %3519 = vmatpush1.msra.mxu0 %v3262
    %3520 = vmatprep.subr.mxu0 0.0
    %3521 = vmatpush1.msra.mxu0 0.0
    %3522 = vmatprep.subr.mxu0 0.0
    %3523 = vmatpush1.msra.mxu0 0.0
    %3524 = vmatprep.subr.mxu0 0.0
    %3525 = vmatpush1.msra.mxu0 0.0
    %3526 = vmatprep.subr.mxu0 0.0
    %3527 = vmatpush1.msra.mxu0 0.0
    %3528 = vmatprep.subr.mxu0 0.0
    %3529 = vmatpush1.msra.mxu0 0.0
    %3530 = vmatprep.subr.mxu0 0.0
    %3531 = vmatpush1.msra.mxu0 0.0
    %3532 = vmatprep.subr.mxu0 0.0
    %3533 = vmatpush1.msra.mxu0 0.0
    %3534 = vmatprep.subr.mxu0 0.0
    %3535 = vmatpush1.msra.mxu0 0.0
    %3536 = vmatprep.subr.mxu0 0.0
    %3537 = vmatpush1.msra.mxu0 0.0
    %3538 = vmatprep.subr.mxu0 0.0
    %3539 = vmatpush1.msra.mxu0 0.0
    %3540 = vmatprep.subr.mxu0 0.0
    %3541 = vmatpush1.msra.mxu0 0.0
    %3542 = vmatprep.subr.mxu0 0.0
    %3543 = vmatpush1.msra.mxu0 0.0
    %3544 = vmatprep.subr.mxu0 0.0
    %3545 = vmatpush1.msra.mxu0 0.0
    %3546 = vmatprep.subr.mxu0 0.0
    %3547 = vmatpush1.msra.mxu0 0.0
    %3548 = vmatprep.subr.mxu0 0.0
    %3549 = vmatpush1.msra.mxu0 0.0
    %3550 = vmatprep.subr.mxu0 0.0
    %3551 = vmatpush1.msra.mxu0 0.0
    %3552 = vmatprep.mubr.f32.mxu0 0.0
    %3553 = vmatmul.mubr.f32.gmra.mrb[0].mxu0 %v3182
    %v3554 = vpop.f32.mrb[0].mxu0
    %v3555 = vadd.f32 %v3330, %v3554
    %v3556 = vpop.f32.mrb[0].mxu0
    %3557 = vmatprep.mubr.f32.mxu0 0.0
    %3558 = vmatmul.mubr.f32.gmra.mrb[0].mxu0 %v3183
    %v3559 = vpop.f32.mrb[0].mxu0
    %v3560 = vadd.f32 %v3335, %v3559
    %v3561 = vpop.f32.mrb[0].mxu0
    %3562 = vmatprep.mubr.f32.mxu0 0.0
    %3563 = vmatmul.mubr.f32.gmra.mrb[0].mxu0 %v3184
    %v3564 = vpop.f32.mrb[0].mxu0
    %v3565 = vadd.f32 %v3340, %v3564
    %v3566 = vpop.f32.mrb[0].mxu0
    %3567 = vmatprep.mubr.f32.mxu0 0.0
    %3568 = vmatmul.mubr.f32.gmra.mrb[0].mxu0 %v3185
    %v3569 = vpop.f32.mrb[0].mxu0
    %v3570 = vadd.f32 %v3345, %v3569
    %v3571 = vpop.f32.mrb[0].mxu0
    %3572 = vmatprep.mubr.f32.mxu0 0.0
    %3573 = vmatmul.mubr.f32.gmra.mrb[0].mxu0 %v3186
    %v3574 = vpop.f32.mrb[0].mxu0
    %v3575 = vadd.f32 %v3350, %v3574
    %v3576 = vpop.f32.mrb[0].mxu0
    %3577 = vmatprep.mubr.f32.mxu0 0.0
    %3578 = vmatmul.mubr.f32.gmra.mrb[0].mxu0 %v3187
    %v3579 = vpop.f32.mrb[0].mxu0
    %v3580 = vadd.f32 %v3355, %v3579
    %v3581 = vpop.f32.mrb[0].mxu0
    %3582 = vmatprep.mubr.f32.mxu0 0.0
    %3583 = vmatmul.mubr.f32.gmra.mrb[0].mxu0 %v3188
    %v3584 = vpop.f32.mrb[0].mxu0
    %v3585 = vadd.f32 %v3360, %v3584
    %v3586 = vpop.f32.mrb[0].mxu0
    %3587 = vmatprep.mubr.f32.mxu0 0.0
    %3588 = vmatmul.mubr.f32.gmra.mrb[0].mxu0 %v3189
    %v3589 = vpop.f32.mrb[0].mxu0
    %v3590 = vadd.f32 %v3365, %v3589
    %v3591 = vpop.f32.mrb[0].mxu0
    %3592 = vmatprep.mubr.f32.mxu0 0.0
    %3593 = vmatmul.mubr.f32.gmra.mrb[0].mxu0 %v3190
    %v3594 = vpop.f32.mrb[0].mxu0
    %v3595 = vadd.f32 %v3370, %v3594
    %v3596 = vpop.f32.mrb[0].mxu0
    %3597 = vmatprep.mubr.f32.mxu0 0.0
    %3598 = vmatmul.mubr.f32.gmra.mrb[0].mxu0 %v3191
    %v3599 = vpop.f32.mrb[0].mxu0
    %v3600 = vadd.f32 %v3375, %v3599
    %v3601 = vpop.f32.mrb[0].mxu0
    %3602 = vmatprep.mubr.f32.mxu0 0.0
    %3603 = vmatmul.mubr.f32.gmra.mrb[0].mxu0 %v3192
    %v3604 = vpop.f32.mrb[0].mxu0
    %v3605 = vadd.f32 %v3380, %v3604
    %v3606 = vpop.f32.mrb[0].mxu0
    %3607 = vmatprep.mubr.f32.mxu0 0.0
    %3608 = vmatmul.mubr.f32.gmra.mrb[0].mxu0 %v3193
    %v3609 = vpop.f32.mrb[0].mxu0
    %v3610 = vadd.f32 %v3385, %v3609
    %v3611 = vpop.f32.mrb[0].mxu0
    %3612 = vmatprep.mubr.f32.mxu0 0.0
    %3613 = vmatmul.mubr.f32.gmra.mrb[0].mxu0 %v3194
    %v3614 = vpop.f32.mrb[0].mxu0
    %v3615 = vadd.f32 %v3390, %v3614
    %v3616 = vpop.f32.mrb[0].mxu0
    %3617 = vmatprep.mubr.f32.mxu0 0.0
    %3618 = vmatmul.mubr.f32.gmra.mrb[0].mxu0 %v3195
    %v3619 = vpop.f32.mrb[0].mxu0
    %v3620 = vadd.f32 %v3395, %v3619
    %v3621 = vpop.f32.mrb[0].mxu0
    %3622 = vmatprep.mubr.f32.mxu0 0.0
    %3623 = vmatmul.mubr.f32.gmra.mrb[0].mxu0 %v3196
    %v3624 = vpop.f32.mrb[0].mxu0
    %v3625 = vadd.f32 %v3400, %v3624
    %v3626 = vpop.f32.mrb[0].mxu0
    %3627 = vmatprep.mubr.f32.mxu0 0.0
    %3628 = vmatmul.mubr.f32.gmra.mrb[0].mxu0 %v3197
    %v3629 = vpop.f32.mrb[0].mxu0
    %v3630 = vadd.f32 %v3405, %v3629
    %v3631 = vpop.f32.mrb[0].mxu0
    %3632 = vmatprep.mubr.f32.mxu0 0.0
    %3633 = vmatmul.mubr.f32.gmra.mrb[0].mxu0 %v3198
    %v3634 = vpop.f32.mrb[0].mxu0
    %v3635 = vadd.f32 %v3410, %v3634
    %v3636 = vpop.f32.mrb[0].mxu0
    %3637 = vmatprep.mubr.f32.mxu0 0.0
    %3638 = vmatmul.mubr.f32.gmra.mrb[0].mxu0 %v3199
    %v3639 = vpop.f32.mrb[0].mxu0
    %v3640 = vadd.f32 %v3415, %v3639
    %v3641 = vpop.f32.mrb[0].mxu0
    %3642 = vmatprep.mubr.f32.mxu0 0.0
    %3643 = vmatmul.mubr.f32.gmra.mrb[0].mxu0 %v3200
    %v3644 = vpop.f32.mrb[0].mxu0
    %v3645 = vadd.f32 %v3420, %v3644
    %v3646 = vpop.f32.mrb[0].mxu0
    %3647 = vmatprep.mubr.f32.mxu0 0.0
    %3648 = vmatmul.mubr.f32.gmra.mrb[0].mxu0 %v3201
    %v3649 = vpop.f32.mrb[0].mxu0
    %v3650 = vadd.f32 %v3425, %v3649
    %v3651 = vpop.f32.mrb[0].mxu0
    %3652 = vmatprep.mubr.f32.mxu0 0.0
    %3653 = vmatmul.mubr.f32.gmra.mrb[0].mxu0 %v3202
    %v3654 = vpop.f32.mrb[0].mxu0
    %v3655 = vadd.f32 %v3430, %v3654
    %v3656 = vpop.f32.mrb[0].mxu0
    %3657 = vmatprep.mubr.f32.mxu0 0.0
    %3658 = vmatmul.mubr.f32.gmra.mrb[0].mxu0 %v3203
    %v3659 = vpop.f32.mrb[0].mxu0
    %v3660 = vadd.f32 %v3435, %v3659
    %v3661 = vpop.f32.mrb[0].mxu0
    %3662 = vmatprep.mubr.f32.mxu0 0.0
    %3663 = vmatmul.mubr.f32.gmra.mrb[0].mxu0 %v3204
    %v3664 = vpop.f32.mrb[0].mxu0
    %v3665 = vadd.f32 %v3440, %v3664
    %v3666 = vpop.f32.mrb[0].mxu0
    %3667 = vmatprep.mubr.f32.mxu0 0.0
    %3668 = vmatmul.mubr.f32.gmra.mrb[0].mxu0 %v3205
    %v3669 = vpop.f32.mrb[0].mxu0
    %v3670 = vadd.f32 %v3445, %v3669
    %v3671 = vpop.f32.mrb[0].mxu0
    %3672 = vmatprep.mubr.f32.mxu0 0.0
    %3673 = vmatmul.mubr.f32.gmra.mrb[0].mxu0 %v3206
    %v3674 = vpop.f32.mrb[0].mxu0
    %v3675 = vadd.f32 %v3450, %v3674
    %v3676 = vpop.f32.mrb[0].mxu0
    %3677 = vmatprep.mubr.f32.mxu0 0.0
    %3678 = vmatmul.mubr.f32.gmra.mrb[0].mxu0 %v3207
    %v3679 = vpop.f32.mrb[0].mxu0
    %v3680 = vadd.f32 %v3455, %v3679
    %v3681 = vpop.f32.mrb[0].mxu0
    %3682 = vmatprep.mubr.f32.mxu0 0.0
    %3683 = vmatmul.mubr.f32.gmra.mrb[0].mxu0 %v3208
    %v3684 = vpop.f32.mrb[0].mxu0
    %v3685 = vadd.f32 %v3460, %v3684
    %v3686 = vpop.f32.mrb[0].mxu0
    %3687 = vmatprep.mubr.f32.mxu0 0.0
    %3688 = vmatmul.mubr.f32.gmra.mrb[0].mxu0 %v3209
    %v3689 = vpop.f32.mrb[0].mxu0
    %v3690 = vadd.f32 %v3465, %v3689
    %v3691 = vpop.f32.mrb[0].mxu0
    %3692 = vmatprep.mubr.f32.mxu0 0.0
    %3693 = vmatmul.mubr.f32.gmra.mrb[0].mxu0 %v3210
    %v3694 = vpop.f32.mrb[0].mxu0
    %v3695 = vadd.f32 %v3470, %v3694
    %v3696 = vpop.f32.mrb[0].mxu0
    %3697 = vmatprep.mubr.f32.mxu0 0.0
    %3698 = vmatmul.mubr.f32.gmra.mrb[0].mxu0 %v3211
    %v3699 = vpop.f32.mrb[0].mxu0
    %v3700 = vadd.f32 %v3475, %v3699
    %v3701 = vpop.f32.mrb[0].mxu0
    %3702 = vmatprep.mubr.f32.mxu0 0.0
    %3703 = vmatmul.mubr.f32.gmra.mrb[0].mxu0 %v3212
    %v3704 = vpop.f32.mrb[0].mxu0
    %v3705 = vadd.f32 %v3480, %v3704
    %v3706 = vpop.f32.mrb[0].mxu0
    %3707 = vmatprep.mubr.f32.mxu0 0.0
    %3708 = vmatmul.mubr.f32.gmra.mrb[0].mxu0 %v3213
    %v3709 = vpop.f32.mrb[0].mxu0
    %v3710 = vadd.f32 %v3485, %v3709
    %v3711 = vpop.f32.mrb[0].mxu0
    %3712 = vdwg.mxu0
    %v3713 = vadd.f32 %v3020, %v3555
    %v3714 = vadd.f32 %v3025, %v3560
    %v3715 = vadd.f32 %v3030, %v3565
    %v3716 = vadd.f32 %v3035, %v3570
    %v3717 = vadd.f32 %v3040, %v3575
    %v3718 = vadd.f32 %v3045, %v3580
    %v3719 = vadd.f32 %v3050, %v3585
    %v3720 = vadd.f32 %v3055, %v3590
    %v3721 = vadd.f32 %v3060, %v3595
    %v3722 = vadd.f32 %v3065, %v3600
    %v3723 = vadd.f32 %v3070, %v3605
    %v3724 = vadd.f32 %v3075, %v3610
    %v3725 = vadd.f32 %v3080, %v3615
    %v3726 = vadd.f32 %v3085, %v3620
    %v3727 = vadd.f32 %v3090, %v3625
    %v3728 = vadd.f32 %v3095, %v3630
    %v3729 = vadd.f32 %v3100, %v3635
    %v3730 = vadd.f32 %v3105, %v3640
    %v3731 = vadd.f32 %v3110, %v3645
    %v3732 = vadd.f32 %v3115, %v3650
    %v3733 = vadd.f32 %v3120, %v3655
    %v3734 = vadd.f32 %v3125, %v3660
    %v3735 = vadd.f32 %v3130, %v3665
    %v3736 = vadd.f32 %v3135, %v3670
    %v3737 = vadd.f32 %v3140, %v3675
    %v3738 = vadd.f32 %v3145, %v3680
    %v3739 = vadd.f32 %v3150, %v3685
    %v3740 = vadd.f32 %v3155, %v3690
    %v3741 = vadd.f32 %v3160, %v3695
    %v3742 = vadd.f32 %v3165, %v3700
    %v3743 = vadd.f32 %v3170, %v3705
    %v3744 = vadd.f32 %v3175, %v3710
    %v3745 = vadd.f32 %v3713, %v3714
    %v3746 = vadd.f32 %v3745, %v3715
    %v3747 = vadd.f32 %v3746, %v3716
    %v3748 = vadd.f32 %v3747, %v3717
    %v3749 = vadd.f32 %v3748, %v3718
    %v3750 = vadd.f32 %v3749, %v3719
    %v3751 = vadd.f32 %v3750, %v3720
    %v3752 = vadd.f32 %v3751, %v3721
    %v3753 = vadd.f32 %v3752, %v3722
    %v3754 = vadd.f32 %v3753, %v3723
    %v3755 = vadd.f32 %v3754, %v3724
    %v3756 = vadd.f32 %v3755, %v3725
    %v3757 = vadd.f32 %v3756, %v3726
    %v3758 = vadd.f32 %v3757, %v3727
    %v3759 = vadd.f32 %v3758, %v3728
    %v3760 = vadd.f32 %v3759, %v3729
    %v3761 = vadd.f32 %v3760, %v3730
    %v3762 = vadd.f32 %v3761, %v3731
    %v3763 = vadd.f32 %v3762, %v3732
    %v3764 = vadd.f32 %v3763, %v3733
    %v3765 = vadd.f32 %v3764, %v3734
    %v3766 = vadd.f32 %v3765, %v3735
    %v3767 = vadd.f32 %v3766, %v3736
    %v3768 = vadd.f32 %v3767, %v3737
    %v3769 = vadd.f32 %v3768, %v3738
    %v3770 = vadd.f32 %v3769, %v3739
    %v3771 = vadd.f32 %v3770, %v3740
    %v3772 = vadd.f32 %v3771, %v3741
    %v3773 = vadd.f32 %v3772, %v3742
    %v3774 = vadd.f32 %v3773, %v3743
    %v3775 = vadd.f32 %v3774, %v3744
    %v3776 = vrot.slane %v3775, 4
    %v3777 = vadd.f32 %v3775, %v3776
    %v3778 = vrot.slane %v3777, 2
    %v3779 = vadd.f32 %v3777, %v3778
    %v3780 = vrot.slane %v3779, 1
    %v3781 = vadd.f32 %v3779, %v3780
    %v3782 = vmul.f32 %v3781, 0.00390625
    %v3783 = vsub.f32 %v3713, %v3782
    %v3784 = vsub.f32 %v3714, %v3782
    %v3785 = vsub.f32 %v3715, %v3782
    %v3786 = vsub.f32 %v3716, %v3782
    %v3787 = vsub.f32 %v3717, %v3782
    %v3788 = vsub.f32 %v3718, %v3782
    %v3789 = vsub.f32 %v3719, %v3782
    %v3790 = vsub.f32 %v3720, %v3782
    %v3791 = vsub.f32 %v3721, %v3782
    %v3792 = vsub.f32 %v3722, %v3782
    %v3793 = vsub.f32 %v3723, %v3782
    %v3794 = vsub.f32 %v3724, %v3782
    %v3795 = vsub.f32 %v3725, %v3782
    %v3796 = vsub.f32 %v3726, %v3782
    %v3797 = vsub.f32 %v3727, %v3782
    %v3798 = vsub.f32 %v3728, %v3782
    %v3799 = vsub.f32 %v3729, %v3782
    %v3800 = vsub.f32 %v3730, %v3782
    %v3801 = vsub.f32 %v3731, %v3782
    %v3802 = vsub.f32 %v3732, %v3782
    %v3803 = vsub.f32 %v3733, %v3782
    %v3804 = vsub.f32 %v3734, %v3782
    %v3805 = vsub.f32 %v3735, %v3782
    %v3806 = vsub.f32 %v3736, %v3782
    %v3807 = vsub.f32 %v3737, %v3782
    %v3808 = vsub.f32 %v3738, %v3782
    %v3809 = vsub.f32 %v3739, %v3782
    %v3810 = vsub.f32 %v3740, %v3782
    %v3811 = vsub.f32 %v3741, %v3782
    %v3812 = vsub.f32 %v3742, %v3782
    %v3813 = vsub.f32 %v3743, %v3782
    %v3814 = vsub.f32 %v3744, %v3782
    %v3815 = vmul.f32 %v3783, %v3783
    %v3816 = vmul.f32 %v3784, %v3784
    %v3817 = vmul.f32 %v3785, %v3785
    %v3818 = vmul.f32 %v3786, %v3786
    %v3819 = vmul.f32 %v3787, %v3787
    %v3820 = vmul.f32 %v3788, %v3788
    %v3821 = vmul.f32 %v3789, %v3789
    %v3822 = vmul.f32 %v3790, %v3790
    %v3823 = vmul.f32 %v3791, %v3791
    %v3824 = vmul.f32 %v3792, %v3792
    %v3825 = vmul.f32 %v3793, %v3793
    %v3826 = vmul.f32 %v3794, %v3794
    %v3827 = vmul.f32 %v3795, %v3795
    %v3828 = vmul.f32 %v3796, %v3796
    %v3829 = vmul.f32 %v3797, %v3797
    %v3830 = vmul.f32 %v3798, %v3798
    %v3831 = vmul.f32 %v3799, %v3799
    %v3832 = vmul.f32 %v3800, %v3800
    %v3833 = vmul.f32 %v3801, %v3801
    %v3834 = vmul.f32 %v3802, %v3802
    %v3835 = vmul.f32 %v3803, %v3803
    %v3836 = vmul.f32 %v3804, %v3804
    %v3837 = vmul.f32 %v3805, %v3805
    %v3838 = vmul.f32 %v3806, %v3806
    %v3839 = vmul.f32 %v3807, %v3807
    %v3840 = vmul.f32 %v3808, %v3808
    %v3841 = vmul.f32 %v3809, %v3809
    %v3842 = vmul.f32 %v3810, %v3810
    %v3843 = vmul.f32 %v3811, %v3811
    %v3844 = vmul.f32 %v3812, %v3812
    %v3845 = vmul.f32 %v3813, %v3813
    %v3846 = vmul.f32 %v3814, %v3814
    %v3847 = vadd.f32 %v3815, %v3816
    %v3848 = vadd.f32 %v3847, %v3817
    %v3849 = vadd.f32 %v3848, %v3818
    %v3850 = vadd.f32 %v3849, %v3819
    %v3851 = vadd.f32 %v3850, %v3820
    %v3852 = vadd.f32 %v3851, %v3821
    %v3853 = vadd.f32 %v3852, %v3822
    %v3854 = vadd.f32 %v3853, %v3823
    %v3855 = vadd.f32 %v3854, %v3824
    %v3856 = vadd.f32 %v3855, %v3825
    %v3857 = vadd.f32 %v3856, %v3826
    %v3858 = vadd.f32 %v3857, %v3827
    %v3859 = vadd.f32 %v3858, %v3828
    %v3860 = vadd.f32 %v3859, %v3829
    %v3861 = vadd.f32 %v3860, %v3830
    %v3862 = vadd.f32 %v3861, %v3831
    %v3863 = vadd.f32 %v3862, %v3832
    %v3864 = vadd.f32 %v3863, %v3833
    %v3865 = vadd.f32 %v3864, %v3834
    %v3866 = vadd.f32 %v3865, %v3835
    %v3867 = vadd.f32 %v3866, %v3836
    %v3868 = vadd.f32 %v3867, %v3837
    %v3869 = vadd.f32 %v3868, %v3838
    %v3870 = vadd.f32 %v3869, %v3839
    %v3871 = vadd.f32 %v3870, %v3840
    %v3872 = vadd.f32 %v3871, %v3841
    %v3873 = vadd.f32 %v3872, %v3842
    %v3874 = vadd.f32 %v3873, %v3843
    %v3875 = vadd.f32 %v3874, %v3844
    %v3876 = vadd.f32 %v3875, %v3845
    %v3877 = vadd.f32 %v3876, %v3846
    %v3878 = vrot.slane %v3877, 4
    %v3879 = vadd.f32 %v3877, %v3878
    %v3880 = vrot.slane %v3879, 2
    %v3881 = vadd.f32 %v3879, %v3880
    %v3882 = vrot.slane %v3881, 1
    %v3883 = vadd.f32 %v3881, %v3882
    %v3884 = vmul.f32 %v3883, 0.00390625
    %v3885 = vadd.f32 %v3884, 1e-05
    %v3886 = vrsqrt.pop %v3885
    %v3887 = vmul.f32 %v3783, %v3886
    %v3888 = vmul.f32 %v3784, %v3886
    %v3889 = vmul.f32 %v3785, %v3886
    %v3890 = vmul.f32 %v3786, %v3886
    %v3891 = vmul.f32 %v3787, %v3886
    %v3892 = vmul.f32 %v3788, %v3886
    %v3893 = vmul.f32 %v3789, %v3886
    %v3894 = vmul.f32 %v3790, %v3886
    %v3895 = vmul.f32 %v3791, %v3886
    %v3896 = vmul.f32 %v3792, %v3886
    %v3897 = vmul.f32 %v3793, %v3886
    %v3898 = vmul.f32 %v3794, %v3886
    %v3899 = vmul.f32 %v3795, %v3886
    %v3900 = vmul.f32 %v3796, %v3886
    %v3901 = vmul.f32 %v3797, %v3886
    %v3902 = vmul.f32 %v3798, %v3886
    %v3903 = vmul.f32 %v3799, %v3886
    %v3904 = vmul.f32 %v3800, %v3886
    %v3905 = vmul.f32 %v3801, %v3886
    %v3906 = vmul.f32 %v3802, %v3886
    %v3907 = vmul.f32 %v3803, %v3886
    %v3908 = vmul.f32 %v3804, %v3886
    %v3909 = vmul.f32 %v3805, %v3886
    %v3910 = vmul.f32 %v3806, %v3886
    %v3911 = vmul.f32 %v3807, %v3886
    %v3912 = vmul.f32 %v3808, %v3886
    %v3913 = vmul.f32 %v3809, %v3886
    %v3914 = vmul.f32 %v3810, %v3886
    %v3915 = vmul.f32 %v3811, %v3886
    %v3916 = vmul.f32 %v3812, %v3886
    %v3917 = vmul.f32 %v3813, %v3886
    %v3918 = vmul.f32 %v3814, %v3886
    %v3919 = vld [vmem:[%s0] sm:$0xff]
    %v3920 = vld [vmem:[%s0 + $0x8] sm:$0xff]
    %v3921 = vld [vmem:[%s0 + $0x10] sm:$0xff]
    %v3922 = vld [vmem:[%s0 + $0x18] sm:$0xff]
    %v3923 = vld [vmem:[%s0 + $0x20] sm:$0xff]
    %v3924 = vld [vmem:[%s0 + $0x28] sm:$0xff]
    %v3925 = vld [vmem:[%s0 + $0x30] sm:$0xff]
    %v3926 = vld [vmem:[%s0 + $0x38] sm:$0xff]
    %v3927 = vld [vmem:[%s0 + $0x40] sm:$0xff]
    %v3928 = vld [vmem:[%s0 + $0x48] sm:$0xff]
    %v3929 = vld [vmem:[%s0 + $0x50] sm:$0xff]
    %v3930 = vld [vmem:[%s0 + $0x58] sm:$0xff]
    %v3931 = vld [vmem:[%s0 + $0x60] sm:$0xff]
    %v3932 = vld [vmem:[%s0 + $0x68] sm:$0xff]
    %v3933 = vld [vmem:[%s0 + $0x70] sm:$0xff]
    %v3934 = vld [vmem:[%s0 + $0x78] sm:$0xff]
    %v3935 = vld [vmem:[%s0 + $0x80] sm:$0xff]
    %v3936 = vld [vmem:[%s0 + $0x88] sm:$0xff]
    %v3937 = vld [vmem:[%s0 + $0x90] sm:$0xff]
    %v3938 = vld [vmem:[%s0 + $0x98] sm:$0xff]
    %v3939 = vld [vmem:[%s0 + $0xa0] sm:$0xff]
    %v3940 = vld [vmem:[%s0 + $0xa8] sm:$0xff]
    %v3941 = vld [vmem:[%s0 + $0xb0] sm:$0xff]
    %v3942 = vld [vmem:[%s0 + $0xb8] sm:$0xff]
    %v3943 = vld [vmem:[%s0 + $0xc0] sm:$0xff]
    %v3944 = vld [vmem:[%s0 + $0xc8] sm:$0xff]
    %v3945 = vld [vmem:[%s0 + $0xd0] sm:$0xff]
    %v3946 = vld [vmem:[%s0 + $0xd8] sm:$0xff]
    %v3947 = vld [vmem:[%s0 + $0xe0] sm:$0xff]
    %v3948 = vld [vmem:[%s0 + $0xe8] sm:$0xff]
    %v3949 = vld [vmem:[%s0 + $0xf0] sm:$0xff]
    %v3950 = vld [vmem:[%s0 + $0xf8] sm:$0xff]
    %v3951 = vadd.f32 %v3919, %v3887
    %v3952 = vadd.f32 %v3920, %v3888
    %v3953 = vadd.f32 %v3921, %v3889
    %v3954 = vadd.f32 %v3922, %v3890
    %v3955 = vadd.f32 %v3923, %v3891
    %v3956 = vadd.f32 %v3924, %v3892
    %v3957 = vadd.f32 %v3925, %v3893
    %v3958 = vadd.f32 %v3926, %v3894
    %v3959 = vadd.f32 %v3927, %v3895
    %v3960 = vadd.f32 %v3928, %v3896
    %v3961 = vadd.f32 %v3929, %v3897
    %v3962 = vadd.f32 %v3930, %v3898
    %v3963 = vadd.f32 %v3931, %v3899
    %v3964 = vadd.f32 %v3932, %v3900
    %v3965 = vadd.f32 %v3933, %v3901
    %v3966 = vadd.f32 %v3934, %v3902
    %v3967 = vadd.f32 %v3935, %v3903
    %v3968 = vadd.f32 %v3936, %v3904
    %v3969 = vadd.f32 %v3937, %v3905
    %v3970 = vadd.f32 %v3938, %v3906
    %v3971 = vadd.f32 %v3939, %v3907
    %v3972 = vadd.f32 %v3940, %v3908
    %v3973 = vadd.f32 %v3941, %v3909
    %v3974 = vadd.f32 %v3942, %v3910
    %v3975 = vadd.f32 %v3943, %v3911
    %v3976 = vadd.f32 %v3944, %v3912
    %v3977 = vadd.f32 %v3945, %v3913
    %v3978 = vadd.f32 %v3946, %v3914
    %v3979 = vadd.f32 %v3947, %v3915
    %v3980 = vadd.f32 %v3948, %v3916
    %v3981 = vadd.f32 %v3949, %v3917
    %v3982 = vadd.f32 %v3950, %v3918
    %3983 = vst [vmem:[#allocation4] sm:$0xff] %v3951
    %3984 = vst [vmem:[#allocation4 + $0x8] sm:$0xff] %v3952
    %3985 = vst [vmem:[#allocation4 + $0x10] sm:$0xff] %v3953
    %3986 = vst [vmem:[#allocation4 + $0x18] sm:$0xff] %v3954
    %3987 = vst [vmem:[#allocation4 + $0x20] sm:$0xff] %v3955
    %3988 = vst [vmem:[#allocation4 + $0x28] sm:$0xff] %v3956
    %3989 = vst [vmem:[#allocation4 + $0x30] sm:$0xff] %v3957
    %3990 = vst [vmem:[#allocation4 + $0x38] sm:$0xff] %v3958
    %3991 = vst [vmem:[#allocation4 + $0x40] sm:$0xff] %v3959
    %3992 = vst [vmem:[#allocation4 + $0x48] sm:$0xff] %v3960
    %3993 = vst [vmem:[#allocation4 + $0x50] sm:$0xff] %v3961
    %3994 = vst [vmem:[#allocation4 + $0x58] sm:$0xff] %v3962
    %3995 = vst [vmem:[#allocation4 + $0x60] sm:$0xff] %v3963
    %3996 = vst [vmem:[#allocation4 + $0x68] sm:$0xff] %v3964
    %3997 = vst [vmem:[#allocation4 + $0x70] sm:$0xff] %v3965
    %3998 = vst [vmem:[#allocation4 + $0x78] sm:$0xff] %v3966
    %3999 = vst [vmem:[#allocation4 + $0x80] sm:$0xff] %v3967
    %4000 = vst [vmem:[#allocation4 + $0x88] sm:$0xff] %v3968
    %4001 = vst [vmem:[#allocation4 + $0x90] sm:$0xff] %v3969
    %4002 = vst [vmem:[#allocation4 + $0x98] sm:$0xff] %v3970
    %4003 = vst [vmem:[#allocation4 + $0xa0] sm:$0xff] %v3971
    %4004 = vst [vmem:[#allocation4 + $0xa8] sm:$0xff] %v3972
    %4005 = vst [vmem:[#allocation4 + $0xb0] sm:$0xff] %v3973
    %4006 = vst [vmem:[#allocation4 + $0xb8] sm:$0xff] %v3974
    %4007 = vst [vmem:[#allocation4 + $0xc0] sm:$0xff] %v3975
    %4008 = vst [vmem:[#allocation4 + $0xc8] sm:$0xff] %v3976
    %4009 = vst [vmem:[#allocation4 + $0xd0] sm:$0xff] %v3977
    %4010 = vst [vmem:[#allocation4 + $0xd8] sm:$0xff] %v3978
    %4011 = vst [vmem:[#allocation4 + $0xe0] sm:$0xff] %v3979
    %4012 = vst [vmem:[#allocation4 + $0xe8] sm:$0xff] %v3980
    %4013 = vst [vmem:[#allocation4 + $0xf0] sm:$0xff] %v3981
    %4014 = vst [vmem:[#allocation4 + $0xf8] sm:$0xff] %v3982
    %s4015 = scalar_lea.vmem %s0, 256
    %v4016 = vld [vmem:[%s4015] sm:$0xff]
    %v4017 = vld [vmem:[%s4015 + $0x8] sm:$0xff]
    %v4018 = vld [vmem:[%s4015 + $0x10] sm:$0xff]
    %v4019 = vld [vmem:[%s4015 + $0x18] sm:$0xff]
    %v4020 = vld [vmem:[%s4015 + $0x20] sm:$0xff]
    %v4021 = vld [vmem:[%s4015 + $0x28] sm:$0xff]
    %v4022 = vld [vmem:[%s4015 + $0x30] sm:$0xff]
    %v4023 = vld [vmem:[%s4015 + $0x38] sm:$0xff]
    %v4024 = vld [vmem:[%s4015 + $0x40] sm:$0xff]
    %v4025 = vld [vmem:[%s4015 + $0x48] sm:$0xff]
    %v4026 = vld [vmem:[%s4015 + $0x50] sm:$0xff]
    %v4027 = vld [vmem:[%s4015 + $0x58] sm:$0xff]
    %v4028 = vld [vmem:[%s4015 + $0x60] sm:$0xff]
    %v4029 = vld [vmem:[%s4015 + $0x68] sm:$0xff]
    %v4030 = vld [vmem:[%s4015 + $0x70] sm:$0xff]
    %v4031 = vld [vmem:[%s4015 + $0x78] sm:$0xff]
    %v4032 = vld [vmem:[%s4015 + $0x80] sm:$0xff]
    %v4033 = vld [vmem:[%s4015 + $0x88] sm:$0xff]
    %v4034 = vld [vmem:[%s4015 + $0x90] sm:$0xff]
    %v4035 = vld [vmem:[%s4015 + $0x98] sm:$0xff]
    %v4036 = vld [vmem:[%s4015 + $0xa0] sm:$0xff]
    %v4037 = vld [vmem:[%s4015 + $0xa8] sm:$0xff]
    %v4038 = vld [vmem:[%s4015 + $0xb0] sm:$0xff]
    %v4039 = vld [vmem:[%s4015 + $0xb8] sm:$0xff]
    %v4040 = vld [vmem:[%s4015 + $0xc0] sm:$0xff]
    %v4041 = vld [vmem:[%s4015 + $0xc8] sm:$0xff]
    %v4042 = vld [vmem:[%s4015 + $0xd0] sm:$0xff]
    %v4043 = vld [vmem:[%s4015 + $0xd8] sm:$0xff]
    %v4044 = vld [vmem:[%s4015 + $0xe0] sm:$0xff]
    %v4045 = vld [vmem:[%s4015 + $0xe8] sm:$0xff]
    %v4046 = vld [vmem:[%s4015 + $0xf0] sm:$0xff]
    %v4047 = vld [vmem:[%s4015 + $0xf8] sm:$0xff]
    %4048 = vst [vmem:[%s47 + $0x1] sm:$0xff] %v4016
    %4049 = vst [vmem:[%s47 + $0x9] sm:$0xff] %v4017
    %4050 = vst [vmem:[%s47 + $0x19] sm:$0xff] %v4018
    %4051 = vst [vmem:[%s47 + $0x21] sm:$0xff] %v4019
    %4052 = vst [vmem:[%s47 + $0x31] sm:$0xff] %v4020
    %4053 = vst [vmem:[%s47 + $0x39] sm:$0xff] %v4021
    %4054 = vst [vmem:[%s47 + $0x49] sm:$0xff] %v4022
    %4055 = vst [vmem:[%s47 + $0x51] sm:$0xff] %v4023
    %4056 = vst [vmem:[%s47 + $0x61] sm:$0xff] %v4024
    %4057 = vst [vmem:[%s47 + $0x69] sm:$0xff] %v4025
    %4058 = vst [vmem:[%s47 + $0x79] sm:$0xff] %v4026
    %4059 = vst [vmem:[%s47 + $0x81] sm:$0xff] %v4027
    %4060 = vst [vmem:[%s47 + $0x91] sm:$0xff] %v4028
    %4061 = vst [vmem:[%s47 + $0x99] sm:$0xff] %v4029
    %4062 = vst [vmem:[%s47 + $0xa9] sm:$0xff] %v4030
    %4063 = vst [vmem:[%s47 + $0xb1] sm:$0xff] %v4031
    %4064 = vst [vmem:[%s47 + $0xc1] sm:$0xff] %v4032
    %4065 = vst [vmem:[%s47 + $0xc9] sm:$0xff] %v4033
    %4066 = vst [vmem:[%s47 + $0xd9] sm:$0xff] %v4034
    %4067 = vst [vmem:[%s47 + $0xe1] sm:$0xff] %v4035
    %4068 = vst [vmem:[%s47 + $0xf1] sm:$0xff] %v4036
    %4069 = vst [vmem:[%s47 + $0xf9] sm:$0xff] %v4037
    %4070 = vst [vmem:[%s47 + $0x109] sm:$0xff] %v4038
    %4071 = vst [vmem:[%s47 + $0x111] sm:$0xff] %v4039
    %4072 = vst [vmem:[%s47 + $0x121] sm:$0xff] %v4040
    %4073 = vst [vmem:[%s47 + $0x129] sm:$0xff] %v4041
    %4074 = vst [vmem:[%s47 + $0x139] sm:$0xff] %v4042
    %4075 = vst [vmem:[%s47 + $0x141] sm:$0xff] %v4043
    %4076 = vst [vmem:[%s47 + $0x151] sm:$0xff] %v4044
    %4077 = vst [vmem:[%s47 + $0x159] sm:$0xff] %v4045
    %4078 = vst [vmem:[%s47 + $0x169] sm:$0xff] %v4046
    %4079 = vst [vmem:[%s47 + $0x171] sm:$0xff] %v4047
    %4080 = vst [vmem:[#allocation2 + $0x1] sm:$0xff] %v4018
    %4081 = vst [vmem:[#allocation2 + $0x9] sm:$0xff] %v4019
    %4082 = vst [vmem:[%s82 + $0x1] sm:$0xff] %v4044
    %4083 = vst [vmem:[%s82 + $0x9] sm:$0xff] %v4045
    %v4084 = vld [vmem:[#allocation2 + $0x2] sm:$0x1]
    %v4085 = vld [vmem:[#allocation2 + $0x1a] sm:$0x1]
    %v4086 = vld [vmem:[#allocation2 + $0x32] sm:$0x1]
    %v4087 = vld [vmem:[#allocation2 + $0x4a] sm:$0x1]
    %v4088 = vld [vmem:[#allocation2 + $0x62] sm:$0x1]
    %v4089 = vld [vmem:[#allocation2 + $0x7a] sm:$0x1]
    %v4090 = vld [vmem:[#allocation2 + $0x92] sm:$0x1]
    %v4091 = vld [vmem:[#allocation2 + $0xaa] sm:$0x1]
    %v4092 = vld [vmem:[#allocation2 + $0xc2] sm:$0x1]
    %v4093 = vld [vmem:[#allocation2 + $0xda] sm:$0x1]
    %v4094 = vld [vmem:[#allocation2 + $0xf2] sm:$0x1]
    %v4095 = vld [vmem:[#allocation2 + $0x10a] sm:$0x1]
    %v4096 = vld [vmem:[#allocation2 + $0x122] sm:$0x1]
    %v4097 = vld [vmem:[#allocation2 + $0x13a] sm:$0x1]
    %v4098 = vld [vmem:[#allocation2 + $0x152] sm:$0x1]
    %v4099 = vld [vmem:[#allocation2 + $0x16a] sm:$0x1]
    %v4100 = vld [vmem:[#allocation2 + $0x182] sm:$0x1]
    %v4101 = vld [vmem:[#allocation2 + $0x19a] sm:$0x1]
    %4102 = vst [vmem:[#allocation2] sm:$0x1] %v4084
    %4103 = vst [vmem:[#allocation2 + $0x18] sm:$0x1] %v4085
    %4104 = vst [vmem:[#allocation2 + $0x30] sm:$0x1] %v4086
    %4105 = vst [vmem:[#allocation2 + $0x48] sm:$0x1] %v4087
    %4106 = vst [vmem:[#allocation2 + $0x60] sm:$0x1] %v4088
    %4107 = vst [vmem:[#allocation2 + $0x78] sm:$0x1] %v4089
    %4108 = vst [vmem:[#allocation2 + $0x90] sm:$0x1] %v4090
    %4109 = vst [vmem:[#allocation2 + $0xa8] sm:$0x1] %v4091
    %4110 = vst [vmem:[#allocation2 + $0xc0] sm:$0x1] %v4092
    %4111 = vst [vmem:[#allocation2 + $0xd8] sm:$0x1] %v4093
    %4112 = vst [vmem:[#allocation2 + $0xf0] sm:$0x1] %v4094
    %4113 = vst [vmem:[#allocation2 + $0x108] sm:$0x1] %v4095
    %4114 = vst [vmem:[#allocation2 + $0x120] sm:$0x1] %v4096
    %4115 = vst [vmem:[#allocation2 + $0x138] sm:$0x1] %v4097
    %4116 = vst [vmem:[#allocation2 + $0x150] sm:$0x1] %v4098
    %4117 = vst [vmem:[#allocation2 + $0x168] sm:$0x1] %v4099
    %4118 = vst [vmem:[#allocation2 + $0x180] sm:$0x1] %v4100
    %4119 = vst [vmem:[#allocation2 + $0x198] sm:$0x1] %v4101
    %v4120 = vld [vmem:[#allocation2 + $0xf] sm:$0x1]
    %v4121 = vld [vmem:[#allocation2 + $0x27] sm:$0x1]
    %v4122 = vld [vmem:[#allocation2 + $0x3f] sm:$0x1]
    %v4123 = vld [vmem:[#allocation2 + $0x57] sm:$0x1]
    %v4124 = vld [vmem:[#allocation2 + $0x6f] sm:$0x1]
    %v4125 = vld [vmem:[#allocation2 + $0x87] sm:$0x1]
    %v4126 = vld [vmem:[#allocation2 + $0x9f] sm:$0x1]
    %v4127 = vld [vmem:[#allocation2 + $0xb7] sm:$0x1]
    %v4128 = vld [vmem:[#allocation2 + $0xcf] sm:$0x1]
    %v4129 = vld [vmem:[#allocation2 + $0xe7] sm:$0x1]
    %v4130 = vld [vmem:[#allocation2 + $0xff] sm:$0x1]
    %v4131 = vld [vmem:[#allocation2 + $0x117] sm:$0x1]
    %v4132 = vld [vmem:[#allocation2 + $0x12f] sm:$0x1]
    %v4133 = vld [vmem:[#allocation2 + $0x147] sm:$0x1]
    %v4134 = vld [vmem:[#allocation2 + $0x15f] sm:$0x1]
    %v4135 = vld [vmem:[#allocation2 + $0x177] sm:$0x1]
    %v4136 = vld [vmem:[#allocation2 + $0x18f] sm:$0x1]
    %v4137 = vld [vmem:[#allocation2 + $0x1a7] sm:$0x1]
    %4138 = vst [vmem:[#allocation2 + $0x11] sm:$0x1] %v4120
    %4139 = vst [vmem:[#allocation2 + $0x29] sm:$0x1] %v4121
    %4140 = vst [vmem:[#allocation2 + $0x41] sm:$0x1] %v4122
    %4141 = vst [vmem:[#allocation2 + $0x59] sm:$0x1] %v4123
    %4142 = vst [vmem:[#allocation2 + $0x71] sm:$0x1] %v4124
    %4143 = vst [vmem:[#allocation2 + $0x89] sm:$0x1] %v4125
    %4144 = vst [vmem:[#allocation2 + $0xa1] sm:$0x1] %v4126
    %4145 = vst [vmem:[#allocation2 + $0xb9] sm:$0x1] %v4127
    %4146 = vst [vmem:[#allocation2 + $0xd1] sm:$0x1] %v4128
    %4147 = vst [vmem:[#allocation2 + $0xe9] sm:$0x1] %v4129
    %4148 = vst [vmem:[#allocation2 + $0x101] sm:$0x1] %v4130
    %4149 = vst [vmem:[#allocation2 + $0x119] sm:$0x1] %v4131
    %4150 = vst [vmem:[#allocation2 + $0x131] sm:$0x1] %v4132
    %4151 = vst [vmem:[#allocation2 + $0x149] sm:$0x1] %v4133
    %4152 = vst [vmem:[#allocation2 + $0x161] sm:$0x1] %v4134
    %4153 = vst [vmem:[#allocation2 + $0x179] sm:$0x1] %v4135
    %4154 = vst [vmem:[#allocation2 + $0x191] sm:$0x1] %v4136
    %4155 = vst [vmem:[#allocation2 + $0x1a9] sm:$0x1] %v4137
    %v4156 = vld [vmem:[#allocation2] sm:$0xff]
    %v4157 = vld [vmem:[#allocation2 + $0x8] sm:$0xff]
    %v4158 = vld [vmem:[#allocation2 + $0x18] sm:$0xff]
    %v4159 = vld [vmem:[#allocation2 + $0x20] sm:$0xff]
    %v4160 = vld [vmem:[#allocation2 + $0x30] sm:$0xff]
    %v4161 = vld [vmem:[#allocation2 + $0x38] sm:$0xff]
    %v4162 = vld [vmem:[#allocation2 + $0x48] sm:$0xff]
    %v4163 = vld [vmem:[#allocation2 + $0x50] sm:$0xff]
    %v4164 = vld [vmem:[#allocation2 + $0x60] sm:$0xff]
    %v4165 = vld [vmem:[#allocation2 + $0x68] sm:$0xff]
    %v4166 = vld [vmem:[#allocation2 + $0x78] sm:$0xff]
    %v4167 = vld [vmem:[#allocation2 + $0x80] sm:$0xff]
    %v4168 = vld [vmem:[#allocation2 + $0x90] sm:$0xff]
    %v4169 = vld [vmem:[#allocation2 + $0x98] sm:$0xff]
    %v4170 = vld [vmem:[#allocation2 + $0xa8] sm:$0xff]
    %v4171 = vld [vmem:[#allocation2 + $0xb0] sm:$0xff]
    %v4172 = vld [vmem:[#allocation2 + $0xc0] sm:$0xff]
    %v4173 = vld [vmem:[#allocation2 + $0xc8] sm:$0xff]
    %v4174 = vld [vmem:[#allocation2 + $0xd8] sm:$0xff]
    %v4175 = vld [vmem:[#allocation2 + $0xe0] sm:$0xff]
    %v4176 = vld [vmem:[#allocation2 + $0xf0] sm:$0xff]
    %v4177 = vld [vmem:[#allocation2 + $0xf8] sm:$0xff]
    %v4178 = vld [vmem:[#allocation2 + $0x108] sm:$0xff]
    %v4179 = vld [vmem:[#allocation2 + $0x110] sm:$0xff]
    %v4180 = vld [vmem:[#allocation2 + $0x120] sm:$0xff]
    %v4181 = vld [vmem:[#allocation2 + $0x128] sm:$0xff]
    %v4182 = vld [vmem:[#allocation2 + $0x138] sm:$0xff]
    %v4183 = vld [vmem:[#allocation2 + $0x140] sm:$0xff]
    %v4184 = vld [vmem:[#allocation2 + $0x150] sm:$0xff]
    %v4185 = vld [vmem:[#allocation2 + $0x158] sm:$0xff]
    %v4186 = vld [vmem:[#allocation2 + $0x168] sm:$0xff]
    %v4187 = vld [vmem:[#allocation2 + $0x170] sm:$0xff]
    %v4188 = vld [vmem:[#allocation2 + $0x180] sm:$0xff]
    %v4189 = vld [vmem:[#allocation2 + $0x188] sm:$0xff]
    %v4190 = vld [vmem:[#allocation2 + $0x198] sm:$0xff]
    %v4191 = vld [vmem:[#allocation2 + $0x1a0] sm:$0xff]
    %v4192 = vld [vmem:[%s1] sm:$0xff]
    %v4193 = vld [vmem:[%s1 + $0x8] sm:$0xff]
    %v4194 = vld [vmem:[%s1 + $0x10] sm:$0xff]
    %v4195 = vld [vmem:[%s1 + $0x18] sm:$0xff]
    %v4196 = vld [vmem:[%s1 + $0x20] sm:$0xff]
    %v4197 = vld [vmem:[%s1 + $0x28] sm:$0xff]
    %v4198 = vld [vmem:[%s1 + $0x30] sm:$0xff]
    %v4199 = vld [vmem:[%s1 + $0x38] sm:$0xff]
    %v4200 = vld [vmem:[%s1 + $0x40] sm:$0xff]
    %v4201 = vld [vmem:[%s1 + $0x48] sm:$0xff]
    %v4202 = vld [vmem:[%s1 + $0x50] sm:$0xff]
    %v4203 = vld [vmem:[%s1 + $0x58] sm:$0xff]
    %v4204 = vld [vmem:[%s1 + $0x60] sm:$0xff]
    %v4205 = vld [vmem:[%s1 + $0x68] sm:$0xff]
    %v4206 = vld [vmem:[%s1 + $0x70] sm:$0xff]
    %v4207 = vld [vmem:[%s1 + $0x78] sm:$0xff]
    %v4208 = vld [vmem:[%s1 + $0x80] sm:$0xff]
    %v4209 = vld [vmem:[%s1 + $0x88] sm:$0xff]
    %v4210 = vld [vmem:[%s1 + $0x90] sm:$0xff]
    %v4211 = vld [vmem:[%s1 + $0x98] sm:$0xff]
    %v4212 = vld [vmem:[%s1 + $0xa0] sm:$0xff]
    %v4213 = vld [vmem:[%s1 + $0xa8] sm:$0xff]
    %v4214 = vld [vmem:[%s1 + $0xb0] sm:$0xff]
    %v4215 = vld [vmem:[%s1 + $0xb8] sm:$0xff]
    %v4216 = vld [vmem:[%s1 + $0xc0] sm:$0xff]
    %v4217 = vld [vmem:[%s1 + $0xc8] sm:$0xff]
    %v4218 = vld [vmem:[%s1 + $0xd0] sm:$0xff]
    %v4219 = vld [vmem:[%s1 + $0xd8] sm:$0xff]
    %v4220 = vld [vmem:[%s1 + $0xe0] sm:$0xff]
    %v4221 = vld [vmem:[%s1 + $0xe8] sm:$0xff]
    %v4222 = vld [vmem:[%s1 + $0xf0] sm:$0xff]
    %v4223 = vld [vmem:[%s1 + $0xf8] sm:$0xff]
    %v4224 = vld [vmem:[%s1 + $0x100] sm:$0xff]
    %v4225 = vld [vmem:[%s1 + $0x108] sm:$0xff]
    %v4226 = vld [vmem:[%s1 + $0x110] sm:$0xff]
    %v4227 = vld [vmem:[%s1 + $0x118] sm:$0xff]
    %v4228 = vld [vmem:[%s1 + $0x120] sm:$0xff]
    %v4229 = vld [vmem:[%s1 + $0x128] sm:$0xff]
    %v4230 = vld [vmem:[%s1 + $0x130] sm:$0xff]
    %v4231 = vld [vmem:[%s1 + $0x138] sm:$0xff]
    %v4232 = vld [vmem:[%s1 + $0x140] sm:$0xff]
    %v4233 = vld [vmem:[%s1 + $0x148] sm:$0xff]
    %v4234 = vld [vmem:[%s1 + $0x150] sm:$0xff]
    %v4235 = vld [vmem:[%s1 + $0x158] sm:$0xff]
    %v4236 = vld [vmem:[%s1 + $0x160] sm:$0xff]
    %v4237 = vld [vmem:[%s1 + $0x168] sm:$0xff]
    %v4238 = vld [vmem:[%s1 + $0x170] sm:$0xff]
    %v4239 = vld [vmem:[%s1 + $0x178] sm:$0xff]
    %v4240 = vld [vmem:[#allocation2 + $0x1] sm:$0xff]
    %v4241 = vld [vmem:[#allocation2 + $0x9] sm:$0xff]
    %v4242 = vld [vmem:[#allocation2 + $0x19] sm:$0xff]
    %v4243 = vld [vmem:[#allocation2 + $0x21] sm:$0xff]
    %v4244 = vld [vmem:[#allocation2 + $0x31] sm:$0xff]
    %v4245 = vld [vmem:[#allocation2 + $0x39] sm:$0xff]
    %v4246 = vld [vmem:[#allocation2 + $0x49] sm:$0xff]
    %v4247 = vld [vmem:[#allocation2 + $0x51] sm:$0xff]
    %v4248 = vld [vmem:[#allocation2 + $0x61] sm:$0xff]
    %v4249 = vld [vmem:[#allocation2 + $0x69] sm:$0xff]
    %v4250 = vld [vmem:[#allocation2 + $0x79] sm:$0xff]
    %v4251 = vld [vmem:[#allocation2 + $0x81] sm:$0xff]
    %v4252 = vld [vmem:[#allocation2 + $0x91] sm:$0xff]
    %v4253 = vld [vmem:[#allocation2 + $0x99] sm:$0xff]
    %v4254 = vld [vmem:[#allocation2 + $0xa9] sm:$0xff]
    %v4255 = vld [vmem:[#allocation2 + $0xb1] sm:$0xff]
    %v4256 = vld [vmem:[#allocation2 + $0xc1] sm:$0xff]
    %v4257 = vld [vmem:[#allocation2 + $0xc9] sm:$0xff]
    %v4258 = vld [vmem:[#allocation2 + $0xd9] sm:$0xff]
    %v4259 = vld [vmem:[#allocation2 + $0xe1] sm:$0xff]
    %v4260 = vld [vmem:[#allocation2 + $0xf1] sm:$0xff]
    %v4261 = vld [vmem:[#allocation2 + $0xf9] sm:$0xff]
    %v4262 = vld [vmem:[#allocation2 + $0x109] sm:$0xff]
    %v4263 = vld [vmem:[#allocation2 + $0x111] sm:$0xff]
    %v4264 = vld [vmem:[#allocation2 + $0x121] sm:$0xff]
    %v4265 = vld [vmem:[#allocation2 + $0x129] sm:$0xff]
    %v4266 = vld [vmem:[#allocation2 + $0x139] sm:$0xff]
    %v4267 = vld [vmem:[#allocation2 + $0x141] sm:$0xff]
    %v4268 = vld [vmem:[#allocation2 + $0x151] sm:$0xff]
    %v4269 = vld [vmem:[#allocation2 + $0x159] sm:$0xff]
    %v4270 = vld [vmem:[#allocation2 + $0x169] sm:$0xff]
    %v4271 = vld [vmem:[#allocation2 + $0x171] sm:$0xff]
    %v4272 = vld [vmem:[#allocation2 + $0x181] sm:$0xff]
    %v4273 = vld [vmem:[#allocation2 + $0x189] sm:$0xff]
    %v4274 = vld [vmem:[#allocation2 + $0x199] sm:$0xff]
    %v4275 = vld [vmem:[#allocation2 + $0x1a1] sm:$0xff]
    %v4276 = vld [vmem:[%s277] sm:$0xff]
    %v4277 = vld [vmem:[%s277 + $0x8] sm:$0xff]
    %v4278 = vld [vmem:[%s277 + $0x10] sm:$0xff]
    %v4279 = vld [vmem:[%s277 + $0x18] sm:$0xff]
    %v4280 = vld [vmem:[%s277 + $0x20] sm:$0xff]
    %v4281 = vld [vmem:[%s277 + $0x28] sm:$0xff]
    %v4282 = vld [vmem:[%s277 + $0x30] sm:$0xff]
    %v4283 = vld [vmem:[%s277 + $0x38] sm:$0xff]
    %v4284 = vld [vmem:[%s277 + $0x40] sm:$0xff]
    %v4285 = vld [vmem:[%s277 + $0x48] sm:$0xff]
    %v4286 = vld [vmem:[%s277 + $0x50] sm:$0xff]
    %v4287 = vld [vmem:[%s277 + $0x58] sm:$0xff]
    %v4288 = vld [vmem:[%s277 + $0x60] sm:$0xff]
    %v4289 = vld [vmem:[%s277 + $0x68] sm:$0xff]
    %v4290 = vld [vmem:[%s277 + $0x70] sm:$0xff]
    %v4291 = vld [vmem:[%s277 + $0x78] sm:$0xff]
    %v4292 = vld [vmem:[%s277 + $0x80] sm:$0xff]
    %v4293 = vld [vmem:[%s277 + $0x88] sm:$0xff]
    %v4294 = vld [vmem:[%s277 + $0x90] sm:$0xff]
    %v4295 = vld [vmem:[%s277 + $0x98] sm:$0xff]
    %v4296 = vld [vmem:[%s277 + $0xa0] sm:$0xff]
    %v4297 = vld [vmem:[%s277 + $0xa8] sm:$0xff]
    %v4298 = vld [vmem:[%s277 + $0xb0] sm:$0xff]
    %v4299 = vld [vmem:[%s277 + $0xb8] sm:$0xff]
    %v4300 = vld [vmem:[%s277 + $0xc0] sm:$0xff]
    %v4301 = vld [vmem:[%s277 + $0xc8] sm:$0xff]
    %v4302 = vld [vmem:[%s277 + $0xd0] sm:$0xff]
    %v4303 = vld [vmem:[%s277 + $0xd8] sm:$0xff]
    %v4304 = vld [vmem:[%s277 + $0xe0] sm:$0xff]
    %v4305 = vld [vmem:[%s277 + $0xe8] sm:$0xff]
    %v4306 = vld [vmem:[%s277 + $0xf0] sm:$0xff]
    %v4307 = vld [vmem:[%s277 + $0xf8] sm:$0xff]
    %v4308 = vld [vmem:[%s277 + $0x100] sm:$0xff]
    %v4309 = vld [vmem:[%s277 + $0x108] sm:$0xff]
    %v4310 = vld [vmem:[%s277 + $0x110] sm:$0xff]
    %v4311 = vld [vmem:[%s277 + $0x118] sm:$0xff]
    %v4312 = vld [vmem:[%s277 + $0x120] sm:$0xff]
    %v4313 = vld [vmem:[%s277 + $0x128] sm:$0xff]
    %v4314 = vld [vmem:[%s277 + $0x130] sm:$0xff]
    %v4315 = vld [vmem:[%s277 + $0x138] sm:$0xff]
    %v4316 = vld [vmem:[%s277 + $0x140] sm:$0xff]
    %v4317 = vld [vmem:[%s277 + $0x148] sm:$0xff]
    %v4318 = vld [vmem:[%s277 + $0x150] sm:$0xff]
    %v4319 = vld [vmem:[%s277 + $0x158] sm:$0xff]
    %v4320 = vld [vmem:[%s277 + $0x160] sm:$0xff]
    %v4321 = vld [vmem:[%s277 + $0x168] sm:$0xff]
    %v4322 = vld [vmem:[%s277 + $0x170] sm:$0xff]
    %v4323 = vld [vmem:[%s277 + $0x178] sm:$0xff]
    %4324 = vmatprep.subr.mxu0 0.0
    %4325 = vmatpush1.msra.mxu0 %v4276
    %4326 = vmatprep.subr.mxu0 0.0
    %4327 = vmatpush1.msra.mxu0 %v4277
    %4328 = vmatprep.subr.mxu0 0.0
    %4329 = vmatpush1.msra.mxu0 %v4278
    %4330 = vmatprep.subr.mxu0 0.0
    %4331 = vmatpush1.msra.mxu0 %v4279
    %4332 = vmatprep.subr.mxu0 0.0
    %4333 = vmatpush1.msra.mxu0 %v4280
    %4334 = vmatprep.subr.mxu0 0.0
    %4335 = vmatpush1.msra.mxu0 %v4281
    %4336 = vmatprep.subr.mxu0 0.0
    %4337 = vmatpush1.msra.mxu0 %v4282
    %4338 = vmatprep.subr.mxu0 0.0
    %4339 = vmatpush1.msra.mxu0 %v4283
    %4340 = vmatprep.subr.mxu0 0.0
    %4341 = vmatpush1.msra.mxu0 %v4284
    %4342 = vmatprep.subr.mxu0 0.0
    %4343 = vmatpush1.msra.mxu0 %v4285
    %4344 = vmatprep.subr.mxu0 0.0
    %4345 = vmatpush1.msra.mxu0 %v4286
    %4346 = vmatprep.subr.mxu0 0.0
    %4347 = vmatpush1.msra.mxu0 %v4287
    %4348 = vmatprep.subr.mxu0 0.0
    %4349 = vmatpush1.msra.mxu0 %v4288
    %4350 = vmatprep.subr.mxu0 0.0
    %4351 = vmatpush1.msra.mxu0 %v4289
    %4352 = vmatprep.subr.mxu0 0.0
    %4353 = vmatpush1.msra.mxu0 %v4290
    %4354 = vmatprep.subr.mxu0 0.0
    %4355 = vmatpush1.msra.mxu0 %v4291
    %4356 = vmatprep.subr.mxu0 0.0
    %4357 = vmatpush1.msra.mxu0 %v4292
    %4358 = vmatprep.subr.mxu0 0.0
    %4359 = vmatpush1.msra.mxu0 %v4293
    %4360 = vmatprep.subr.mxu0 0.0
    %4361 = vmatpush1.msra.mxu0 %v4294
    %4362 = vmatprep.subr.mxu0 0.0
    %4363 = vmatpush1.msra.mxu0 %v4295
    %4364 = vmatprep.subr.mxu0 0.0
    %4365 = vmatpush1.msra.mxu0 %v4296
    %4366 = vmatprep.subr.mxu0 0.0
    %4367 = vmatpush1.msra.mxu0 %v4297
    %4368 = vmatprep.subr.mxu0 0.0
    %4369 = vmatpush1.msra.mxu0 %v4298
    %4370 = vmatprep.subr.mxu0 0.0
    %4371 = vmatpush1.msra.mxu0 %v4299
    %4372 = vmatprep.subr.mxu0 0.0
    %4373 = vmatpush1.msra.mxu0 %v4300
    %4374 = vmatprep.subr.mxu0 0.0
    %4375 = vmatpush1.msra.mxu0 %v4301
    %4376 = vmatprep.subr.mxu0 0.0
    %4377 = vmatpush1.msra.mxu0 %v4302
    %4378 = vmatprep.subr.mxu0 0.0
    %4379 = vmatpush1.msra.mxu0 %v4303
    %4380 = vmatprep.subr.mxu0 0.0
    %4381 = vmatpush1.msra.mxu0 %v4304
    %4382 = vmatprep.subr.mxu0 0.0
    %4383 = vmatpush1.msra.mxu0 %v4305
    %4384 = vmatprep.subr.mxu0 0.0
    %4385 = vmatpush1.msra.mxu0 %v4306
    %4386 = vmatprep.subr.mxu0 0.0
    %4387 = vmatpush1.msra.mxu0 %v4307
    %4388 = vmatprep.mubr.f32.mxu0 %v4242
    %4389 = vmatmul.mubr.f32.gmra.mrb[0].mxu0 %v4240
    %v4390 = vpop.f32.mrb[0].mxu0
    %v4391 = vadd.f32 0.0, %v4390
    %v4392 = vpop.f32.mrb[0].mxu0
    %4393 = vmatprep.mubr.f32.mxu0 %v4243
    %4394 = vmatmul.mubr.f32.gmra.mrb[0].mxu0 %v4241
    %v4395 = vpop.f32.mrb[0].mxu0
    %v4396 = vadd.f32 0.0, %v4395
    %v4397 = vpop.f32.mrb[0].mxu0
    %4398 = vmatprep.mubr.f32.mxu0 %v4244
    %4399 = vmatmul.mubr.f32.gmra.mrb[0].mxu0 %v4242
    %v4400 = vpop.f32.mrb[0].mxu0
    %v4401 = vadd.f32 0.0, %v4400
    %v4402 = vpop.f32.mrb[0].mxu0
    %4403 = vmatprep.mubr.f32.mxu0 %v4245
    %4404 = vmatmul.mubr.f32.gmra.mrb[0].mxu0 %v4243
    %v4405 = vpop.f32.mrb[0].mxu0
    %v4406 = vadd.f32 0.0, %v4405
    %v4407 = vpop.f32.mrb[0].mxu0
    %4408 = vmatprep.mubr.f32.mxu0 %v4246
    %4409 = vmatmul.mubr.f32.gmra.mrb[0].mxu0 %v4244
    %v4410 = vpop.f32.mrb[0].mxu0
    %v4411 = vadd.f32 0.0, %v4410
    %v4412 = vpop.f32.mrb[0].mxu0
    %4413 = vmatprep.mubr.f32.mxu0 %v4247
    %4414 = vmatmul.mubr.f32.gmra.mrb[0].mxu0 %v4245
    %v4415 = vpop.f32.mrb[0].mxu0
    %v4416 = vadd.f32 0.0, %v4415
    %v4417 = vpop.f32.mrb[0].mxu0
    %4418 = vmatprep.mubr.f32.mxu0 %v4248
    %4419 = vmatmul.mubr.f32.gmra.mrb[0].mxu0 %v4246
    %v4420 = vpop.f32.mrb[0].mxu0
    %v4421 = vadd.f32 0.0, %v4420
    %v4422 = vpop.f32.mrb[0].mxu0
    %4423 = vmatprep.mubr.f32.mxu0 %v4249
    %4424 = vmatmul.mubr.f32.gmra.mrb[0].mxu0 %v4247
    %v4425 = vpop.f32.mrb[0].mxu0
    %v4426 = vadd.f32 0.0, %v4425
    %v4427 = vpop.f32.mrb[0].mxu0
    %4428 = vmatprep.mubr.f32.mxu0 %v4250
    %4429 = vmatmul.mubr.f32.gmra.mrb[0].mxu0 %v4248
    %v4430 = vpop.f32.mrb[0].mxu0
    %v4431 = vadd.f32 0.0, %v4430
    %v4432 = vpop.f32.mrb[0].mxu0
    %4433 = vmatprep.mubr.f32.mxu0 %v4251
    %4434 = vmatmul.mubr.f32.gmra.mrb[0].mxu0 %v4249
    %v4435 = vpop.f32.mrb[0].mxu0
    %v4436 = vadd.f32 0.0, %v4435
    %v4437 = vpop.f32.mrb[0].mxu0
    %4438 = vmatprep.mubr.f32.mxu0 %v4252
    %4439 = vmatmul.mubr.f32.gmra.mrb[0].mxu0 %v4250
    %v4440 = vpop.f32.mrb[0].mxu0
    %v4441 = vadd.f32 0.0, %v4440
    %v4442 = vpop.f32.mrb[0].mxu0
    %4443 = vmatprep.mubr.f32.mxu0 %v4253
    %4444 = vmatmul.mubr.f32.gmra.mrb[0].mxu0 %v4251
    %v4445 = vpop.f32.mrb[0].mxu0
    %v4446 = vadd.f32 0.0, %v4445
    %v4447 = vpop.f32.mrb[0].mxu0
    %4448 = vmatprep.mubr.f32.mxu0 %v4254
    %4449 = vmatmul.mubr.f32.gmra.mrb[0].mxu0 %v4252
    %v4450 = vpop.f32.mrb[0].mxu0
    %v4451 = vadd.f32 0.0, %v4450
    %v4452 = vpop.f32.mrb[0].mxu0
    %4453 = vmatprep.mubr.f32.mxu0 %v4255
    %4454 = vmatmul.mubr.f32.gmra.mrb[0].mxu0 %v4253
    %v4455 = vpop.f32.mrb[0].mxu0
    %v4456 = vadd.f32 0.0, %v4455
    %v4457 = vpop.f32.mrb[0].mxu0
    %4458 = vmatprep.mubr.f32.mxu0 %v4256
    %4459 = vmatmul.mubr.f32.gmra.mrb[0].mxu0 %v4254
    %v4460 = vpop.f32.mrb[0].mxu0
    %v4461 = vadd.f32 0.0, %v4460
    %v4462 = vpop.f32.mrb[0].mxu0
    %4463 = vmatprep.mubr.f32.mxu0 %v4257
    %4464 = vmatmul.mubr.f32.gmra.mrb[0].mxu0 %v4255
    %v4465 = vpop.f32.mrb[0].mxu0
    %v4466 = vadd.f32 0.0, %v4465
    %v4467 = vpop.f32.mrb[0].mxu0
    %4468 = vmatprep.mubr.f32.mxu0 %v4258
    %4469 = vmatmul.mubr.f32.gmra.mrb[0].mxu0 %v4256
    %v4470 = vpop.f32.mrb[0].mxu0
    %v4471 = vadd.f32 0.0, %v4470
    %v4472 = vpop.f32.mrb[0].mxu0
    %4473 = vmatprep.mubr.f32.mxu0 %v4259
    %4474 = vmatmul.mubr.f32.gmra.mrb[0].mxu0 %v4257
    %v4475 = vpop.f32.mrb[0].mxu0
    %v4476 = vadd.f32 0.0, %v4475
    %v4477 = vpop.f32.mrb[0].mxu0
    %4478 = vmatprep.mubr.f32.mxu0 %v4260
    %4479 = vmatmul.mubr.f32.gmra.mrb[0].mxu0 %v4258
    %v4480 = vpop.f32.mrb[0].mxu0
    %v4481 = vadd.f32 0.0, %v4480
    %v4482 = vpop.f32.mrb[0].mxu0
    %4483 = vmatprep.mubr.f32.mxu0 %v4261
    %4484 = vmatmul.mubr.f32.gmra.mrb[0].mxu0 %v4259
    %v4485 = vpop.f32.mrb[0].mxu0
    %v4486 = vadd.f32 0.0, %v4485
    %v4487 = vpop.f32.mrb[0].mxu0
    %4488 = vmatprep.mubr.f32.mxu0 %v4262
    %4489 = vmatmul.mubr.f32.gmra.mrb[0].mxu0 %v4260
    %v4490 = vpop.f32.mrb[0].mxu0
    %v4491 = vadd.f32 0.0, %v4490
    %v4492 = vpop.f32.mrb[0].mxu0
    %4493 = vmatprep.mubr.f32.mxu0 %v4263
    %4494 = vmatmul.mubr.f32.gmra.mrb[0].mxu0 %v4261
    %v4495 = vpop.f32.mrb[0].mxu0
    %v4496 = vadd.f32 0.0, %v4495
    %v4497 = vpop.f32.mrb[0].mxu0
    %4498 = vmatprep.mubr.f32.mxu0 %v4264
    %4499 = vmatmul.mubr.f32.gmra.mrb[0].mxu0 %v4262
    %v4500 = vpop.f32.mrb[0].mxu0
    %v4501 = vadd.f32 0.0, %v4500
    %v4502 = vpop.f32.mrb[0].mxu0
    %4503 = vmatprep.mubr.f32.mxu0 %v4265
    %4504 = vmatmul.mubr.f32.gmra.mrb[0].mxu0 %v4263
    %v4505 = vpop.f32.mrb[0].mxu0
    %v4506 = vadd.f32 0.0, %v4505
    %v4507 = vpop.f32.mrb[0].mxu0
    %4508 = vmatprep.mubr.f32.mxu0 %v4266
    %4509 = vmatmul.mubr.f32.gmra.mrb[0].mxu0 %v4264
    %v4510 = vpop.f32.mrb[0].mxu0
    %v4511 = vadd.f32 0.0, %v4510
    %v4512 = vpop.f32.mrb[0].mxu0
    %4513 = vmatprep.mubr.f32.mxu0 %v4267
    %4514 = vmatmul.mubr.f32.gmra.mrb[0].mxu0 %v4265
    %v4515 = vpop.f32.mrb[0].mxu0
    %v4516 = vadd.f32 0.0, %v4515
    %v4517 = vpop.f32.mrb[0].mxu0
    %4518 = vmatprep.mubr.f32.mxu0 %v4268
    %4519 = vmatmul.mubr.f32.gmra.mrb[0].mxu0 %v4266
    %v4520 = vpop.f32.mrb[0].mxu0
    %v4521 = vadd.f32 0.0, %v4520
    %v4522 = vpop.f32.mrb[0].mxu0
    %4523 = vmatprep.mubr.f32.mxu0 %v4269
    %4524 = vmatmul.mubr.f32.gmra.mrb[0].mxu0 %v4267
    %v4525 = vpop.f32.mrb[0].mxu0
    %v4526 = vadd.f32 0.0, %v4525
    %v4527 = vpop.f32.mrb[0].mxu0
    %4528 = vmatprep.mubr.f32.mxu0 %v4270
    %4529 = vmatmul.mubr.f32.gmra.mrb[0].mxu0 %v4268
    %v4530 = vpop.f32.mrb[0].mxu0
    %v4531 = vadd.f32 0.0, %v4530
    %v4532 = vpop.f32.mrb[0].mxu0
    %4533 = vmatprep.mubr.f32.mxu0 %v4271
    %4534 = vmatmul.mubr.f32.gmra.mrb[0].mxu0 %v4269
    %v4535 = vpop.f32.mrb[0].mxu0
    %v4536 = vadd.f32 0.0, %v4535
    %v4537 = vpop.f32.mrb[0].mxu0
    %4538 = vmatprep.mubr.f32.mxu0 %v4272
    %4539 = vmatmul.mubr.f32.gmra.mrb[0].mxu0 %v4270
    %v4540 = vpop.f32.mrb[0].mxu0
    %v4541 = vadd.f32 0.0, %v4540
    %v4542 = vpop.f32.mrb[0].mxu0
    %4543 = vmatprep.mubr.f32.mxu0 %v4273
    %4544 = vmatmul.mubr.f32.gmra.mrb[0].mxu0 %v4271
    %v4545 = vpop.f32.mrb[0].mxu0
    %v4546 = vadd.f32 0.0, %v4545
    %v4547 = vpop.f32.mrb[0].mxu0
    %4548 = vdwg.mxu0
    %4549 = vmatprep.subr.mxu0 0.0
    %4550 = vmatpush1.msra.mxu0 %v4308
    %4551 = vmatprep.subr.mxu0 0.0
    %4552 = vmatpush1.msra.mxu0 %v4309
    %4553 = vmatprep.subr.mxu0 0.0
    %4554 = vmatpush1.msra.mxu0 %v4310
    %4555 = vmatprep.subr.mxu0 0.0
    %4556 = vmatpush1.msra.mxu0 %v4311
    %4557 = vmatprep.subr.mxu0 0.0
    %4558 = vmatpush1.msra.mxu0 %v4312
    %4559 = vmatprep.subr.mxu0 0.0
    %4560 = vmatpush1.msra.mxu0 %v4313
    %4561 = vmatprep.subr.mxu0 0.0
    %4562 = vmatpush1.msra.mxu0 %v4314
    %4563 = vmatprep.subr.mxu0 0.0
    %4564 = vmatpush1.msra.mxu0 %v4315
    %4565 = vmatprep.subr.mxu0 0.0
    %4566 = vmatpush1.msra.mxu0 %v4316
    %4567 = vmatprep.subr.mxu0 0.0
    %4568 = vmatpush1.msra.mxu0 %v4317
    %4569 = vmatprep.subr.mxu0 0.0
    %4570 = vmatpush1.msra.mxu0 %v4318
    %4571 = vmatprep.subr.mxu0 0.0
    %4572 = vmatpush1.msra.mxu0 %v4319
    %4573 = vmatprep.subr.mxu0 0.0
    %4574 = vmatpush1.msra.mxu0 %v4320
    %4575 = vmatprep.subr.mxu0 0.0
    %4576 = vmatpush1.msra.mxu0 %v4321
    %4577 = vmatprep.subr.mxu0 0.0
    %4578 = vmatpush1.msra.mxu0 %v4322
    %4579 = vmatprep.subr.mxu0 0.0
    %4580 = vmatpush1.msra.mxu0 %v4323
    %4581 = vmatprep.subr.mxu0 0.0
    %4582 = vmatpush1.msra.mxu0 0.0
    %4583 = vmatprep.subr.mxu0 0.0
    %4584 = vmatpush1.msra.mxu0 0.0
    %4585 = vmatprep.subr.mxu0 0.0
    %4586 = vmatpush1.msra.mxu0 0.0
    %4587 = vmatprep.subr.mxu0 0.0
    %4588 = vmatpush1.msra.mxu0 0.0
    %4589 = vmatprep.subr.mxu0 0.0
    %4590 = vmatpush1.msra.mxu0 0.0
    %4591 = vmatprep.subr.mxu0 0.0
    %4592 = vmatpush1.msra.mxu0 0.0
    %4593 = vmatprep.subr.mxu0 0.0
    %4594 = vmatpush1.msra.mxu0 0.0
    %4595 = vmatprep.subr.mxu0 0.0
    %4596 = vmatpush1.msra.mxu0 0.0
    %4597 = vmatprep.subr.mxu0 0.0
    %4598 = vmatpush1.msra.mxu0 0.0
    %4599 = vmatprep.subr.mxu0 0.0
    %4600 = vmatpush1.msra.mxu0 0.0
    %4601 = vmatprep.subr.mxu0 0.0
    %4602 = vmatpush1.msra.mxu0 0.0
    %4603 = vmatprep.subr.mxu0 0.0
    %4604 = vmatpush1.msra.mxu0 0.0
    %4605 = vmatprep.subr.mxu0 0.0
    %4606 = vmatpush1.msra.mxu0 0.0
    %4607 = vmatprep.subr.mxu0 0.0
    %4608 = vmatpush1.msra.mxu0 0.0
    %4609 = vmatprep.subr.mxu0 0.0
    %4610 = vmatpush1.msra.mxu0 0.0
    %4611 = vmatprep.subr.mxu0 0.0
    %4612 = vmatpush1.msra.mxu0 0.0
    %4613 = vmatprep.mubr.f32.mxu0 0.0
    %4614 = vmatmul.mubr.f32.gmra.mrb[0].mxu0 %v4244
    %v4615 = vpop.f32.mrb[0].mxu0
    %v4616 = vadd.f32 %v4391, %v4615
    %v4617 = vpop.f32.mrb[0].mxu0
    %4618 = vmatprep.mubr.f32.mxu0 0.0
    %4619 = vmatmul.mubr.f32.gmra.mrb[0].mxu0 %v4245
    %v4620 = vpop.f32.mrb[0].mxu0
    %v4621 = vadd.f32 %v4396, %v4620
    %v4622 = vpop.f32.mrb[0].mxu0
    %4623 = vmatprep.mubr.f32.mxu0 0.0
    %4624 = vmatmul.mubr.f32.gmra.mrb[0].mxu0 %v4246
    %v4625 = vpop.f32.mrb[0].mxu0
    %v4626 = vadd.f32 %v4401, %v4625
    %v4627 = vpop.f32.mrb[0].mxu0
    %4628 = vmatprep.mubr.f32.mxu0 0.0
    %4629 = vmatmul.mubr.f32.gmra.mrb[0].mxu0 %v4247
    %v4630 = vpop.f32.mrb[0].mxu0
    %v4631 = vadd.f32 %v4406, %v4630
    %v4632 = vpop.f32.mrb[0].mxu0
    %4633 = vmatprep.mubr.f32.mxu0 0.0
    %4634 = vmatmul.mubr.f32.gmra.mrb[0].mxu0 %v4248
    %v4635 = vpop.f32.mrb[0].mxu0
    %v4636 = vadd.f32 %v4411, %v4635
    %v4637 = vpop.f32.mrb[0].mxu0
    %4638 = vmatprep.mubr.f32.mxu0 0.0
    %4639 = vmatmul.mubr.f32.gmra.mrb[0].mxu0 %v4249
    %v4640 = vpop.f32.mrb[0].mxu0
    %v4641 = vadd.f32 %v4416, %v4640
    %v4642 = vpop.f32.mrb[0].mxu0
    %4643 = vmatprep.mubr.f32.mxu0 0.0
    %4644 = vmatmul.mubr.f32.gmra.mrb[0].mxu0 %v4250
    %v4645 = vpop.f32.mrb[0].mxu0
    %v4646 = vadd.f32 %v4421, %v4645
    %v4647 = vpop.f32.mrb[0].mxu0
    %4648 = vmatprep.mubr.f32.mxu0 0.0
    %4649 = vmatmul.mubr.f32.gmra.mrb[0].mxu0 %v4251
    %v4650 = vpop.f32.mrb[0].mxu0
    %v4651 = vadd.f32 %v4426, %v4650
    %v4652 = vpop.f32.mrb[0].mxu0
    %4653 = vmatprep.mubr.f32.mxu0 0.0
    %4654 = vmatmul.mubr.f32.gmra.mrb[0].mxu0 %v4252
    %v4655 = vpop.f32.mrb[0].mxu0
    %v4656 = vadd.f32 %v4431, %v4655
    %v4657 = vpop.f32.mrb[0].mxu0
    %4658 = vmatprep.mubr.f32.mxu0 0.0
    %4659 = vmatmul.mubr.f32.gmra.mrb[0].mxu0 %v4253
    %v4660 = vpop.f32.mrb[0].mxu0
    %v4661 = vadd.f32 %v4436, %v4660
    %v4662 = vpop.f32.mrb[0].mxu0
    %4663 = vmatprep.mubr.f32.mxu0 0.0
    %4664 = vmatmul.mubr.f32.gmra.mrb[0].mxu0 %v4254
    %v4665 = vpop.f32.mrb[0].mxu0
    %v4666 = vadd.f32 %v4441, %v4665
    %v4667 = vpop.f32.mrb[0].mxu0
    %4668 = vmatprep.mubr.f32.mxu0 0.0
    %4669 = vmatmul.mubr.f32.gmra.mrb[0].mxu0 %v4255
    %v4670 = vpop.f32.mrb[0].mxu0
    %v4671 = vadd.f32 %v4446, %v4670
    %v4672 = vpop.f32.mrb[0].mxu0
    %4673 = vmatprep.mubr.f32.mxu0 0.0
    %4674 = vmatmul.mubr.f32.gmra.mrb[0].mxu0 %v4256
    %v4675 = vpop.f32.mrb[0].mxu0
    %v4676 = vadd.f32 %v4451, %v4675
    %v4677 = vpop.f32.mrb[0].mxu0
    %4678 = vmatprep.mubr.f32.mxu0 0.0
    %4679 = vmatmul.mubr.f32.gmra.mrb[0].mxu0 %v4257
    %v4680 = vpop.f32.mrb[0].mxu0
    %v4681 = vadd.f32 %v4456, %v4680
    %v4682 = vpop.f32.mrb[0].mxu0
    %4683 = vmatprep.mubr.f32.mxu0 0.0
    %4684 = vmatmul.mubr.f32.gmra.mrb[0].mxu0 %v4258
    %v4685 = vpop.f32.mrb[0].mxu0
    %v4686 = vadd.f32 %v4461, %v4685
    %v4687 = vpop.f32.mrb[0].mxu0
    %4688 = vmatprep.mubr.f32.mxu0 0.0
    %4689 = vmatmul.mubr.f32.gmra.mrb[0].mxu0 %v4259
    %v4690 = vpop.f32.mrb[0].mxu0
    %v4691 = vadd.f32 %v4466, %v4690
    %v4692 = vpop.f32.mrb[0].mxu0
    %4693 = vmatprep.mubr.f32.mxu0 0.0
    %4694 = vmatmul.mubr.f32.gmra.mrb[0].mxu0 %v4260
    %v4695 = vpop.f32.mrb[0].mxu0
    %v4696 = vadd.f32 %v4471, %v4695
    %v4697 = vpop.f32.mrb[0].mxu0
    %4698 = vmatprep.mubr.f32.mxu0 0.0
    %4699 = vmatmul.mubr.f32.gmra.mrb[0].mxu0 %v4261
    %v4700 = vpop.f32.mrb[0].mxu0
    %v4701 = vadd.f32 %v4476, %v4700
    %v4702 = vpop.f32.mrb[0].mxu0
    %4703 = vmatprep.mubr.f32.mxu0 0.0
    %4704 = vmatmul.mubr.f32.gmra.mrb[0].mxu0 %v4262
    %v4705 = vpop.f32.mrb[0].mxu0
    %v4706 = vadd.f32 %v4481, %v4705
    %v4707 = vpop.f32.mrb[0].mxu0
    %4708 = vmatprep.mubr.f32.mxu0 0.0
    %4709 = vmatmul.mubr.f32.gmra.mrb[0].mxu0 %v4263
    %v4710 = vpop.f32.mrb[0].mxu0
    %v4711 = vadd.f32 %v4486, %v4710
    %v4712 = vpop.f32.mrb[0].mxu0
    %4713 = vmatprep.mubr.f32.mxu0 0.0
    %4714 = vmatmul.mubr.f32.gmra.mrb[0].mxu0 %v4264
    %v4715 = vpop.f32.mrb[0].mxu0
    %v4716 = vadd.f32 %v4491, %v4715
    %v4717 = vpop.f32.mrb[0].mxu0
    %4718 = vmatprep.mubr.f32.mxu0 0.0
    %4719 = vmatmul.mubr.f32.gmra.mrb[0].mxu0 %v4265
    %v4720 = vpop.f32.mrb[0].mxu0
    %v4721 = vadd.f32 %v4496, %v4720
    %v4722 = vpop.f32.mrb[0].mxu0
    %4723 = vmatprep.mubr.f32.mxu0 0.0
    %4724 = vmatmul.mubr.f32.gmra.mrb[0].mxu0 %v4266
    %v4725 = vpop.f32.mrb[0].mxu0
    %v4726 = vadd.f32 %v4501, %v4725
    %v4727 = vpop.f32.mrb[0].mxu0
    %4728 = vmatprep.mubr.f32.mxu0 0.0
    %4729 = vmatmul.mubr.f32.gmra.mrb[0].mxu0 %v4267
    %v4730 = vpop.f32.mrb[0].mxu0
    %v4731 = vadd.f32 %v4506, %v4730
    %v4732 = vpop.f32.mrb[0].mxu0
    %4733 = vmatprep.mubr.f32.mxu0 0.0
    %4734 = vmatmul.mubr.f32.gmra.mrb[0].mxu0 %v4268
    %v4735 = vpop.f32.mrb[0].mxu0
    %v4736 = vadd.f32 %v4511, %v4735
    %v4737 = vpop.f32.mrb[0].mxu0
    %4738 = vmatprep.mubr.f32.mxu0 0.0
    %4739 = vmatmul.mubr.f32.gmra.mrb[0].mxu0 %v4269
    %v4740 = vpop.f32.mrb[0].mxu0
    %v4741 = vadd.f32 %v4516, %v4740
    %v4742 = vpop.f32.mrb[0].mxu0
    %4743 = vmatprep.mubr.f32.mxu0 0.0
    %4744 = vmatmul.mubr.f32.gmra.mrb[0].mxu0 %v4270
    %v4745 = vpop.f32.mrb[0].mxu0
    %v4746 = vadd.f32 %v4521, %v4745
    %v4747 = vpop.f32.mrb[0].mxu0
    %4748 = vmatprep.mubr.f32.mxu0 0.0
    %4749 = vmatmul.mubr.f32.gmra.mrb[0].mxu0 %v4271
    %v4750 = vpop.f32.mrb[0].mxu0
    %v4751 = vadd.f32 %v4526, %v4750
    %v4752 = vpop.f32.mrb[0].mxu0
    %4753 = vmatprep.mubr.f32.mxu0 0.0
    %4754 = vmatmul.mubr.f32.gmra.mrb[0].mxu0 %v4272
    %v4755 = vpop.f32.mrb[0].mxu0
    %v4756 = vadd.f32 %v4531, %v4755
    %v4757 = vpop.f32.mrb[0].mxu0
    %4758 = vmatprep.mubr.f32.mxu0 0.0
    %4759 = vmatmul.mubr.f32.gmra.mrb[0].mxu0 %v4273
    %v4760 = vpop.f32.mrb[0].mxu0
    %v4761 = vadd.f32 %v4536, %v4760
    %v4762 = vpop.f32.mrb[0].mxu0
    %4763 = vmatprep.mubr.f32.mxu0 0.0
    %4764 = vmatmul.mubr.f32.gmra.mrb[0].mxu0 %v4274
    %v4765 = vpop.f32.mrb[0].mxu0
    %v4766 = vadd.f32 %v4541, %v4765
    %v4767 = vpop.f32.mrb[0].mxu0
    %4768 = vmatprep.mubr.f32.mxu0 0.0
    %4769 = vmatmul.mubr.f32.gmra.mrb[0].mxu0 %v4275
    %v4770 = vpop.f32.mrb[0].mxu0
    %v4771 = vadd.f32 %v4546, %v4770
    %v4772 = vpop.f32.mrb[0].mxu0
    %4773 = vdwg.mxu0
    %4774 = vmatprep.subr.mxu0 0.0
    %4775 = vmatpush1.msra.mxu0 %v4192
    %4776 = vmatprep.subr.mxu0 0.0
    %4777 = vmatpush1.msra.mxu0 %v4193
    %4778 = vmatprep.subr.mxu0 0.0
    %4779 = vmatpush1.msra.mxu0 %v4194
    %4780 = vmatprep.subr.mxu0 0.0
    %4781 = vmatpush1.msra.mxu0 %v4195
    %4782 = vmatprep.subr.mxu0 0.0
    %4783 = vmatpush1.msra.mxu0 %v4196
    %4784 = vmatprep.subr.mxu0 0.0
    %4785 = vmatpush1.msra.mxu0 %v4197
    %4786 = vmatprep.subr.mxu0 0.0
    %4787 = vmatpush1.msra.mxu0 %v4198
    %4788 = vmatprep.subr.mxu0 0.0
    %4789 = vmatpush1.msra.mxu0 %v4199
    %4790 = vmatprep.subr.mxu0 0.0
    %4791 = vmatpush1.msra.mxu0 %v4200
    %4792 = vmatprep.subr.mxu0 0.0
    %4793 = vmatpush1.msra.mxu0 %v4201
    %4794 = vmatprep.subr.mxu0 0.0
    %4795 = vmatpush1.msra.mxu0 %v4202
    %4796 = vmatprep.subr.mxu0 0.0
    %4797 = vmatpush1.msra.mxu0 %v4203
    %4798 = vmatprep.subr.mxu0 0.0
    %4799 = vmatpush1.msra.mxu0 %v4204
    %4800 = vmatprep.subr.mxu0 0.0
    %4801 = vmatpush1.msra.mxu0 %v4205
    %4802 = vmatprep.subr.mxu0 0.0
    %4803 = vmatpush1.msra.mxu0 %v4206
    %4804 = vmatprep.subr.mxu0 0.0
    %4805 = vmatpush1.msra.mxu0 %v4207
    %4806 = vmatprep.subr.mxu0 0.0
    %4807 = vmatpush1.msra.mxu0 %v4208
    %4808 = vmatprep.subr.mxu0 0.0
    %4809 = vmatpush1.msra.mxu0 %v4209
    %4810 = vmatprep.subr.mxu0 0.0
    %4811 = vmatpush1.msra.mxu0 %v4210
    %4812 = vmatprep.subr.mxu0 0.0
    %4813 = vmatpush1.msra.mxu0 %v4211
    %4814 = vmatprep.subr.mxu0 0.0
    %4815 = vmatpush1.msra.mxu0 %v4212
    %4816 = vmatprep.subr.mxu0 0.0
    %4817 = vmatpush1.msra.mxu0 %v4213
    %4818 = vmatprep.subr.mxu0 0.0
    %4819 = vmatpush1.msra.mxu0 %v4214
    %4820 = vmatprep.subr.mxu0 0.0
    %4821 = vmatpush1.msra.mxu0 %v4215
    %4822 = vmatprep.subr.mxu0 0.0
    %4823 = vmatpush1.msra.mxu0 %v4216
    %4824 = vmatprep.subr.mxu0 0.0
    %4825 = vmatpush1.msra.mxu0 %v4217
    %4826 = vmatprep.subr.mxu0 0.0
    %4827 = vmatpush1.msra.mxu0 %v4218
    %4828 = vmatprep.subr.mxu0 0.0
    %4829 = vmatpush1.msra.mxu0 %v4219
    %4830 = vmatprep.subr.mxu0 0.0
    %4831 = vmatpush1.msra.mxu0 %v4220
    %4832 = vmatprep.subr.mxu0 0.0
    %4833 = vmatpush1.msra.mxu0 %v4221
    %4834 = vmatprep.subr.mxu0 0.0
    %4835 = vmatpush1.msra.mxu0 %v4222
    %4836 = vmatprep.subr.mxu0 0.0
    %4837 = vmatpush1.msra.mxu0 %v4223
    %4838 = vmatprep.mubr.f32.mxu0 %v4158
    %4839 = vmatmul.mubr.f32.gmra.mrb[0].mxu0 %v4156
    %v4840 = vpop.f32.mrb[0].mxu0
    %v4841 = vadd.f32 %v4616, %v4840
    %v4842 = vpop.f32.mrb[0].mxu0
    %4843 = vmatprep.mubr.f32.mxu0 %v4159
    %4844 = vmatmul.mubr.f32.gmra.mrb[0].mxu0 %v4157
    %v4845 = vpop.f32.mrb[0].mxu0
    %v4846 = vadd.f32 %v4621, %v4845
    %v4847 = vpop.f32.mrb[0].mxu0
    %4848 = vmatprep.mubr.f32.mxu0 %v4160
    %4849 = vmatmul.mubr.f32.gmra.mrb[0].mxu0 %v4158
    %v4850 = vpop.f32.mrb[0].mxu0
    %v4851 = vadd.f32 %v4626, %v4850
    %v4852 = vpop.f32.mrb[0].mxu0
    %4853 = vmatprep.mubr.f32.mxu0 %v4161
    %4854 = vmatmul.mubr.f32.gmra.mrb[0].mxu0 %v4159
    %v4855 = vpop.f32.mrb[0].mxu0
    %v4856 = vadd.f32 %v4631, %v4855
    %v4857 = vpop.f32.mrb[0].mxu0
    %4858 = vmatprep.mubr.f32.mxu0 %v4162
    %4859 = vmatmul.mubr.f32.gmra.mrb[0].mxu0 %v4160
    %v4860 = vpop.f32.mrb[0].mxu0
    %v4861 = vadd.f32 %v4636, %v4860
    %v4862 = vpop.f32.mrb[0].mxu0
    %4863 = vmatprep.mubr.f32.mxu0 %v4163
    %4864 = vmatmul.mubr.f32.gmra.mrb[0].mxu0 %v4161
    %v4865 = vpop.f32.mrb[0].mxu0
    %v4866 = vadd.f32 %v4641, %v4865
    %v4867 = vpop.f32.mrb[0].mxu0
    %4868 = vmatprep.mubr.f32.mxu0 %v4164
    %4869 = vmatmul.mubr.f32.gmra.mrb[0].mxu0 %v4162
    %v4870 = vpop.f32.mrb[0].mxu0
    %v4871 = vadd.f32 %v4646, %v4870
    %v4872 = vpop.f32.mrb[0].mxu0
    %4873 = vmatprep.mubr.f32.mxu0 %v4165
    %4874 = vmatmul.mubr.f32.gmra.mrb[0].mxu0 %v4163
    %v4875 = vpop.f32.mrb[0].mxu0
    %v4876 = vadd.f32 %v4651, %v4875
    %v4877 = vpop.f32.mrb[0].mxu0
    %4878 = vmatprep.mubr.f32.mxu0 %v4166
    %4879 = vmatmul.mubr.f32.gmra.mrb[0].mxu0 %v4164
    %v4880 = vpop.f32.mrb[0].mxu0
    %v4881 = vadd.f32 %v4656, %v4880
    %v4882 = vpop.f32.mrb[0].mxu0
    %4883 = vmatprep.mubr.f32.mxu0 %v4167
    %4884 = vmatmul.mubr.f32.gmra.mrb[0].mxu0 %v4165
    %v4885 = vpop.f32.mrb[0].mxu0
    %v4886 = vadd.f32 %v4661, %v4885
    %v4887 = vpop.f32.mrb[0].mxu0
    %4888 = vmatprep.mubr.f32.mxu0 %v4168
    %4889 = vmatmul.mubr.f32.gmra.mrb[0].mxu0 %v4166
    %v4890 = vpop.f32.mrb[0].mxu0
    %v4891 = vadd.f32 %v4666, %v4890
    %v4892 = vpop.f32.mrb[0].mxu0
    %4893 = vmatprep.mubr.f32.mxu0 %v4169
    %4894 = vmatmul.mubr.f32.gmra.mrb[0].mxu0 %v4167
    %v4895 = vpop.f32.mrb[0].mxu0
    %v4896 = vadd.f32 %v4671, %v4895
    %v4897 = vpop.f32.mrb[0].mxu0
    %4898 = vmatprep.mubr.f32.mxu0 %v4170
    %4899 = vmatmul.mubr.f32.gmra.mrb[0].mxu0 %v4168
    %v4900 = vpop.f32.mrb[0].mxu0
    %v4901 = vadd.f32 %v4676, %v4900
    %v4902 = vpop.f32.mrb[0].mxu0
    %4903 = vmatprep.mubr.f32.mxu0 %v4171
    %4904 = vmatmul.mubr.f32.gmra.mrb[0].mxu0 %v4169
    %v4905 = vpop.f32.mrb[0].mxu0
    %v4906 = vadd.f32 %v4681, %v4905
    %v4907 = vpop.f32.mrb[0].mxu0
    %4908 = vmatprep.mubr.f32.mxu0 %v4172
    %4909 = vmatmul.mubr.f32.gmra.mrb[0].mxu0 %v4170
    %v4910 = vpop.f32.mrb[0].mxu0
    %v4911 = vadd.f32 %v4686, %v4910
    %v4912 = vpop.f32.mrb[0].mxu0
    %4913 = vmatprep.mubr.f32.mxu0 %v4173
    %4914 = vmatmul.mubr.f32.gmra.mrb[0].mxu0 %v4171
    %v4915 = vpop.f32.mrb[0].mxu0
    %v4916 = vadd.f32 %v4691, %v4915
    %v4917 = vpop.f32.mrb[0].mxu0
    %4918 = vmatprep.mubr.f32.mxu0 %v4174
    %4919 = vmatmul.mubr.f32.gmra.mrb[0].mxu0 %v4172
    %v4920 = vpop.f32.mrb[0].mxu0
    %v4921 = vadd.f32 %v4696, %v4920
    %v4922 = vpop.f32.mrb[0].mxu0
    %4923 = vmatprep.mubr.f32.mxu0 %v4175
    %4924 = vmatmul.mubr.f32.gmra.mrb[0].mxu0 %v4173
    %v4925 = vpop.f32.mrb[0].mxu0
    %v4926 = vadd.f32 %v4701, %v4925
    %v4927 = vpop.f32.mrb[0].mxu0
    %4928 = vmatprep.mubr.f32.mxu0 %v4176
    %4929 = vmatmul.mubr.f32.gmra.mrb[0].mxu0 %v4174
    %v4930 = vpop.f32.mrb[0].mxu0
    %v4931 = vadd.f32 %v4706, %v4930
    %v4932 = vpop.f32.mrb[0].mxu0
    %4933 = vmatprep.mubr.f32.mxu0 %v4177
    %4934 = vmatmul.mubr.f32.gmra.mrb[0].mxu0 %v4175
    %v4935 = vpop.f32.mrb[0].mxu0
    %v4936 = vadd.f32 %v4711, %v4935
    %v4937 = vpop.f32.mrb[0].mxu0
    %4938 = vmatprep.mubr.f32.mxu0 %v4178
    %4939 = vmatmul.mubr.f32.gmra.mrb[0].mxu0 %v4176
    %v4940 = vpop.f32.mrb[0].mxu0
    %v4941 = vadd.f32 %v4716, %v4940
    %v4942 = vpop.f32.mrb[0].mxu0
    %4943 = vmatprep.mubr.f32.mxu0 %v4179
    %4944 = vmatmul.mubr.f32.gmra.mrb[0].mxu0 %v4177
    %v4945 = vpop.f32.mrb[0].mxu0
    %v4946 = vadd.f32 %v4721, %v4945
    %v4947 = vpop.f32.mrb[0].mxu0
    %4948 = vmatprep.mubr.f32.mxu0 %v4180
    %4949 = vmatmul.mubr.f32.gmra.mrb[0].mxu0 %v4178
    %v4950 = vpop.f32.mrb[0].mxu0
    %v4951 = vadd.f32 %v4726, %v4950
    %v4952 = vpop.f32.mrb[0].mxu0
    %4953 = vmatprep.mubr.f32.mxu0 %v4181
    %4954 = vmatmul.mubr.f32.gmra.mrb[0].mxu0 %v4179
    %v4955 = vpop.f32.mrb[0].mxu0
    %v4956 = vadd.f32 %v4731, %v4955
    %v4957 = vpop.f32.mrb[0].mxu0
    %4958 = vmatprep.mubr.f32.mxu0 %v4182
    %4959 = vmatmul.mubr.f32.gmra.mrb[0].mxu0 %v4180
    %v4960 = vpop.f32.mrb[0].mxu0
    %v4961 = vadd.f32 %v4736, %v4960
    %v4962 = vpop.f32.mrb[0].mxu0
    %4963 = vmatprep.mubr.f32.mxu0 %v4183
    %4964 = vmatmul.mubr.f32.gmra.mrb[0].mxu0 %v4181
    %v4965 = vpop.f32.mrb[0].mxu0
    %v4966 = vadd.f32 %v4741, %v4965
    %v4967 = vpop.f32.mrb[0].mxu0
    %4968 = vmatprep.mubr.f32.mxu0 %v4184
    %4969 = vmatmul.mubr.f32.gmra.mrb[0].mxu0 %v4182
    %v4970 = vpop.f32.mrb[0].mxu0
    %v4971 = vadd.f32 %v4746, %v4970
    %v4972 = vpop.f32.mrb[0].mxu0
    %4973 = vmatprep.mubr.f32.mxu0 %v4185
    %4974 = vmatmul.mubr.f32.gmra.mrb[0].mxu0 %v4183
    %v4975 = vpop.f32.mrb[0].mxu0
    %v4976 = vadd.f32 %v4751, %v4975
    %v4977 = vpop.f32.mrb[0].mxu0
    %4978 = vmatprep.mubr.f32.mxu0 %v4186
    %4979 = vmatmul.mubr.f32.gmra.mrb[0].mxu0 %v4184
    %v4980 = vpop.f32.mrb[0].mxu0
    %v4981 = vadd.f32 %v4756, %v4980
    %v4982 = vpop.f32.mrb[0].mxu0
    %4983 = vmatprep.mubr.f32.mxu0 %v4187
    %4984 = vmatmul.mubr.f32.gmra.mrb[0].mxu0 %v4185
    %v4985 = vpop.f32.mrb[0].mxu0
    %v4986 = vadd.f32 %v4761, %v4985
    %v4987 = vpop.f32.mrb[0].mxu0
    %4988 = vmatprep.mubr.f32.mxu0 %v4188
    %4989 = vmatmul.mubr.f32.gmra.mrb[0].mxu0 %v4186
    %v4990 = vpop.f32.mrb[0].mxu0
    %v4991 = vadd.f32 %v4766, %v4990
    %v4992 = vpop.f32.mrb[0].mxu0
    %4993 = vmatprep.mubr.f32.mxu0 %v4189
    %4994 = vmatmul.mubr.f32.gmra.mrb[0].mxu0 %v4187
    %v4995 = vpop.f32.mrb[0].mxu0
    %v4996 = vadd.f32 %v4771, %v4995
    %v4997 = vpop.f32.mrb[0].mxu0
    %4998 = vdwg.mxu0
    %4999 = vmatprep.subr.mxu0 0.0
    %5000 = vmatpush1.msra.mxu0 %v4224
    %5001 = vmatprep.subr.mxu0 0.0
    %5002 = vmatpush1.msra.mxu0 %v4225
    %5003 = vmatprep.subr.mxu0 0.0
    %5004 = vmatpush1.msra.mxu0 %v4226
    %5005 = vmatprep.subr.mxu0 0.0
    %5006 = vmatpush1.msra.mxu0 %v4227
    %5007 = vmatprep.subr.mxu0 0.0
    %5008 = vmatpush1.msra.mxu0 %v4228
    %5009 = vmatprep.subr.mxu0 0.0
    %5010 = vmatpush1.msra.mxu0 %v4229
    %5011 = vmatprep.subr.mxu0 0.0
    %5012 = vmatpush1.msra.mxu0 %v4230
    %5013 = vmatprep.subr.mxu0 0.0
    %5014 = vmatpush1.msra.mxu0 %v4231
    %5015 = vmatprep.subr.mxu0 0.0
    %5016 = vmatpush1.msra.mxu0 %v4232
    %5017 = vmatprep.subr.mxu0 0.0
    %5018 = vmatpush1.msra.mxu0 %v4233
    %5019 = vmatprep.subr.mxu0 0.0
    %5020 = vmatpush1.msra.mxu0 %v4234
    %5021 = vmatprep.subr.mxu0 0.0
    %5022 = vmatpush1.msra.mxu0 %v4235
    %5023 = vmatprep.subr.mxu0 0.0
    %5024 = vmatpush1.msra.mxu0 %v4236
    %5025 = vmatprep.subr.mxu0 0.0
    %5026 = vmatpush1.msra.mxu0 %v4237
    %5027 = vmatprep.subr.mxu0 0.0
    %5028 = vmatpush1.msra.mxu0 %v4238
    %5029 = vmatprep.subr.mxu0 0.0
    %5030 = vmatpush1.msra.mxu0 %v4239
    %5031 = vmatprep.subr.mxu0 0.0
    %5032 = vmatpush1.msra.mxu0 0.0
    %5033 = vmatprep.subr.mxu0 0.0
    %5034 = vmatpush1.msra.mxu0 0.0
    %5035 = vmatprep.subr.mxu0 0.0
    %5036 = vmatpush1.msra.mxu0 0.0
    %5037 = vmatprep.subr.mxu0 0.0
    %5038 = vmatpush1.msra.mxu0 0.0
    %5039 = vmatprep.subr.mxu0 0.0
    %5040 = vmatpush1.msra.mxu0 0.0
    %5041 = vmatprep.subr.mxu0 0.0
    %5042 = vmatpush1.msra.mxu0 0.0
    %5043 = vmatprep.subr.mxu0 0.0
    %5044 = vmatpush1.msra.mxu0 0.0
    %5045 = vmatprep.subr.mxu0 0.0
    %5046 = vmatpush1.msra.mxu0 0.0
    %5047 = vmatprep.subr.mxu0 0.0
    %5048 = vmatpush1.msra.mxu0 0.0
    %5049 = vmatprep.subr.mxu0 0.0
    %5050 = vmatpush1.msra.mxu0 0.0
    %5051 = vmatprep.subr.mxu0 0.0
    %5052 = vmatpush1.msra.mxu0 0.0
    %5053 = vmatprep.subr.mxu0 0.0
    %5054 = vmatpush1.msra.mxu0 0.0
    %5055 = vmatprep.subr.mxu0 0.0
    %5056 = vmatpush1.msra.mxu0 0.0
    %5057 = vmatprep.subr.mxu0 0.0
    %5058 = vmatpush1.msra.mxu0 0.0
    %5059 = vmatprep.subr.mxu0 0.0
    %5060 = vmatpush1.msra.mxu0 0.0
    %5061 = vmatprep.subr.mxu0 0.0
    %5062 = vmatpush1.msra.mxu0 0.0
    %5063 = vmatprep.mubr.f32.mxu0 0.0
    %5064 = vmatmul.mubr.f32.gmra.mrb[0].mxu0 %v4160
    %v5065 = vpop.f32.mrb[0].mxu0
    %v5066 = vadd.f32 %v4841, %v5065
    %v5067 = vpop.f32.mrb[0].mxu0
    %5068 = vmatprep.mubr.f32.mxu0 0.0
    %5069 = vmatmul.mubr.f32.gmra.mrb[0].mxu0 %v4161
    %v5070 = vpop.f32.mrb[0].mxu0
    %v5071 = vadd.f32 %v4846, %v5070
    %v5072 = vpop.f32.mrb[0].mxu0
    %5073 = vmatprep.mubr.f32.mxu0 0.0
    %5074 = vmatmul.mubr.f32.gmra.mrb[0].mxu0 %v4162
    %v5075 = vpop.f32.mrb[0].mxu0
    %v5076 = vadd.f32 %v4851, %v5075
    %v5077 = vpop.f32.mrb[0].mxu0
    %5078 = vmatprep.mubr.f32.mxu0 0.0
    %5079 = vmatmul.mubr.f32.gmra.mrb[0].mxu0 %v4163
    %v5080 = vpop.f32.mrb[0].mxu0
    %v5081 = vadd.f32 %v4856, %v5080
    %v5082 = vpop.f32.mrb[0].mxu0
    %5083 = vmatprep.mubr.f32.mxu0 0.0
    %5084 = vmatmul.mubr.f32.gmra.mrb[0].mxu0 %v4164
    %v5085 = vpop.f32.mrb[0].mxu0
    %v5086 = vadd.f32 %v4861, %v5085
    %v5087 = vpop.f32.mrb[0].mxu0
    %5088 = vmatprep.mubr.f32.mxu0 0.0
    %5089 = vmatmul.mubr.f32.gmra.mrb[0].mxu0 %v4165
    %v5090 = vpop.f32.mrb[0].mxu0
    %v5091 = vadd.f32 %v4866, %v5090
    %v5092 = vpop.f32.mrb[0].mxu0
    %5093 = vmatprep.mubr.f32.mxu0 0.0
    %5094 = vmatmul.mubr.f32.gmra.mrb[0].mxu0 %v4166
    %v5095 = vpop.f32.mrb[0].mxu0
    %v5096 = vadd.f32 %v4871, %v5095
    %v5097 = vpop.f32.mrb[0].mxu0
    %5098 = vmatprep.mubr.f32.mxu0 0.0
    %5099 = vmatmul.mubr.f32.gmra.mrb[0].mxu0 %v4167
    %v5100 = vpop.f32.mrb[0].mxu0
    %v5101 = vadd.f32 %v4876, %v5100
    %v5102 = vpop.f32.mrb[0].mxu0
    %5103 = vmatprep.mubr.f32.mxu0 0.0
    %5104 = vmatmul.mubr.f32.gmra.mrb[0].mxu0 %v4168
    %v5105 = vpop.f32.mrb[0].mxu0
    %v5106 = vadd.f32 %v4881, %v5105
    %v5107 = vpop.f32.mrb[0].mxu0
    %5108 = vmatprep.mubr.f32.mxu0 0.0
    %5109 = vmatmul.mubr.f32.gmra.mrb[0].mxu0 %v4169
    %v5110 = vpop.f32.mrb[0].mxu0
    %v5111 = vadd.f32 %v4886, %v5110
    %v5112 = vpop.f32.mrb[0].mxu0
    %5113 = vmatprep.mubr.f32.mxu0 0.0
    %5114 = vmatmul.mubr.f32.gmra.mrb[0].mxu0 %v4170
    %v5115 = vpop.f32.mrb[0].mxu0
    %v5116 = vadd.f32 %v4891, %v5115
    %v5117 = vpop.f32.mrb[0].mxu0
    %5118 = vmatprep.mubr.f32.mxu0 0.0
    %5119 = vmatmul.mubr.f32.gmra.mrb[0].mxu0 %v4171
    %v5120 = vpop.f32.mrb[0].mxu0
    %v5121 = vadd.f32 %v4896, %v5120
    %v5122 = vpop.f32.mrb[0].mxu0
    %5123 = vmatprep.mubr.f32.mxu0 0.0
    %5124 = vmatmul.mubr.f32.gmra.mrb[0].mxu0 %v4172
    %v5125 = vpop.f32.mrb[0].mxu0
    %v5126 = vadd.f32 %v4901, %v5125
    %v5127 = vpop.f32.mrb[0].mxu0
    %5128 = vmatprep.mubr.f32.mxu0 0.0
    %5129 = vmatmul.mubr.f32.gmra.mrb[0].mxu0 %v4173
    %v5130 = vpop.f32.mrb[0].mxu0
    %v5131 = vadd.f32 %v4906, %v5130
    %v5132 = vpop.f32.mrb[0].mxu0
    %5133 = vmatprep.mubr.f32.mxu0 0.0
    %5134 = vmatmul.mubr.f32.gmra.mrb[0].mxu0 %v4174
    %v5135 = vpop.f32.mrb[0].mxu0
    %v5136 = vadd.f32 %v4911, %v5135
    %v5137 = vpop.f32.mrb[0].mxu0
    %5138 = vmatprep.mubr.f32.mxu0 0.0
    %5139 = vmatmul.mubr.f32.gmra.mrb[0].mxu0 %v4175
    %v5140 = vpop.f32.mrb[0].mxu0
    %v5141 = vadd.f32 %v4916, %v5140
    %v5142 = vpop.f32.mrb[0].mxu0
    %5143 = vmatprep.mubr.f32.mxu0 0.0
    %5144 = vmatmul.mubr.f32.gmra.mrb[0].mxu0 %v4176
    %v5145 = vpop.f32.mrb[0].mxu0
    %v5146 = vadd.f32 %v4921, %v5145
    %v5147 = vpop.f32.mrb[0].mxu0
    %5148 = vmatprep.mubr.f32.mxu0 0.0
    %5149 = vmatmul.mubr.f32.gmra.mrb[0].mxu0 %v4177
    %v5150 = vpop.f32.mrb[0].mxu0
    %v5151 = vadd.f32 %v4926, %v5150
    %v5152 = vpop.f32.mrb[0].mxu0
    %5153 = vmatprep.mubr.f32.mxu0 0.0
    %5154 = vmatmul.mubr.f32.gmra.mrb[0].mxu0 %v4178
    %v5155 = vpop.f32.mrb[0].mxu0
    %v5156 = vadd.f32 %v4931, %v5155
    %v5157 = vpop.f32.mrb[0].mxu0
    %5158 = vmatprep.mubr.f32.mxu0 0.0
    %5159 = vmatmul.mubr.f32.gmra.mrb[0].mxu0 %v4179
    %v5160 = vpop.f32.mrb[0].mxu0
    %v5161 = vadd.f32 %v4936, %v5160
    %v5162 = vpop.f32.mrb[0].mxu0
    %5163 = vmatprep.mubr.f32.mxu0 0.0
    %5164 = vmatmul.mubr.f32.gmra.mrb[0].mxu0 %v4180
    %v5165 = vpop.f32.mrb[0].mxu0
    %v5166 = vadd.f32 %v4941, %v5165
    %v5167 = vpop.f32.mrb[0].mxu0
    %5168 = vmatprep.mubr.f32.mxu0 0.0
    %5169 = vmatmul.mubr.f32.gmra.mrb[0].mxu0 %v4181
    %v5170 = vpop.f32.mrb[0].mxu0
    %v5171 = vadd.f32 %v4946, %v5170
    %v5172 = vpop.f32.mrb[0].mxu0
    %5173 = vmatprep.mubr.f32.mxu0 0.0
    %5174 = vmatmul.mubr.f32.gmra.mrb[0].mxu0 %v4182
    %v5175 = vpop.f32.mrb[0].mxu0
    %v5176 = vadd.f32 %v4951, %v5175
    %v5177 = vpop.f32.mrb[0].mxu0
    %5178 = vmatprep.mubr.f32.mxu0 0.0
    %5179 = vmatmul.mubr.f32.gmra.mrb[0].mxu0 %v4183
    %v5180 = vpop.f32.mrb[0].mxu0
    %v5181 = vadd.f32 %v4956, %v5180
    %v5182 = vpop.f32.mrb[0].mxu0
    %5183 = vmatprep.mubr.f32.mxu0 0.0
    %5184 = vmatmul.mubr.f32.gmra.mrb[0].mxu0 %v4184
    %v5185 = vpop.f32.mrb[0].mxu0
    %v5186 = vadd.f32 %v4961, %v5185
    %v5187 = vpop.f32.mrb[0].mxu0
    %5188 = vmatprep.mubr.f32.mxu0 0.0
    %5189 = vmatmul.mubr.f32.gmra.mrb[0].mxu0 %v4185
    %v5190 = vpop.f32.mrb[0].mxu0
    %v5191 = vadd.f32 %v4966, %v5190
    %v5192 = vpop.f32.mrb[0].mxu0
    %5193 = vmatprep.mubr.f32.mxu0 0.0
    %5194 = vmatmul.mubr.f32.gmra.mrb[0].mxu0 %v4186
    %v5195 = vpop.f32.mrb[0].mxu0
    %v5196 = vadd.f32 %v4971, %v5195
    %v5197 = vpop.f32.mrb[0].mxu0
    %5198 = vmatprep.mubr.f32.mxu0 0.0
    %5199 = vmatmul.mubr.f32.gmra.mrb[0].mxu0 %v4187
    %v5200 = vpop.f32.mrb[0].mxu0
    %v5201 = vadd.f32 %v4976, %v5200
    %v5202 = vpop.f32.mrb[0].mxu0
    %5203 = vmatprep.mubr.f32.mxu0 0.0
    %5204 = vmatmul.mubr.f32.gmra.mrb[0].mxu0 %v4188
    %v5205 = vpop.f32.mrb[0].mxu0
    %v5206 = vadd.f32 %v4981, %v5205
    %v5207 = vpop.f32.mrb[0].mxu0
    %5208 = vmatprep.mubr.f32.mxu0 0.0
    %5209 = vmatmul.mubr.f32.gmra.mrb[0].mxu0 %v4189
    %v5210 = vpop.f32.mrb[0].mxu0
    %v5211 = vadd.f32 %v4986, %v5210
    %v5212 = vpop.f32.mrb[0].mxu0
    %5213 = vmatprep.mubr.f32.mxu0 0.0
    %5214 = vmatmul.mubr.f32.gmra.mrb[0].mxu0 %v4190
    %v5215 = vpop.f32.mrb[0].mxu0
    %v5216 = vadd.f32 %v4991, %v5215
    %v5217 = vpop.f32.mrb[0].mxu0
    %5218 = vmatprep.mubr.f32.mxu0 0.0
    %5219 = vmatmul.mubr.f32.gmra.mrb[0].mxu0 %v4191
    %v5220 = vpop.f32.mrb[0].mxu0
    %v5221 = vadd.f32 %v4996, %v5220
    %v5222 = vpop.f32.mrb[0].mxu0
    %5223 = vdwg.mxu0
    %v5224 = vld [vmem:[#allocation2 + $0x2] sm:$0xff]
    %v5225 = vld [vmem:[#allocation2 + $0xa] sm:$0xff]
    %v5226 = vld [vmem:[#allocation2 + $0x1a] sm:$0xff]
    %v5227 = vld [vmem:[#allocation2 + $0x22] sm:$0xff]
    %v5228 = vld [vmem:[#allocation2 + $0x32] sm:$0xff]
    %v5229 = vld [vmem:[#allocation2 + $0x3a] sm:$0xff]
    %v5230 = vld [vmem:[#allocation2 + $0x4a] sm:$0xff]
    %v5231 = vld [vmem:[#allocation2 + $0x52] sm:$0xff]
    %v5232 = vld [vmem:[#allocation2 + $0x62] sm:$0xff]
    %v5233 = vld [vmem:[#allocation2 + $0x6a] sm:$0xff]
    %v5234 = vld [vmem:[#allocation2 + $0x7a] sm:$0xff]
    %v5235 = vld [vmem:[#allocation2 + $0x82] sm:$0xff]
    %v5236 = vld [vmem:[#allocation2 + $0x92] sm:$0xff]
    %v5237 = vld [vmem:[#allocation2 + $0x9a] sm:$0xff]
    %v5238 = vld [vmem:[#allocation2 + $0xaa] sm:$0xff]
    %v5239 = vld [vmem:[#allocation2 + $0xb2] sm:$0xff]
    %v5240 = vld [vmem:[#allocation2 + $0xc2] sm:$0xff]
    %v5241 = vld [vmem:[#allocation2 + $0xca] sm:$0xff]
    %v5242 = vld [vmem:[#allocation2 + $0xda] sm:$0xff]
    %v5243 = vld [vmem:[#allocation2 + $0xe2] sm:$0xff]
    %v5244 = vld [vmem:[#allocation2 + $0xf2] sm:$0xff]
    %v5245 = vld [vmem:[#allocation2 + $0xfa] sm:$0xff]
    %v5246 = vld [vmem:[#allocation2 + $0x10a] sm:$0xff]
    %v5247 = vld [vmem:[#allocation2 + $0x112] sm:$0xff]
    %v5248 = vld [vmem:[#allocation2 + $0x122] sm:$0xff]
    %v5249 = vld [vmem:[#allocation2 + $0x12a] sm:$0xff]
    %v5250 = vld [vmem:[#allocation2 + $0x13a] sm:$0xff]
    %v5251 = vld [vmem:[#allocation2 + $0x142] sm:$0xff]
    %v5252 = vld [vmem:[#allocation2 + $0x152] sm:$0xff]
    %v5253 = vld [vmem:[#allocation2 + $0x15a] sm:$0xff]
    %v5254 = vld [vmem:[#allocation2 + $0x16a] sm:$0xff]
    %v5255 = vld [vmem:[#allocation2 + $0x172] sm:$0xff]
    %v5256 = vld [vmem:[#allocation2 + $0x182] sm:$0xff]
    %v5257 = vld [vmem:[#allocation2 + $0x18a] sm:$0xff]
    %v5258 = vld [vmem:[#allocation2 + $0x19a] sm:$0xff]
    %v5259 = vld [vmem:[#allocation2 + $0x1a2] sm:$0xff]
    %v5260 = vld [vmem:[%s1262] sm:$0xff]
    %v5261 = vld [vmem:[%s1262 + $0x8] sm:$0xff]
    %v5262 = vld [vmem:[%s1262 + $0x10] sm:$0xff]
    %v5263 = vld [vmem:[%s1262 + $0x18] sm:$0xff]
    %v5264 = vld [vmem:[%s1262 + $0x20] sm:$0xff]
    %v5265 = vld [vmem:[%s1262 + $0x28] sm:$0xff]
    %v5266 = vld [vmem:[%s1262 + $0x30] sm:$0xff]
    %v5267 = vld [vmem:[%s1262 + $0x38] sm:$0xff]
    %v5268 = vld [vmem:[%s1262 + $0x40] sm:$0xff]
    %v5269 = vld [vmem:[%s1262 + $0x48] sm:$0xff]
    %v5270 = vld [vmem:[%s1262 + $0x50] sm:$0xff]
    %v5271 = vld [vmem:[%s1262 + $0x58] sm:$0xff]
    %v5272 = vld [vmem:[%s1262 + $0x60] sm:$0xff]
    %v5273 = vld [vmem:[%s1262 + $0x68] sm:$0xff]
    %v5274 = vld [vmem:[%s1262 + $0x70] sm:$0xff]
    %v5275 = vld [vmem:[%s1262 + $0x78] sm:$0xff]
    %v5276 = vld [vmem:[%s1262 + $0x80] sm:$0xff]
    %v5277 = vld [vmem:[%s1262 + $0x88] sm:$0xff]
    %v5278 = vld [vmem:[%s1262 + $0x90] sm:$0xff]
    %v5279 = vld [vmem:[%s1262 + $0x98] sm:$0xff]
    %v5280 = vld [vmem:[%s1262 + $0xa0] sm:$0xff]
    %v5281 = vld [vmem:[%s1262 + $0xa8] sm:$0xff]
    %v5282 = vld [vmem:[%s1262 + $0xb0] sm:$0xff]
    %v5283 = vld [vmem:[%s1262 + $0xb8] sm:$0xff]
    %v5284 = vld [vmem:[%s1262 + $0xc0] sm:$0xff]
    %v5285 = vld [vmem:[%s1262 + $0xc8] sm:$0xff]
    %v5286 = vld [vmem:[%s1262 + $0xd0] sm:$0xff]
    %v5287 = vld [vmem:[%s1262 + $0xd8] sm:$0xff]
    %v5288 = vld [vmem:[%s1262 + $0xe0] sm:$0xff]
    %v5289 = vld [vmem:[%s1262 + $0xe8] sm:$0xff]
    %v5290 = vld [vmem:[%s1262 + $0xf0] sm:$0xff]
    %v5291 = vld [vmem:[%s1262 + $0xf8] sm:$0xff]
    %v5292 = vld [vmem:[%s1262 + $0x100] sm:$0xff]
    %v5293 = vld [vmem:[%s1262 + $0x108] sm:$0xff]
    %v5294 = vld [vmem:[%s1262 + $0x110] sm:$0xff]
    %v5295 = vld [vmem:[%s1262 + $0x118] sm:$0xff]
    %v5296 = vld [vmem:[%s1262 + $0x120] sm:$0xff]
    %v5297 = vld [vmem:[%s1262 + $0x128] sm:$0xff]
    %v5298 = vld [vmem:[%s1262 + $0x130] sm:$0xff]
    %v5299 = vld [vmem:[%s1262 + $0x138] sm:$0xff]
    %v5300 = vld [vmem:[%s1262 + $0x140] sm:$0xff]
    %v5301 = vld [vmem:[%s1262 + $0x148] sm:$0xff]
    %v5302 = vld [vmem:[%s1262 + $0x150] sm:$0xff]
    %v5303 = vld [vmem:[%s1262 + $0x158] sm:$0xff]
    %v5304 = vld [vmem:[%s1262 + $0x160] sm:$0xff]
    %v5305 = vld [vmem:[%s1262 + $0x168] sm:$0xff]
    %v5306 = vld [vmem:[%s1262 + $0x170] sm:$0xff]
    %v5307 = vld [vmem:[%s1262 + $0x178] sm:$0xff]
    %5308 = vmatprep.subr.mxu0 0.0
    %5309 = vmatpush1.msra.mxu0 %v5260
    %5310 = vmatprep.subr.mxu0 0.0
    %5311 = vmatpush1.msra.mxu0 %v5261
    %5312 = vmatprep.subr.mxu0 0.0
    %5313 = vmatpush1.msra.mxu0 %v5262
    %5314 = vmatprep.subr.mxu0 0.0
    %5315 = vmatpush1.msra.mxu0 %v5263
    %5316 = vmatprep.subr.mxu0 0.0
    %5317 = vmatpush1.msra.mxu0 %v5264
    %5318 = vmatprep.subr.mxu0 0.0
    %5319 = vmatpush1.msra.mxu0 %v5265
    %5320 = vmatprep.subr.mxu0 0.0
    %5321 = vmatpush1.msra.mxu0 %v5266
    %5322 = vmatprep.subr.mxu0 0.0
    %5323 = vmatpush1.msra.mxu0 %v5267
    %5324 = vmatprep.subr.mxu0 0.0
    %5325 = vmatpush1.msra.mxu0 %v5268
    %5326 = vmatprep.subr.mxu0 0.0
    %5327 = vmatpush1.msra.mxu0 %v5269
    %5328 = vmatprep.subr.mxu0 0.0
    %5329 = vmatpush1.msra.mxu0 %v5270
    %5330 = vmatprep.subr.mxu0 0.0
    %5331 = vmatpush1.msra.mxu0 %v5271
    %5332 = vmatprep.subr.mxu0 0.0
    %5333 = vmatpush1.msra.mxu0 %v5272
    %5334 = vmatprep.subr.mxu0 0.0
    %5335 = vmatpush1.msra.mxu0 %v5273
    %5336 = vmatprep.subr.mxu0 0.0
    %5337 = vmatpush1.msra.mxu0 %v5274
    %5338 = vmatprep.subr.mxu0 0.0
    %5339 = vmatpush1.msra.mxu0 %v5275
    %5340 = vmatprep.subr.mxu0 0.0
    %5341 = vmatpush1.msra.mxu0 %v5276
    %5342 = vmatprep.subr.mxu0 0.0
    %5343 = vmatpush1.msra.mxu0 %v5277
    %5344 = vmatprep.subr.mxu0 0.0
    %5345 = vmatpush1.msra.mxu0 %v5278
    %5346 = vmatprep.subr.mxu0 0.0
    %5347 = vmatpush1.msra.mxu0 %v5279
    %5348 = vmatprep.subr.mxu0 0.0
    %5349 = vmatpush1.msra.mxu0 %v5280
    %5350 = vmatprep.subr.mxu0 0.0
    %5351 = vmatpush1.msra.mxu0 %v5281
    %5352 = vmatprep.subr.mxu0 0.0
    %5353 = vmatpush1.msra.mxu0 %v5282
    %5354 = vmatprep.subr.mxu0 0.0
    %5355 = vmatpush1.msra.mxu0 %v5283
    %5356 = vmatprep.subr.mxu0 0.0
    %5357 = vmatpush1.msra.mxu0 %v5284
    %5358 = vmatprep.subr.mxu0 0.0
    %5359 = vmatpush1.msra.mxu0 %v5285
    %5360 = vmatprep.subr.mxu0 0.0
    %5361 = vmatpush1.msra.mxu0 %v5286
    %5362 = vmatprep.subr.mxu0 0.0
    %5363 = vmatpush1.msra.mxu0 %v5287
    %5364 = vmatprep.subr.mxu0 0.0
    %5365 = vmatpush1.msra.mxu0 %v5288
    %5366 = vmatprep.subr.mxu0 0.0
    %5367 = vmatpush1.msra.mxu0 %v5289
    %5368 = vmatprep.subr.mxu0 0.0
    %5369 = vmatpush1.msra.mxu0 %v5290
    %5370 = vmatprep.subr.mxu0 0.0
    %5371 = vmatpush1.msra.mxu0 %v5291
    %5372 = vmatprep.mubr.f32.mxu0 %v5226
    %5373 = vmatmul.mubr.f32.gmra.mrb[0].mxu0 %v5224
    %v5374 = vpop.f32.mrb[0].mxu0
    %v5375 = vadd.f32 0.0, %v5374
    %v5376 = vpop.f32.mrb[0].mxu0
    %5377 = vmatprep.mubr.f32.mxu0 %v5227
    %5378 = vmatmul.mubr.f32.gmra.mrb[0].mxu0 %v5225
    %v5379 = vpop.f32.mrb[0].mxu0
    %v5380 = vadd.f32 0.0, %v5379
    %v5381 = vpop.f32.mrb[0].mxu0
    %5382 = vmatprep.mubr.f32.mxu0 %v5228
    %5383 = vmatmul.mubr.f32.gmra.mrb[0].mxu0 %v5226
    %v5384 = vpop.f32.mrb[0].mxu0
    %v5385 = vadd.f32 0.0, %v5384
    %v5386 = vpop.f32.mrb[0].mxu0
    %5387 = vmatprep.mubr.f32.mxu0 %v5229
    %5388 = vmatmul.mubr.f32.gmra.mrb[0].mxu0 %v5227
    %v5389 = vpop.f32.mrb[0].mxu0
    %v5390 = vadd.f32 0.0, %v5389
    %v5391 = vpop.f32.mrb[0].mxu0
    %5392 = vmatprep.mubr.f32.mxu0 %v5230
    %5393 = vmatmul.mubr.f32.gmra.mrb[0].mxu0 %v5228
    %v5394 = vpop.f32.mrb[0].mxu0
    %v5395 = vadd.f32 0.0, %v5394
    %v5396 = vpop.f32.mrb[0].mxu0
    %5397 = vmatprep.mubr.f32.mxu0 %v5231
    %5398 = vmatmul.mubr.f32.gmra.mrb[0].mxu0 %v5229
    %v5399 = vpop.f32.mrb[0].mxu0
    %v5400 = vadd.f32 0.0, %v5399
    %v5401 = vpop.f32.mrb[0].mxu0
    %5402 = vmatprep.mubr.f32.mxu0 %v5232
    %5403 = vmatmul.mubr.f32.gmra.mrb[0].mxu0 %v5230
    %v5404 = vpop.f32.mrb[0].mxu0
    %v5405 = vadd.f32 0.0, %v5404
    %v5406 = vpop.f32.mrb[0].mxu0
    %5407 = vmatprep.mubr.f32.mxu0 %v5233
    %5408 = vmatmul.mubr.f32.gmra.mrb[0].mxu0 %v5231
    %v5409 = vpop.f32.mrb[0].mxu0
    %v5410 = vadd.f32 0.0, %v5409
    %v5411 = vpop.f32.mrb[0].mxu0
    %5412 = vmatprep.mubr.f32.mxu0 %v5234
    %5413 = vmatmul.mubr.f32.gmra.mrb[0].mxu0 %v5232
    %v5414 = vpop.f32.mrb[0].mxu0
    %v5415 = vadd.f32 0.0, %v5414
    %v5416 = vpop.f32.mrb[0].mxu0
    %5417 = vmatprep.mubr.f32.mxu0 %v5235
    %5418 = vmatmul.mubr.f32.gmra.mrb[0].mxu0 %v5233
    %v5419 = vpop.f32.mrb[0].mxu0
    %v5420 = vadd.f32 0.0, %v5419
    %v5421 = vpop.f32.mrb[0].mxu0
    %5422 = vmatprep.mubr.f32.mxu0 %v5236
    %5423 = vmatmul.mubr.f32.gmra.mrb[0].mxu0 %v5234
    %v5424 = vpop.f32.mrb[0].mxu0
    %v5425 = vadd.f32 0.0, %v5424
    %v5426 = vpop.f32.mrb[0].mxu0
    %5427 = vmatprep.mubr.f32.mxu0 %v5237
    %5428 = vmatmul.mubr.f32.gmra.mrb[0].mxu0 %v5235
    %v5429 = vpop.f32.mrb[0].mxu0
    %v5430 = vadd.f32 0.0, %v5429
    %v5431 = vpop.f32.mrb[0].mxu0
    %5432 = vmatprep.mubr.f32.mxu0 %v5238
    %5433 = vmatmul.mubr.f32.gmra.mrb[0].mxu0 %v5236
    %v5434 = vpop.f32.mrb[0].mxu0
    %v5435 = vadd.f32 0.0, %v5434
    %v5436 = vpop.f32.mrb[0].mxu0
    %5437 = vmatprep.mubr.f32.mxu0 %v5239
    %5438 = vmatmul.mubr.f32.gmra.mrb[0].mxu0 %v5237
    %v5439 = vpop.f32.mrb[0].mxu0
    %v5440 = vadd.f32 0.0, %v5439
    %v5441 = vpop.f32.mrb[0].mxu0
    %5442 = vmatprep.mubr.f32.mxu0 %v5240
    %5443 = vmatmul.mubr.f32.gmra.mrb[0].mxu0 %v5238
    %v5444 = vpop.f32.mrb[0].mxu0
    %v5445 = vadd.f32 0.0, %v5444
    %v5446 = vpop.f32.mrb[0].mxu0
    %5447 = vmatprep.mubr.f32.mxu0 %v5241
    %5448 = vmatmul.mubr.f32.gmra.mrb[0].mxu0 %v5239
    %v5449 = vpop.f32.mrb[0].mxu0
    %v5450 = vadd.f32 0.0, %v5449
    %v5451 = vpop.f32.mrb[0].mxu0
    %5452 = vmatprep.mubr.f32.mxu0 %v5242
    %5453 = vmatmul.mubr.f32.gmra.mrb[0].mxu0 %v5240
    %v5454 = vpop.f32.mrb[0].mxu0
    %v5455 = vadd.f32 0.0, %v5454
    %v5456 = vpop.f32.mrb[0].mxu0
    %5457 = vmatprep.mubr.f32.mxu0 %v5243
    %5458 = vmatmul.mubr.f32.gmra.mrb[0].mxu0 %v5241
    %v5459 = vpop.f32.mrb[0].mxu0
    %v5460 = vadd.f32 0.0, %v5459
    %v5461 = vpop.f32.mrb[0].mxu0
    %5462 = vmatprep.mubr.f32.mxu0 %v5244
    %5463 = vmatmul.mubr.f32.gmra.mrb[0].mxu0 %v5242
    %v5464 = vpop.f32.mrb[0].mxu0
    %v5465 = vadd.f32 0.0, %v5464
    %v5466 = vpop.f32.mrb[0].mxu0
    %5467 = vmatprep.mubr.f32.mxu0 %v5245
    %5468 = vmatmul.mubr.f32.gmra.mrb[0].mxu0 %v5243
    %v5469 = vpop.f32.mrb[0].mxu0
    %v5470 = vadd.f32 0.0, %v5469
    %v5471 = vpop.f32.mrb[0].mxu0
    %5472 = vmatprep.mubr.f32.mxu0 %v5246
    %5473 = vmatmul.mubr.f32.gmra.mrb[0].mxu0 %v5244
    %v5474 = vpop.f32.mrb[0].mxu0
    %v5475 = vadd.f32 0.0, %v5474
    %v5476 = vpop.f32.mrb[0].mxu0
    %5477 = vmatprep.mubr.f32.mxu0 %v5247
    %5478 = vmatmul.mubr.f32.gmra.mrb[0].mxu0 %v5245
    %v5479 = vpop.f32.mrb[0].mxu0
    %v5480 = vadd.f32 0.0, %v5479
    %v5481 = vpop.f32.mrb[0].mxu0
    %5482 = vmatprep.mubr.f32.mxu0 %v5248
    %5483 = vmatmul.mubr.f32.gmra.mrb[0].mxu0 %v5246
    %v5484 = vpop.f32.mrb[0].mxu0
    %v5485 = vadd.f32 0.0, %v5484
    %v5486 = vpop.f32.mrb[0].mxu0
    %5487 = vmatprep.mubr.f32.mxu0 %v5249
    %5488 = vmatmul.mubr.f32.gmra.mrb[0].mxu0 %v5247
    %v5489 = vpop.f32.mrb[0].mxu0
    %v5490 = vadd.f32 0.0, %v5489
    %v5491 = vpop.f32.mrb[0].mxu0
    %5492 = vmatprep.mubr.f32.mxu0 %v5250
    %5493 = vmatmul.mubr.f32.gmra.mrb[0].mxu0 %v5248
    %v5494 = vpop.f32.mrb[0].mxu0
    %v5495 = vadd.f32 0.0, %v5494
    %v5496 = vpop.f32.mrb[0].mxu0
    %5497 = vmatprep.mubr.f32.mxu0 %v5251
    %5498 = vmatmul.mubr.f32.gmra.mrb[0].mxu0 %v5249
    %v5499 = vpop.f32.mrb[0].mxu0
    %v5500 = vadd.f32 0.0, %v5499
    %v5501 = vpop.f32.mrb[0].mxu0
    %5502 = vmatprep.mubr.f32.mxu0 %v5252
    %5503 = vmatmul.mubr.f32.gmra.mrb[0].mxu0 %v5250
    %v5504 = vpop.f32.mrb[0].mxu0
    %v5505 = vadd.f32 0.0, %v5504
    %v5506 = vpop.f32.mrb[0].mxu0
    %5507 = vmatprep.mubr.f32.mxu0 %v5253
    %5508 = vmatmul.mubr.f32.gmra.mrb[0].mxu0 %v5251
    %v5509 = vpop.f32.mrb[0].mxu0
    %v5510 = vadd.f32 0.0, %v5509
    %v5511 = vpop.f32.mrb[0].mxu0
    %5512 = vmatprep.mubr.f32.mxu0 %v5254
    %5513 = vmatmul.mubr.f32.gmra.mrb[0].mxu0 %v5252
    %v5514 = vpop.f32.mrb[0].mxu0
    %v5515 = vadd.f32 0.0, %v5514
    %v5516 = vpop.f32.mrb[0].mxu0
    %5517 = vmatprep.mubr.f32.mxu0 %v5255
    %5518 = vmatmul.mubr.f32.gmra.mrb[0].mxu0 %v5253
    %v5519 = vpop.f32.mrb[0].mxu0
    %v5520 = vadd.f32 0.0, %v5519
    %v5521 = vpop.f32.mrb[0].mxu0
    %5522 = vmatprep.mubr.f32.mxu0 %v5256
    %5523 = vmatmul.mubr.f32.gmra.mrb[0].mxu0 %v5254
    %v5524 = vpop.f32.mrb[0].mxu0
    %v5525 = vadd.f32 0.0, %v5524
    %v5526 = vpop.f32.mrb[0].mxu0
    %5527 = vmatprep.mubr.f32.mxu0 %v5257
    %5528 = vmatmul.mubr.f32.gmra.mrb[0].mxu0 %v5255
    %v5529 = vpop.f32.mrb[0].mxu0
    %v5530 = vadd.f32 0.0, %v5529
    %v5531 = vpop.f32.mrb[0].mxu0
    %5532 = vdwg.mxu0
    %5533 = vmatprep.subr.mxu0 0.0
    %5534 = vmatpush1.msra.mxu0 %v5292
    %5535 = vmatprep.subr.mxu0 0.0
    %5536 = vmatpush1.msra.mxu0 %v5293
    %5537 = vmatprep.subr.mxu0 0.0
    %5538 = vmatpush1.msra.mxu0 %v5294
    %5539 = vmatprep.subr.mxu0 0.0
    %5540 = vmatpush1.msra.mxu0 %v5295
    %5541 = vmatprep.subr.mxu0 0.0
    %5542 = vmatpush1.msra.mxu0 %v5296
    %5543 = vmatprep.subr.mxu0 0.0
    %5544 = vmatpush1.msra.mxu0 %v5297
    %5545 = vmatprep.subr.mxu0 0.0
    %5546 = vmatpush1.msra.mxu0 %v5298
    %5547 = vmatprep.subr.mxu0 0.0
    %5548 = vmatpush1.msra.mxu0 %v5299
    %5549 = vmatprep.subr.mxu0 0.0
    %5550 = vmatpush1.msra.mxu0 %v5300
    %5551 = vmatprep.subr.mxu0 0.0
    %5552 = vmatpush1.msra.mxu0 %v5301
    %5553 = vmatprep.subr.mxu0 0.0
    %5554 = vmatpush1.msra.mxu0 %v5302
    %5555 = vmatprep.subr.mxu0 0.0
    %5556 = vmatpush1.msra.mxu0 %v5303
    %5557 = vmatprep.subr.mxu0 0.0
    %5558 = vmatpush1.msra.mxu0 %v5304
    %5559 = vmatprep.subr.mxu0 0.0
    %5560 = vmatpush1.msra.mxu0 %v5305
    %5561 = vmatprep.subr.mxu0 0.0
    %5562 = vmatpush1.msra.mxu0 %v5306
    %5563 = vmatprep.subr.mxu0 0.0
    %5564 = vmatpush1.msra.mxu0 %v5307
    %5565 = vmatprep.subr.mxu0 0.0
    %5566 = vmatpush1.msra.mxu0 0.0
    %5567 = vmatprep.subr.mxu0 0.0
    %5568 = vmatpush1.msra.mxu0 0.0
    %5569 = vmatprep.subr.mxu0 0.0
    %5570 = vmatpush1.msra.mxu0 0.0
    %5571 = vmatprep.subr.mxu0 0.0
    %5572 = vmatpush1.msra.mxu0 0.0
    %5573 = vmatprep.subr.mxu0 0.0
    %5574 = vmatpush1.msra.mxu0 0.0
    %5575 = vmatprep.subr.mxu0 0.0
    %5576 = vmatpush1.msra.mxu0 0.0
    %5577 = vmatprep.subr.mxu0 0.0
    %5578 = vmatpush1.msra.mxu0 0.0
    %5579 = vmatprep.subr.mxu0 0.0
    %5580 = vmatpush1.msra.mxu0 0.0
    %5581 = vmatprep.subr.mxu0 0.0
    %5582 = vmatpush1.msra.mxu0 0.0
    %5583 = vmatprep.subr.mxu0 0.0
    %5584 = vmatpush1.msra.mxu0 0.0
    %5585 = vmatprep.subr.mxu0 0.0
    %5586 = vmatpush1.msra.mxu0 0.0
    %5587 = vmatprep.subr.mxu0 0.0
    %5588 = vmatpush1.msra.mxu0 0.0
    %5589 = vmatprep.subr.mxu0 0.0
    %5590 = vmatpush1.msra.mxu0 0.0
    %5591 = vmatprep.subr.mxu0 0.0
    %5592 = vmatpush1.msra.mxu0 0.0
    %5593 = vmatprep.subr.mxu0 0.0
    %5594 = vmatpush1.msra.mxu0 0.0
    %5595 = vmatprep.subr.mxu0 0.0
    %5596 = vmatpush1.msra.mxu0 0.0
    %5597 = vmatprep.mubr.f32.mxu0 0.0
    %5598 = vmatmul.mubr.f32.gmra.mrb[0].mxu0 %v5228
    %v5599 = vpop.f32.mrb[0].mxu0
    %v5600 = vadd.f32 %v5375, %v5599
    %v5601 = vpop.f32.mrb[0].mxu0
    %5602 = vmatprep.mubr.f32.mxu0 0.0
    %5603 = vmatmul.mubr.f32.gmra.mrb[0].mxu0 %v5229
    %v5604 = vpop.f32.mrb[0].mxu0
    %v5605 = vadd.f32 %v5380, %v5604
    %v5606 = vpop.f32.mrb[0].mxu0
    %5607 = vmatprep.mubr.f32.mxu0 0.0
    %5608 = vmatmul.mubr.f32.gmra.mrb[0].mxu0 %v5230
    %v5609 = vpop.f32.mrb[0].mxu0
    %v5610 = vadd.f32 %v5385, %v5609
    %v5611 = vpop.f32.mrb[0].mxu0
    %5612 = vmatprep.mubr.f32.mxu0 0.0
    %5613 = vmatmul.mubr.f32.gmra.mrb[0].mxu0 %v5231
    %v5614 = vpop.f32.mrb[0].mxu0
    %v5615 = vadd.f32 %v5390, %v5614
    %v5616 = vpop.f32.mrb[0].mxu0
    %5617 = vmatprep.mubr.f32.mxu0 0.0
    %5618 = vmatmul.mubr.f32.gmra.mrb[0].mxu0 %v5232
    %v5619 = vpop.f32.mrb[0].mxu0
    %v5620 = vadd.f32 %v5395, %v5619
    %v5621 = vpop.f32.mrb[0].mxu0
    %5622 = vmatprep.mubr.f32.mxu0 0.0
    %5623 = vmatmul.mubr.f32.gmra.mrb[0].mxu0 %v5233
    %v5624 = vpop.f32.mrb[0].mxu0
    %v5625 = vadd.f32 %v5400, %v5624
    %v5626 = vpop.f32.mrb[0].mxu0
    %5627 = vmatprep.mubr.f32.mxu0 0.0
    %5628 = vmatmul.mubr.f32.gmra.mrb[0].mxu0 %v5234
    %v5629 = vpop.f32.mrb[0].mxu0
    %v5630 = vadd.f32 %v5405, %v5629
    %v5631 = vpop.f32.mrb[0].mxu0
    %5632 = vmatprep.mubr.f32.mxu0 0.0
    %5633 = vmatmul.mubr.f32.gmra.mrb[0].mxu0 %v5235
    %v5634 = vpop.f32.mrb[0].mxu0
    %v5635 = vadd.f32 %v5410, %v5634
    %v5636 = vpop.f32.mrb[0].mxu0
    %5637 = vmatprep.mubr.f32.mxu0 0.0
    %5638 = vmatmul.mubr.f32.gmra.mrb[0].mxu0 %v5236
    %v5639 = vpop.f32.mrb[0].mxu0
    %v5640 = vadd.f32 %v5415, %v5639
    %v5641 = vpop.f32.mrb[0].mxu0
    %5642 = vmatprep.mubr.f32.mxu0 0.0
    %5643 = vmatmul.mubr.f32.gmra.mrb[0].mxu0 %v5237
    %v5644 = vpop.f32.mrb[0].mxu0
    %v5645 = vadd.f32 %v5420, %v5644
    %v5646 = vpop.f32.mrb[0].mxu0
    %5647 = vmatprep.mubr.f32.mxu0 0.0
    %5648 = vmatmul.mubr.f32.gmra.mrb[0].mxu0 %v5238
    %v5649 = vpop.f32.mrb[0].mxu0
    %v5650 = vadd.f32 %v5425, %v5649
    %v5651 = vpop.f32.mrb[0].mxu0
    %5652 = vmatprep.mubr.f32.mxu0 0.0
    %5653 = vmatmul.mubr.f32.gmra.mrb[0].mxu0 %v5239
    %v5654 = vpop.f32.mrb[0].mxu0
    %v5655 = vadd.f32 %v5430, %v5654
    %v5656 = vpop.f32.mrb[0].mxu0
    %5657 = vmatprep.mubr.f32.mxu0 0.0
    %5658 = vmatmul.mubr.f32.gmra.mrb[0].mxu0 %v5240
    %v5659 = vpop.f32.mrb[0].mxu0
    %v5660 = vadd.f32 %v5435, %v5659
    %v5661 = vpop.f32.mrb[0].mxu0
    %5662 = vmatprep.mubr.f32.mxu0 0.0
    %5663 = vmatmul.mubr.f32.gmra.mrb[0].mxu0 %v5241
    %v5664 = vpop.f32.mrb[0].mxu0
    %v5665 = vadd.f32 %v5440, %v5664
    %v5666 = vpop.f32.mrb[0].mxu0
    %5667 = vmatprep.mubr.f32.mxu0 0.0
    %5668 = vmatmul.mubr.f32.gmra.mrb[0].mxu0 %v5242
    %v5669 = vpop.f32.mrb[0].mxu0
    %v5670 = vadd.f32 %v5445, %v5669
    %v5671 = vpop.f32.mrb[0].mxu0
    %5672 = vmatprep.mubr.f32.mxu0 0.0
    %5673 = vmatmul.mubr.f32.gmra.mrb[0].mxu0 %v5243
    %v5674 = vpop.f32.mrb[0].mxu0
    %v5675 = vadd.f32 %v5450, %v5674
    %v5676 = vpop.f32.mrb[0].mxu0
    %5677 = vmatprep.mubr.f32.mxu0 0.0
    %5678 = vmatmul.mubr.f32.gmra.mrb[0].mxu0 %v5244
    %v5679 = vpop.f32.mrb[0].mxu0
    %v5680 = vadd.f32 %v5455, %v5679
    %v5681 = vpop.f32.mrb[0].mxu0
    %5682 = vmatprep.mubr.f32.mxu0 0.0
    %5683 = vmatmul.mubr.f32.gmra.mrb[0].mxu0 %v5245
    %v5684 = vpop.f32.mrb[0].mxu0
    %v5685 = vadd.f32 %v5460, %v5684
    %v5686 = vpop.f32.mrb[0].mxu0
    %5687 = vmatprep.mubr.f32.mxu0 0.0
    %5688 = vmatmul.mubr.f32.gmra.mrb[0].mxu0 %v5246
    %v5689 = vpop.f32.mrb[0].mxu0
    %v5690 = vadd.f32 %v5465, %v5689
    %v5691 = vpop.f32.mrb[0].mxu0
    %5692 = vmatprep.mubr.f32.mxu0 0.0
    %5693 = vmatmul.mubr.f32.gmra.mrb[0].mxu0 %v5247
    %v5694 = vpop.f32.mrb[0].mxu0
    %v5695 = vadd.f32 %v5470, %v5694
    %v5696 = vpop.f32.mrb[0].mxu0
    %5697 = vmatprep.mubr.f32.mxu0 0.0
    %5698 = vmatmul.mubr.f32.gmra.mrb[0].mxu0 %v5248
    %v5699 = vpop.f32.mrb[0].mxu0
    %v5700 = vadd.f32 %v5475, %v5699
    %v5701 = vpop.f32.mrb[0].mxu0
    %5702 = vmatprep.mubr.f32.mxu0 0.0
    %5703 = vmatmul.mubr.f32.gmra.mrb[0].mxu0 %v5249
    %v5704 = vpop.f32.mrb[0].mxu0
    %v5705 = vadd.f32 %v5480, %v5704
    %v5706 = vpop.f32.mrb[0].mxu0
    %5707 = vmatprep.mubr.f32.mxu0 0.0
    %5708 = vmatmul.mubr.f32.gmra.mrb[0].mxu0 %v5250
    %v5709 = vpop.f32.mrb[0].mxu0
    %v5710 = vadd.f32 %v5485, %v5709
    %v5711 = vpop.f32.mrb[0].mxu0
    %5712 = vmatprep.mubr.f32.mxu0 0.0
    %5713 = vmatmul.mubr.f32.gmra.mrb[0].mxu0 %v5251
    %v5714 = vpop.f32.mrb[0].mxu0
    %v5715 = vadd.f32 %v5490, %v5714
    %v5716 = vpop.f32.mrb[0].mxu0
    %5717 = vmatprep.mubr.f32.mxu0 0.0
    %5718 = vmatmul.mubr.f32.gmra.mrb[0].mxu0 %v5252
    %v5719 = vpop.f32.mrb[0].mxu0
    %v5720 = vadd.f32 %v5495, %v5719
    %v5721 = vpop.f32.mrb[0].mxu0
    %5722 = vmatprep.mubr.f32.mxu0 0.0
    %5723 = vmatmul.mubr.f32.gmra.mrb[0].mxu0 %v5253
    %v5724 = vpop.f32.mrb[0].mxu0
    %v5725 = vadd.f32 %v5500, %v5724
    %v5726 = vpop.f32.mrb[0].mxu0
    %5727 = vmatprep.mubr.f32.mxu0 0.0
    %5728 = vmatmul.mubr.f32.gmra.mrb[0].mxu0 %v5254
    %v5729 = vpop.f32.mrb[0].mxu0
    %v5730 = vadd.f32 %v5505, %v5729
    %v5731 = vpop.f32.mrb[0].mxu0
    %5732 = vmatprep.mubr.f32.mxu0 0.0
    %5733 = vmatmul.mubr.f32.gmra.mrb[0].mxu0 %v5255
    %v5734 = vpop.f32.mrb[0].mxu0
    %v5735 = vadd.f32 %v5510, %v5734
    %v5736 = vpop.f32.mrb[0].mxu0
    %5737 = vmatprep.mubr.f32.mxu0 0.0
    %5738 = vmatmul.mubr.f32.gmra.mrb[0].mxu0 %v5256
    %v5739 = vpop.f32.mrb[0].mxu0
    %v5740 = vadd.f32 %v5515, %v5739
    %v5741 = vpop.f32.mrb[0].mxu0
    %5742 = vmatprep.mubr.f32.mxu0 0.0
    %5743 = vmatmul.mubr.f32.gmra.mrb[0].mxu0 %v5257
    %v5744 = vpop.f32.mrb[0].mxu0
    %v5745 = vadd.f32 %v5520, %v5744
    %v5746 = vpop.f32.mrb[0].mxu0
    %5747 = vmatprep.mubr.f32.mxu0 0.0
    %5748 = vmatmul.mubr.f32.gmra.mrb[0].mxu0 %v5258
    %v5749 = vpop.f32.mrb[0].mxu0
    %v5750 = vadd.f32 %v5525, %v5749
    %v5751 = vpop.f32.mrb[0].mxu0
    %5752 = vmatprep.mubr.f32.mxu0 0.0
    %5753 = vmatmul.mubr.f32.gmra.mrb[0].mxu0 %v5259
    %v5754 = vpop.f32.mrb[0].mxu0
    %v5755 = vadd.f32 %v5530, %v5754
    %v5756 = vpop.f32.mrb[0].mxu0
    %5757 = vdwg.mxu0
    %v5758 = vadd.f32 %v5066, %v5600
    %v5759 = vadd.f32 %v5071, %v5605
    %v5760 = vadd.f32 %v5076, %v5610
    %v5761 = vadd.f32 %v5081, %v5615
    %v5762 = vadd.f32 %v5086, %v5620
    %v5763 = vadd.f32 %v5091, %v5625
    %v5764 = vadd.f32 %v5096, %v5630
    %v5765 = vadd.f32 %v5101, %v5635
    %v5766 = vadd.f32 %v5106, %v5640
    %v5767 = vadd.f32 %v5111, %v5645
    %v5768 = vadd.f32 %v5116, %v5650
    %v5769 = vadd.f32 %v5121, %v5655
    %v5770 = vadd.f32 %v5126, %v5660
    %v5771 = vadd.f32 %v5131, %v5665
    %v5772 = vadd.f32 %v5136, %v5670
    %v5773 = vadd.f32 %v5141, %v5675
    %v5774 = vadd.f32 %v5146, %v5680
    %v5775 = vadd.f32 %v5151, %v5685
    %v5776 = vadd.f32 %v5156, %v5690
    %v5777 = vadd.f32 %v5161, %v5695
    %v5778 = vadd.f32 %v5166, %v5700
    %v5779 = vadd.f32 %v5171, %v5705
    %v5780 = vadd.f32 %v5176, %v5710
    %v5781 = vadd.f32 %v5181, %v5715
    %v5782 = vadd.f32 %v5186, %v5720
    %v5783 = vadd.f32 %v5191, %v5725
    %v5784 = vadd.f32 %v5196, %v5730
    %v5785 = vadd.f32 %v5201, %v5735
    %v5786 = vadd.f32 %v5206, %v5740
    %v5787 = vadd.f32 %v5211, %v5745
    %v5788 = vadd.f32 %v5216, %v5750
    %v5789 = vadd.f32 %v5221, %v5755
    %v5790 = vadd.f32 %v5758, %v5759
    %v5791 = vadd.f32 %v5790, %v5760
    %v5792 = vadd.f32 %v5791, %v5761
    %v5793 = vadd.f32 %v5792, %v5762
    %v5794 = vadd.f32 %v5793, %v5763
    %v5795 = vadd.f32 %v5794, %v5764
    %v5796 = vadd.f32 %v5795, %v5765
    %v5797 = vadd.f32 %v5796, %v5766
    %v5798 = vadd.f32 %v5797, %v5767
    %v5799 = vadd.f32 %v5798, %v5768
    %v5800 = vadd.f32 %v5799, %v5769
    %v5801 = vadd.f32 %v5800, %v5770
    %v5802 = vadd.f32 %v5801, %v5771
    %v5803 = vadd.f32 %v5802, %v5772
    %v5804 = vadd.f32 %v5803, %v5773
    %v5805 = vadd.f32 %v5804, %v5774
    %v5806 = vadd.f32 %v5805, %v5775
    %v5807 = vadd.f32 %v5806, %v5776
    %v5808 = vadd.f32 %v5807, %v5777
    %v5809 = vadd.f32 %v5808, %v5778
    %v5810 = vadd.f32 %v5809, %v5779
    %v5811 = vadd.f32 %v5810, %v5780
    %v5812 = vadd.f32 %v5811, %v5781
    %v5813 = vadd.f32 %v5812, %v5782
    %v5814 = vadd.f32 %v5813, %v5783
    %v5815 = vadd.f32 %v5814, %v5784
    %v5816 = vadd.f32 %v5815, %v5785
    %v5817 = vadd.f32 %v5816, %v5786
    %v5818 = vadd.f32 %v5817, %v5787
    %v5819 = vadd.f32 %v5818, %v5788
    %v5820 = vadd.f32 %v5819, %v5789
    %v5821 = vrot.slane %v5820, 4
    %v5822 = vadd.f32 %v5820, %v5821
    %v5823 = vrot.slane %v5822, 2
    %v5824 = vadd.f32 %v5822, %v5823
    %v5825 = vrot.slane %v5824, 1
    %v5826 = vadd.f32 %v5824, %v5825
    %v5827 = vmul.f32 %v5826, 0.00390625
    %v5828 = vsub.f32 %v5758, %v5827
    %v5829 = vsub.f32 %v5759, %v5827
    %v5830 = vsub.f32 %v5760, %v5827
    %v5831 = vsub.f32 %v5761, %v5827
    %v5832 = vsub.f32 %v5762, %v5827
    %v5833 = vsub.f32 %v5763, %v5827
    %v5834 = vsub.f32 %v5764, %v5827
    %v5835 = vsub.f32 %v5765, %v5827
    %v5836 = vsub.f32 %v5766, %v5827
    %v5837 = vsub.f32 %v5767, %v5827
    %v5838 = vsub.f32 %v5768, %v5827
    %v5839 = vsub.f32 %v5769, %v5827
    %v5840 = vsub.f32 %v5770, %v5827
    %v5841 = vsub.f32 %v5771, %v5827
    %v5842 = vsub.f32 %v5772, %v5827
    %v5843 = vsub.f32 %v5773, %v5827
    %v5844 = vsub.f32 %v5774, %v5827
    %v5845 = vsub.f32 %v5775, %v5827
    %v5846 = vsub.f32 %v5776, %v5827
    %v5847 = vsub.f32 %v5777, %v5827
    %v5848 = vsub.f32 %v5778, %v5827
    %v5849 = vsub.f32 %v5779, %v5827
    %v5850 = vsub.f32 %v5780, %v5827
    %v5851 = vsub.f32 %v5781, %v5827
    %v5852 = vsub.f32 %v5782, %v5827
    %v5853 = vsub.f32 %v5783, %v5827
    %v5854 = vsub.f32 %v5784, %v5827
    %v5855 = vsub.f32 %v5785, %v5827
    %v5856 = vsub.f32 %v5786, %v5827
    %v5857 = vsub.f32 %v5787, %v5827
    %v5858 = vsub.f32 %v5788, %v5827
    %v5859 = vsub.f32 %v5789, %v5827
    %v5860 = vmul.f32 %v5828, %v5828
    %v5861 = vmul.f32 %v5829, %v5829
    %v5862 = vmul.f32 %v5830, %v5830
    %v5863 = vmul.f32 %v5831, %v5831
    %v5864 = vmul.f32 %v5832, %v5832
    %v5865 = vmul.f32 %v5833, %v5833
    %v5866 = vmul.f32 %v5834, %v5834
    %v5867 = vmul.f32 %v5835, %v5835
    %v5868 = vmul.f32 %v5836, %v5836
    %v5869 = vmul.f32 %v5837, %v5837
    %v5870 = vmul.f32 %v5838, %v5838
    %v5871 = vmul.f32 %v5839, %v5839
    %v5872 = vmul.f32 %v5840, %v5840
    %v5873 = vmul.f32 %v5841, %v5841
    %v5874 = vmul.f32 %v5842, %v5842
    %v5875 = vmul.f32 %v5843, %v5843
    %v5876 = vmul.f32 %v5844, %v5844
    %v5877 = vmul.f32 %v5845, %v5845
    %v5878 = vmul.f32 %v5846, %v5846
    %v5879 = vmul.f32 %v5847, %v5847
    %v5880 = vmul.f32 %v5848, %v5848
    %v5881 = vmul.f32 %v5849, %v5849
    %v5882 = vmul.f32 %v5850, %v5850
    %v5883 = vmul.f32 %v5851, %v5851
    %v5884 = vmul.f32 %v5852, %v5852
    %v5885 = vmul.f32 %v5853, %v5853
    %v5886 = vmul.f32 %v5854, %v5854
    %v5887 = vmul.f32 %v5855, %v5855
    %v5888 = vmul.f32 %v5856, %v5856
    %v5889 = vmul.f32 %v5857, %v5857
    %v5890 = vmul.f32 %v5858, %v5858
    %v5891 = vmul.f32 %v5859, %v5859
    %v5892 = vadd.f32 %v5860, %v5861
    %v5893 = vadd.f32 %v5892, %v5862
    %v5894 = vadd.f32 %v5893, %v5863
    %v5895 = vadd.f32 %v5894, %v5864
    %v5896 = vadd.f32 %v5895, %v5865
    %v5897 = vadd.f32 %v5896, %v5866
    %v5898 = vadd.f32 %v5897, %v5867
    %v5899 = vadd.f32 %v5898, %v5868
    %v5900 = vadd.f32 %v5899, %v5869
    %v5901 = vadd.f32 %v5900, %v5870
    %v5902 = vadd.f32 %v5901, %v5871
    %v5903 = vadd.f32 %v5902, %v5872
    %v5904 = vadd.f32 %v5903, %v5873
    %v5905 = vadd.f32 %v5904, %v5874
    %v5906 = vadd.f32 %v5905, %v5875
    %v5907 = vadd.f32 %v5906, %v5876
    %v5908 = vadd.f32 %v5907, %v5877
    %v5909 = vadd.f32 %v5908, %v5878
    %v5910 = vadd.f32 %v5909, %v5879
    %v5911 = vadd.f32 %v5910, %v5880
    %v5912 = vadd.f32 %v5911, %v5881
    %v5913 = vadd.f32 %v5912, %v5882
    %v5914 = vadd.f32 %v5913, %v5883
    %v5915 = vadd.f32 %v5914, %v5884
    %v5916 = vadd.f32 %v5915, %v5885
    %v5917 = vadd.f32 %v5916, %v5886
    %v5918 = vadd.f32 %v5917, %v5887
    %v5919 = vadd.f32 %v5918, %v5888
    %v5920 = vadd.f32 %v5919, %v5889
    %v5921 = vadd.f32 %v5920, %v5890
    %v5922 = vadd.f32 %v5921, %v5891
    %v5923 = vrot.slane %v5922, 4
    %v5924 = vadd.f32 %v5922, %v5923
    %v5925 = vrot.slane %v5924, 2
    %v5926 = vadd.f32 %v5924, %v5925
    %v5927 = vrot.slane %v5926, 1
    %v5928 = vadd.f32 %v5926, %v5927
    %v5929 = vmul.f32 %v5928, 0.00390625
    %v5930 = vadd.f32 %v5929, 1e-05
    %v5931 = vrsqrt.pop %v5930
    %v5932 = vmul.f32 %v5828, %v5931
    %v5933 = vmul.f32 %v5829, %v5931
    %v5934 = vmul.f32 %v5830, %v5931
    %v5935 = vmul.f32 %v5831, %v5931
    %v5936 = vmul.f32 %v5832, %v5931
    %v5937 = vmul.f32 %v5833, %v5931
    %v5938 = vmul.f32 %v5834, %v5931
    %v5939 = vmul.f32 %v5835, %v5931
    %v5940 = vmul.f32 %v5836, %v5931
    %v5941 = vmul.f32 %v5837, %v5931
    %v5942 = vmul.f32 %v5838, %v5931
    %v5943 = vmul.f32 %v5839, %v5931
    %v5944 = vmul.f32 %v5840, %v5931
    %v5945 = vmul.f32 %v5841, %v5931
    %v5946 = vmul.f32 %v5842, %v5931
    %v5947 = vmul.f32 %v5843, %v5931
    %v5948 = vmul.f32 %v5844, %v5931
    %v5949 = vmul.f32 %v5845, %v5931
    %v5950 = vmul.f32 %v5846, %v5931
    %v5951 = vmul.f32 %v5847, %v5931
    %v5952 = vmul.f32 %v5848, %v5931
    %v5953 = vmul.f32 %v5849, %v5931
    %v5954 = vmul.f32 %v5850, %v5931
    %v5955 = vmul.f32 %v5851, %v5931
    %v5956 = vmul.f32 %v5852, %v5931
    %v5957 = vmul.f32 %v5853, %v5931
    %v5958 = vmul.f32 %v5854, %v5931
    %v5959 = vmul.f32 %v5855, %v5931
    %v5960 = vmul.f32 %v5856, %v5931
    %v5961 = vmul.f32 %v5857, %v5931
    %v5962 = vmul.f32 %v5858, %v5931
    %v5963 = vmul.f32 %v5859, %v5931
    %v5964 = vmax.f32 %v5932, 0.0
    %v5965 = vmax.f32 %v5933, 0.0
    %v5966 = vmax.f32 %v5934, 0.0
    %v5967 = vmax.f32 %v5935, 0.0
    %v5968 = vmax.f32 %v5936, 0.0
    %v5969 = vmax.f32 %v5937, 0.0
    %v5970 = vmax.f32 %v5938, 0.0
    %v5971 = vmax.f32 %v5939, 0.0
    %v5972 = vmax.f32 %v5940, 0.0
    %v5973 = vmax.f32 %v5941, 0.0
    %v5974 = vmax.f32 %v5942, 0.0
    %v5975 = vmax.f32 %v5943, 0.0
    %v5976 = vmax.f32 %v5944, 0.0
    %v5977 = vmax.f32 %v5945, 0.0
    %v5978 = vmax.f32 %v5946, 0.0
    %v5979 = vmax.f32 %v5947, 0.0
    %v5980 = vmax.f32 %v5948, 0.0
    %v5981 = vmax.f32 %v5949, 0.0
    %v5982 = vmax.f32 %v5950, 0.0
    %v5983 = vmax.f32 %v5951, 0.0
    %v5984 = vmax.f32 %v5952, 0.0
    %v5985 = vmax.f32 %v5953, 0.0
    %v5986 = vmax.f32 %v5954, 0.0
    %v5987 = vmax.f32 %v5955, 0.0
    %v5988 = vmax.f32 %v5956, 0.0
    %v5989 = vmax.f32 %v5957, 0.0
    %v5990 = vmax.f32 %v5958, 0.0
    %v5991 = vmax.f32 %v5959, 0.0
    %v5992 = vmax.f32 %v5960, 0.0
    %v5993 = vmax.f32 %v5961, 0.0
    %v5994 = vmax.f32 %v5962, 0.0
    %v5995 = vmax.f32 %v5963, 0.0
    %5996 = vst [vmem:[%s1999 + $0x1] sm:$0xff] %v5964
    %5997 = vst [vmem:[%s1999 + $0x9] sm:$0xff] %v5965
    %5998 = vst [vmem:[%s1999 + $0x19] sm:$0xff] %v5966
    %5999 = vst [vmem:[%s1999 + $0x21] sm:$0xff] %v5967
    %6000 = vst [vmem:[%s1999 + $0x31] sm:$0xff] %v5968
    %6001 = vst [vmem:[%s1999 + $0x39] sm:$0xff] %v5969
    %6002 = vst [vmem:[%s1999 + $0x49] sm:$0xff] %v5970
    %6003 = vst [vmem:[%s1999 + $0x51] sm:$0xff] %v5971
    %6004 = vst [vmem:[%s1999 + $0x61] sm:$0xff] %v5972
    %6005 = vst [vmem:[%s1999 + $0x69] sm:$0xff] %v5973
    %6006 = vst [vmem:[%s1999 + $0x79] sm:$0xff] %v5974
    %6007 = vst [vmem:[%s1999 + $0x81] sm:$0xff] %v5975
    %6008 = vst [vmem:[%s1999 + $0x91] sm:$0xff] %v5976
    %6009 = vst [vmem:[%s1999 + $0x99] sm:$0xff] %v5977
    %6010 = vst [vmem:[%s1999 + $0xa9] sm:$0xff] %v5978
    %6011 = vst [vmem:[%s1999 + $0xb1] sm:$0xff] %v5979
    %6012 = vst [vmem:[%s1999 + $0xc1] sm:$0xff] %v5980
    %6013 = vst [vmem:[%s1999 + $0xc9] sm:$0xff] %v5981
    %6014 = vst [vmem:[%s1999 + $0xd9] sm:$0xff] %v5982
    %6015 = vst [vmem:[%s1999 + $0xe1] sm:$0xff] %v5983
    %6016 = vst [vmem:[%s1999 + $0xf1] sm:$0xff] %v5984
    %6017 = vst [vmem:[%s1999 + $0xf9] sm:$0xff] %v5985
    %6018 = vst [vmem:[%s1999 + $0x109] sm:$0xff] %v5986
    %6019 = vst [vmem:[%s1999 + $0x111] sm:$0xff] %v5987
    %6020 = vst [vmem:[%s1999 + $0x121] sm:$0xff] %v5988
    %6021 = vst [vmem:[%s1999 + $0x129] sm:$0xff] %v5989
    %6022 = vst [vmem:[%s1999 + $0x139] sm:$0xff] %v5990
    %6023 = vst [vmem:[%s1999 + $0x141] sm:$0xff] %v5991
    %6024 = vst [vmem:[%s1999 + $0x151] sm:$0xff] %v5992
    %6025 = vst [vmem:[%s1999 + $0x159] sm:$0xff] %v5993
    %6026 = vst [vmem:[%s1999 + $0x169] sm:$0xff] %v5994
    %6027 = vst [vmem:[%s1999 + $0x171] sm:$0xff] %v5995
    %6028 = vst [vmem:[#allocation3 + $0x1] sm:$0xff] %v5966
    %6029 = vst [vmem:[#allocation3 + $0x9] sm:$0xff] %v5967
    %6030 = vst [vmem:[%s2034 + $0x1] sm:$0xff] %v5992
    %6031 = vst [vmem:[%s2034 + $0x9] sm:$0xff] %v5993
    %v6032 = vld [vmem:[#allocation3 + $0x2] sm:$0x1]
    %v6033 = vld [vmem:[#allocation3 + $0x1a] sm:$0x1]
    %v6034 = vld [vmem:[#allocation3 + $0x32] sm:$0x1]
    %v6035 = vld [vmem:[#allocation3 + $0x4a] sm:$0x1]
    %v6036 = vld [vmem:[#allocation3 + $0x62] sm:$0x1]
    %v6037 = vld [vmem:[#allocation3 + $0x7a] sm:$0x1]
    %v6038 = vld [vmem:[#allocation3 + $0x92] sm:$0x1]
    %v6039 = vld [vmem:[#allocation3 + $0xaa] sm:$0x1]
    %v6040 = vld [vmem:[#allocation3 + $0xc2] sm:$0x1]
    %v6041 = vld [vmem:[#allocation3 + $0xda] sm:$0x1]
    %v6042 = vld [vmem:[#allocation3 + $0xf2] sm:$0x1]
    %v6043 = vld [vmem:[#allocation3 + $0x10a] sm:$0x1]
    %v6044 = vld [vmem:[#allocation3 + $0x122] sm:$0x1]
    %v6045 = vld [vmem:[#allocation3 + $0x13a] sm:$0x1]
    %v6046 = vld [vmem:[#allocation3 + $0x152] sm:$0x1]
    %v6047 = vld [vmem:[#allocation3 + $0x16a] sm:$0x1]
    %v6048 = vld [vmem:[#allocation3 + $0x182] sm:$0x1]
    %v6049 = vld [vmem:[#allocation3 + $0x19a] sm:$0x1]
    %6050 = vst [vmem:[#allocation3] sm:$0x1] %v6032
    %6051 = vst [vmem:[#allocation3 + $0x18] sm:$0x1] %v6033
    %6052 = vst [vmem:[#allocation3 + $0x30] sm:$0x1] %v6034
    %6053 = vst [vmem:[#allocation3 + $0x48] sm:$0x1] %v6035
    %6054 = vst [vmem:[#allocation3 + $0x60] sm:$0x1] %v6036
    %6055 = vst [vmem:[#allocation3 + $0x78] sm:$0x1] %v6037
    %6056 = vst [vmem:[#allocation3 + $0x90] sm:$0x1] %v6038
    %6057 = vst [vmem:[#allocation3 + $0xa8] sm:$0x1] %v6039
    %6058 = vst [vmem:[#allocation3 + $0xc0] sm:$0x1] %v6040
    %6059 = vst [vmem:[#allocation3 + $0xd8] sm:$0x1] %v6041
    %6060 = vst [vmem:[#allocation3 + $0xf0] sm:$0x1] %v6042
    %6061 = vst [vmem:[#allocation3 + $0x108] sm:$0x1] %v6043
    %6062 = vst [vmem:[#allocation3 + $0x120] sm:$0x1] %v6044
    %6063 = vst [vmem:[#allocation3 + $0x138] sm:$0x1] %v6045
    %6064 = vst [vmem:[#allocation3 + $0x150] sm:$0x1] %v6046
    %6065 = vst [vmem:[#allocation3 + $0x168] sm:$0x1] %v6047
    %6066 = vst [vmem:[#allocation3 + $0x180] sm:$0x1] %v6048
    %6067 = vst [vmem:[#allocation3 + $0x198] sm:$0x1] %v6049
    %v6068 = vld [vmem:[#allocation3 + $0xf] sm:$0x1]
    %v6069 = vld [vmem:[#allocation3 + $0x27] sm:$0x1]
    %v6070 = vld [vmem:[#allocation3 + $0x3f] sm:$0x1]
    %v6071 = vld [vmem:[#allocation3 + $0x57] sm:$0x1]
    %v6072 = vld [vmem:[#allocation3 + $0x6f] sm:$0x1]
    %v6073 = vld [vmem:[#allocation3 + $0x87] sm:$0x1]
    %v6074 = vld [vmem:[#allocation3 + $0x9f] sm:$0x1]
    %v6075 = vld [vmem:[#allocation3 + $0xb7] sm:$0x1]
    %v6076 = vld [vmem:[#allocation3 + $0xcf] sm:$0x1]
    %v6077 = vld [vmem:[#allocation3 + $0xe7] sm:$0x1]
    %v6078 = vld [vmem:[#allocation3 + $0xff] sm:$0x1]
    %v6079 = vld [vmem:[#allocation3 + $0x117] sm:$0x1]
    %v6080 = vld [vmem:[#allocation3 + $0x12f] sm:$0x1]
    %v6081 = vld [vmem:[#allocation3 + $0x147] sm:$0x1]
    %v6082 = vld [vmem:[#allocation3 + $0x15f] sm:$0x1]
    %v6083 = vld [vmem:[#allocation3 + $0x177] sm:$0x1]
    %v6084 = vld [vmem:[#allocation3 + $0x18f] sm:$0x1]
    %v6085 = vld [vmem:[#allocation3 + $0x1a7] sm:$0x1]
    %6086 = vst [vmem:[#allocation3 + $0x11] sm:$0x1] %v6068
    %6087 = vst [vmem:[#allocation3 + $0x29] sm:$0x1] %v6069
    %6088 = vst [vmem:[#allocation3 + $0x41] sm:$0x1] %v6070
    %6089 = vst [vmem:[#allocation3 + $0x59] sm:$0x1] %v6071
    %6090 = vst [vmem:[#allocation3 + $0x71] sm:$0x1] %v6072
    %6091 = vst [vmem:[#allocation3 + $0x89] sm:$0x1] %v6073
    %6092 = vst [vmem:[#allocation3 + $0xa1] sm:$0x1] %v6074
    %6093 = vst [vmem:[#allocation3 + $0xb9] sm:$0x1] %v6075
    %6094 = vst [vmem:[#allocation3 + $0xd1] sm:$0x1] %v6076
    %6095 = vst [vmem:[#allocation3 + $0xe9] sm:$0x1] %v6077
    %6096 = vst [vmem:[#allocation3 + $0x101] sm:$0x1] %v6078
    %6097 = vst [vmem:[#allocation3 + $0x119] sm:$0x1] %v6079
    %6098 = vst [vmem:[#allocation3 + $0x131] sm:$0x1] %v6080
    %6099 = vst [vmem:[#allocation3 + $0x149] sm:$0x1] %v6081
    %6100 = vst [vmem:[#allocation3 + $0x161] sm:$0x1] %v6082
    %6101 = vst [vmem:[#allocation3 + $0x179] sm:$0x1] %v6083
    %6102 = vst [vmem:[#allocation3 + $0x191] sm:$0x1] %v6084
    %6103 = vst [vmem:[#allocation3 + $0x1a9] sm:$0x1] %v6085
    %v6104 = vld [vmem:[#allocation3] sm:$0xff]
    %v6105 = vld [vmem:[#allocation3 + $0x8] sm:$0xff]
    %v6106 = vld [vmem:[#allocation3 + $0x18] sm:$0xff]
    %v6107 = vld [vmem:[#allocation3 + $0x20] sm:$0xff]
    %v6108 = vld [vmem:[#allocation3 + $0x30] sm:$0xff]
    %v6109 = vld [vmem:[#allocation3 + $0x38] sm:$0xff]
    %v6110 = vld [vmem:[#allocation3 + $0x48] sm:$0xff]
    %v6111 = vld [vmem:[#allocation3 + $0x50] sm:$0xff]
    %v6112 = vld [vmem:[#allocation3 + $0x60] sm:$0xff]
    %v6113 = vld [vmem:[#allocation3 + $0x68] sm:$0xff]
    %v6114 = vld [vmem:[#allocation3 + $0x78] sm:$0xff]
    %v6115 = vld [vmem:[#allocation3 + $0x80] sm:$0xff]
    %v6116 = vld [vmem:[#allocation3 + $0x90] sm:$0xff]
    %v6117 = vld [vmem:[#allocation3 + $0x98] sm:$0xff]
    %v6118 = vld [vmem:[#allocation3 + $0xa8] sm:$0xff]
    %v6119 = vld [vmem:[#allocation3 + $0xb0] sm:$0xff]
    %v6120 = vld [vmem:[#allocation3 + $0xc0] sm:$0xff]
    %v6121 = vld [vmem:[#allocation3 + $0xc8] sm:$0xff]
    %v6122 = vld [vmem:[#allocation3 + $0xd8] sm:$0xff]
    %v6123 = vld [vmem:[#allocation3 + $0xe0] sm:$0xff]
    %v6124 = vld [vmem:[#allocation3 + $0xf0] sm:$0xff]
    %v6125 = vld [vmem:[#allocation3 + $0xf8] sm:$0xff]
    %v6126 = vld [vmem:[#allocation3 + $0x108] sm:$0xff]
    %v6127 = vld [vmem:[#allocation3 + $0x110] sm:$0xff]
    %v6128 = vld [vmem:[#allocation3 + $0x120] sm:$0xff]
    %v6129 = vld [vmem:[#allocation3 + $0x128] sm:$0xff]
    %v6130 = vld [vmem:[#allocation3 + $0x138] sm:$0xff]
    %v6131 = vld [vmem:[#allocation3 + $0x140] sm:$0xff]
    %v6132 = vld [vmem:[#allocation3 + $0x150] sm:$0xff]
    %v6133 = vld [vmem:[#allocation3 + $0x158] sm:$0xff]
    %v6134 = vld [vmem:[#allocation3 + $0x168] sm:$0xff]
    %v6135 = vld [vmem:[#allocation3 + $0x170] sm:$0xff]
    %v6136 = vld [vmem:[#allocation3 + $0x180] sm:$0xff]
    %v6137 = vld [vmem:[#allocation3 + $0x188] sm:$0xff]
    %v6138 = vld [vmem:[#allocation3 + $0x198] sm:$0xff]
    %v6139 = vld [vmem:[#allocation3 + $0x1a0] sm:$0xff]
    %v6140 = vld [vmem:[%s2] sm:$0xff]
    %v6141 = vld [vmem:[%s2 + $0x8] sm:$0xff]
    %v6142 = vld [vmem:[%s2 + $0x10] sm:$0xff]
    %v6143 = vld [vmem:[%s2 + $0x18] sm:$0xff]
    %v6144 = vld [vmem:[%s2 + $0x20] sm:$0xff]
    %v6145 = vld [vmem:[%s2 + $0x28] sm:$0xff]
    %v6146 = vld [vmem:[%s2 + $0x30] sm:$0xff]
    %v6147 = vld [vmem:[%s2 + $0x38] sm:$0xff]
    %v6148 = vld [vmem:[%s2 + $0x40] sm:$0xff]
    %v6149 = vld [vmem:[%s2 + $0x48] sm:$0xff]
    %v6150 = vld [vmem:[%s2 + $0x50] sm:$0xff]
    %v6151 = vld [vmem:[%s2 + $0x58] sm:$0xff]
    %v6152 = vld [vmem:[%s2 + $0x60] sm:$0xff]
    %v6153 = vld [vmem:[%s2 + $0x68] sm:$0xff]
    %v6154 = vld [vmem:[%s2 + $0x70] sm:$0xff]
    %v6155 = vld [vmem:[%s2 + $0x78] sm:$0xff]
    %v6156 = vld [vmem:[%s2 + $0x80] sm:$0xff]
    %v6157 = vld [vmem:[%s2 + $0x88] sm:$0xff]
    %v6158 = vld [vmem:[%s2 + $0x90] sm:$0xff]
    %v6159 = vld [vmem:[%s2 + $0x98] sm:$0xff]
    %v6160 = vld [vmem:[%s2 + $0xa0] sm:$0xff]
    %v6161 = vld [vmem:[%s2 + $0xa8] sm:$0xff]
    %v6162 = vld [vmem:[%s2 + $0xb0] sm:$0xff]
    %v6163 = vld [vmem:[%s2 + $0xb8] sm:$0xff]
    %v6164 = vld [vmem:[%s2 + $0xc0] sm:$0xff]
    %v6165 = vld [vmem:[%s2 + $0xc8] sm:$0xff]
    %v6166 = vld [vmem:[%s2 + $0xd0] sm:$0xff]
    %v6167 = vld [vmem:[%s2 + $0xd8] sm:$0xff]
    %v6168 = vld [vmem:[%s2 + $0xe0] sm:$0xff]
    %v6169 = vld [vmem:[%s2 + $0xe8] sm:$0xff]
    %v6170 = vld [vmem:[%s2 + $0xf0] sm:$0xff]
    %v6171 = vld [vmem:[%s2 + $0xf8] sm:$0xff]
    %v6172 = vld [vmem:[%s2 + $0x100] sm:$0xff]
    %v6173 = vld [vmem:[%s2 + $0x108] sm:$0xff]
    %v6174 = vld [vmem:[%s2 + $0x110] sm:$0xff]
    %v6175 = vld [vmem:[%s2 + $0x118] sm:$0xff]
    %v6176 = vld [vmem:[%s2 + $0x120] sm:$0xff]
    %v6177 = vld [vmem:[%s2 + $0x128] sm:$0xff]
    %v6178 = vld [vmem:[%s2 + $0x130] sm:$0xff]
    %v6179 = vld [vmem:[%s2 + $0x138] sm:$0xff]
    %v6180 = vld [vmem:[%s2 + $0x140] sm:$0xff]
    %v6181 = vld [vmem:[%s2 + $0x148] sm:$0xff]
    %v6182 = vld [vmem:[%s2 + $0x150] sm:$0xff]
    %v6183 = vld [vmem:[%s2 + $0x158] sm:$0xff]
    %v6184 = vld [vmem:[%s2 + $0x160] sm:$0xff]
    %v6185 = vld [vmem:[%s2 + $0x168] sm:$0xff]
    %v6186 = vld [vmem:[%s2 + $0x170] sm:$0xff]
    %v6187 = vld [vmem:[%s2 + $0x178] sm:$0xff]
    %v6188 = vld [vmem:[#allocation3 + $0x1] sm:$0xff]
    %v6189 = vld [vmem:[#allocation3 + $0x9] sm:$0xff]
    %v6190 = vld [vmem:[#allocation3 + $0x19] sm:$0xff]
    %v6191 = vld [vmem:[#allocation3 + $0x21] sm:$0xff]
    %v6192 = vld [vmem:[#allocation3 + $0x31] sm:$0xff]
    %v6193 = vld [vmem:[#allocation3 + $0x39] sm:$0xff]
    %v6194 = vld [vmem:[#allocation3 + $0x49] sm:$0xff]
    %v6195 = vld [vmem:[#allocation3 + $0x51] sm:$0xff]
    %v6196 = vld [vmem:[#allocation3 + $0x61] sm:$0xff]
    %v6197 = vld [vmem:[#allocation3 + $0x69] sm:$0xff]
    %v6198 = vld [vmem:[#allocation3 + $0x79] sm:$0xff]
    %v6199 = vld [vmem:[#allocation3 + $0x81] sm:$0xff]
    %v6200 = vld [vmem:[#allocation3 + $0x91] sm:$0xff]
    %v6201 = vld [vmem:[#allocation3 + $0x99] sm:$0xff]
    %v6202 = vld [vmem:[#allocation3 + $0xa9] sm:$0xff]
    %v6203 = vld [vmem:[#allocation3 + $0xb1] sm:$0xff]
    %v6204 = vld [vmem:[#allocation3 + $0xc1] sm:$0xff]
    %v6205 = vld [vmem:[#allocation3 + $0xc9] sm:$0xff]
    %v6206 = vld [vmem:[#allocation3 + $0xd9] sm:$0xff]
    %v6207 = vld [vmem:[#allocation3 + $0xe1] sm:$0xff]
    %v6208 = vld [vmem:[#allocation3 + $0xf1] sm:$0xff]
    %v6209 = vld [vmem:[#allocation3 + $0xf9] sm:$0xff]
    %v6210 = vld [vmem:[#allocation3 + $0x109] sm:$0xff]
    %v6211 = vld [vmem:[#allocation3 + $0x111] sm:$0xff]
    %v6212 = vld [vmem:[#allocation3 + $0x121] sm:$0xff]
    %v6213 = vld [vmem:[#allocation3 + $0x129] sm:$0xff]
    %v6214 = vld [vmem:[#allocation3 + $0x139] sm:$0xff]
    %v6215 = vld [vmem:[#allocation3 + $0x141] sm:$0xff]
    %v6216 = vld [vmem:[#allocation3 + $0x151] sm:$0xff]
    %v6217 = vld [vmem:[#allocation3 + $0x159] sm:$0xff]
    %v6218 = vld [vmem:[#allocation3 + $0x169] sm:$0xff]
    %v6219 = vld [vmem:[#allocation3 + $0x171] sm:$0xff]
    %v6220 = vld [vmem:[#allocation3 + $0x181] sm:$0xff]
    %v6221 = vld [vmem:[#allocation3 + $0x189] sm:$0xff]
    %v6222 = vld [vmem:[#allocation3 + $0x199] sm:$0xff]
    %v6223 = vld [vmem:[#allocation3 + $0x1a1] sm:$0xff]
    %v6224 = vld [vmem:[%s2229] sm:$0xff]
    %v6225 = vld [vmem:[%s2229 + $0x8] sm:$0xff]
    %v6226 = vld [vmem:[%s2229 + $0x10] sm:$0xff]
    %v6227 = vld [vmem:[%s2229 + $0x18] sm:$0xff]
    %v6228 = vld [vmem:[%s2229 + $0x20] sm:$0xff]
    %v6229 = vld [vmem:[%s2229 + $0x28] sm:$0xff]
    %v6230 = vld [vmem:[%s2229 + $0x30] sm:$0xff]
    %v6231 = vld [vmem:[%s2229 + $0x38] sm:$0xff]
    %v6232 = vld [vmem:[%s2229 + $0x40] sm:$0xff]
    %v6233 = vld [vmem:[%s2229 + $0x48] sm:$0xff]
    %v6234 = vld [vmem:[%s2229 + $0x50] sm:$0xff]
    %v6235 = vld [vmem:[%s2229 + $0x58] sm:$0xff]
    %v6236 = vld [vmem:[%s2229 + $0x60] sm:$0xff]
    %v6237 = vld [vmem:[%s2229 + $0x68] sm:$0xff]
    %v6238 = vld [vmem:[%s2229 + $0x70] sm:$0xff]
    %v6239 = vld [vmem:[%s2229 + $0x78] sm:$0xff]
    %v6240 = vld [vmem:[%s2229 + $0x80] sm:$0xff]
    %v6241 = vld [vmem:[%s2229 + $0x88] sm:$0xff]
    %v6242 = vld [vmem:[%s2229 + $0x90] sm:$0xff]
    %v6243 = vld [vmem:[%s2229 + $0x98] sm:$0xff]
    %v6244 = vld [vmem:[%s2229 + $0xa0] sm:$0xff]
    %v6245 = vld [vmem:[%s2229 + $0xa8] sm:$0xff]
    %v6246 = vld [vmem:[%s2229 + $0xb0] sm:$0xff]
    %v6247 = vld [vmem:[%s2229 + $0xb8] sm:$0xff]
    %v6248 = vld [vmem:[%s2229 + $0xc0] sm:$0xff]
    %v6249 = vld [vmem:[%s2229 + $0xc8] sm:$0xff]
    %v6250 = vld [vmem:[%s2229 + $0xd0] sm:$0xff]
    %v6251 = vld [vmem:[%s2229 + $0xd8] sm:$0xff]
    %v6252 = vld [vmem:[%s2229 + $0xe0] sm:$0xff]
    %v6253 = vld [vmem:[%s2229 + $0xe8] sm:$0xff]
    %v6254 = vld [vmem:[%s2229 + $0xf0] sm:$0xff]
    %v6255 = vld [vmem:[%s2229 + $0xf8] sm:$0xff]
    %v6256 = vld [vmem:[%s2229 + $0x100] sm:$0xff]
    %v6257 = vld [vmem:[%s2229 + $0x108] sm:$0xff]
    %v6258 = vld [vmem:[%s2229 + $0x110] sm:$0xff]
    %v6259 = vld [vmem:[%s2229 + $0x118] sm:$0xff]
    %v6260 = vld [vmem:[%s2229 + $0x120] sm:$0xff]
    %v6261 = vld [vmem:[%s2229 + $0x128] sm:$0xff]
    %v6262 = vld [vmem:[%s2229 + $0x130] sm:$0xff]
    %v6263 = vld [vmem:[%s2229 + $0x138] sm:$0xff]
    %v6264 = vld [vmem:[%s2229 + $0x140] sm:$0xff]
    %v6265 = vld [vmem:[%s2229 + $0x148] sm:$0xff]
    %v6266 = vld [vmem:[%s2229 + $0x150] sm:$0xff]
    %v6267 = vld [vmem:[%s2229 + $0x158] sm:$0xff]
    %v6268 = vld [vmem:[%s2229 + $0x160] sm:$0xff]
    %v6269 = vld [vmem:[%s2229 + $0x168] sm:$0xff]
    %v6270 = vld [vmem:[%s2229 + $0x170] sm:$0xff]
    %v6271 = vld [vmem:[%s2229 + $0x178] sm:$0xff]
    %6272 = vmatprep.subr.mxu0 0.0
    %6273 = vmatpush1.msra.mxu0 %v6224
    %6274 = vmatprep.subr.mxu0 0.0
    %6275 = vmatpush1.msra.mxu0 %v6225
    %6276 = vmatprep.subr.mxu0 0.0
    %6277 = vmatpush1.msra.mxu0 %v6226
    %6278 = vmatprep.subr.mxu0 0.0
    %6279 = vmatpush1.msra.mxu0 %v6227
    %6280 = vmatprep.subr.mxu0 0.0
    %6281 = vmatpush1.msra.mxu0 %v6228
    %6282 = vmatprep.subr.mxu0 0.0
    %6283 = vmatpush1.msra.mxu0 %v6229
    %6284 = vmatprep.subr.mxu0 0.0
    %6285 = vmatpush1.msra.mxu0 %v6230
    %6286 = vmatprep.subr.mxu0 0.0
    %6287 = vmatpush1.msra.mxu0 %v6231
    %6288 = vmatprep.subr.mxu0 0.0
    %6289 = vmatpush1.msra.mxu0 %v6232
    %6290 = vmatprep.subr.mxu0 0.0
    %6291 = vmatpush1.msra.mxu0 %v6233
    %6292 = vmatprep.subr.mxu0 0.0
    %6293 = vmatpush1.msra.mxu0 %v6234
    %6294 = vmatprep.subr.mxu0 0.0
    %6295 = vmatpush1.msra.mxu0 %v6235
    %6296 = vmatprep.subr.mxu0 0.0
    %6297 = vmatpush1.msra.mxu0 %v6236
    %6298 = vmatprep.subr.mxu0 0.0
    %6299 = vmatpush1.msra.mxu0 %v6237
    %6300 = vmatprep.subr.mxu0 0.0
    %6301 = vmatpush1.msra.mxu0 %v6238
    %6302 = vmatprep.subr.mxu0 0.0
    %6303 = vmatpush1.msra.mxu0 %v6239
    %6304 = vmatprep.subr.mxu0 0.0
    %6305 = vmatpush1.msra.mxu0 %v6240
    %6306 = vmatprep.subr.mxu0 0.0
    %6307 = vmatpush1.msra.mxu0 %v6241
    %6308 = vmatprep.subr.mxu0 0.0
    %6309 = vmatpush1.msra.mxu0 %v6242
    %6310 = vmatprep.subr.mxu0 0.0
    %6311 = vmatpush1.msra.mxu0 %v6243
    %6312 = vmatprep.subr.mxu0 0.0
    %6313 = vmatpush1.msra.mxu0 %v6244
    %6314 = vmatprep.subr.mxu0 0.0
    %6315 = vmatpush1.msra.mxu0 %v6245
    %6316 = vmatprep.subr.mxu0 0.0
    %6317 = vmatpush1.msra.mxu0 %v6246
    %6318 = vmatprep.subr.mxu0 0.0
    %6319 = vmatpush1.msra.mxu0 %v6247
    %6320 = vmatprep.subr.mxu0 0.0
    %6321 = vmatpush1.msra.mxu0 %v6248
    %6322 = vmatprep.subr.mxu0 0.0
    %6323 = vmatpush1.msra.mxu0 %v6249
    %6324 = vmatprep.subr.mxu0 0.0
    %6325 = vmatpush1.msra.mxu0 %v6250
    %6326 = vmatprep.subr.mxu0 0.0
    %6327 = vmatpush1.msra.mxu0 %v6251
    %6328 = vmatprep.subr.mxu0 0.0
    %6329 = vmatpush1.msra.mxu0 %v6252
    %6330 = vmatprep.subr.mxu0 0.0
    %6331 = vmatpush1.msra.mxu0 %v6253
    %6332 = vmatprep.subr.mxu0 0.0
    %6333 = vmatpush1.msra.mxu0 %v6254
    %6334 = vmatprep.subr.mxu0 0.0
    %6335 = vmatpush1.msra.mxu0 %v6255
    %6336 = vmatprep.mubr.f32.mxu0 %v6190
    %6337 = vmatmul.mubr.f32.gmra.mrb[0].mxu0 %v6188
    %v6338 = vpop.f32.mrb[0].mxu0
    %v6339 = vadd.f32 0.0, %v6338
    %v6340 = vpop.f32.mrb[0].mxu0
    %6341 = vmatprep.mubr.f32.mxu0 %v6191
    %6342 = vmatmul.mubr.f32.gmra.mrb[0].mxu0 %v6189
    %v6343 = vpop.f32.mrb[0].mxu0
    %v6344 = vadd.f32 0.0, %v6343
    %v6345 = vpop.f32.mrb[0].mxu0
    %6346 = vmatprep.mubr.f32.mxu0 %v6192
    %6347 = vmatmul.mubr.f32.gmra.mrb[0].mxu0 %v6190
    %v6348 = vpop.f32.mrb[0].mxu0
    %v6349 = vadd.f32 0.0, %v6348
    %v6350 = vpop.f32.mrb[0].mxu0
    %6351 = vmatprep.mubr.f32.mxu0 %v6193
    %6352 = vmatmul.mubr.f32.gmra.mrb[0].mxu0 %v6191
    %v6353 = vpop.f32.mrb[0].mxu0
    %v6354 = vadd.f32 0.0, %v6353
    %v6355 = vpop.f32.mrb[0].mxu0
    %6356 = vmatprep.mubr.f32.mxu0 %v6194
    %6357 = vmatmul.mubr.f32.gmra.mrb[0].mxu0 %v6192
    %v6358 = vpop.f32.mrb[0].mxu0
    %v6359 = vadd.f32 0.0, %v6358
    %v6360 = vpop.f32.mrb[0].mxu0
    %6361 = vmatprep.mubr.f32.mxu0 %v6195
    %6362 = vmatmul.mubr.f32.gmra.mrb[0].mxu0 %v6193
    %v6363 = vpop.f32.mrb[0].mxu0
    %v6364 = vadd.f32 0.0, %v6363
    %v6365 = vpop.f32.mrb[0].mxu0
    %6366 = vmatprep.mubr.f32.mxu0 %v6196
    %6367 = vmatmul.mubr.f32.gmra.mrb[0].mxu0 %v6194
    %v6368 = vpop.f32.mrb[0].mxu0
    %v6369 = vadd.f32 0.0, %v6368
    %v6370 = vpop.f32.mrb[0].mxu0
    %6371 = vmatprep.mubr.f32.mxu0 %v6197
    %6372 = vmatmul.mubr.f32.gmra.mrb[0].mxu0 %v6195
    %v6373 = vpop.f32.mrb[0].mxu0
    %v6374 = vadd.f32 0.0, %v6373
    %v6375 = vpop.f32.mrb[0].mxu0
    %6376 = vmatprep.mubr.f32.mxu0 %v6198
    %6377 = vmatmul.mubr.f32.gmra.mrb[0].mxu0 %v6196
    %v6378 = vpop.f32.mrb[0].mxu0
    %v6379 = vadd.f32 0.0, %v6378
    %v6380 = vpop.f32.mrb[0].mxu0
    %6381 = vmatprep.mubr.f32.mxu0 %v6199
    %6382 = vmatmul.mubr.f32.gmra.mrb[0].mxu0 %v6197
    %v6383 = vpop.f32.mrb[0].mxu0
    %v6384 = vadd.f32 0.0, %v6383
    %v6385 = vpop.f32.mrb[0].mxu0
    %6386 = vmatprep.mubr.f32.mxu0 %v6200
    %6387 = vmatmul.mubr.f32.gmra.mrb[0].mxu0 %v6198
    %v6388 = vpop.f32.mrb[0].mxu0
    %v6389 = vadd.f32 0.0, %v6388
    %v6390 = vpop.f32.mrb[0].mxu0
    %6391 = vmatprep.mubr.f32.mxu0 %v6201
    %6392 = vmatmul.mubr.f32.gmra.mrb[0].mxu0 %v6199
    %v6393 = vpop.f32.mrb[0].mxu0
    %v6394 = vadd.f32 0.0, %v6393
    %v6395 = vpop.f32.mrb[0].mxu0
    %6396 = vmatprep.mubr.f32.mxu0 %v6202
    %6397 = vmatmul.mubr.f32.gmra.mrb[0].mxu0 %v6200
    %v6398 = vpop.f32.mrb[0].mxu0
    %v6399 = vadd.f32 0.0, %v6398
    %v6400 = vpop.f32.mrb[0].mxu0
    %6401 = vmatprep.mubr.f32.mxu0 %v6203
    %6402 = vmatmul.mubr.f32.gmra.mrb[0].mxu0 %v6201
    %v6403 = vpop.f32.mrb[0].mxu0
    %v6404 = vadd.f32 0.0, %v6403
    %v6405 = vpop.f32.mrb[0].mxu0
    %6406 = vmatprep.mubr.f32.mxu0 %v6204
    %6407 = vmatmul.mubr.f32.gmra.mrb[0].mxu0 %v6202
    %v6408 = vpop.f32.mrb[0].mxu0
    %v6409 = vadd.f32 0.0, %v6408
    %v6410 = vpop.f32.mrb[0].mxu0
    %6411 = vmatprep.mubr.f32.mxu0 %v6205
    %6412 = vmatmul.mubr.f32.gmra.mrb[0].mxu0 %v6203
    %v6413 = vpop.f32.mrb[0].mxu0
    %v6414 = vadd.f32 0.0, %v6413
    %v6415 = vpop.f32.mrb[0].mxu0
    %6416 = vmatprep.mubr.f32.mxu0 %v6206
    %6417 = vmatmul.mubr.f32.gmra.mrb[0].mxu0 %v6204
    %v6418 = vpop.f32.mrb[0].mxu0
    %v6419 = vadd.f32 0.0, %v6418
    %v6420 = vpop.f32.mrb[0].mxu0
    %6421 = vmatprep.mubr.f32.mxu0 %v6207
    %6422 = vmatmul.mubr.f32.gmra.mrb[0].mxu0 %v6205
    %v6423 = vpop.f32.mrb[0].mxu0
    %v6424 = vadd.f32 0.0, %v6423
    %v6425 = vpop.f32.mrb[0].mxu0
    %6426 = vmatprep.mubr.f32.mxu0 %v6208
    %6427 = vmatmul.mubr.f32.gmra.mrb[0].mxu0 %v6206
    %v6428 = vpop.f32.mrb[0].mxu0
    %v6429 = vadd.f32 0.0, %v6428
    %v6430 = vpop.f32.mrb[0].mxu0
    %6431 = vmatprep.mubr.f32.mxu0 %v6209
    %6432 = vmatmul.mubr.f32.gmra.mrb[0].mxu0 %v6207
    %v6433 = vpop.f32.mrb[0].mxu0
    %v6434 = vadd.f32 0.0, %v6433
    %v6435 = vpop.f32.mrb[0].mxu0
    %6436 = vmatprep.mubr.f32.mxu0 %v6210
    %6437 = vmatmul.mubr.f32.gmra.mrb[0].mxu0 %v6208
    %v6438 = vpop.f32.mrb[0].mxu0
    %v6439 = vadd.f32 0.0, %v6438
    %v6440 = vpop.f32.mrb[0].mxu0
    %6441 = vmatprep.mubr.f32.mxu0 %v6211
    %6442 = vmatmul.mubr.f32.gmra.mrb[0].mxu0 %v6209
    %v6443 = vpop.f32.mrb[0].mxu0
    %v6444 = vadd.f32 0.0, %v6443
    %v6445 = vpop.f32.mrb[0].mxu0
    %6446 = vmatprep.mubr.f32.mxu0 %v6212
    %6447 = vmatmul.mubr.f32.gmra.mrb[0].mxu0 %v6210
    %v6448 = vpop.f32.mrb[0].mxu0
    %v6449 = vadd.f32 0.0, %v6448
    %v6450 = vpop.f32.mrb[0].mxu0
    %6451 = vmatprep.mubr.f32.mxu0 %v6213
    %6452 = vmatmul.mubr.f32.gmra.mrb[0].mxu0 %v6211
    %v6453 = vpop.f32.mrb[0].mxu0
    %v6454 = vadd.f32 0.0, %v6453
    %v6455 = vpop.f32.mrb[0].mxu0
    %6456 = vmatprep.mubr.f32.mxu0 %v6214
    %6457 = vmatmul.mubr.f32.gmra.mrb[0].mxu0 %v6212
    %v6458 = vpop.f32.mrb[0].mxu0
    %v6459 = vadd.f32 0.0, %v6458
    %v6460 = vpop.f32.mrb[0].mxu0
    %6461 = vmatprep.mubr.f32.mxu0 %v6215
    %6462 = vmatmul.mubr.f32.gmra.mrb[0].mxu0 %v6213
    %v6463 = vpop.f32.mrb[0].mxu0
    %v6464 = vadd.f32 0.0, %v6463
    %v6465 = vpop.f32.mrb[0].mxu0
    %6466 = vmatprep.mubr.f32.mxu0 %v6216
    %6467 = vmatmul.mubr.f32.gmra.mrb[0].mxu0 %v6214
    %v6468 = vpop.f32.mrb[0].mxu0
    %v6469 = vadd.f32 0.0, %v6468
    %v6470 = vpop.f32.mrb[0].mxu0
    %6471 = vmatprep.mubr.f32.mxu0 %v6217
    %6472 = vmatmul.mubr.f32.gmra.mrb[0].mxu0 %v6215
    %v6473 = vpop.f32.mrb[0].mxu0
    %v6474 = vadd.f32 0.0, %v6473
    %v6475 = vpop.f32.mrb[0].mxu0
    %6476 = vmatprep.mubr.f32.mxu0 %v6218
    %6477 = vmatmul.mubr.f32.gmra.mrb[0].mxu0 %v6216
    %v6478 = vpop.f32.mrb[0].mxu0
    %v6479 = vadd.f32 0.0, %v6478
    %v6480 = vpop.f32.mrb[0].mxu0
    %6481 = vmatprep.mubr.f32.mxu0 %v6219
    %6482 = vmatmul.mubr.f32.gmra.mrb[0].mxu0 %v6217
    %v6483 = vpop.f32.mrb[0].mxu0
    %v6484 = vadd.f32 0.0, %v6483
    %v6485 = vpop.f32.mrb[0].mxu0
    %6486 = vmatprep.mubr.f32.mxu0 %v6220
    %6487 = vmatmul.mubr.f32.gmra.mrb[0].mxu0 %v6218
    %v6488 = vpop.f32.mrb[0].mxu0
    %v6489 = vadd.f32 0.0, %v6488
    %v6490 = vpop.f32.mrb[0].mxu0
    %6491 = vmatprep.mubr.f32.mxu0 %v6221
    %6492 = vmatmul.mubr.f32.gmra.mrb[0].mxu0 %v6219
    %v6493 = vpop.f32.mrb[0].mxu0
    %v6494 = vadd.f32 0.0, %v6493
    %v6495 = vpop.f32.mrb[0].mxu0
    %6496 = vdwg.mxu0
    %6497 = vmatprep.subr.mxu0 0.0
    %6498 = vmatpush1.msra.mxu0 %v6256
    %6499 = vmatprep.subr.mxu0 0.0
    %6500 = vmatpush1.msra.mxu0 %v6257
    %6501 = vmatprep.subr.mxu0 0.0
    %6502 = vmatpush1.msra.mxu0 %v6258
    %6503 = vmatprep.subr.mxu0 0.0
    %6504 = vmatpush1.msra.mxu0 %v6259
    %6505 = vmatprep.subr.mxu0 0.0
    %6506 = vmatpush1.msra.mxu0 %v6260
    %6507 = vmatprep.subr.mxu0 0.0
    %6508 = vmatpush1.msra.mxu0 %v6261
    %6509 = vmatprep.subr.mxu0 0.0
    %6510 = vmatpush1.msra.mxu0 %v6262
    %6511 = vmatprep.subr.mxu0 0.0
    %6512 = vmatpush1.msra.mxu0 %v6263
    %6513 = vmatprep.subr.mxu0 0.0
    %6514 = vmatpush1.msra.mxu0 %v6264
    %6515 = vmatprep.subr.mxu0 0.0
    %6516 = vmatpush1.msra.mxu0 %v6265
    %6517 = vmatprep.subr.mxu0 0.0
    %6518 = vmatpush1.msra.mxu0 %v6266
    %6519 = vmatprep.subr.mxu0 0.0
    %6520 = vmatpush1.msra.mxu0 %v6267
    %6521 = vmatprep.subr.mxu0 0.0
    %6522 = vmatpush1.msra.mxu0 %v6268
    %6523 = vmatprep.subr.mxu0 0.0
    %6524 = vmatpush1.msra.mxu0 %v6269
    %6525 = vmatprep.subr.mxu0 0.0
    %6526 = vmatpush1.msra.mxu0 %v6270
    %6527 = vmatprep.subr.mxu0 0.0
    %6528 = vmatpush1.msra.mxu0 %v6271
    %6529 = vmatprep.subr.mxu0 0.0
    %6530 = vmatpush1.msra.mxu0 0.0
    %6531 = vmatprep.subr.mxu0 0.0
    %6532 = vmatpush1.msra.mxu0 0.0
    %6533 = vmatprep.subr.mxu0 0.0
    %6534 = vmatpush1.msra.mxu0 0.0
    %6535 = vmatprep.subr.mxu0 0.0
    %6536 = vmatpush1.msra.mxu0 0.0
    %6537 = vmatprep.subr.mxu0 0.0
    %6538 = vmatpush1.msra.mxu0 0.0
    %6539 = vmatprep.subr.mxu0 0.0
    %6540 = vmatpush1.msra.mxu0 0.0
    %6541 = vmatprep.subr.mxu0 0.0
    %6542 = vmatpush1.msra.mxu0 0.0
    %6543 = vmatprep.subr.mxu0 0.0
    %6544 = vmatpush1.msra.mxu0 0.0
    %6545 = vmatprep.subr.mxu0 0.0
    %6546 = vmatpush1.msra.mxu0 0.0
    %6547 = vmatprep.subr.mxu0 0.0
    %6548 = vmatpush1.msra.mxu0 0.0
    %6549 = vmatprep.subr.mxu0 0.0
    %6550 = vmatpush1.msra.mxu0 0.0
    %6551 = vmatprep.subr.mxu0 0.0
    %6552 = vmatpush1.msra.mxu0 0.0
    %6553 = vmatprep.subr.mxu0 0.0
    %6554 = vmatpush1.msra.mxu0 0.0
    %6555 = vmatprep.subr.mxu0 0.0
    %6556 = vmatpush1.msra.mxu0 0.0
    %6557 = vmatprep.subr.mxu0 0.0
    %6558 = vmatpush1.msra.mxu0 0.0
    %6559 = vmatprep.subr.mxu0 0.0
    %6560 = vmatpush1.msra.mxu0 0.0
    %6561 = vmatprep.mubr.f32.mxu0 0.0
    %6562 = vmatmul.mubr.f32.gmra.mrb[0].mxu0 %v6192
    %v6563 = vpop.f32.mrb[0].mxu0
    %v6564 = vadd.f32 %v6339, %v6563
    %v6565 = vpop.f32.mrb[0].mxu0
    %6566 = vmatprep.mubr.f32.mxu0 0.0
    %6567 = vmatmul.mubr.f32.gmra.mrb[0].mxu0 %v6193
    %v6568 = vpop.f32.mrb[0].mxu0
    %v6569 = vadd.f32 %v6344, %v6568
    %v6570 = vpop.f32.mrb[0].mxu0
    %6571 = vmatprep.mubr.f32.mxu0 0.0
    %6572 = vmatmul.mubr.f32.gmra.mrb[0].mxu0 %v6194
    %v6573 = vpop.f32.mrb[0].mxu0
    %v6574 = vadd.f32 %v6349, %v6573
    %v6575 = vpop.f32.mrb[0].mxu0
    %6576 = vmatprep.mubr.f32.mxu0 0.0
    %6577 = vmatmul.mubr.f32.gmra.mrb[0].mxu0 %v6195
    %v6578 = vpop.f32.mrb[0].mxu0
    %v6579 = vadd.f32 %v6354, %v6578
    %v6580 = vpop.f32.mrb[0].mxu0
    %6581 = vmatprep.mubr.f32.mxu0 0.0
    %6582 = vmatmul.mubr.f32.gmra.mrb[0].mxu0 %v6196
    %v6583 = vpop.f32.mrb[0].mxu0
    %v6584 = vadd.f32 %v6359, %v6583
    %v6585 = vpop.f32.mrb[0].mxu0
    %6586 = vmatprep.mubr.f32.mxu0 0.0
    %6587 = vmatmul.mubr.f32.gmra.mrb[0].mxu0 %v6197
    %v6588 = vpop.f32.mrb[0].mxu0
    %v6589 = vadd.f32 %v6364, %v6588
    %v6590 = vpop.f32.mrb[0].mxu0
    %6591 = vmatprep.mubr.f32.mxu0 0.0
    %6592 = vmatmul.mubr.f32.gmra.mrb[0].mxu0 %v6198
    %v6593 = vpop.f32.mrb[0].mxu0
    %v6594 = vadd.f32 %v6369, %v6593
    %v6595 = vpop.f32.mrb[0].mxu0
    %6596 = vmatprep.mubr.f32.mxu0 0.0
    %6597 = vmatmul.mubr.f32.gmra.mrb[0].mxu0 %v6199
    %v6598 = vpop.f32.mrb[0].mxu0
    %v6599 = vadd.f32 %v6374, %v6598
    %v6600 = vpop.f32.mrb[0].mxu0
    %6601 = vmatprep.mubr.f32.mxu0 0.0
    %6602 = vmatmul.mubr.f32.gmra.mrb[0].mxu0 %v6200
    %v6603 = vpop.f32.mrb[0].mxu0
    %v6604 = vadd.f32 %v6379, %v6603
    %v6605 = vpop.f32.mrb[0].mxu0
    %6606 = vmatprep.mubr.f32.mxu0 0.0
    %6607 = vmatmul.mubr.f32.gmra.mrb[0].mxu0 %v6201
    %v6608 = vpop.f32.mrb[0].mxu0
    %v6609 = vadd.f32 %v6384, %v6608
    %v6610 = vpop.f32.mrb[0].mxu0
    %6611 = vmatprep.mubr.f32.mxu0 0.0
    %6612 = vmatmul.mubr.f32.gmra.mrb[0].mxu0 %v6202
    %v6613 = vpop.f32.mrb[0].mxu0
    %v6614 = vadd.f32 %v6389, %v6613
    %v6615 = vpop.f32.mrb[0].mxu0
    %6616 = vmatprep.mubr.f32.mxu0 0.0
    %6617 = vmatmul.mubr.f32.gmra.mrb[0].mxu0 %v6203
    %v6618 = vpop.f32.mrb[0].mxu0
    %v6619 = vadd.f32 %v6394, %v6618
    %v6620 = vpop.f32.mrb[0].mxu0
    %6621 = vmatprep.mubr.f32.mxu0 0.0
    %6622 = vmatmul.mubr.f32.gmra.mrb[0].mxu0 %v6204
    %v6623 = vpop.f32.mrb[0].mxu0
    %v6624 = vadd.f32 %v6399, %v6623
    %v6625 = vpop.f32.mrb[0].mxu0
    %6626 = vmatprep.mubr.f32.mxu0 0.0
    %6627 = vmatmul.mubr.f32.gmra.mrb[0].mxu0 %v6205
    %v6628 = vpop.f32.mrb[0].mxu0
    %v6629 = vadd.f32 %v6404, %v6628
    %v6630 = vpop.f32.mrb[0].mxu0
    %6631 = vmatprep.mubr.f32.mxu0 0.0
    %6632 = vmatmul.mubr.f32.gmra.mrb[0].mxu0 %v6206
    %v6633 = vpop.f32.mrb[0].mxu0
    %v6634 = vadd.f32 %v6409, %v6633
    %v6635 = vpop.f32.mrb[0].mxu0
    %6636 = vmatprep.mubr.f32.mxu0 0.0
    %6637 = vmatmul.mubr.f32.gmra.mrb[0].mxu0 %v6207
    %v6638 = vpop.f32.mrb[0].mxu0
    %v6639 = vadd.f32 %v6414, %v6638
    %v6640 = vpop.f32.mrb[0].mxu0
    %6641 = vmatprep.mubr.f32.mxu0 0.0
    %6642 = vmatmul.mubr.f32.gmra.mrb[0].mxu0 %v6208
    %v6643 = vpop.f32.mrb[0].mxu0
    %v6644 = vadd.f32 %v6419, %v6643
    %v6645 = vpop.f32.mrb[0].mxu0
    %6646 = vmatprep.mubr.f32.mxu0 0.0
    %6647 = vmatmul.mubr.f32.gmra.mrb[0].mxu0 %v6209
    %v6648 = vpop.f32.mrb[0].mxu0
    %v6649 = vadd.f32 %v6424, %v6648
    %v6650 = vpop.f32.mrb[0].mxu0
    %6651 = vmatprep.mubr.f32.mxu0 0.0
    %6652 = vmatmul.mubr.f32.gmra.mrb[0].mxu0 %v6210
    %v6653 = vpop.f32.mrb[0].mxu0
    %v6654 = vadd.f32 %v6429, %v6653
    %v6655 = vpop.f32.mrb[0].mxu0
    %6656 = vmatprep.mubr.f32.mxu0 0.0
    %6657 = vmatmul.mubr.f32.gmra.mrb[0].mxu0 %v6211
    %v6658 = vpop.f32.mrb[0].mxu0
    %v6659 = vadd.f32 %v6434, %v6658
    %v6660 = vpop.f32.mrb[0].mxu0
    %6661 = vmatprep.mubr.f32.mxu0 0.0
    %6662 = vmatmul.mubr.f32.gmra.mrb[0].mxu0 %v6212
    %v6663 = vpop.f32.mrb[0].mxu0
    %v6664 = vadd.f32 %v6439, %v6663
    %v6665 = vpop.f32.mrb[0].mxu0
    %6666 = vmatprep.mubr.f32.mxu0 0.0
    %6667 = vmatmul.mubr.f32.gmra.mrb[0].mxu0 %v6213
    %v6668 = vpop.f32.mrb[0].mxu0
    %v6669 = vadd.f32 %v6444, %v6668
    %v6670 = vpop.f32.mrb[0].mxu0
    %6671 = vmatprep.mubr.f32.mxu0 0.0
    %6672 = vmatmul.mubr.f32.gmra.mrb[0].mxu0 %v6214
    %v6673 = vpop.f32.mrb[0].mxu0
    %v6674 = vadd.f32 %v6449, %v6673
    %v6675 = vpop.f32.mrb[0].mxu0
    %6676 = vmatprep.mubr.f32.mxu0 0.0
    %6677 = vmatmul.mubr.f32.gmra.mrb[0].mxu0 %v6215
    %v6678 = vpop.f32.mrb[0].mxu0
    %v6679 = vadd.f32 %v6454, %v6678
    %v6680 = vpop.f32.mrb[0].mxu0
    %6681 = vmatprep.mubr.f32.mxu0 0.0
    %6682 = vmatmul.mubr.f32.gmra.mrb[0].mxu0 %v6216
    %v6683 = vpop.f32.mrb[0].mxu0
    %v6684 = vadd.f32 %v6459, %v6683
    %v6685 = vpop.f32.mrb[0].mxu0
    %6686 = vmatprep.mubr.f32.mxu0 0.0
    %6687 = vmatmul.mubr.f32.gmra.mrb[0].mxu0 %v6217
    %v6688 = vpop.f32.mrb[0].mxu0
    %v6689 = vadd.f32 %v6464, %v6688
    %v6690 = vpop.f32.mrb[0].mxu0
    %6691 = vmatprep.mubr.f32.mxu0 0.0
    %6692 = vmatmul.mubr.f32.gmra.mrb[0].mxu0 %v6218
    %v6693 = vpop.f32.mrb[0].mxu0
    %v6694 = vadd.f32 %v6469, %v6693
    %v6695 = vpop.f32.mrb[0].mxu0
    %6696 = vmatprep.mubr.f32.mxu0 0.0
    %6697 = vmatmul.mubr.f32.gmra.mrb[0].mxu0 %v6219
    %v6698 = vpop.f32.mrb[0].mxu0
    %v6699 = vadd.f32 %v6474, %v6698
    %v6700 = vpop.f32.mrb[0].mxu0
    %6701 = vmatprep.mubr.f32.mxu0 0.0
    %6702 = vmatmul.mubr.f32.gmra.mrb[0].mxu0 %v6220
    %v6703 = vpop.f32.mrb[0].mxu0
    %v6704 = vadd.f32 %v6479, %v6703
    %v6705 = vpop.f32.mrb[0].mxu0
    %6706 = vmatprep.mubr.f32.mxu0 0.0
    %6707 = vmatmul.mubr.f32.gmra.mrb[0].mxu0 %v6221
    %v6708 = vpop.f32.mrb[0].mxu0
    %v6709 = vadd.f32 %v6484, %v6708
    %v6710 = vpop.f32.mrb[0].mxu0
    %6711 = vmatprep.mubr.f32.mxu0 0.0
    %6712 = vmatmul.mubr.f32.gmra.mrb[0].mxu0 %v6222
    %v6713 = vpop.f32.mrb[0].mxu0
    %v6714 = vadd.f32 %v6489, %v6713
    %v6715 = vpop.f32.mrb[0].mxu0
    %6716 = vmatprep.mubr.f32.mxu0 0.0
    %6717 = vmatmul.mubr.f32.gmra.mrb[0].mxu0 %v6223
    %v6718 = vpop.f32.mrb[0].mxu0
    %v6719 = vadd.f32 %v6494, %v6718
    %v6720 = vpop.f32.mrb[0].mxu0
    %6721 = vdwg.mxu0
    %6722 = vmatprep.subr.mxu0 0.0
    %6723 = vmatpush1.msra.mxu0 %v6140
    %6724 = vmatprep.subr.mxu0 0.0
    %6725 = vmatpush1.msra.mxu0 %v6141
    %6726 = vmatprep.subr.mxu0 0.0
    %6727 = vmatpush1.msra.mxu0 %v6142
    %6728 = vmatprep.subr.mxu0 0.0
    %6729 = vmatpush1.msra.mxu0 %v6143
    %6730 = vmatprep.subr.mxu0 0.0
    %6731 = vmatpush1.msra.mxu0 %v6144
    %6732 = vmatprep.subr.mxu0 0.0
    %6733 = vmatpush1.msra.mxu0 %v6145
    %6734 = vmatprep.subr.mxu0 0.0
    %6735 = vmatpush1.msra.mxu0 %v6146
    %6736 = vmatprep.subr.mxu0 0.0
    %6737 = vmatpush1.msra.mxu0 %v6147
    %6738 = vmatprep.subr.mxu0 0.0
    %6739 = vmatpush1.msra.mxu0 %v6148
    %6740 = vmatprep.subr.mxu0 0.0
    %6741 = vmatpush1.msra.mxu0 %v6149
    %6742 = vmatprep.subr.mxu0 0.0
    %6743 = vmatpush1.msra.mxu0 %v6150
    %6744 = vmatprep.subr.mxu0 0.0
    %6745 = vmatpush1.msra.mxu0 %v6151
    %6746 = vmatprep.subr.mxu0 0.0
    %6747 = vmatpush1.msra.mxu0 %v6152
    %6748 = vmatprep.subr.mxu0 0.0
    %6749 = vmatpush1.msra.mxu0 %v6153
    %6750 = vmatprep.subr.mxu0 0.0
    %6751 = vmatpush1.msra.mxu0 %v6154
    %6752 = vmatprep.subr.mxu0 0.0
    %6753 = vmatpush1.msra.mxu0 %v6155
    %6754 = vmatprep.subr.mxu0 0.0
    %6755 = vmatpush1.msra.mxu0 %v6156
    %6756 = vmatprep.subr.mxu0 0.0
    %6757 = vmatpush1.msra.mxu0 %v6157
    %6758 = vmatprep.subr.mxu0 0.0
    %6759 = vmatpush1.msra.mxu0 %v6158
    %6760 = vmatprep.subr.mxu0 0.0
    %6761 = vmatpush1.msra.mxu0 %v6159
    %6762 = vmatprep.subr.mxu0 0.0
    %6763 = vmatpush1.msra.mxu0 %v6160
    %6764 = vmatprep.subr.mxu0 0.0
    %6765 = vmatpush1.msra.mxu0 %v6161
    %6766 = vmatprep.subr.mxu0 0.0
    %6767 = vmatpush1.msra.mxu0 %v6162
    %6768 = vmatprep.subr.mxu0 0.0
    %6769 = vmatpush1.msra.mxu0 %v6163
    %6770 = vmatprep.subr.mxu0 0.0
    %6771 = vmatpush1.msra.mxu0 %v6164
    %6772 = vmatprep.subr.mxu0 0.0
    %6773 = vmatpush1.msra.mxu0 %v6165
    %6774 = vmatprep.subr.mxu0 0.0
    %6775 = vmatpush1.msra.mxu0 %v6166
    %6776 = vmatprep.subr.mxu0 0.0
    %6777 = vmatpush1.msra.mxu0 %v6167
    %6778 = vmatprep.subr.mxu0 0.0
    %6779 = vmatpush1.msra.mxu0 %v6168
    %6780 = vmatprep.subr.mxu0 0.0
    %6781 = vmatpush1.msra.mxu0 %v6169
    %6782 = vmatprep.subr.mxu0 0.0
    %6783 = vmatpush1.msra.mxu0 %v6170
    %6784 = vmatprep.subr.mxu0 0.0
    %6785 = vmatpush1.msra.mxu0 %v6171
    %6786 = vmatprep.mubr.f32.mxu0 %v6106
    %6787 = vmatmul.mubr.f32.gmra.mrb[0].mxu0 %v6104
    %v6788 = vpop.f32.mrb[0].mxu0
    %v6789 = vadd.f32 %v6564, %v6788
    %v6790 = vpop.f32.mrb[0].mxu0
    %6791 = vmatprep.mubr.f32.mxu0 %v6107
    %6792 = vmatmul.mubr.f32.gmra.mrb[0].mxu0 %v6105
    %v6793 = vpop.f32.mrb[0].mxu0
    %v6794 = vadd.f32 %v6569, %v6793
    %v6795 = vpop.f32.mrb[0].mxu0
    %6796 = vmatprep.mubr.f32.mxu0 %v6108
    %6797 = vmatmul.mubr.f32.gmra.mrb[0].mxu0 %v6106
    %v6798 = vpop.f32.mrb[0].mxu0
    %v6799 = vadd.f32 %v6574, %v6798
    %v6800 = vpop.f32.mrb[0].mxu0
    %6801 = vmatprep.mubr.f32.mxu0 %v6109
    %6802 = vmatmul.mubr.f32.gmra.mrb[0].mxu0 %v6107
    %v6803 = vpop.f32.mrb[0].mxu0
    %v6804 = vadd.f32 %v6579, %v6803
    %v6805 = vpop.f32.mrb[0].mxu0
    %6806 = vmatprep.mubr.f32.mxu0 %v6110
    %6807 = vmatmul.mubr.f32.gmra.mrb[0].mxu0 %v6108
    %v6808 = vpop.f32.mrb[0].mxu0
    %v6809 = vadd.f32 %v6584, %v6808
    %v6810 = vpop.f32.mrb[0].mxu0
    %6811 = vmatprep.mubr.f32.mxu0 %v6111
    %6812 = vmatmul.mubr.f32.gmra.mrb[0].mxu0 %v6109
    %v6813 = vpop.f32.mrb[0].mxu0
    %v6814 = vadd.f32 %v6589, %v6813
    %v6815 = vpop.f32.mrb[0].mxu0
    %6816 = vmatprep.mubr.f32.mxu0 %v6112
    %6817 = vmatmul.mubr.f32.gmra.mrb[0].mxu0 %v6110
    %v6818 = vpop.f32.mrb[0].mxu0
    %v6819 = vadd.f32 %v6594, %v6818
    %v6820 = vpop.f32.mrb[0].mxu0
    %6821 = vmatprep.mubr.f32.mxu0 %v6113
    %6822 = vmatmul.mubr.f32.gmra.mrb[0].mxu0 %v6111
    %v6823 = vpop.f32.mrb[0].mxu0
    %v6824 = vadd.f32 %v6599, %v6823
    %v6825 = vpop.f32.mrb[0].mxu0
    %6826 = vmatprep.mubr.f32.mxu0 %v6114
    %6827 = vmatmul.mubr.f32.gmra.mrb[0].mxu0 %v6112
    %v6828 = vpop.f32.mrb[0].mxu0
    %v6829 = vadd.f32 %v6604, %v6828
    %v6830 = vpop.f32.mrb[0].mxu0
    %6831 = vmatprep.mubr.f32.mxu0 %v6115
    %6832 = vmatmul.mubr.f32.gmra.mrb[0].mxu0 %v6113
    %v6833 = vpop.f32.mrb[0].mxu0
    %v6834 = vadd.f32 %v6609, %v6833
    %v6835 = vpop.f32.mrb[0].mxu0
    %6836 = vmatprep.mubr.f32.mxu0 %v6116
    %6837 = vmatmul.mubr.f32.gmra.mrb[0].mxu0 %v6114
    %v6838 = vpop.f32.mrb[0].mxu0
    %v6839 = vadd.f32 %v6614, %v6838
    %v6840 = vpop.f32.mrb[0].mxu0
    %6841 = vmatprep.mubr.f32.mxu0 %v6117
    %6842 = vmatmul.mubr.f32.gmra.mrb[0].mxu0 %v6115
    %v6843 = vpop.f32.mrb[0].mxu0
    %v6844 = vadd.f32 %v6619, %v6843
    %v6845 = vpop.f32.mrb[0].mxu0
    %6846 = vmatprep.mubr.f32.mxu0 %v6118
    %6847 = vmatmul.mubr.f32.gmra.mrb[0].mxu0 %v6116
    %v6848 = vpop.f32.mrb[0].mxu0
    %v6849 = vadd.f32 %v6624, %v6848
    %v6850 = vpop.f32.mrb[0].mxu0
    %6851 = vmatprep.mubr.f32.mxu0 %v6119
    %6852 = vmatmul.mubr.f32.gmra.mrb[0].mxu0 %v6117
    %v6853 = vpop.f32.mrb[0].mxu0
    %v6854 = vadd.f32 %v6629, %v6853
    %v6855 = vpop.f32.mrb[0].mxu0
    %6856 = vmatprep.mubr.f32.mxu0 %v6120
    %6857 = vmatmul.mubr.f32.gmra.mrb[0].mxu0 %v6118
    %v6858 = vpop.f32.mrb[0].mxu0
    %v6859 = vadd.f32 %v6634, %v6858
    %v6860 = vpop.f32.mrb[0].mxu0
    %6861 = vmatprep.mubr.f32.mxu0 %v6121
    %6862 = vmatmul.mubr.f32.gmra.mrb[0].mxu0 %v6119
    %v6863 = vpop.f32.mrb[0].mxu0
    %v6864 = vadd.f32 %v6639, %v6863
    %v6865 = vpop.f32.mrb[0].mxu0
    %6866 = vmatprep.mubr.f32.mxu0 %v6122
    %6867 = vmatmul.mubr.f32.gmra.mrb[0].mxu0 %v6120
    %v6868 = vpop.f32.mrb[0].mxu0
    %v6869 = vadd.f32 %v6644, %v6868
    %v6870 = vpop.f32.mrb[0].mxu0
    %6871 = vmatprep.mubr.f32.mxu0 %v6123
    %6872 = vmatmul.mubr.f32.gmra.mrb[0].mxu0 %v6121
    %v6873 = vpop.f32.mrb[0].mxu0
    %v6874 = vadd.f32 %v6649, %v6873
    %v6875 = vpop.f32.mrb[0].mxu0
    %6876 = vmatprep.mubr.f32.mxu0 %v6124
    %6877 = vmatmul.mubr.f32.gmra.mrb[0].mxu0 %v6122
    %v6878 = vpop.f32.mrb[0].mxu0
    %v6879 = vadd.f32 %v6654, %v6878
    %v6880 = vpop.f32.mrb[0].mxu0
    %6881 = vmatprep.mubr.f32.mxu0 %v6125
    %6882 = vmatmul.mubr.f32.gmra.mrb[0].mxu0 %v6123
    %v6883 = vpop.f32.mrb[0].mxu0
    %v6884 = vadd.f32 %v6659, %v6883
    %v6885 = vpop.f32.mrb[0].mxu0
    %6886 = vmatprep.mubr.f32.mxu0 %v6126
    %6887 = vmatmul.mubr.f32.gmra.mrb[0].mxu0 %v6124
    %v6888 = vpop.f32.mrb[0].mxu0
    %v6889 = vadd.f32 %v6664, %v6888
    %v6890 = vpop.f32.mrb[0].mxu0
    %6891 = vmatprep.mubr.f32.mxu0 %v6127
    %6892 = vmatmul.mubr.f32.gmra.mrb[0].mxu0 %v6125
    %v6893 = vpop.f32.mrb[0].mxu0
    %v6894 = vadd.f32 %v6669, %v6893
    %v6895 = vpop.f32.mrb[0].mxu0
    %6896 = vmatprep.mubr.f32.mxu0 %v6128
    %6897 = vmatmul.mubr.f32.gmra.mrb[0].mxu0 %v6126
    %v6898 = vpop.f32.mrb[0].mxu0
    %v6899 = vadd.f32 %v6674, %v6898
    %v6900 = vpop.f32.mrb[0].mxu0
    %6901 = vmatprep.mubr.f32.mxu0 %v6129
    %6902 = vmatmul.mubr.f32.gmra.mrb[0].mxu0 %v6127
    %v6903 = vpop.f32.mrb[0].mxu0
    %v6904 = vadd.f32 %v6679, %v6903
    %v6905 = vpop.f32.mrb[0].mxu0
    %6906 = vmatprep.mubr.f32.mxu0 %v6130
    %6907 = vmatmul.mubr.f32.gmra.mrb[0].mxu0 %v6128
    %v6908 = vpop.f32.mrb[0].mxu0
    %v6909 = vadd.f32 %v6684, %v6908
    %v6910 = vpop.f32.mrb[0].mxu0
    %6911 = vmatprep.mubr.f32.mxu0 %v6131
    %6912 = vmatmul.mubr.f32.gmra.mrb[0].mxu0 %v6129
    %v6913 = vpop.f32.mrb[0].mxu0
    %v6914 = vadd.f32 %v6689, %v6913
    %v6915 = vpop.f32.mrb[0].mxu0
    %6916 = vmatprep.mubr.f32.mxu0 %v6132
    %6917 = vmatmul.mubr.f32.gmra.mrb[0].mxu0 %v6130
    %v6918 = vpop.f32.mrb[0].mxu0
    %v6919 = vadd.f32 %v6694, %v6918
    %v6920 = vpop.f32.mrb[0].mxu0
    %6921 = vmatprep.mubr.f32.mxu0 %v6133
    %6922 = vmatmul.mubr.f32.gmra.mrb[0].mxu0 %v6131
    %v6923 = vpop.f32.mrb[0].mxu0
    %v6924 = vadd.f32 %v6699, %v6923
    %v6925 = vpop.f32.mrb[0].mxu0
    %6926 = vmatprep.mubr.f32.mxu0 %v6134
    %6927 = vmatmul.mubr.f32.gmra.mrb[0].mxu0 %v6132
    %v6928 = vpop.f32.mrb[0].mxu0
    %v6929 = vadd.f32 %v6704, %v6928
    %v6930 = vpop.f32.mrb[0].mxu0
    %6931 = vmatprep.mubr.f32.mxu0 %v6135
    %6932 = vmatmul.mubr.f32.gmra.mrb[0].mxu0 %v6133
    %v6933 = vpop.f32.mrb[0].mxu0
    %v6934 = vadd.f32 %v6709, %v6933
    %v6935 = vpop.f32.mrb[0].mxu0
    %6936 = vmatprep.mubr.f32.mxu0 %v6136
    %6937 = vmatmul.mubr.f32.gmra.mrb[0].mxu0 %v6134
    %v6938 = vpop.f32.mrb[0].mxu0
    %v6939 = vadd.f32 %v6714, %v6938
    %v6940 = vpop.f32.mrb[0].mxu0
    %6941 = vmatprep.mubr.f32.mxu0 %v6137
    %6942 = vmatmul.mubr.f32.gmra.mrb[0].mxu0 %v6135
    %v6943 = vpop.f32.mrb[0].mxu0
    %v6944 = vadd.f32 %v6719, %v6943
    %v6945 = vpop.f32.mrb[0].mxu0
    %6946 = vdwg.mxu0
    %6947 = vmatprep.subr.mxu0 0.0
    %6948 = vmatpush1.msra.mxu0 %v6172
    %6949 = vmatprep.subr.mxu0 0.0
    %6950 = vmatpush1.msra.mxu0 %v6173
    %6951 = vmatprep.subr.mxu0 0.0
    %6952 = vmatpush1.msra.mxu0 %v6174
    %6953 = vmatprep.subr.mxu0 0.0
    %6954 = vmatpush1.msra.mxu0 %v6175
    %6955 = vmatprep.subr.mxu0 0.0
    %6956 = vmatpush1.msra.mxu0 %v6176
    %6957 = vmatprep.subr.mxu0 0.0
    %6958 = vmatpush1.msra.mxu0 %v6177
    %6959 = vmatprep.subr.mxu0 0.0
    %6960 = vmatpush1.msra.mxu0 %v6178
    %6961 = vmatprep.subr.mxu0 0.0
    %6962 = vmatpush1.msra.mxu0 %v6179
    %6963 = vmatprep.subr.mxu0 0.0
    %6964 = vmatpush1.msra.mxu0 %v6180
    %6965 = vmatprep.subr.mxu0 0.0
    %6966 = vmatpush1.msra.mxu0 %v6181
    %6967 = vmatprep.subr.mxu0 0.0
    %6968 = vmatpush1.msra.mxu0 %v6182
    %6969 = vmatprep.subr.mxu0 0.0
    %6970 = vmatpush1.msra.mxu0 %v6183
    %6971 = vmatprep.subr.mxu0 0.0
    %6972 = vmatpush1.msra.mxu0 %v6184
    %6973 = vmatprep.subr.mxu0 0.0
    %6974 = vmatpush1.msra.mxu0 %v6185
    %6975 = vmatprep.subr.mxu0 0.0
    %6976 = vmatpush1.msra.mxu0 %v6186
    %6977 = vmatprep.subr.mxu0 0.0
    %6978 = vmatpush1.msra.mxu0 %v6187
    %6979 = vmatprep.subr.mxu0 0.0
    %6980 = vmatpush1.msra.mxu0 0.0
    %6981 = vmatprep.subr.mxu0 0.0
    %6982 = vmatpush1.msra.mxu0 0.0
    %6983 = vmatprep.subr.mxu0 0.0
    %6984 = vmatpush1.msra.mxu0 0.0
    %6985 = vmatprep.subr.mxu0 0.0
    %6986 = vmatpush1.msra.mxu0 0.0
    %6987 = vmatprep.subr.mxu0 0.0
    %6988 = vmatpush1.msra.mxu0 0.0
    %6989 = vmatprep.subr.mxu0 0.0
    %6990 = vmatpush1.msra.mxu0 0.0
    %6991 = vmatprep.subr.mxu0 0.0
    %6992 = vmatpush1.msra.mxu0 0.0
    %6993 = vmatprep.subr.mxu0 0.0
    %6994 = vmatpush1.msra.mxu0 0.0
    %6995 = vmatprep.subr.mxu0 0.0
    %6996 = vmatpush1.msra.mxu0 0.0
    %6997 = vmatprep.subr.mxu0 0.0
    %6998 = vmatpush1.msra.mxu0 0.0
    %6999 = vmatprep.subr.mxu0 0.0
    %7000 = vmatpush1.msra.mxu0 0.0
    %7001 = vmatprep.subr.mxu0 0.0
    %7002 = vmatpush1.msra.mxu0 0.0
    %7003 = vmatprep.subr.mxu0 0.0
    %7004 = vmatpush1.msra.mxu0 0.0
    %7005 = vmatprep.subr.mxu0 0.0
    %7006 = vmatpush1.msra.mxu0 0.0
    %7007 = vmatprep.subr.mxu0 0.0
    %7008 = vmatpush1.msra.mxu0 0.0
    %7009 = vmatprep.subr.mxu0 0.0
    %7010 = vmatpush1.msra.mxu0 0.0
    %7011 = vmatprep.mubr.f32.mxu0 0.0
    %7012 = vmatmul.mubr.f32.gmra.mrb[0].mxu0 %v6108
    %v7013 = vpop.f32.mrb[0].mxu0
    %v7014 = vadd.f32 %v6789, %v7013
    %v7015 = vpop.f32.mrb[0].mxu0
    %7016 = vmatprep.mubr.f32.mxu0 0.0
    %7017 = vmatmul.mubr.f32.gmra.mrb[0].mxu0 %v6109
    %v7018 = vpop.f32.mrb[0].mxu0
    %v7019 = vadd.f32 %v6794, %v7018
    %v7020 = vpop.f32.mrb[0].mxu0
    %7021 = vmatprep.mubr.f32.mxu0 0.0
    %7022 = vmatmul.mubr.f32.gmra.mrb[0].mxu0 %v6110
    %v7023 = vpop.f32.mrb[0].mxu0
    %v7024 = vadd.f32 %v6799, %v7023
    %v7025 = vpop.f32.mrb[0].mxu0
    %7026 = vmatprep.mubr.f32.mxu0 0.0
    %7027 = vmatmul.mubr.f32.gmra.mrb[0].mxu0 %v6111
    %v7028 = vpop.f32.mrb[0].mxu0
    %v7029 = vadd.f32 %v6804, %v7028
    %v7030 = vpop.f32.mrb[0].mxu0
    %7031 = vmatprep.mubr.f32.mxu0 0.0
    %7032 = vmatmul.mubr.f32.gmra.mrb[0].mxu0 %v6112
    %v7033 = vpop.f32.mrb[0].mxu0
    %v7034 = vadd.f32 %v6809, %v7033
    %v7035 = vpop.f32.mrb[0].mxu0
    %7036 = vmatprep.mubr.f32.mxu0 0.0
    %7037 = vmatmul.mubr.f32.gmra.mrb[0].mxu0 %v6113
    %v7038 = vpop.f32.mrb[0].mxu0
    %v7039 = vadd.f32 %v6814, %v7038
    %v7040 = vpop.f32.mrb[0].mxu0
    %7041 = vmatprep.mubr.f32.mxu0 0.0
    %7042 = vmatmul.mubr.f32.gmra.mrb[0].mxu0 %v6114
    %v7043 = vpop.f32.mrb[0].mxu0
    %v7044 = vadd.f32 %v6819, %v7043
    %v7045 = vpop.f32.mrb[0].mxu0
    %7046 = vmatprep.mubr.f32.mxu0 0.0
    %7047 = vmatmul.mubr.f32.gmra.mrb[0].mxu0 %v6115
    %v7048 = vpop.f32.mrb[0].mxu0
    %v7049 = vadd.f32 %v6824, %v7048
    %v7050 = vpop.f32.mrb[0].mxu0
    %7051 = vmatprep.mubr.f32.mxu0 0.0
    %7052 = vmatmul.mubr.f32.gmra.mrb[0].mxu0 %v6116
    %v7053 = vpop.f32.mrb[0].mxu0
    %v7054 = vadd.f32 %v6829, %v7053
    %v7055 = vpop.f32.mrb[0].mxu0
    %7056 = vmatprep.mubr.f32.mxu0 0.0
    %7057 = vmatmul.mubr.f32.gmra.mrb[0].mxu0 %v6117
    %v7058 = vpop.f32.mrb[0].mxu0
    %v7059 = vadd.f32 %v6834, %v7058
    %v7060 = vpop.f32.mrb[0].mxu0
    %7061 = vmatprep.mubr.f32.mxu0 0.0
    %7062 = vmatmul.mubr.f32.gmra.mrb[0].mxu0 %v6118
    %v7063 = vpop.f32.mrb[0].mxu0
    %v7064 = vadd.f32 %v6839, %v7063
    %v7065 = vpop.f32.mrb[0].mxu0
    %7066 = vmatprep.mubr.f32.mxu0 0.0
    %7067 = vmatmul.mubr.f32.gmra.mrb[0].mxu0 %v6119
    %v7068 = vpop.f32.mrb[0].mxu0
    %v7069 = vadd.f32 %v6844, %v7068
    %v7070 = vpop.f32.mrb[0].mxu0
    %7071 = vmatprep.mubr.f32.mxu0 0.0
    %7072 = vmatmul.mubr.f32.gmra.mrb[0].mxu0 %v6120
    %v7073 = vpop.f32.mrb[0].mxu0
    %v7074 = vadd.f32 %v6849, %v7073
    %v7075 = vpop.f32.mrb[0].mxu0
    %7076 = vmatprep.mubr.f32.mxu0 0.0
    %7077 = vmatmul.mubr.f32.gmra.mrb[0].mxu0 %v6121
    %v7078 = vpop.f32.mrb[0].mxu0
    %v7079 = vadd.f32 %v6854, %v7078
    %v7080 = vpop.f32.mrb[0].mxu0
    %7081 = vmatprep.mubr.f32.mxu0 0.0
    %7082 = vmatmul.mubr.f32.gmra.mrb[0].mxu0 %v6122
    %v7083 = vpop.f32.mrb[0].mxu0
    %v7084 = vadd.f32 %v6859, %v7083
    %v7085 = vpop.f32.mrb[0].mxu0
    %7086 = vmatprep.mubr.f32.mxu0 0.0
    %7087 = vmatmul.mubr.f32.gmra.mrb[0].mxu0 %v6123
    %v7088 = vpop.f32.mrb[0].mxu0
    %v7089 = vadd.f32 %v6864, %v7088
    %v7090 = vpop.f32.mrb[0].mxu0
    %7091 = vmatprep.mubr.f32.mxu0 0.0
    %7092 = vmatmul.mubr.f32.gmra.mrb[0].mxu0 %v6124
    %v7093 = vpop.f32.mrb[0].mxu0
    %v7094 = vadd.f32 %v6869, %v7093
    %v7095 = vpop.f32.mrb[0].mxu0
    %7096 = vmatprep.mubr.f32.mxu0 0.0
    %7097 = vmatmul.mubr.f32.gmra.mrb[0].mxu0 %v6125
    %v7098 = vpop.f32.mrb[0].mxu0
    %v7099 = vadd.f32 %v6874, %v7098
    %v7100 = vpop.f32.mrb[0].mxu0
    %7101 = vmatprep.mubr.f32.mxu0 0.0
    %7102 = vmatmul.mubr.f32.gmra.mrb[0].mxu0 %v6126
    %v7103 = vpop.f32.mrb[0].mxu0
    %v7104 = vadd.f32 %v6879, %v7103
    %v7105 = vpop.f32.mrb[0].mxu0
    %7106 = vmatprep.mubr.f32.mxu0 0.0
    %7107 = vmatmul.mubr.f32.gmra.mrb[0].mxu0 %v6127
    %v7108 = vpop.f32.mrb[0].mxu0
    %v7109 = vadd.f32 %v6884, %v7108
    %v7110 = vpop.f32.mrb[0].mxu0
    %7111 = vmatprep.mubr.f32.mxu0 0.0
    %7112 = vmatmul.mubr.f32.gmra.mrb[0].mxu0 %v6128
    %v7113 = vpop.f32.mrb[0].mxu0
    %v7114 = vadd.f32 %v6889, %v7113
    %v7115 = vpop.f32.mrb[0].mxu0
    %7116 = vmatprep.mubr.f32.mxu0 0.0
    %7117 = vmatmul.mubr.f32.gmra.mrb[0].mxu0 %v6129
    %v7118 = vpop.f32.mrb[0].mxu0
    %v7119 = vadd.f32 %v6894, %v7118
    %v7120 = vpop.f32.mrb[0].mxu0
    %7121 = vmatprep.mubr.f32.mxu0 0.0
    %7122 = vmatmul.mubr.f32.gmra.mrb[0].mxu0 %v6130
    %v7123 = vpop.f32.mrb[0].mxu0
    %v7124 = vadd.f32 %v6899, %v7123
    %v7125 = vpop.f32.mrb[0].mxu0
    %7126 = vmatprep.mubr.f32.mxu0 0.0
    %7127 = vmatmul.mubr.f32.gmra.mrb[0].mxu0 %v6131
    %v7128 = vpop.f32.mrb[0].mxu0
    %v7129 = vadd.f32 %v6904, %v7128
    %v7130 = vpop.f32.mrb[0].mxu0
    %7131 = vmatprep.mubr.f32.mxu0 0.0
    %7132 = vmatmul.mubr.f32.gmra.mrb[0].mxu0 %v6132
    %v7133 = vpop.f32.mrb[0].mxu0
    %v7134 = vadd.f32 %v6909, %v7133
    %v7135 = vpop.f32.mrb[0].mxu0
    %7136 = vmatprep.mubr.f32.mxu0 0.0
    %7137 = vmatmul.mubr.f32.gmra.mrb[0].mxu0 %v6133
    %v7138 = vpop.f32.mrb[0].mxu0
    %v7139 = vadd.f32 %v6914, %v7138
    %v7140 = vpop.f32.mrb[0].mxu0
    %7141 = vmatprep.mubr.f32.mxu0 0.0
    %7142 = vmatmul.mubr.f32.gmra.mrb[0].mxu0 %v6134
    %v7143 = vpop.f32.mrb[0].mxu0
    %v7144 = vadd.f32 %v6919, %v7143
    %v7145 = vpop.f32.mrb[0].mxu0
    %7146 = vmatprep.mubr.f32.mxu0 0.0
    %7147 = vmatmul.mubr.f32.gmra.mrb[0].mxu0 %v6135
    %v7148 = vpop.f32.mrb[0].mxu0
    %v7149 = vadd.f32 %v6924, %v7148
    %v7150 = vpop.f32.mrb[0].mxu0
    %7151 = vmatprep.mubr.f32.mxu0 0.0
    %7152 = vmatmul.mubr.f32.gmra.mrb[0].mxu0 %v6136
    %v7153 = vpop.f32.mrb[0].mxu0
    %v7154 = vadd.f32 %v6929, %v7153
    %v7155 = vpop.f32.mrb[0].mxu0
    %7156 = vmatprep.mubr.f32.mxu0 0.0
    %7157 = vmatmul.mubr.f32.gmra.mrb[0].mxu0 %v6137
    %v7158 = vpop.f32.mrb[0].mxu0
    %v7159 = vadd.f32 %v6934, %v7158
    %v7160 = vpop.f32.mrb[0].mxu0
    %7161 = vmatprep.mubr.f32.mxu0 0.0
    %7162 = vmatmul.mubr.f32.gmra.mrb[0].mxu0 %v6138
    %v7163 = vpop.f32.mrb[0].mxu0
    %v7164 = vadd.f32 %v6939, %v7163
    %v7165 = vpop.f32.mrb[0].mxu0
    %7166 = vmatprep.mubr.f32.mxu0 0.0
    %7167 = vmatmul.mubr.f32.gmra.mrb[0].mxu0 %v6139
    %v7168 = vpop.f32.mrb[0].mxu0
    %v7169 = vadd.f32 %v6944, %v7168
    %v7170 = vpop.f32.mrb[0].mxu0
    %7171 = vdwg.mxu0
    %v7172 = vld [vmem:[#allocation3 + $0x2] sm:$0xff]
    %v7173 = vld [vmem:[#allocation3 + $0xa] sm:$0xff]
    %v7174 = vld [vmem:[#allocation3 + $0x1a] sm:$0xff]
    %v7175 = vld [vmem:[#allocation3 + $0x22] sm:$0xff]
    %v7176 = vld [vmem:[#allocation3 + $0x32] sm:$0xff]
    %v7177 = vld [vmem:[#allocation3 + $0x3a] sm:$0xff]
    %v7178 = vld [vmem:[#allocation3 + $0x4a] sm:$0xff]
    %v7179 = vld [vmem:[#allocation3 + $0x52] sm:$0xff]
    %v7180 = vld [vmem:[#allocation3 + $0x62] sm:$0xff]
    %v7181 = vld [vmem:[#allocation3 + $0x6a] sm:$0xff]
    %v7182 = vld [vmem:[#allocation3 + $0x7a] sm:$0xff]
    %v7183 = vld [vmem:[#allocation3 + $0x82] sm:$0xff]
    %v7184 = vld [vmem:[#allocation3 + $0x92] sm:$0xff]
    %v7185 = vld [vmem:[#allocation3 + $0x9a] sm:$0xff]
    %v7186 = vld [vmem:[#allocation3 + $0xaa] sm:$0xff]
    %v7187 = vld [vmem:[#allocation3 + $0xb2] sm:$0xff]
    %v7188 = vld [vmem:[#allocation3 + $0xc2] sm:$0xff]
    %v7189 = vld [vmem:[#allocation3 + $0xca] sm:$0xff]
    %v7190 = vld [vmem:[#allocation3 + $0xda] sm:$0xff]
    %v7191 = vld [vmem:[#allocation3 + $0xe2] sm:$0xff]
    %v7192 = vld [vmem:[#allocation3 + $0xf2] sm:$0xff]
    %v7193 = vld [vmem:[#allocation3 + $0xfa] sm:$0xff]
    %v7194 = vld [vmem:[#allocation3 + $0x10a] sm:$0xff]
    %v7195 = vld [vmem:[#allocation3 + $0x112] sm:$0xff]
    %v7196 = vld [vmem:[#allocation3 + $0x122] sm:$0xff]
    %v7197 = vld [vmem:[#allocation3 + $0x12a] sm:$0xff]
    %v7198 = vld [vmem:[#allocation3 + $0x13a] sm:$0xff]
    %v7199 = vld [vmem:[#allocation3 + $0x142] sm:$0xff]
    %v7200 = vld [vmem:[#allocation3 + $0x152] sm:$0xff]
    %v7201 = vld [vmem:[#allocation3 + $0x15a] sm:$0xff]
    %v7202 = vld [vmem:[#allocation3 + $0x16a] sm:$0xff]
    %v7203 = vld [vmem:[#allocation3 + $0x172] sm:$0xff]
    %v7204 = vld [vmem:[#allocation3 + $0x182] sm:$0xff]
    %v7205 = vld [vmem:[#allocation3 + $0x18a] sm:$0xff]
    %v7206 = vld [vmem:[#allocation3 + $0x19a] sm:$0xff]
    %v7207 = vld [vmem:[#allocation3 + $0x1a2] sm:$0xff]
    %v7208 = vld [vmem:[%s3214] sm:$0xff]
    %v7209 = vld [vmem:[%s3214 + $0x8] sm:$0xff]
    %v7210 = vld [vmem:[%s3214 + $0x10] sm:$0xff]
    %v7211 = vld [vmem:[%s3214 + $0x18] sm:$0xff]
    %v7212 = vld [vmem:[%s3214 + $0x20] sm:$0xff]
    %v7213 = vld [vmem:[%s3214 + $0x28] sm:$0xff]
    %v7214 = vld [vmem:[%s3214 + $0x30] sm:$0xff]
    %v7215 = vld [vmem:[%s3214 + $0x38] sm:$0xff]
    %v7216 = vld [vmem:[%s3214 + $0x40] sm:$0xff]
    %v7217 = vld [vmem:[%s3214 + $0x48] sm:$0xff]
    %v7218 = vld [vmem:[%s3214 + $0x50] sm:$0xff]
    %v7219 = vld [vmem:[%s3214 + $0x58] sm:$0xff]
    %v7220 = vld [vmem:[%s3214 + $0x60] sm:$0xff]
    %v7221 = vld [vmem:[%s3214 + $0x68] sm:$0xff]
    %v7222 = vld [vmem:[%s3214 + $0x70] sm:$0xff]
    %v7223 = vld [vmem:[%s3214 + $0x78] sm:$0xff]
    %v7224 = vld [vmem:[%s3214 + $0x80] sm:$0xff]
    %v7225 = vld [vmem:[%s3214 + $0x88] sm:$0xff]
    %v7226 = vld [vmem:[%s3214 + $0x90] sm:$0xff]
    %v7227 = vld [vmem:[%s3214 + $0x98] sm:$0xff]
    %v7228 = vld [vmem:[%s3214 + $0xa0] sm:$0xff]
    %v7229 = vld [vmem:[%s3214 + $0xa8] sm:$0xff]
    %v7230 = vld [vmem:[%s3214 + $0xb0] sm:$0xff]
    %v7231 = vld [vmem:[%s3214 + $0xb8] sm:$0xff]
    %v7232 = vld [vmem:[%s3214 + $0xc0] sm:$0xff]
    %v7233 = vld [vmem:[%s3214 + $0xc8] sm:$0xff]
    %v7234 = vld [vmem:[%s3214 + $0xd0] sm:$0xff]
    %v7235 = vld [vmem:[%s3214 + $0xd8] sm:$0xff]
    %v7236 = vld [vmem:[%s3214 + $0xe0] sm:$0xff]
    %v7237 = vld [vmem:[%s3214 + $0xe8] sm:$0xff]
    %v7238 = vld [vmem:[%s3214 + $0xf0] sm:$0xff]
    %v7239 = vld [vmem:[%s3214 + $0xf8] sm:$0xff]
    %v7240 = vld [vmem:[%s3214 + $0x100] sm:$0xff]
    %v7241 = vld [vmem:[%s3214 + $0x108] sm:$0xff]
    %v7242 = vld [vmem:[%s3214 + $0x110] sm:$0xff]
    %v7243 = vld [vmem:[%s3214 + $0x118] sm:$0xff]
    %v7244 = vld [vmem:[%s3214 + $0x120] sm:$0xff]
    %v7245 = vld [vmem:[%s3214 + $0x128] sm:$0xff]
    %v7246 = vld [vmem:[%s3214 + $0x130] sm:$0xff]
    %v7247 = vld [vmem:[%s3214 + $0x138] sm:$0xff]
    %v7248 = vld [vmem:[%s3214 + $0x140] sm:$0xff]
    %v7249 = vld [vmem:[%s3214 + $0x148] sm:$0xff]
    %v7250 = vld [vmem:[%s3214 + $0x150] sm:$0xff]
    %v7251 = vld [vmem:[%s3214 + $0x158] sm:$0xff]
    %v7252 = vld [vmem:[%s3214 + $0x160] sm:$0xff]
    %v7253 = vld [vmem:[%s3214 + $0x168] sm:$0xff]
    %v7254 = vld [vmem:[%s3214 + $0x170] sm:$0xff]
    %v7255 = vld [vmem:[%s3214 + $0x178] sm:$0xff]
    %7256 = vmatprep.subr.mxu0 0.0
    %7257 = vmatpush1.msra.mxu0 %v7208
    %7258 = vmatprep.subr.mxu0 0.0
    %7259 = vmatpush1.msra.mxu0 %v7209
    %7260 = vmatprep.subr.mxu0 0.0
    %7261 = vmatpush1.msra.mxu0 %v7210
    %7262 = vmatprep.subr.mxu0 0.0
    %7263 = vmatpush1.msra.mxu0 %v7211
    %7264 = vmatprep.subr.mxu0 0.0
    %7265 = vmatpush1.msra.mxu0 %v7212
    %7266 = vmatprep.subr.mxu0 0.0
    %7267 = vmatpush1.msra.mxu0 %v7213
    %7268 = vmatprep.subr.mxu0 0.0
    %7269 = vmatpush1.msra.mxu0 %v7214
    %7270 = vmatprep.subr.mxu0 0.0
    %7271 = vmatpush1.msra.mxu0 %v7215
    %7272 = vmatprep.subr.mxu0 0.0
    %7273 = vmatpush1.msra.mxu0 %v7216
    %7274 = vmatprep.subr.mxu0 0.0
    %7275 = vmatpush1.msra.mxu0 %v7217
    %7276 = vmatprep.subr.mxu0 0.0
    %7277 = vmatpush1.msra.mxu0 %v7218
    %7278 = vmatprep.subr.mxu0 0.0
    %7279 = vmatpush1.msra.mxu0 %v7219
    %7280 = vmatprep.subr.mxu0 0.0
    %7281 = vmatpush1.msra.mxu0 %v7220
    %7282 = vmatprep.subr.mxu0 0.0
    %7283 = vmatpush1.msra.mxu0 %v7221
    %7284 = vmatprep.subr.mxu0 0.0
    %7285 = vmatpush1.msra.mxu0 %v7222
    %7286 = vmatprep.subr.mxu0 0.0
    %7287 = vmatpush1.msra.mxu0 %v7223
    %7288 = vmatprep.subr.mxu0 0.0
    %7289 = vmatpush1.msra.mxu0 %v7224
    %7290 = vmatprep.subr.mxu0 0.0
    %7291 = vmatpush1.msra.mxu0 %v7225
    %7292 = vmatprep.subr.mxu0 0.0
    %7293 = vmatpush1.msra.mxu0 %v7226
    %7294 = vmatprep.subr.mxu0 0.0
    %7295 = vmatpush1.msra.mxu0 %v7227
    %7296 = vmatprep.subr.mxu0 0.0
    %7297 = vmatpush1.msra.mxu0 %v7228
    %7298 = vmatprep.subr.mxu0 0.0
    %7299 = vmatpush1.msra.mxu0 %v7229
    %7300 = vmatprep.subr.mxu0 0.0
    %7301 = vmatpush1.msra.mxu0 %v7230
    %7302 = vmatprep.subr.mxu0 0.0
    %7303 = vmatpush1.msra.mxu0 %v7231
    %7304 = vmatprep.subr.mxu0 0.0
    %7305 = vmatpush1.msra.mxu0 %v7232
    %7306 = vmatprep.subr.mxu0 0.0
    %7307 = vmatpush1.msra.mxu0 %v7233
    %7308 = vmatprep.subr.mxu0 0.0
    %7309 = vmatpush1.msra.mxu0 %v7234
    %7310 = vmatprep.subr.mxu0 0.0
    %7311 = vmatpush1.msra.mxu0 %v7235
    %7312 = vmatprep.subr.mxu0 0.0
    %7313 = vmatpush1.msra.mxu0 %v7236
    %7314 = vmatprep.subr.mxu0 0.0
    %7315 = vmatpush1.msra.mxu0 %v7237
    %7316 = vmatprep.subr.mxu0 0.0
    %7317 = vmatpush1.msra.mxu0 %v7238
    %7318 = vmatprep.subr.mxu0 0.0
    %7319 = vmatpush1.msra.mxu0 %v7239
    %7320 = vmatprep.mubr.f32.mxu0 %v7174
    %7321 = vmatmul.mubr.f32.gmra.mrb[0].mxu0 %v7172
    %v7322 = vpop.f32.mrb[0].mxu0
    %v7323 = vadd.f32 0.0, %v7322
    %v7324 = vpop.f32.mrb[0].mxu0
    %7325 = vmatprep.mubr.f32.mxu0 %v7175
    %7326 = vmatmul.mubr.f32.gmra.mrb[0].mxu0 %v7173
    %v7327 = vpop.f32.mrb[0].mxu0
    %v7328 = vadd.f32 0.0, %v7327
    %v7329 = vpop.f32.mrb[0].mxu0
    %7330 = vmatprep.mubr.f32.mxu0 %v7176
    %7331 = vmatmul.mubr.f32.gmra.mrb[0].mxu0 %v7174
    %v7332 = vpop.f32.mrb[0].mxu0
    %v7333 = vadd.f32 0.0, %v7332
    %v7334 = vpop.f32.mrb[0].mxu0
    %7335 = vmatprep.mubr.f32.mxu0 %v7177
    %7336 = vmatmul.mubr.f32.gmra.mrb[0].mxu0 %v7175
    %v7337 = vpop.f32.mrb[0].mxu0
    %v7338 = vadd.f32 0.0, %v7337
    %v7339 = vpop.f32.mrb[0].mxu0
    %7340 = vmatprep.mubr.f32.mxu0 %v7178
    %7341 = vmatmul.mubr.f32.gmra.mrb[0].mxu0 %v7176
    %v7342 = vpop.f32.mrb[0].mxu0
    %v7343 = vadd.f32 0.0, %v7342
    %v7344 = vpop.f32.mrb[0].mxu0
    %7345 = vmatprep.mubr.f32.mxu0 %v7179
    %7346 = vmatmul.mubr.f32.gmra.mrb[0].mxu0 %v7177
    %v7347 = vpop.f32.mrb[0].mxu0
    %v7348 = vadd.f32 0.0, %v7347
    %v7349 = vpop.f32.mrb[0].mxu0
    %7350 = vmatprep.mubr.f32.mxu0 %v7180
    %7351 = vmatmul.mubr.f32.gmra.mrb[0].mxu0 %v7178
    %v7352 = vpop.f32.mrb[0].mxu0
    %v7353 = vadd.f32 0.0, %v7352
    %v7354 = vpop.f32.mrb[0].mxu0
    %7355 = vmatprep.mubr.f32.mxu0 %v7181
    %7356 = vmatmul.mubr.f32.gmra.mrb[0].mxu0 %v7179
    %v7357 = vpop.f32.mrb[0].mxu0
    %v7358 = vadd.f32 0.0, %v7357
    %v7359 = vpop.f32.mrb[0].mxu0
    %7360 = vmatprep.mubr.f32.mxu0 %v7182
    %7361 = vmatmul.mubr.f32.gmra.mrb[0].mxu0 %v7180
    %v7362 = vpop.f32.mrb[0].mxu0
    %v7363 = vadd.f32 0.0, %v7362
    %v7364 = vpop.f32.mrb[0].mxu0
    %7365 = vmatprep.mubr.f32.mxu0 %v7183
    %7366 = vmatmul.mubr.f32.gmra.mrb[0].mxu0 %v7181
    %v7367 = vpop.f32.mrb[0].mxu0
    %v7368 = vadd.f32 0.0, %v7367
    %v7369 = vpop.f32.mrb[0].mxu0
    %7370 = vmatprep.mubr.f32.mxu0 %v7184
    %7371 = vmatmul.mubr.f32.gmra.mrb[0].mxu0 %v7182
    %v7372 = vpop.f32.mrb[0].mxu0
    %v7373 = vadd.f32 0.0, %v7372
    %v7374 = vpop.f32.mrb[0].mxu0
    %7375 = vmatprep.mubr.f32.mxu0 %v7185
    %7376 = vmatmul.mubr.f32.gmra.mrb[0].mxu0 %v7183
    %v7377 = vpop.f32.mrb[0].mxu0
    %v7378 = vadd.f32 0.0, %v7377
    %v7379 = vpop.f32.mrb[0].mxu0
    %7380 = vmatprep.mubr.f32.mxu0 %v7186
    %7381 = vmatmul.mubr.f32.gmra.mrb[0].mxu0 %v7184
    %v7382 = vpop.f32.mrb[0].mxu0
    %v7383 = vadd.f32 0.0, %v7382
    %v7384 = vpop.f32.mrb[0].mxu0
    %7385 = vmatprep.mubr.f32.mxu0 %v7187
    %7386 = vmatmul.mubr.f32.gmra.mrb[0].mxu0 %v7185
    %v7387 = vpop.f32.mrb[0].mxu0
    %v7388 = vadd.f32 0.0, %v7387
    %v7389 = vpop.f32.mrb[0].mxu0
    %7390 = vmatprep.mubr.f32.mxu0 %v7188
    %7391 = vmatmul.mubr.f32.gmra.mrb[0].mxu0 %v7186
    %v7392 = vpop.f32.mrb[0].mxu0
    %v7393 = vadd.f32 0.0, %v7392
    %v7394 = vpop.f32.mrb[0].mxu0
    %7395 = vmatprep.mubr.f32.mxu0 %v7189
    %7396 = vmatmul.mubr.f32.gmra.mrb[0].mxu0 %v7187
    %v7397 = vpop.f32.mrb[0].mxu0
    %v7398 = vadd.f32 0.0, %v7397
    %v7399 = vpop.f32.mrb[0].mxu0
    %7400 = vmatprep.mubr.f32.mxu0 %v7190
    %7401 = vmatmul.mubr.f32.gmra.mrb[0].mxu0 %v7188
    %v7402 = vpop.f32.mrb[0].mxu0
    %v7403 = vadd.f32 0.0, %v7402
    %v7404 = vpop.f32.mrb[0].mxu0
    %7405 = vmatprep.mubr.f32.mxu0 %v7191
    %7406 = vmatmul.mubr.f32.gmra.mrb[0].mxu0 %v7189
    %v7407 = vpop.f32.mrb[0].mxu0
    %v7408 = vadd.f32 0.0, %v7407
    %v7409 = vpop.f32.mrb[0].mxu0
    %7410 = vmatprep.mubr.f32.mxu0 %v7192
    %7411 = vmatmul.mubr.f32.gmra.mrb[0].mxu0 %v7190
    %v7412 = vpop.f32.mrb[0].mxu0
    %v7413 = vadd.f32 0.0, %v7412
    %v7414 = vpop.f32.mrb[0].mxu0
    %7415 = vmatprep.mubr.f32.mxu0 %v7193
    %7416 = vmatmul.mubr.f32.gmra.mrb[0].mxu0 %v7191
    %v7417 = vpop.f32.mrb[0].mxu0
    %v7418 = vadd.f32 0.0, %v7417
    %v7419 = vpop.f32.mrb[0].mxu0
    %7420 = vmatprep.mubr.f32.mxu0 %v7194
    %7421 = vmatmul.mubr.f32.gmra.mrb[0].mxu0 %v7192
    %v7422 = vpop.f32.mrb[0].mxu0
    %v7423 = vadd.f32 0.0, %v7422
    %v7424 = vpop.f32.mrb[0].mxu0
    %7425 = vmatprep.mubr.f32.mxu0 %v7195
    %7426 = vmatmul.mubr.f32.gmra.mrb[0].mxu0 %v7193
    %v7427 = vpop.f32.mrb[0].mxu0
    %v7428 = vadd.f32 0.0, %v7427
    %v7429 = vpop.f32.mrb[0].mxu0
    %7430 = vmatprep.mubr.f32.mxu0 %v7196
    %7431 = vmatmul.mubr.f32.gmra.mrb[0].mxu0 %v7194
    %v7432 = vpop.f32.mrb[0].mxu0
    %v7433 = vadd.f32 0.0, %v7432
    %v7434 = vpop.f32.mrb[0].mxu0
    %7435 = vmatprep.mubr.f32.mxu0 %v7197
    %7436 = vmatmul.mubr.f32.gmra.mrb[0].mxu0 %v7195
    %v7437 = vpop.f32.mrb[0].mxu0
    %v7438 = vadd.f32 0.0, %v7437
    %v7439 = vpop.f32.mrb[0].mxu0
    %7440 = vmatprep.mubr.f32.mxu0 %v7198
    %7441 = vmatmul.mubr.f32.gmra.mrb[0].mxu0 %v7196
    %v7442 = vpop.f32.mrb[0].mxu0
    %v7443 = vadd.f32 0.0, %v7442
    %v7444 = vpop.f32.mrb[0].mxu0
    %7445 = vmatprep.mubr.f32.mxu0 %v7199
    %7446 = vmatmul.mubr.f32.gmra.mrb[0].mxu0 %v7197
    %v7447 = vpop.f32.mrb[0].mxu0
    %v7448 = vadd.f32 0.0, %v7447
    %v7449 = vpop.f32.mrb[0].mxu0
    %7450 = vmatprep.mubr.f32.mxu0 %v7200
    %7451 = vmatmul.mubr.f32.gmra.mrb[0].mxu0 %v7198
    %v7452 = vpop.f32.mrb[0].mxu0
    %v7453 = vadd.f32 0.0, %v7452
    %v7454 = vpop.f32.mrb[0].mxu0
    %7455 = vmatprep.mubr.f32.mxu0 %v7201
    %7456 = vmatmul.mubr.f32.gmra.mrb[0].mxu0 %v7199
    %v7457 = vpop.f32.mrb[0].mxu0
    %v7458 = vadd.f32 0.0, %v7457
    %v7459 = vpop.f32.mrb[0].mxu0
    %7460 = vmatprep.mubr.f32.mxu0 %v7202
    %7461 = vmatmul.mubr.f32.gmra.mrb[0].mxu0 %v7200
    %v7462 = vpop.f32.mrb[0].mxu0
    %v7463 = vadd.f32 0.0, %v7462
    %v7464 = vpop.f32.mrb[0].mxu0
    %7465 = vmatprep.mubr.f32.mxu0 %v7203
    %7466 = vmatmul.mubr.f32.gmra.mrb[0].mxu0 %v7201
    %v7467 = vpop.f32.mrb[0].mxu0
    %v7468 = vadd.f32 0.0, %v7467
    %v7469 = vpop.f32.mrb[0].mxu0
    %7470 = vmatprep.mubr.f32.mxu0 %v7204
    %7471 = vmatmul.mubr.f32.gmra.mrb[0].mxu0 %v7202
    %v7472 = vpop.f32.mrb[0].mxu0
    %v7473 = vadd.f32 0.0, %v7472
    %v7474 = vpop.f32.mrb[0].mxu0
    %7475 = vmatprep.mubr.f32.mxu0 %v7205
    %7476 = vmatmul.mubr.f32.gmra.mrb[0].mxu0 %v7203
    %v7477 = vpop.f32.mrb[0].mxu0
    %v7478 = vadd.f32 0.0, %v7477
    %v7479 = vpop.f32.mrb[0].mxu0
    %7480 = vdwg.mxu0
    %7481 = vmatprep.subr.mxu0 0.0
    %7482 = vmatpush1.msra.mxu0 %v7240
    %7483 = vmatprep.subr.mxu0 0.0
    %7484 = vmatpush1.msra.mxu0 %v7241
    %7485 = vmatprep.subr.mxu0 0.0
    %7486 = vmatpush1.msra.mxu0 %v7242
    %7487 = vmatprep.subr.mxu0 0.0
    %7488 = vmatpush1.msra.mxu0 %v7243
    %7489 = vmatprep.subr.mxu0 0.0
    %7490 = vmatpush1.msra.mxu0 %v7244
    %7491 = vmatprep.subr.mxu0 0.0
    %7492 = vmatpush1.msra.mxu0 %v7245
    %7493 = vmatprep.subr.mxu0 0.0
    %7494 = vmatpush1.msra.mxu0 %v7246
    %7495 = vmatprep.subr.mxu0 0.0
    %7496 = vmatpush1.msra.mxu0 %v7247
    %7497 = vmatprep.subr.mxu0 0.0
    %7498 = vmatpush1.msra.mxu0 %v7248
    %7499 = vmatprep.subr.mxu0 0.0
    %7500 = vmatpush1.msra.mxu0 %v7249
    %7501 = vmatprep.subr.mxu0 0.0
    %7502 = vmatpush1.msra.mxu0 %v7250
    %7503 = vmatprep.subr.mxu0 0.0
    %7504 = vmatpush1.msra.mxu0 %v7251
    %7505 = vmatprep.subr.mxu0 0.0
    %7506 = vmatpush1.msra.mxu0 %v7252
    %7507 = vmatprep.subr.mxu0 0.0
    %7508 = vmatpush1.msra.mxu0 %v7253
    %7509 = vmatprep.subr.mxu0 0.0
    %7510 = vmatpush1.msra.mxu0 %v7254
    %7511 = vmatprep.subr.mxu0 0.0
    %7512 = vmatpush1.msra.mxu0 %v7255
    %7513 = vmatprep.subr.mxu0 0.0
    %7514 = vmatpush1.msra.mxu0 0.0
    %7515 = vmatprep.subr.mxu0 0.0
    %7516 = vmatpush1.msra.mxu0 0.0
    %7517 = vmatprep.subr.mxu0 0.0
    %7518 = vmatpush1.msra.mxu0 0.0
    %7519 = vmatprep.subr.mxu0 0.0
    %7520 = vmatpush1.msra.mxu0 0.0
    %7521 = vmatprep.subr.mxu0 0.0
    %7522 = vmatpush1.msra.mxu0 0.0
    %7523 = vmatprep.subr.mxu0 0.0
    %7524 = vmatpush1.msra.mxu0 0.0
    %7525 = vmatprep.subr.mxu0 0.0
    %7526 = vmatpush1.msra.mxu0 0.0
    %7527 = vmatprep.subr.mxu0 0.0
    %7528 = vmatpush1.msra.mxu0 0.0
    %7529 = vmatprep.subr.mxu0 0.0
    %7530 = vmatpush1.msra.mxu0 0.0
    %7531 = vmatprep.subr.mxu0 0.0
    %7532 = vmatpush1.msra.mxu0 0.0
    %7533 = vmatprep.subr.mxu0 0.0
    %7534 = vmatpush1.msra.mxu0 0.0
    %7535 = vmatprep.subr.mxu0 0.0
    %7536 = vmatpush1.msra.mxu0 0.0
    %7537 = vmatprep.subr.mxu0 0.0
    %7538 = vmatpush1.msra.mxu0 0.0
    %7539 = vmatprep.subr.mxu0 0.0
    %7540 = vmatpush1.msra.mxu0 0.0
    %7541 = vmatprep.subr.mxu0 0.0
    %7542 = vmatpush1.msra.mxu0 0.0
    %7543 = vmatprep.subr.mxu0 0.0
    %7544 = vmatpush1.msra.mxu0 0.0
    %7545 = vmatprep.mubr.f32.mxu0 0.0
    %7546 = vmatmul.mubr.f32.gmra.mrb[0].mxu0 %v7176
    %v7547 = vpop.f32.mrb[0].mxu0
    %v7548 = vadd.f32 %v7323, %v7547
    %v7549 = vpop.f32.mrb[0].mxu0
    %7550 = vmatprep.mubr.f32.mxu0 0.0
    %7551 = vmatmul.mubr.f32.gmra.mrb[0].mxu0 %v7177
    %v7552 = vpop.f32.mrb[0].mxu0
    %v7553 = vadd.f32 %v7328, %v7552
    %v7554 = vpop.f32.mrb[0].mxu0
    %7555 = vmatprep.mubr.f32.mxu0 0.0
    %7556 = vmatmul.mubr.f32.gmra.mrb[0].mxu0 %v7178
    %v7557 = vpop.f32.mrb[0].mxu0
    %v7558 = vadd.f32 %v7333, %v7557
    %v7559 = vpop.f32.mrb[0].mxu0
    %7560 = vmatprep.mubr.f32.mxu0 0.0
    %7561 = vmatmul.mubr.f32.gmra.mrb[0].mxu0 %v7179
    %v7562 = vpop.f32.mrb[0].mxu0
    %v7563 = vadd.f32 %v7338, %v7562
    %v7564 = vpop.f32.mrb[0].mxu0
    %7565 = vmatprep.mubr.f32.mxu0 0.0
    %7566 = vmatmul.mubr.f32.gmra.mrb[0].mxu0 %v7180
    %v7567 = vpop.f32.mrb[0].mxu0
    %v7568 = vadd.f32 %v7343, %v7567
    %v7569 = vpop.f32.mrb[0].mxu0
    %7570 = vmatprep.mubr.f32.mxu0 0.0
    %7571 = vmatmul.mubr.f32.gmra.mrb[0].mxu0 %v7181
    %v7572 = vpop.f32.mrb[0].mxu0
    %v7573 = vadd.f32 %v7348, %v7572
    %v7574 = vpop.f32.mrb[0].mxu0
    %7575 = vmatprep.mubr.f32.mxu0 0.0
    %7576 = vmatmul.mubr.f32.gmra.mrb[0].mxu0 %v7182
    %v7577 = vpop.f32.mrb[0].mxu0
    %v7578 = vadd.f32 %v7353, %v7577
    %v7579 = vpop.f32.mrb[0].mxu0
    %7580 = vmatprep.mubr.f32.mxu0 0.0
    %7581 = vmatmul.mubr.f32.gmra.mrb[0].mxu0 %v7183
    %v7582 = vpop.f32.mrb[0].mxu0
    %v7583 = vadd.f32 %v7358, %v7582
    %v7584 = vpop.f32.mrb[0].mxu0
    %7585 = vmatprep.mubr.f32.mxu0 0.0
    %7586 = vmatmul.mubr.f32.gmra.mrb[0].mxu0 %v7184
    %v7587 = vpop.f32.mrb[0].mxu0
    %v7588 = vadd.f32 %v7363, %v7587
    %v7589 = vpop.f32.mrb[0].mxu0
    %7590 = vmatprep.mubr.f32.mxu0 0.0
    %7591 = vmatmul.mubr.f32.gmra.mrb[0].mxu0 %v7185
    %v7592 = vpop.f32.mrb[0].mxu0
    %v7593 = vadd.f32 %v7368, %v7592
    %v7594 = vpop.f32.mrb[0].mxu0
    %7595 = vmatprep.mubr.f32.mxu0 0.0
    %7596 = vmatmul.mubr.f32.gmra.mrb[0].mxu0 %v7186
    %v7597 = vpop.f32.mrb[0].mxu0
    %v7598 = vadd.f32 %v7373, %v7597
    %v7599 = vpop.f32.mrb[0].mxu0
    %7600 = vmatprep.mubr.f32.mxu0 0.0
    %7601 = vmatmul.mubr.f32.gmra.mrb[0].mxu0 %v7187
    %v7602 = vpop.f32.mrb[0].mxu0
    %v7603 = vadd.f32 %v7378, %v7602
    %v7604 = vpop.f32.mrb[0].mxu0
    %7605 = vmatprep.mubr.f32.mxu0 0.0
    %7606 = vmatmul.mubr.f32.gmra.mrb[0].mxu0 %v7188
    %v7607 = vpop.f32.mrb[0].mxu0
    %v7608 = vadd.f32 %v7383, %v7607
    %v7609 = vpop.f32.mrb[0].mxu0
    %7610 = vmatprep.mubr.f32.mxu0 0.0
    %7611 = vmatmul.mubr.f32.gmra.mrb[0].mxu0 %v7189
    %v7612 = vpop.f32.mrb[0].mxu0
    %v7613 = vadd.f32 %v7388, %v7612
    %v7614 = vpop.f32.mrb[0].mxu0
    %7615 = vmatprep.mubr.f32.mxu0 0.0
    %7616 = vmatmul.mubr.f32.gmra.mrb[0].mxu0 %v7190
    %v7617 = vpop.f32.mrb[0].mxu0
    %v7618 = vadd.f32 %v7393, %v7617
    %v7619 = vpop.f32.mrb[0].mxu0
    %7620 = vmatprep.mubr.f32.mxu0 0.0
    %7621 = vmatmul.mubr.f32.gmra.mrb[0].mxu0 %v7191
    %v7622 = vpop.f32.mrb[0].mxu0
    %v7623 = vadd.f32 %v7398, %v7622
    %v7624 = vpop.f32.mrb[0].mxu0
    %7625 = vmatprep.mubr.f32.mxu0 0.0
    %7626 = vmatmul.mubr.f32.gmra.mrb[0].mxu0 %v7192
    %v7627 = vpop.f32.mrb[0].mxu0
    %v7628 = vadd.f32 %v7403, %v7627
    %v7629 = vpop.f32.mrb[0].mxu0
    %7630 = vmatprep.mubr.f32.mxu0 0.0
    %7631 = vmatmul.mubr.f32.gmra.mrb[0].mxu0 %v7193
    %v7632 = vpop.f32.mrb[0].mxu0
    %v7633 = vadd.f32 %v7408, %v7632
    %v7634 = vpop.f32.mrb[0].mxu0
    %7635 = vmatprep.mubr.f32.mxu0 0.0
    %7636 = vmatmul.mubr.f32.gmra.mrb[0].mxu0 %v7194
    %v7637 = vpop.f32.mrb[0].mxu0
    %v7638 = vadd.f32 %v7413, %v7637
    %v7639 = vpop.f32.mrb[0].mxu0
    %7640 = vmatprep.mubr.f32.mxu0 0.0
    %7641 = vmatmul.mubr.f32.gmra.mrb[0].mxu0 %v7195
    %v7642 = vpop.f32.mrb[0].mxu0
    %v7643 = vadd.f32 %v7418, %v7642
    %v7644 = vpop.f32.mrb[0].mxu0
    %7645 = vmatprep.mubr.f32.mxu0 0.0
    %7646 = vmatmul.mubr.f32.gmra.mrb[0].mxu0 %v7196
    %v7647 = vpop.f32.mrb[0].mxu0
    %v7648 = vadd.f32 %v7423, %v7647
    %v7649 = vpop.f32.mrb[0].mxu0
    %7650 = vmatprep.mubr.f32.mxu0 0.0
    %7651 = vmatmul.mubr.f32.gmra.mrb[0].mxu0 %v7197
    %v7652 = vpop.f32.mrb[0].mxu0
    %v7653 = vadd.f32 %v7428, %v7652
    %v7654 = vpop.f32.mrb[0].mxu0
    %7655 = vmatprep.mubr.f32.mxu0 0.0
    %7656 = vmatmul.mubr.f32.gmra.mrb[0].mxu0 %v7198
    %v7657 = vpop.f32.mrb[0].mxu0
    %v7658 = vadd.f32 %v7433, %v7657
    %v7659 = vpop.f32.mrb[0].mxu0
    %7660 = vmatprep.mubr.f32.mxu0 0.0
    %7661 = vmatmul.mubr.f32.gmra.mrb[0].mxu0 %v7199
    %v7662 = vpop.f32.mrb[0].mxu0
    %v7663 = vadd.f32 %v7438, %v7662
    %v7664 = vpop.f32.mrb[0].mxu0
    %7665 = vmatprep.mubr.f32.mxu0 0.0
    %7666 = vmatmul.mubr.f32.gmra.mrb[0].mxu0 %v7200
    %v7667 = vpop.f32.mrb[0].mxu0
    %v7668 = vadd.f32 %v7443, %v7667
    %v7669 = vpop.f32.mrb[0].mxu0
    %7670 = vmatprep.mubr.f32.mxu0 0.0
    %7671 = vmatmul.mubr.f32.gmra.mrb[0].mxu0 %v7201
    %v7672 = vpop.f32.mrb[0].mxu0
    %v7673 = vadd.f32 %v7448, %v7672
    %v7674 = vpop.f32.mrb[0].mxu0
    %7675 = vmatprep.mubr.f32.mxu0 0.0
    %7676 = vmatmul.mubr.f32.gmra.mrb[0].mxu0 %v7202
    %v7677 = vpop.f32.mrb[0].mxu0
    %v7678 = vadd.f32 %v7453, %v7677
    %v7679 = vpop.f32.mrb[0].mxu0
    %7680 = vmatprep.mubr.f32.mxu0 0.0
    %7681 = vmatmul.mubr.f32.gmra.mrb[0].mxu0 %v7203
    %v7682 = vpop.f32.mrb[0].mxu0
    %v7683 = vadd.f32 %v7458, %v7682
    %v7684 = vpop.f32.mrb[0].mxu0
    %7685 = vmatprep.mubr.f32.mxu0 0.0
    %7686 = vmatmul.mubr.f32.gmra.mrb[0].mxu0 %v7204
    %v7687 = vpop.f32.mrb[0].mxu0
    %v7688 = vadd.f32 %v7463, %v7687
    %v7689 = vpop.f32.mrb[0].mxu0
    %7690 = vmatprep.mubr.f32.mxu0 0.0
    %7691 = vmatmul.mubr.f32.gmra.mrb[0].mxu0 %v7205
    %v7692 = vpop.f32.mrb[0].mxu0
    %v7693 = vadd.f32 %v7468, %v7692
    %v7694 = vpop.f32.mrb[0].mxu0
    %7695 = vmatprep.mubr.f32.mxu0 0.0
    %7696 = vmatmul.mubr.f32.gmra.mrb[0].mxu0 %v7206
    %v7697 = vpop.f32.mrb[0].mxu0
    %v7698 = vadd.f32 %v7473, %v7697
    %v7699 = vpop.f32.mrb[0].mxu0
    %7700 = vmatprep.mubr.f32.mxu0 0.0
    %7701 = vmatmul.mubr.f32.gmra.mrb[0].mxu0 %v7207
    %v7702 = vpop.f32.mrb[0].mxu0
    %v7703 = vadd.f32 %v7478, %v7702
    %v7704 = vpop.f32.mrb[0].mxu0
    %7705 = vdwg.mxu0
    %v7706 = vadd.f32 %v7014, %v7548
    %v7707 = vadd.f32 %v7019, %v7553
    %v7708 = vadd.f32 %v7024, %v7558
    %v7709 = vadd.f32 %v7029, %v7563
    %v7710 = vadd.f32 %v7034, %v7568
    %v7711 = vadd.f32 %v7039, %v7573
    %v7712 = vadd.f32 %v7044, %v7578
    %v7713 = vadd.f32 %v7049, %v7583
    %v7714 = vadd.f32 %v7054, %v7588
    %v7715 = vadd.f32 %v7059, %v7593
    %v7716 = vadd.f32 %v7064, %v7598
    %v7717 = vadd.f32 %v7069, %v7603
    %v7718 = vadd.f32 %v7074, %v7608
    %v7719 = vadd.f32 %v7079, %v7613
    %v7720 = vadd.f32 %v7084, %v7618
    %v7721 = vadd.f32 %v7089, %v7623
    %v7722 = vadd.f32 %v7094, %v7628
    %v7723 = vadd.f32 %v7099, %v7633
    %v7724 = vadd.f32 %v7104, %v7638
    %v7725 = vadd.f32 %v7109, %v7643
    %v7726 = vadd.f32 %v7114, %v7648
    %v7727 = vadd.f32 %v7119, %v7653
    %v7728 = vadd.f32 %v7124, %v7658
    %v7729 = vadd.f32 %v7129, %v7663
    %v7730 = vadd.f32 %v7134, %v7668
    %v7731 = vadd.f32 %v7139, %v7673
    %v7732 = vadd.f32 %v7144, %v7678
    %v7733 = vadd.f32 %v7149, %v7683
    %v7734 = vadd.f32 %v7154, %v7688
    %v7735 = vadd.f32 %v7159, %v7693
    %v7736 = vadd.f32 %v7164, %v7698
    %v7737 = vadd.f32 %v7169, %v7703
    %v7738 = vadd.f32 %v7706, %v7707
    %v7739 = vadd.f32 %v7738, %v7708
    %v7740 = vadd.f32 %v7739, %v7709
    %v7741 = vadd.f32 %v7740, %v7710
    %v7742 = vadd.f32 %v7741, %v7711
    %v7743 = vadd.f32 %v7742, %v7712
    %v7744 = vadd.f32 %v7743, %v7713
    %v7745 = vadd.f32 %v7744, %v7714
    %v7746 = vadd.f32 %v7745, %v7715
    %v7747 = vadd.f32 %v7746, %v7716
    %v7748 = vadd.f32 %v7747, %v7717
    %v7749 = vadd.f32 %v7748, %v7718
    %v7750 = vadd.f32 %v7749, %v7719
    %v7751 = vadd.f32 %v7750, %v7720
    %v7752 = vadd.f32 %v7751, %v7721
    %v7753 = vadd.f32 %v7752, %v7722
    %v7754 = vadd.f32 %v7753, %v7723
    %v7755 = vadd.f32 %v7754, %v7724
    %v7756 = vadd.f32 %v7755, %v7725
    %v7757 = vadd.f32 %v7756, %v7726
    %v7758 = vadd.f32 %v7757, %v7727
    %v7759 = vadd.f32 %v7758, %v7728
    %v7760 = vadd.f32 %v7759, %v7729
    %v7761 = vadd.f32 %v7760, %v7730
    %v7762 = vadd.f32 %v7761, %v7731
    %v7763 = vadd.f32 %v7762, %v7732
    %v7764 = vadd.f32 %v7763, %v7733
    %v7765 = vadd.f32 %v7764, %v7734
    %v7766 = vadd.f32 %v7765, %v7735
    %v7767 = vadd.f32 %v7766, %v7736
    %v7768 = vadd.f32 %v7767, %v7737
    %v7769 = vrot.slane %v7768, 4
    %v7770 = vadd.f32 %v7768, %v7769
    %v7771 = vrot.slane %v7770, 2
    %v7772 = vadd.f32 %v7770, %v7771
    %v7773 = vrot.slane %v7772, 1
    %v7774 = vadd.f32 %v7772, %v7773
    %v7775 = vmul.f32 %v7774, 0.00390625
    %v7776 = vsub.f32 %v7706, %v7775
    %v7777 = vsub.f32 %v7707, %v7775
    %v7778 = vsub.f32 %v7708, %v7775
    %v7779 = vsub.f32 %v7709, %v7775
    %v7780 = vsub.f32 %v7710, %v7775
    %v7781 = vsub.f32 %v7711, %v7775
    %v7782 = vsub.f32 %v7712, %v7775
    %v7783 = vsub.f32 %v7713, %v7775
    %v7784 = vsub.f32 %v7714, %v7775
    %v7785 = vsub.f32 %v7715, %v7775
    %v7786 = vsub.f32 %v7716, %v7775
    %v7787 = vsub.f32 %v7717, %v7775
    %v7788 = vsub.f32 %v7718, %v7775
    %v7789 = vsub.f32 %v7719, %v7775
    %v7790 = vsub.f32 %v7720, %v7775
    %v7791 = vsub.f32 %v7721, %v7775
    %v7792 = vsub.f32 %v7722, %v7775
    %v7793 = vsub.f32 %v7723, %v7775
    %v7794 = vsub.f32 %v7724, %v7775
    %v7795 = vsub.f32 %v7725, %v7775
    %v7796 = vsub.f32 %v7726, %v7775
    %v7797 = vsub.f32 %v7727, %v7775
    %v7798 = vsub.f32 %v7728, %v7775
    %v7799 = vsub.f32 %v7729, %v7775
    %v7800 = vsub.f32 %v7730, %v7775
    %v7801 = vsub.f32 %v7731, %v7775
    %v7802 = vsub.f32 %v7732, %v7775
    %v7803 = vsub.f32 %v7733, %v7775
    %v7804 = vsub.f32 %v7734, %v7775
    %v7805 = vsub.f32 %v7735, %v7775
    %v7806 = vsub.f32 %v7736, %v7775
    %v7807 = vsub.f32 %v7737, %v7775
    %v7808 = vmul.f32 %v7776, %v7776
    %v7809 = vmul.f32 %v7777, %v7777
    %v7810 = vmul.f32 %v7778, %v7778
    %v7811 = vmul.f32 %v7779, %v7779
    %v7812 = vmul.f32 %v7780, %v7780
    %v7813 = vmul.f32 %v7781, %v7781
    %v7814 = vmul.f32 %v7782, %v7782
    %v7815 = vmul.f32 %v7783, %v7783
    %v7816 = vmul.f32 %v7784, %v7784
    %v7817 = vmul.f32 %v7785, %v7785
    %v7818 = vmul.f32 %v7786, %v7786
    %v7819 = vmul.f32 %v7787, %v7787
    %v7820 = vmul.f32 %v7788, %v7788
    %v7821 = vmul.f32 %v7789, %v7789
    %v7822 = vmul.f32 %v7790, %v7790
    %v7823 = vmul.f32 %v7791, %v7791
    %v7824 = vmul.f32 %v7792, %v7792
    %v7825 = vmul.f32 %v7793, %v7793
    %v7826 = vmul.f32 %v7794, %v7794
    %v7827 = vmul.f32 %v7795, %v7795
    %v7828 = vmul.f32 %v7796, %v7796
    %v7829 = vmul.f32 %v7797, %v7797
    %v7830 = vmul.f32 %v7798, %v7798
    %v7831 = vmul.f32 %v7799, %v7799
    %v7832 = vmul.f32 %v7800, %v7800
    %v7833 = vmul.f32 %v7801, %v7801
    %v7834 = vmul.f32 %v7802, %v7802
    %v7835 = vmul.f32 %v7803, %v7803
    %v7836 = vmul.f32 %v7804, %v7804
    %v7837 = vmul.f32 %v7805, %v7805
    %v7838 = vmul.f32 %v7806, %v7806
    %v7839 = vmul.f32 %v7807, %v7807
    %v7840 = vadd.f32 %v7808, %v7809
    %v7841 = vadd.f32 %v7840, %v7810
    %v7842 = vadd.f32 %v7841, %v7811
    %v7843 = vadd.f32 %v7842, %v7812
    %v7844 = vadd.f32 %v7843, %v7813
    %v7845 = vadd.f32 %v7844, %v7814
    %v7846 = vadd.f32 %v7845, %v7815
    %v7847 = vadd.f32 %v7846, %v7816
    %v7848 = vadd.f32 %v7847, %v7817
    %v7849 = vadd.f32 %v7848, %v7818
    %v7850 = vadd.f32 %v7849, %v7819
    %v7851 = vadd.f32 %v7850, %v7820
    %v7852 = vadd.f32 %v7851, %v7821
    %v7853 = vadd.f32 %v7852, %v7822
    %v7854 = vadd.f32 %v7853, %v7823
    %v7855 = vadd.f32 %v7854, %v7824
    %v7856 = vadd.f32 %v7855, %v7825
    %v7857 = vadd.f32 %v7856, %v7826
    %v7858 = vadd.f32 %v7857, %v7827
    %v7859 = vadd.f32 %v7858, %v7828
    %v7860 = vadd.f32 %v7859, %v7829
    %v7861 = vadd.f32 %v7860, %v7830
    %v7862 = vadd.f32 %v7861, %v7831
    %v7863 = vadd.f32 %v7862, %v7832
    %v7864 = vadd.f32 %v7863, %v7833
    %v7865 = vadd.f32 %v7864, %v7834
    %v7866 = vadd.f32 %v7865, %v7835
    %v7867 = vadd.f32 %v7866, %v7836
    %v7868 = vadd.f32 %v7867, %v7837
    %v7869 = vadd.f32 %v7868, %v7838
    %v7870 = vadd.f32 %v7869, %v7839
    %v7871 = vrot.slane %v7870, 4
    %v7872 = vadd.f32 %v7870, %v7871
    %v7873 = vrot.slane %v7872, 2
    %v7874 = vadd.f32 %v7872, %v7873
    %v7875 = vrot.slane %v7874, 1
    %v7876 = vadd.f32 %v7874, %v7875
    %v7877 = vmul.f32 %v7876, 0.00390625
    %v7878 = vadd.f32 %v7877, 1e-05
    %v7879 = vrsqrt.pop %v7878
    %v7880 = vmul.f32 %v7776, %v7879
    %v7881 = vmul.f32 %v7777, %v7879
    %v7882 = vmul.f32 %v7778, %v7879
    %v7883 = vmul.f32 %v7779, %v7879
    %v7884 = vmul.f32 %v7780, %v7879
    %v7885 = vmul.f32 %v7781, %v7879
    %v7886 = vmul.f32 %v7782, %v7879
    %v7887 = vmul.f32 %v7783, %v7879
    %v7888 = vmul.f32 %v7784, %v7879
    %v7889 = vmul.f32 %v7785, %v7879
    %v7890 = vmul.f32 %v7786, %v7879
    %v7891 = vmul.f32 %v7787, %v7879
    %v7892 = vmul.f32 %v7788, %v7879
    %v7893 = vmul.f32 %v7789, %v7879
    %v7894 = vmul.f32 %v7790, %v7879
    %v7895 = vmul.f32 %v7791, %v7879
    %v7896 = vmul.f32 %v7792, %v7879
    %v7897 = vmul.f32 %v7793, %v7879
    %v7898 = vmul.f32 %v7794, %v7879
    %v7899 = vmul.f32 %v7795, %v7879
    %v7900 = vmul.f32 %v7796, %v7879
    %v7901 = vmul.f32 %v7797, %v7879
    %v7902 = vmul.f32 %v7798, %v7879
    %v7903 = vmul.f32 %v7799, %v7879
    %v7904 = vmul.f32 %v7800, %v7879
    %v7905 = vmul.f32 %v7801, %v7879
    %v7906 = vmul.f32 %v7802, %v7879
    %v7907 = vmul.f32 %v7803, %v7879
    %v7908 = vmul.f32 %v7804, %v7879
    %v7909 = vmul.f32 %v7805, %v7879
    %v7910 = vmul.f32 %v7806, %v7879
    %v7911 = vmul.f32 %v7807, %v7879
    %v7912 = vld [vmem:[%s4015] sm:$0xff]
    %v7913 = vld [vmem:[%s4015 + $0x8] sm:$0xff]
    %v7914 = vld [vmem:[%s4015 + $0x10] sm:$0xff]
    %v7915 = vld [vmem:[%s4015 + $0x18] sm:$0xff]
    %v7916 = vld [vmem:[%s4015 + $0x20] sm:$0xff]
    %v7917 = vld [vmem:[%s4015 + $0x28] sm:$0xff]
    %v7918 = vld [vmem:[%s4015 + $0x30] sm:$0xff]
    %v7919 = vld [vmem:[%s4015 + $0x38] sm:$0xff]
    %v7920 = vld [vmem:[%s4015 + $0x40] sm:$0xff]
    %v7921 = vld [vmem:[%s4015 + $0x48] sm:$0xff]
    %v7922 = vld [vmem:[%s4015 + $0x50] sm:$0xff]
    %v7923 = vld [vmem:[%s4015 + $0x58] sm:$0xff]
    %v7924 = vld [vmem:[%s4015 + $0x60] sm:$0xff]
    %v7925 = vld [vmem:[%s4015 + $0x68] sm:$0xff]
    %v7926 = vld [vmem:[%s4015 + $0x70] sm:$0xff]
    %v7927 = vld [vmem:[%s4015 + $0x78] sm:$0xff]
    %v7928 = vld [vmem:[%s4015 + $0x80] sm:$0xff]
    %v7929 = vld [vmem:[%s4015 + $0x88] sm:$0xff]
    %v7930 = vld [vmem:[%s4015 + $0x90] sm:$0xff]
    %v7931 = vld [vmem:[%s4015 + $0x98] sm:$0xff]
    %v7932 = vld [vmem:[%s4015 + $0xa0] sm:$0xff]
    %v7933 = vld [vmem:[%s4015 + $0xa8] sm:$0xff]
    %v7934 = vld [vmem:[%s4015 + $0xb0] sm:$0xff]
    %v7935 = vld [vmem:[%s4015 + $0xb8] sm:$0xff]
    %v7936 = vld [vmem:[%s4015 + $0xc0] sm:$0xff]
    %v7937 = vld [vmem:[%s4015 + $0xc8] sm:$0xff]
    %v7938 = vld [vmem:[%s4015 + $0xd0] sm:$0xff]
    %v7939 = vld [vmem:[%s4015 + $0xd8] sm:$0xff]
    %v7940 = vld [vmem:[%s4015 + $0xe0] sm:$0xff]
    %v7941 = vld [vmem:[%s4015 + $0xe8] sm:$0xff]
    %v7942 = vld [vmem:[%s4015 + $0xf0] sm:$0xff]
    %v7943 = vld [vmem:[%s4015 + $0xf8] sm:$0xff]
    %v7944 = vadd.f32 %v7912, %v7880
    %v7945 = vadd.f32 %v7913, %v7881
    %v7946 = vadd.f32 %v7914, %v7882
    %v7947 = vadd.f32 %v7915, %v7883
    %v7948 = vadd.f32 %v7916, %v7884
    %v7949 = vadd.f32 %v7917, %v7885
    %v7950 = vadd.f32 %v7918, %v7886
    %v7951 = vadd.f32 %v7919, %v7887
    %v7952 = vadd.f32 %v7920, %v7888
    %v7953 = vadd.f32 %v7921, %v7889
    %v7954 = vadd.f32 %v7922, %v7890
    %v7955 = vadd.f32 %v7923, %v7891
    %v7956 = vadd.f32 %v7924, %v7892
    %v7957 = vadd.f32 %v7925, %v7893
    %v7958 = vadd.f32 %v7926, %v7894
    %v7959 = vadd.f32 %v7927, %v7895
    %v7960 = vadd.f32 %v7928, %v7896
    %v7961 = vadd.f32 %v7929, %v7897
    %v7962 = vadd.f32 %v7930, %v7898
    %v7963 = vadd.f32 %v7931, %v7899
    %v7964 = vadd.f32 %v7932, %v7900
    %v7965 = vadd.f32 %v7933, %v7901
    %v7966 = vadd.f32 %v7934, %v7902
    %v7967 = vadd.f32 %v7935, %v7903
    %v7968 = vadd.f32 %v7936, %v7904
    %v7969 = vadd.f32 %v7937, %v7905
    %v7970 = vadd.f32 %v7938, %v7906
    %v7971 = vadd.f32 %v7939, %v7907
    %v7972 = vadd.f32 %v7940, %v7908
    %v7973 = vadd.f32 %v7941, %v7909
    %v7974 = vadd.f32 %v7942, %v7910
    %v7975 = vadd.f32 %v7943, %v7911
    %s7976 = scalar_lea.vmem [#allocation4], 256
    %7977 = vst [vmem:[%s7976] sm:$0xff] %v7944
    %7978 = vst [vmem:[%s7976 + $0x8] sm:$0xff] %v7945
    %7979 = vst [vmem:[%s7976 + $0x10] sm:$0xff] %v7946
    %7980 = vst [vmem:[%s7976 + $0x18] sm:$0xff] %v7947
    %7981 = vst [vmem:[%s7976 + $0x20] sm:$0xff] %v7948
    %7982 = vst [vmem:[%s7976 + $0x28] sm:$0xff] %v7949
    %7983 = vst [vmem:[%s7976 + $0x30] sm:$0xff] %v7950
    %7984 = vst [vmem:[%s7976 + $0x38] sm:$0xff] %v7951
    %7985 = vst [vmem:[%s7976 + $0x40] sm:$0xff] %v7952
    %7986 = vst [vmem:[%s7976 + $0x48] sm:$0xff] %v7953
    %7987 = vst [vmem:[%s7976 + $0x50] sm:$0xff] %v7954
    %7988 = vst [vmem:[%s7976 + $0x58] sm:$0xff] %v7955
    %7989 = vst [vmem:[%s7976 + $0x60] sm:$0xff] %v7956
    %7990 = vst [vmem:[%s7976 + $0x68] sm:$0xff] %v7957
    %7991 = vst [vmem:[%s7976 + $0x70] sm:$0xff] %v7958
    %7992 = vst [vmem:[%s7976 + $0x78] sm:$0xff] %v7959
    %7993 = vst [vmem:[%s7976 + $0x80] sm:$0xff] %v7960
    %7994 = vst [vmem:[%s7976 + $0x88] sm:$0xff] %v7961
    %7995 = vst [vmem:[%s7976 + $0x90] sm:$0xff] %v7962
    %7996 = vst [vmem:[%s7976 + $0x98] sm:$0xff] %v7963
    %7997 = vst [vmem:[%s7976 + $0xa0] sm:$0xff] %v7964
    %7998 = vst [vmem:[%s7976 + $0xa8] sm:$0xff] %v7965
    %7999 = vst [vmem:[%s7976 + $0xb0] sm:$0xff] %v7966
    %8000 = vst [vmem:[%s7976 + $0xb8] sm:$0xff] %v7967
    %8001 = vst [vmem:[%s7976 + $0xc0] sm:$0xff] %v7968
    %8002 = vst [vmem:[%s7976 + $0xc8] sm:$0xff] %v7969
    %8003 = vst [vmem:[%s7976 + $0xd0] sm:$0xff] %v7970
    %8004 = vst [vmem:[%s7976 + $0xd8] sm:$0xff] %v7971
    %8005 = vst [vmem:[%s7976 + $0xe0] sm:$0xff] %v7972
    %8006 = vst [vmem:[%s7976 + $0xe8] sm:$0xff] %v7973
    %8007 = vst [vmem:[%s7976 + $0xf0] sm:$0xff] %v7974
    %8008 = vst [vmem:[%s7976 + $0xf8] sm:$0xff] %v7975
    // Predicated region
    $region14: #{resnet_block.1} parent=1 // pred_check
      _
    $region15: #{resnet_block.1} parent=1 // pred_check_branch
      %8010 = sbr.rel (0) target = $region17
    $region16: #{resnet_block.1} parent=1 // pred_region
      %s8012 = ssub.s32 8192, 8192
      %8013 = vsyncadd [#allocation5], %s8012
      %s8014 = sshll.u32 [#allocation4], 4
      %s8015 = int_to_ptr.vmem [resolvable:$true] %s8014
      %8020 = dma.vmem_to_hbm [thread:$0]  %s8015, 8192, %s3, [#allocation5], 128, 128, 8
    $region17: #{resnet_block.1} parent=1 // pred_fallthru
      _
    // Predicated region
    $region18: #{resnet_block.1} parent=1 // pred_check
      _
    $region19: #{resnet_block.1} parent=1 // pred_check_branch
      %8022 = sbr.rel (0) target = $region21
    $region20: #{resnet_block.1} parent=1 // pred_region
      %8023 = dma.done [#allocation5], 8192
    $region21: #{resnet_block.1} parent=1 // pred_fallthru
      _
    %8024 = vsyncpa [#allocation5], 1

</llo_original>
